<compile_context>
chip_gen: v5e
topology: v5e:2x2
jax: 0.10.0
libtpu: 0.0.40
codegen_flags: <defaults>
</compile_context>

<pallas_src>
import math
import functools

import jax
import jax.numpy as jnp
from jax.experimental import pallas as pl
from jax.experimental.pallas import tpu as pltpu


# ----------------------------------------------------------------------------
# tiling helpers
# ----------------------------------------------------------------------------
def _round_up(n, m):
    return ((n + m - 1) // m) * m


def _row_tile(H, W, target_elems=2048):
    """Rows per tile: an exact divisor of H whose tile (rows*W) is 8-aligned
    (or full-extent) and <= target_elems.  NOTE: if W % 8 != 0 and no such
    divisor exists this falls back to the smallest legal tile, which for very
    large maps can be the full map (VMEM heavy)."""
    divs = [d for d in range(1, H + 1)
            if H % d == 0 and ((d * W) % 8 == 0 or d == H)]
    fitting = [d for d in divs if d * W <= target_elems]
    return max(fitting) if fitting else min(divs)


def _pad_nhwc(feat_flat, B, H, W):
    """[B, H*W, C] -> zero-padded bf16 NHWC [B, H+2, W+2, C] (raw values)."""
    x = feat_flat.reshape(B, H, W, feat_flat.shape[-1])
    return jnp.pad(x, ((0, 0), (1, 1), (1, 1), (0, 0))).astype(jnp.bfloat16)


# ----------------------------------------------------------------------------
# Pallas kernel 1: 3x3 "same" conv with fused im2col, optional input-GN+ReLU
# epilogue on the slab, optional bias / relu / exp output epilogue, optional
# per-tile GN statistics output.
# ----------------------------------------------------------------------------
def conv3x3(xp, w, *, H, W, in_scale=None, in_shift=None, bias=None,
            relu_cols=0, exp_lo=0, exp_hi=0, collect_stats=False,
            out_dtype=jnp.bfloat16):
    """3x3 conv, padding=1, stride=1.

    xp : [B, H+2, W+2, Cin]  bf16, zero padded RAW values (resident per batch).
    w  : [9*Cin, Nout]       bf16, K ordered (kh, kw, cin) row-major.
    in_scale / in_shift : [B, 1, Cin] f32 -- if given, the kernel applies
        relu(x * scale + shift) to the slab (previous layer's GroupNorm+ReLU)
        and re-zeroes the spatial padding border before the im2col.
    bias : [1, Nout] f32 (optional).
    relu_cols / exp_lo..exp_hi : compile-time column ranges that get ReLU /
        exp applied in the output epilogue.
    Returns y [B, H*W, Nout]; if collect_stats also returns per-tile partial
    stats [B, n_t, 2, Nout] f32 = (sum, sum-of-squares) of the stored output.
    """
    B, Hp, Wp, Cin = xp.shape
    K9, Nout = w.shape
    assert K9 == 9 * Cin
    HW = H * W
    th = _row_tile(H, W)
    tm = th * W
    n_t = H // th
    in_gn = in_scale is not None
    use_bias = bias is not None
    use_epi = (relu_cols > 0) or (exp_hi > exp_lo)

    def kernel(*refs):
        it = iter(refs)
        xp_ref = next(it)
        w_ref = next(it)
        isc_ref = next(it) if in_gn else None
        ish_ref = next(it) if in_gn else None
        b_ref = next(it) if use_bias else None
        y_ref = next(it)
        st_ref = next(it) if collect_stats else None

        t = pl.program_id(1)
        row0 = t * th
        # one (th+2)-row slab load per tile (leading-dim dynamic slice)
        slab = xp_ref[0, pl.ds(row0, th + 2), :, :]            # [th+2, Wp, Cin]

        if in_gn:
            # previous layer's GroupNorm affine + ReLU, fused on the slab
            v = jnp.maximum(slab.astype(jnp.float32) * isc_ref[0]
                            + ish_ref[0], 0.0)
            # re-zero the spatial zero-padding (affine maps raw 0 -> relu(shift))
            zc = jnp.zeros((th + 2, 1, Cin), jnp.float32)
            v = jnp.concatenate([zc, v[:, 1:W + 1, :], zc], axis=1)
            keep_top = (t > 0).astype(jnp.float32)
            keep_bot = (t < n_t - 1).astype(jnp.float32)
            v = jnp.concatenate([v[0:1] * keep_top,
                                 v[1:th + 1],
                                 v[th + 1:th + 2] * keep_bot], axis=0)
            slab = v.astype(jnp.bfloat16)

        # fused im2col: deep-K MXU dot(s), no per-tap accumulator adds
        if Cin < 128:
            taps = [slab[kh:kh + th, kw:kw + W, :]
                    for kh in range(3) for kw in range(3)]
            col = jnp.concatenate(taps, axis=-1).reshape(tm, 9 * Cin)
            acc = jnp.dot(col, w_ref[...], preferred_element_type=jnp.float32)
        else:
            acc = None
            for kh in range(3):
                taps = [slab[kh:kh + th, kw:kw + W, :] for kw in range(3)]
                col = jnp.concatenate(taps, axis=-1).reshape(tm, 3 * Cin)
                part = jnp.dot(col, w_ref[pl.ds(3 * Cin * kh, 3 * Cin), :],
                               preferred_element_type=jnp.float32)
                acc = part if acc is None else acc + part

        y = acc
        if use_bias:
            y = y + b_ref[...]
        if use_epi:
            cid = jax.lax.broadcasted_iota(jnp.int32, (tm, Nout), 1)
            if relu_cols > 0:
                y = jnp.where(cid < relu_cols, jnp.maximum(y, 0.0), y)
            if exp_hi > exp_lo:
                em = (cid >= exp_lo) & (cid < exp_hi)
                y = jnp.where(em, jnp.exp(jnp.where(em, y, 0.0)), y)
        yb = y.astype(y_ref.dtype)
        y_ref[0] = yb

        if collect_stats:
            # stats of the *stored* (rounded) value so the consumer-side
            # normalization is self-consistent with what it reads back
            yf = yb.astype(jnp.float32)
            s = jnp.sum(yf, axis=0, keepdims=True)
            ss = jnp.sum(yf * yf, axis=0, keepdims=True)
            st_ref[0, 0] = jnp.concatenate([s, ss], axis=0)     # (2, Nout)

    in_specs = [
        # TODO(synk): for very large FPN levels on v7x (64 MiB VMEM) switch
        # this whole-map-resident spec to Buffered(1) or a manual halo DMA.
        pl.BlockSpec((1, Hp, Wp, Cin), lambda b, t: (b, 0, 0, 0)),
        pl.BlockSpec((K9, Nout), lambda b, t: (0, 0)),
    ]
    inputs = [xp, w]
    if in_gn:
        in_specs += [pl.BlockSpec((1, 1, Cin), lambda b, t: (b, 0, 0)),
                     pl.BlockSpec((1, 1, Cin), lambda b, t: (b, 0, 0))]
        inputs += [in_scale, in_shift]
    if use_bias:
        in_specs.append(pl.BlockSpec((1, Nout), lambda b, t: (0, 0)))
        inputs.append(bias)

    out_shape = [jax.ShapeDtypeStruct((B, HW, Nout), out_dtype)]
    out_specs = [pl.BlockSpec((1, tm, Nout), lambda b, t: (b, t, 0))]
    if collect_stats:
        out_shape.append(jax.ShapeDtypeStruct((B, n_t, 2, Nout), jnp.float32))
        out_specs.append(pl.BlockSpec((1, 1, 2, Nout), lambda b, t: (b, t, 0, 0)))

    return pl.pallas_call(
        kernel,
        out_shape=tuple(out_shape) if collect_stats else out_shape[0],
        grid=(B, n_t),
        in_specs=in_specs,
        out_specs=tuple(out_specs) if collect_stats else out_specs[0],
        compiler_params=pltpu.CompilerParams(
            dimension_semantics=("parallel", "parallel"),
            vmem_limit_bytes=48 * 1024 * 1024),
    )(*inputs)


# ----------------------------------------------------------------------------
# Pallas kernel 2: flat GEMM (DCN GEMM and the fused offset/result head)
# ----------------------------------------------------------------------------
def flat_gemm(a, w, bias, *, tm, out_dtype=jnp.float32):
    """y = a @ w + bias.  a: [B, HW, K] bf16, w: [K, Nout] bf16, bias: [1, Nout]."""
    B, HW, K = a.shape
    Nout = w.shape[-1]
    n_t = HW // tm

    def kernel(a_ref, w_ref, b_ref, y_ref):
        y = jnp.dot(a_ref[0], w_ref[...], preferred_element_type=jnp.float32)
        y_ref[0] = (y + b_ref[...]).astype(y_ref.dtype)

    return pl.pallas_call(
        kernel,
        out_shape=jax.ShapeDtypeStruct((B, HW, Nout), out_dtype),
        grid=(B, n_t),
        in_specs=[pl.BlockSpec((1, tm, K), lambda b, t: (b, t, 0)),
                  pl.BlockSpec((K, Nout), lambda b, t: (0, 0)),
                  pl.BlockSpec((1, Nout), lambda b, t: (0, 0))],
        out_specs=pl.BlockSpec((1, tm, Nout), lambda b, t: (b, t, 0)),
        compiler_params=pltpu.CompilerParams(
            dimension_semantics=("parallel", "parallel")),
    )(a, w, bias)


# ----------------------------------------------------------------------------
# tiny XLA glue: GN per-(batch, channel) affine from conv-emitted statistics
# ----------------------------------------------------------------------------
def _gn_affine_from_stats(stats, gamma, beta, *, groups, HW, eps=1e-5):
    """stats: [B, n_t, 2, C] partial (sum, sumsq) -> (scale, shift) [B, 1, C]."""
    B = stats.shape[0]
    C = stats.shape[-1]
    cg = C // groups
    st = stats.sum(axis=1)                                  # [B, 2, C]
    s, ss = st[:, 0, :], st[:, 1, :]
    n = float(HW * cg)
    sg = s.reshape(B, groups, cg).sum(-1)
    ssg = ss.reshape(B, groups, cg).sum(-1)
    mean = sg / n
    var = jnp.maximum(ssg / n - mean * mean, 0.0)           # cancellation guard
    inv = jax.lax.rsqrt(var + eps)
    mean_c = jnp.repeat(mean, cg, axis=-1)                  # [B, C]
    inv_c = jnp.repeat(inv, cg, axis=-1)
    scale_c = (gamma[None, :] * inv_c).reshape(B, 1, C)
    shift_c = (beta[None, :] - mean_c * gamma[None, :] * inv_c).reshape(B, 1, C)
    return scale_c, shift_c


# ----------------------------------------------------------------------------
# plain-XLA glue: small im2col (bbox, 36 cols) and deformable bilinear gather
# ----------------------------------------------------------------------------
def im2col_3x3_flat(x_bhwc):
    """[B, H, W, C] -> [B, H*W, 9*C]  (tap order kh, kw, cin; padding=1)."""
    B, H, W, C = x_bhwc.shape
    xp = jnp.pad(x_bhwc, ((0, 0), (1, 1), (1, 1), (0, 0)))
    cols = [xp[:, kh:kh + H, kw:kw + W, :] for kh in range(3) for kw in range(3)]
    return jnp.concatenate(cols, axis=-1).reshape(B, H * W, 9 * C)


def deform_im2col_3x3(x, offset):
    """DeformConv sampling.  x: [B, H, W, C] f32, offset: [B, H, W, 18] with
    (dy, dx) per tap (mmcv convention).  Returns [B, HW, 9*C] bf16.
    # TODO(synk): the data-dependent bilinear gather stays in plain XLA; at
    # production sizes this (not the Pallas GEMMs) dominates and should become
    # a Pallas kernel with x resident in VMEM and the weighting fused."""
    B, H, W, C = x.shape
    xf = x.reshape(B, H * W, C)
    hh = jnp.arange(H, dtype=jnp.float32)[None, :, None]
    ww = jnp.arange(W, dtype=jnp.float32)[None, None, :]

    def gather_bilinear(yc, xc):
        y0 = jnp.floor(yc)
        x0 = jnp.floor(xc)
        vals = 0.0
        for dyi, dxi in ((0, 0), (0, 1), (1, 0), (1, 1)):
            yi = y0 + dyi
            xi = x0 + dxi
            wgt = (1.0 - jnp.abs(yc - yi)) * (1.0 - jnp.abs(xc - xi))
            valid = (yi >= 0) & (yi <= H - 1) & (xi >= 0) & (xi <= W - 1)
            yci = jnp.clip(yi, 0, H - 1).astype(jnp.int32)
            xci = jnp.clip(xi, 0, W - 1).astype(jnp.int32)
            flat = (yci * W + xci).reshape(B, H * W, 1)
            g = jnp.take_along_axis(xf, flat, axis=1).reshape(B, H, W, C)
            vals = vals + g * (wgt * valid.astype(jnp.float32))[..., None]
        return vals

    cols = []
    for k in range(9):
        kh, kw = k // 3, k % 3
        dy = offset[..., 2 * k]
        dx = offset[..., 2 * k + 1]
        yc = hh + (kh - 1) + dy
        xc = ww + (kw - 1) + dx
        cols.append(gather_bilinear(yc, xc))
    out = jnp.concatenate(cols, axis=-1).reshape(B, H * W, 9 * C)
    return out.astype(jnp.bfloat16)


# ----------------------------------------------------------------------------
# forward pass (one FPN level) == FCOSoffsetHead.forward_single
# ----------------------------------------------------------------------------
def forward_single(params, x_nchw, *, num_classes, feat_channels, stacked_convs, groups):
    B, Cin, H, W = x_nchw.shape
    HW = H * W
    C = feat_channels
    x_nhwc = jnp.transpose(x_nchw, (0, 2, 3, 1))
    x_flat = x_nhwc.reshape(B, HW, Cin)
    tm2 = _row_tile(H, W, 4096) * W

    # ---- tower: [conv3x3(no bias) + GN + ReLU] x stacked_convs ----
    # Each conv emits raw bf16 output + partial GN stats; the GN affine + ReLU
    # is applied by the NEXT conv's input epilogue (no standalone GN kernel,
    # no extra HBM round trip).
    # TODO(synk): tower channel width stays at feat_channels; at the demo C=32
    # the output stores are lane-sparse -- production feat_channels=256 is
    # already lane-dense.
    def tower(x0_flat, prefix):
        xp = _pad_nhwc(x0_flat, B, H, W)
        sc = sh = None
        for i in range(stacked_convs):
            w = params[f"{prefix}_conv_w{i}"]
            chn = w.shape[2]
            w9 = w.reshape(9 * chn, C).astype(jnp.bfloat16)
            y_raw, stats = conv3x3(xp, w9, H=H, W=W,
                                   in_scale=sc, in_shift=sh,
                                   collect_stats=True, out_dtype=jnp.bfloat16)
            sc, sh = _gn_affine_from_stats(
                stats, params[f"{prefix}_gn_g{i}"], params[f"{prefix}_gn_b{i}"],
                groups=groups, HW=HW)
            xp = _pad_nhwc(y_raw, B, H, W)          # pad the RAW conv output
        return xp, sc, sh

    reg_xp, reg_sc, reg_sh = tower(x_flat, "reg")

    # ---- fused reg heads: [off_conv+ReLU | scale-folded fcos_reg->exp | ctr] ----
    n_head = C + 4 + 1
    Np1 = _round_up(n_head, 128)                    # lane-dense output
    scale = params["scale"].reshape(())
    w1 = jnp.zeros((3, 3, C, Np1), jnp.float32)
    w1 = w1.at[..., :C].set(params["off_conv_w"])
    w1 = w1.at[..., C:C + 4].set(params["fcos_reg_w"] * scale)   # fold Scale
    w1 = w1.at[..., C + 4].set(params["ctr_w"][..., 0])
    b1 = jnp.zeros((Np1,), jnp.float32)
    b1 = b1.at[:C].set(params["off_conv_b"])
    b1 = b1.at[C:C + 4].set(params["fcos_reg_b"] * scale)
    b1 = b1.at[C + 4].set(params["ctr_b"][0])

    heads1 = conv3x3(reg_xp, w1.reshape(9 * C, Np1).astype(jnp.bfloat16),
                     H=H, W=W, in_scale=reg_sc, in_shift=reg_sh,
                     bias=b1.reshape(1, Np1),
                     relu_cols=C, exp_lo=C, exp_hi=C + 4,
                     out_dtype=jnp.bfloat16)
    off_feat = heads1[..., :C]                      # relu(off_conv(reg)), bf16
    bbox = heads1[..., C:C + 4]                     # exp(scale * fcos_reg), bf16
    pre_c = heads1[..., C + 4:C + 5].astype(jnp.float32)

    # ---- fused [fcos_offset 1x1 | BatchNorm(result conv(bbox))] GEMM ----
    # TODO(synk): BatchNorm2d reproduced in inference mode with default stats
    # (running_mean=0, running_var=1, gamma=1, beta=0); train-mode batch stats
    # are not computed here.
    bn_scale = 1.0 / math.sqrt(1.0 + 1e-5)
    bbox_cols = im2col_3x3_flat(bbox.reshape(B, H, W, 4))         # [B, HW, 36]
    K2 = C + 36
    K2p = _round_up(K2, 128)                         # lane-aligned K
    pad_cols = jnp.zeros((B, HW, K2p - K2), jnp.bfloat16)
    a2 = jnp.concatenate([off_feat, bbox_cols.astype(jnp.bfloat16), pad_cols],
                         axis=-1)
    Np2 = 128
    w2 = jnp.zeros((K2p, Np2), jnp.float32)
    w2 = w2.at[:C, :18].set(params["fcos_off_w"].reshape(C, 18))
    w2 = w2.at[C:C + 36, 18:19].set(bn_scale * params["result_w"].reshape(36, 1))
    b2 = jnp.zeros((Np2,), jnp.float32)
    b2 = b2.at[:18].set(params["fcos_off_b"])
    b2 = b2.at[18].set(bn_scale * params["result_b"][0])
    head2 = flat_gemm(a2, w2.astype(jnp.bfloat16), b2.reshape(1, Np2), tm=tm2)
    offset = head2[..., :18]                         # fcos_offset, f32
    centerness = pre_c + head2[..., 18:19]           # pre_c + BN(result conv)

    # ---- classification tower: DeformConv, then [conv + GN + ReLU] x N ----
    offset_nhwc = offset.reshape(B, H, W, 18)
    dcols = deform_im2col_3x3(x_nhwc, offset_nhwc)   # [B, HW, 9C] bf16
    cls_raw = flat_gemm(dcols,
                        params["dcn_w"].reshape(9 * C, C).astype(jnp.bfloat16),
                        jnp.zeros((1, C), jnp.float32), tm=tm2,
                        out_dtype=jnp.bfloat16)
    cls_xp, cls_sc, cls_sh = tower(cls_raw, "cls")

    NpC = _round_up(num_classes, 128)
    wc = jnp.zeros((3, 3, C, NpC), jnp.float32).at[..., :num_classes].set(
        params["fcos_cls_w"])
    bc = jnp.zeros((NpC,), jnp.float32).at[:num_classes].set(params["fcos_cls_b"])
    cls_out = conv3x3(cls_xp, wc.reshape(9 * C, NpC).astype(jnp.bfloat16),
                      H=H, W=W, in_scale=cls_sc, in_shift=cls_sh,
                      bias=bc.reshape(1, NpC), out_dtype=jnp.bfloat16)
    cls_score = cls_out[..., :num_classes]

    def to_nchw(t, c):
        return jnp.transpose(t.reshape(B, H, W, c), (0, 3, 1, 2)).astype(jnp.float32)

    return (to_nchw(cls_score, num_classes), to_nchw(bbox, 4),
            to_nchw(centerness, 1), to_nchw(offset, 18))


# ----------------------------------------------------------------------------
# deterministic synthetic parameters (mirrors __init__/_init_layers/init_weights)
# ----------------------------------------------------------------------------
def make_params(key, num_classes, in_channels, feat_channels, stacked_convs):
    keys = iter(jax.random.split(key, 64))
    params = {}

    def nrm(shape, std=0.01):
        return std * jax.random.normal(next(keys), shape, jnp.float32)

    for i in range(stacked_convs):
        chn = in_channels if i == 0 else feat_channels
        params[f"reg_conv_w{i}"] = nrm((3, 3, chn, feat_channels))
        params[f"cls_conv_w{i}"] = nrm((3, 3, chn, feat_channels))
        params[f"reg_gn_g{i}"] = jnp.ones((feat_channels,), jnp.float32)
        params[f"reg_gn_b{i}"] = jnp.zeros((feat_channels,), jnp.float32)
        params[f"cls_gn_g{i}"] = jnp.ones((feat_channels,), jnp.float32)
        params[f"cls_gn_b{i}"] = jnp.zeros((feat_channels,), jnp.float32)

    params["fcos_cls_w"] = nrm((3, 3, feat_channels, num_classes))
    bias_cls = -math.log((1.0 - 0.01) / 0.01)          # bias_init_with_prob(0.01)
    params["fcos_cls_b"] = jnp.full((num_classes,), bias_cls, jnp.float32)

    params["fcos_reg_w"] = nrm((3, 3, feat_channels, 4))
    params["fcos_reg_b"] = jnp.zeros((4,), jnp.float32)
    params["ctr_w"] = nrm((3, 3, feat_channels, 1))
    params["ctr_b"] = jnp.zeros((1,), jnp.float32)
    params["off_conv_w"] = nrm((3, 3, feat_channels, feat_channels))
    params["off_conv_b"] = jnp.zeros((feat_channels,), jnp.float32)
    params["fcos_off_w"] = nrm((1, 1, feat_channels, 18))
    params["fcos_off_b"] = jnp.zeros((18,), jnp.float32)
    params["dcn_w"] = nrm((3, 3, feat_channels, feat_channels))      # DeformConv, bias=False
    params["result_w"] = nrm((3, 3, 4, 1))
    params["result_b"] = jnp.zeros((1,), jnp.float32)
    params["scale"] = jnp.ones((1,), jnp.float32)                    # Scale(1.0)
    return params


# ----------------------------------------------------------------------------
if __name__ == "__main__":
    # NOTE: the original module implicitly requires in_channels == feat_channels
    # (DeformConv / cls_convs channel plumbing), so we use 32 for both.
    B, H, W = 2, 16, 16
    num_classes = 4
    in_channels = feat_channels = 32
    stacked_convs = 4
    groups = 32                         # default norm_cfg GN num_groups

    key = jax.random.PRNGKey(0)
    kp, kx = jax.random.split(key)
    params = make_params(kp, num_classes, in_channels, feat_channels, stacked_convs)
    x = jax.random.normal(kx, (B, in_channels, H, W), jnp.float32)   # NCHW input

    fwd = jax.jit(functools.partial(
        forward_single,
        num_classes=num_classes,
        feat_channels=feat_channels,
        stacked_convs=stacked_convs,
        groups=groups,
    ))

    cls_score, bbox_pred, centerness, fcos_offset = jax.block_until_ready(fwd(params, x))

    assert cls_score.shape == (B, num_classes, H, W)
    assert bbox_pred.shape == (B, 4, H, W)
    assert centerness.shape == (B, 1, H, W)
    assert fcos_offset.shape == (B, 18, H, W)
    assert bool(jnp.all(jnp.isfinite(cls_score)))
    assert bool(jnp.all(jnp.isfinite(centerness)))
    assert bool(jnp.all(jnp.isfinite(fcos_offset)))
    assert bool(jnp.all(bbox_pred > 0.0))            # exp output
    print("KERNEL_OK")
</pallas_src>

<mosaic_0001>
module attributes {stable_mosaic.version = 11 : i64} {
  func.func @kernel(%arg0: i32, %arg1: i32, %arg2: memref<1x18x18x32xbf16, #tpu.memory_space<vmem>>, %arg3: memref<288x32xbf16, #tpu.memory_space<vmem>>, %arg4: memref<1x256x32xbf16, #tpu.memory_space<vmem>>, %arg5: memref<1x1x2x32xf32, #tpu.memory_space<vmem>>) attributes {dimension_semantics = [#tpu.dimension_semantics<parallel>, #tpu.dimension_semantics<parallel>], iteration_bounds = array<i64: 2, 1>, scalar_prefetch = 0 : i64, scratch_operands = 0 : i64, tpu.core_type = #tpu.core_type<tc>, window_params = [{transform_indices = @transform_0, window_bounds = array<i64: 1, 18, 18, 32>}, {pipeline_mode = #tpu.pipeline_mode<synchronous>, transform_indices = @transform_1, window_bounds = array<i64: 288, 32>}, {transform_indices = @transform_2, window_bounds = array<i64: 1, 256, 32>}, {transform_indices = @transform_3, window_bounds = array<i64: 1, 1, 2, 32>}]} {
    %c16_i32 = arith.constant 16 : i32
    %0 = arith.muli %arg1, %c16_i32 : i32
    %c0 = arith.constant 0 : index
    %1 = arith.index_cast %0 : i32 to index
    %c0_0 = arith.constant 0 : index
    %c0_1 = arith.constant 0 : index
    %2 = vector.load %arg2[%c0, %1, %c0_0, %c0_1] : memref<1x18x18x32xbf16, #tpu.memory_space<vmem>>, vector<1x18x18x32xbf16>
    %3 = vector.shape_cast %2 : vector<1x18x18x32xbf16> to vector<18x18x32xbf16>
    %4 = vector.extract_strided_slice %3 {offsets = [0, 0, 0], sizes = [16, 16, 32], strides = [1, 1, 1]} : vector<18x18x32xbf16> to vector<16x16x32xbf16>
    %5 = vector.extract_strided_slice %3 {offsets = [0, 1, 0], sizes = [16, 16, 32], strides = [1, 1, 1]} : vector<18x18x32xbf16> to vector<16x16x32xbf16>
    %6 = vector.extract_strided_slice %3 {offsets = [0, 2, 0], sizes = [16, 16, 32], strides = [1, 1, 1]} : vector<18x18x32xbf16> to vector<16x16x32xbf16>
    %7 = vector.extract_strided_slice %3 {offsets = [1, 0, 0], sizes = [16, 16, 32], strides = [1, 1, 1]} : vector<18x18x32xbf16> to vector<16x16x32xbf16>
    %8 = vector.extract_strided_slice %3 {offsets = [1, 1, 0], sizes = [16, 16, 32], strides = [1, 1, 1]} : vector<18x18x32xbf16> to vector<16x16x32xbf16>
    %9 = vector.extract_strided_slice %3 {offsets = [1, 2, 0], sizes = [16, 16, 32], strides = [1, 1, 1]} : vector<18x18x32xbf16> to vector<16x16x32xbf16>
    %10 = vector.extract_strided_slice %3 {offsets = [2, 0, 0], sizes = [16, 16, 32], strides = [1, 1, 1]} : vector<18x18x32xbf16> to vector<16x16x32xbf16>
    %11 = vector.extract_strided_slice %3 {offsets = [2, 1, 0], sizes = [16, 16, 32], strides = [1, 1, 1]} : vector<18x18x32xbf16> to vector<16x16x32xbf16>
    %12 = vector.extract_strided_slice %3 {offsets = [2, 2, 0], sizes = [16, 16, 32], strides = [1, 1, 1]} : vector<18x18x32xbf16> to vector<16x16x32xbf16>
    %13 = tpu.concatenate %4, %5, %6, %7, %8, %9, %10, %11, %12 in 2 : vector<16x16x32xbf16>, vector<16x16x32xbf16>, vector<16x16x32xbf16>, vector<16x16x32xbf16>, vector<16x16x32xbf16>, vector<16x16x32xbf16>, vector<16x16x32xbf16>, vector<16x16x32xbf16>, vector<16x16x32xbf16> -> vector<16x16x288xbf16>
    %14 = vector.shape_cast %13 : vector<16x16x288xbf16> to vector<256x288xbf16>
    %c0_2 = arith.constant 0 : index
    %c0_3 = arith.constant 0 : index
    %15 = vector.load %arg3[%c0_2, %c0_3] : memref<288x32xbf16, #tpu.memory_space<vmem>>, vector<288x32xbf16>
    %cst = arith.constant dense<0.000000e+00> : vector<256x32xf32>
    %16 = tpu.matmul %14, %15, %cst {dimension_numbers = #tpu.dot_dimension_numbers<[1], [0], [0], [1], [0, 0, 1, 1], [], []>} : vector<256x288xbf16>, vector<288x32xbf16>, vector<256x32xf32> -> vector<256x32xf32>
    %17 = arith.truncf %16 : vector<256x32xf32> to vector<256x32xbf16>
    %c0_4 = arith.constant 0 : index
    %c0_5 = arith.constant 0 : index
    %c0_6 = arith.constant 0 : index
    %18 = vector.load %arg4[%c0_4, %c0_5, %c0_6] : memref<1x256x32xbf16, #tpu.memory_space<vmem>>, vector<1x256x32xbf16>
    %19 = vector.shape_cast %18 : vector<1x256x32xbf16> to vector<256x32xbf16>
    %20 = vector.shape_cast %17 : vector<256x32xbf16> to vector<1x256x32xbf16>
    tpu.vector_store %arg4[%c0_4, %c0_5, %c0_6], %20 {strides = array<i32>} : memref<1x256x32xbf16, #tpu.memory_space<vmem>>, vector<1x256x32xbf16>,
    %21 = arith.extf %17 : vector<256x32xbf16> to vector<256x32xf32>
    %cst_7 = arith.constant dense<0.000000e+00> : vector<32xf32>
    %22 = vector.multi_reduction <add>, %21, %cst_7 [0] : vector<256x32xf32> to vector<32xf32>
    %23 = vector.shape_cast %22 : vector<32xf32> to vector<1x32xf32>
    %24 = arith.mulf %21, %21 : vector<256x32xf32>
    %cst_8 = arith.constant dense<0.000000e+00> : vector<32xf32>
    %25 = vector.multi_reduction <add>, %24, %cst_8 [0] : vector<256x32xf32> to vector<32xf32>
    %26 = vector.shape_cast %25 : vector<32xf32> to vector<1x32xf32>
    %27 = tpu.concatenate %23, %26 in 0 : vector<1x32xf32>, vector<1x32xf32> -> vector<2x32xf32>
    %c0_9 = arith.constant 0 : index
    %c0_10 = arith.constant 0 : index
    %c0_11 = arith.constant 0 : index
    %c0_12 = arith.constant 0 : index
    %28 = vector.load %arg5[%c0_9, %c0_10, %c0_11, %c0_12] : memref<1x1x2x32xf32, #tpu.memory_space<vmem>>, vector<1x1x2x32xf32>
    %29 = vector.shape_cast %28 : vector<1x1x2x32xf32> to vector<2x32xf32>
    %30 = vector.shape_cast %27 : vector<2x32xf32> to vector<1x1x2x32xf32>
    tpu.vector_store %arg5[%c0_9, %c0_10, %c0_11, %c0_12], %30 {strides = array<i32>} : memref<1x1x2x32xf32, #tpu.memory_space<vmem>>, vector<1x1x2x32xf32>,
    return
  }
  func.func @transform_0(%arg0: i32, %arg1: i32) -> (i32, i32, i32, i32) {
    %c0_i32 = arith.constant 0 : i32
    %c0_i32_0 = arith.constant 0 : i32
    %c0_i32_1 = arith.constant 0 : i32
    %c0_i32_2 = arith.constant 0 : i32
    return %arg0, %c0_i32, %c0_i32_0, %c0_i32_1 : i32, i32, i32, i32
  }
  func.func @transform_1(%arg0: i32, %arg1: i32) -> (i32, i32) {
    %c0_i32 = arith.constant 0 : i32
    %c0_i32_0 = arith.constant 0 : i32
    %c0_i32_1 = arith.constant 0 : i32
    return %c0_i32, %c0_i32_0 : i32, i32
  }
  func.func @transform_2(%arg0: i32, %arg1: i32) -> (i32, i32, i32) {
    %c0_i32 = arith.constant 0 : i32
    %c0_i32_0 = arith.constant 0 : i32
    return %arg0, %arg1, %c0_i32 : i32, i32, i32
  }
  func.func @transform_3(%arg0: i32, %arg1: i32) -> (i32, i32, i32, i32) {
    %c0_i32 = arith.constant 0 : i32
    %c0_i32_0 = arith.constant 0 : i32
    %c0_i32_1 = arith.constant 0 : i32
    return %arg0, %arg1, %c0_i32, %c0_i32_0 : i32, i32, i32, i32
  }
}

module attributes {stable_mosaic.version = 11 : i64} {
  func.func @kernel(%arg0: i32, %arg1: i32, %arg2: memref<1x18x18x32xbf16, #tpu.memory_space<vmem>>, %arg3: memref<288x32xbf16, #tpu.memory_space<vmem>>, %arg4: memref<1x1x32xf32, #tpu.memory_space<vmem>>, %arg5: memref<1x1x32xf32, #tpu.memory_space<vmem>>, %arg6: memref<1x256x32xbf16, #tpu.memory_space<vmem>>, %arg7: memref<1x1x2x32xf32, #tpu.memory_space<vmem>>) attributes {dimension_semantics = [#tpu.dimension_semantics<parallel>, #tpu.dimension_semantics<parallel>], iteration_bounds = array<i64: 2, 1>, scalar_prefetch = 0 : i64, scratch_operands = 0 : i64, tpu.core_type = #tpu.core_type<tc>, window_params = [{transform_indices = @transform_0, window_bounds = array<i64: 1, 18, 18, 32>}, {pipeline_mode = #tpu.pipeline_mode<synchronous>, transform_indices = @transform_1, window_bounds = array<i64: 288, 32>}, {transform_indices = @transform_2, window_bounds = array<i64: 1, 1, 32>}, {transform_indices = @transform_3, window_bounds = array<i64: 1, 1, 32>}, {transform_indices = @transform_4, window_bounds = array<i64: 1, 256, 32>}, {transform_indices = @transform_5, window_bounds = array<i64: 1, 1, 2, 32>}]} {
    %c16_i32 = arith.constant 16 : i32
    %0 = arith.muli %arg1, %c16_i32 : i32
    %c0 = arith.constant 0 : index
    %1 = arith.index_cast %0 : i32 to index
    %c0_0 = arith.constant 0 : index
    %c0_1 = arith.constant 0 : index
    %2 = vector.load %arg2[%c0, %1, %c0_0, %c0_1] : memref<1x18x18x32xbf16, #tpu.memory_space<vmem>>, vector<1x18x18x32xbf16>
    %3 = vector.shape_cast %2 : vector<1x18x18x32xbf16> to vector<18x18x32xbf16>
    %4 = arith.extf %3 : vector<18x18x32xbf16> to vector<18x18x32xf32>
    %c0_2 = arith.constant 0 : index
    %c0_3 = arith.constant 0 : index
    %c0_4 = arith.constant 0 : index
    %5 = vector.load %arg4[%c0_2, %c0_3, %c0_4] : memref<1x1x32xf32, #tpu.memory_space<vmem>>, vector<1x1x32xf32>
    %6 = vector.shape_cast %5 : vector<1x1x32xf32> to vector<1x32xf32>
    %7 = vector.shape_cast %6 : vector<1x32xf32> to vector<1x1x32xf32>
    %8 = vector.broadcast %7 : vector<1x1x32xf32> to vector<18x18x32xf32>
    %9 = arith.mulf %4, %8 : vector<18x18x32xf32>
    %c0_5 = arith.constant 0 : index
    %c0_6 = arith.constant 0 : index
    %c0_7 = arith.constant 0 : index
    %10 = vector.load %arg5[%c0_5, %c0_6, %c0_7] : memref<1x1x32xf32, #tpu.memory_space<vmem>>, vector<1x1x32xf32>
    %11 = vector.shape_cast %10 : vector<1x1x32xf32> to vector<1x32xf32>
    %12 = vector.shape_cast %11 : vector<1x32xf32> to vector<1x1x32xf32>
    %13 = vector.broadcast %12 : vector<1x1x32xf32> to vector<18x18x32xf32>
    %14 = arith.addf %9, %13 : vector<18x18x32xf32>
    %cst = arith.constant 0.000000e+00 : f32
    %15 = vector.broadcast %cst : f32 to vector<18x18x32xf32>
    %16 = arith.maximumf %14, %15 : vector<18x18x32xf32>
    %cst_8 = arith.constant 0.000000e+00 : f32
    %17 = vector.broadcast %cst_8 : f32 to vector<18x1x32xf32>
    %18 = vector.extract_strided_slice %16 {offsets = [0, 1, 0], sizes = [18, 16, 32], strides = [1, 1, 1]} : vector<18x18x32xf32> to vector<18x16x32xf32>
    %19 = tpu.concatenate %17, %18, %17 in 1 : vector<18x1x32xf32>, vector<18x16x32xf32>, vector<18x1x32xf32> -> vector<18x18x32xf32>
    %c0_i32 = arith.constant 0 : i32
    %20 = arith.cmpi sgt, %arg1, %c0_i32 : i32
    %21 = arith.extui %20 : i1 to i32
    %22 = arith.sitofp %21 : i32 to f32
    %c0_i32_9 = arith.constant 0 : i32
    %23 = arith.cmpi slt, %arg1, %c0_i32_9 : i32
    %24 = arith.extui %23 : i1 to i32
    %25 = arith.sitofp %24 : i32 to f32
    %26 = vector.extract_strided_slice %19 {offsets = [0, 0, 0], sizes = [1, 18, 32], strides = [1, 1, 1]} : vector<18x18x32xf32> to vector<1x18x32xf32>
    %27 = vector.broadcast %22 : f32 to vector<1x18x32xf32>
    %28 = arith.mulf %26, %27 : vector<1x18x32xf32>
    %29 = vector.extract_strided_slice %19 {offsets = [1, 0, 0], sizes = [16, 18, 32], strides = [1, 1, 1]} : vector<18x18x32xf32> to vector<16x18x32xf32>
    %30 = vector.extract_strided_slice %19 {offsets = [17, 0, 0], sizes = [1, 18, 32], strides = [1, 1, 1]} : vector<18x18x32xf32> to vector<1x18x32xf32>
    %31 = vector.broadcast %25 : f32 to vector<1x18x32xf32>
    %32 = arith.mulf %30, %31 : vector<1x18x32xf32>
    %33 = tpu.concatenate %28, %29, %32 in 0 : vector<1x18x32xf32>, vector<16x18x32xf32>, vector<1x18x32xf32> -> vector<18x18x32xf32>
    %34 = arith.truncf %33 : vector<18x18x32xf32> to vector<18x18x32xbf16>
    %35 = vector.extract_strided_slice %34 {offsets = [0, 0, 0], sizes = [16, 16, 32], strides = [1, 1, 1]} : vector<18x18x32xbf16> to vector<16x16x32xbf16>
    %36 = vector.extract_strided_slice %34 {offsets = [0, 1, 0], sizes = [16, 16, 32], strides = [1, 1, 1]} : vector<18x18x32xbf16> to vector<16x16x32xbf16>
    %37 = vector.extract_strided_slice %34 {offsets = [0, 2, 0], sizes = [16, 16, 32], strides = [1, 1, 1]} : vector<18x18x32xbf16> to vector<16x16x32xbf16>
    %38 = vector.extract_strided_slice %34 {offsets = [1, 0, 0], sizes = [16, 16, 32], strides = [1, 1, 1]} : vector<18x18x32xbf16> to vector<16x16x32xbf16>
    %39 = vector.extract_strided_slice %34 {offsets = [1, 1, 0], sizes = [16, 16, 32], strides = [1, 1, 1]} : vector<18x18x32xbf16> to vector<16x16x32xbf16>
    %40 = vector.extract_strided_slice %34 {offsets = [1, 2, 0], sizes = [16, 16, 32], strides = [1, 1, 1]} : vector<18x18x32xbf16> to vector<16x16x32xbf16>
    %41 = vector.extract_strided_slice %34 {offsets = [2, 0, 0], sizes = [16, 16, 32], strides = [1, 1, 1]} : vector<18x18x32xbf16> to vector<16x16x32xbf16>
    %42 = vector.extract_strided_slice %34 {offsets = [2, 1, 0], sizes = [16, 16, 32], strides = [1, 1, 1]} : vector<18x18x32xbf16> to vector<16x16x32xbf16>
    %43 = vector.extract_strided_slice %34 {offsets = [2, 2, 0], sizes = [16, 16, 32], strides = [1, 1, 1]} : vector<18x18x32xbf16> to vector<16x16x32xbf16>
    %44 = tpu.concatenate %35, %36, %37, %38, %39, %40, %41, %42, %43 in 2 : vector<16x16x32xbf16>, vector<16x16x32xbf16>, vector<16x16x32xbf16>, vector<16x16x32xbf16>, vector<16x16x32xbf16>, vector<16x16x32xbf16>, vector<16x16x32xbf16>, vector<16x16x32xbf16>, vector<16x16x32xbf16> -> vector<16x16x288xbf16>
    %45 = vector.shape_cast %44 : vector<16x16x288xbf16> to vector<256x288xbf16>
    %c0_10 = arith.constant 0 : index
    %c0_11 = arith.constant 0 : index
    %46 = vector.load %arg3[%c0_10, %c0_11] : memref<288x32xbf16, #tpu.memory_space<vmem>>, vector<288x32xbf16>
    %cst_12 = arith.constant dense<0.000000e+00> : vector<256x32xf32>
    %47 = tpu.matmul %45, %46, %cst_12 {dimension_numbers = #tpu.dot_dimension_numbers<[1], [0], [0], [1], [0, 0, 1, 1], [], []>} : vector<256x288xbf16>, vector<288x32xbf16>, vector<256x32xf32> -> vector<256x32xf32>
    %48 = arith.truncf %47 : vector<256x32xf32> to vector<256x32xbf16>
    %c0_13 = arith.constant 0 : index
    %c0_14 = arith.constant 0 : index
    %c0_15 = arith.constant 0 : index
    %49 = vector.load %arg6[%c0_13, %c0_14, %c0_15] : memref<1x256x32xbf16, #tpu.memory_space<vmem>>, vector<1x256x32xbf16>
    %50 = vector.shape_cast %49 : vector<1x256x32xbf16> to vector<256x32xbf16>
    %51 = vector.shape_cast %48 : vector<256x32xbf16> to vector<1x256x32xbf16>
    tpu.vector_store %arg6[%c0_13, %c0_14, %c0_15], %51 {strides = array<i32>} : memref<1x256x32xbf16, #tpu.memory_space<vmem>>, vector<1x256x32xbf16>,
    %52 = arith.extf %48 : vector<256x32xbf16> to vector<256x32xf32>
    %cst_16 = arith.constant dense<0.000000e+00> : vector<32xf32>
    %53 = vector.multi_reduction <add>, %52, %cst_16 [0] : vector<256x32xf32> to vector<32xf32>
    %54 = vector.shape_cast %53 : vector<32xf32> to vector<1x32xf32>
    %55 = arith.mulf %52, %52 : vector<256x32xf32>
    %cst_17 = arith.constant dense<0.000000e+00> : vector<32xf32>
    %56 = vector.multi_reduction <add>, %55, %cst_17 [0] : vector<256x32xf32> to vector<32xf32>
    %57 = vector.shape_cast %56 : vector<32xf32> to vector<1x32xf32>
    %58 = tpu.concatenate %54, %57 in 0 : vector<1x32xf32>, vector<1x32xf32> -> vector<2x32xf32>
    %c0_18 = arith.constant 0 : index
    %c0_19 = arith.constant 0 : index
    %c0_20 = arith.constant 0 : index
    %c0_21 = arith.constant 0 : index
    %59 = vector.load %arg7[%c0_18, %c0_19, %c0_20, %c0_21] : memref<1x1x2x32xf32, #tpu.memory_space<vmem>>, vector<1x1x2x32xf32>
    %60 = vector.shape_cast %59 : vector<1x1x2x32xf32> to vector<2x32xf32>
    %61 = vector.shape_cast %58 : vector<2x32xf32> to vector<1x1x2x32xf32>
    tpu.vector_store %arg7[%c0_18, %c0_19, %c0_20, %c0_21], %61 {strides = array<i32>} : memref<1x1x2x32xf32, #tpu.memory_space<vmem>>, vector<1x1x2x32xf32>,
    return
  }
  func.func @transform_0(%arg0: i32, %arg1: i32) -> (i32, i32, i32, i32) {
    %c0_i32 = arith.constant 0 : i32
    %c0_i32_0 = arith.constant 0 : i32
    %c0_i32_1 = arith.constant 0 : i32
    %c0_i32_2 = arith.constant 0 : i32
    return %arg0, %c0_i32, %c0_i32_0, %c0_i32_1 : i32, i32, i32, i32
  }
  func.func @transform_1(%arg0: i32, %arg1: i32) -> (i32, i32) {
    %c0_i32 = arith.constant 0 : i32
    %c0_i32_0 = arith.constant 0 : i32
    %c0_i32_1 = arith.constant 0 : i32
    return %c0_i32, %c0_i32_0 : i32, i32
  }
  func.func @transform_2(%arg0: i32, %arg1: i32) -> (i32, i32, i32) {
    %c0_i32 = arith.constant 0 : i32
    %c0_i32_0 = arith.constant 0 : i32
    %c0_i32_1 = arith.constant 0 : i32
    return %arg0, %c0_i32, %c0_i32_0 : i32, i32, i32
  }
  func.func @transform_3(%arg0: i32, %arg1: i32) -> (i32, i32, i32) {
    %c0_i32 = arith.constant 0 : i32
    %c0_i32_0 = arith.constant 0 : i32
    %c0_i32_1 = arith.constant 0 : i32
    return %arg0, %c0_i32, %c0_i32_0 : i32, i32, i32
  }
  func.func @transform_4(%arg0: i32, %arg1: i32) -> (i32, i32, i32) {
    %c0_i32 = arith.constant 0 : i32
    %c0_i32_0 = arith.constant 0 : i32
    return %arg0, %arg1, %c0_i32 : i32, i32, i32
  }
  func.func @transform_5(%arg0: i32, %arg1: i32) -> (i32, i32, i32, i32) {
    %c0_i32 = arith.constant 0 : i32
    %c0_i32_0 = arith.constant 0 : i32
    %c0_i32_1 = arith.constant 0 : i32
    return %arg0, %arg1, %c0_i32, %c0_i32_0 : i32, i32, i32, i32
  }
}

module attributes {stable_mosaic.version = 11 : i64} {
  func.func @kernel(%arg0: i32, %arg1: i32, %arg2: memref<1x18x18x32xbf16, #tpu.memory_space<vmem>>, %arg3: memref<288x128xbf16, #tpu.memory_space<vmem>>, %arg4: memref<1x1x32xf32, #tpu.memory_space<vmem>>, %arg5: memref<1x1x32xf32, #tpu.memory_space<vmem>>, %arg6: memref<1x128xf32, #tpu.memory_space<vmem>>, %arg7: memref<1x256x128xbf16, #tpu.memory_space<vmem>>) attributes {dimension_semantics = [#tpu.dimension_semantics<parallel>, #tpu.dimension_semantics<parallel>], iteration_bounds = array<i64: 2, 1>, scalar_prefetch = 0 : i64, scratch_operands = 0 : i64, tpu.core_type = #tpu.core_type<tc>, window_params = [{transform_indices = @transform_0, window_bounds = array<i64: 1, 18, 18, 32>}, {pipeline_mode = #tpu.pipeline_mode<synchronous>, transform_indices = @transform_1, window_bounds = array<i64: 288, 128>}, {transform_indices = @transform_2, window_bounds = array<i64: 1, 1, 32>}, {transform_indices = @transform_3, window_bounds = array<i64: 1, 1, 32>}, {pipeline_mode = #tpu.pipeline_mode<synchronous>, transform_indices = @transform_4, window_bounds = array<i64: 1, 128>}, {transform_indices = @transform_5, window_bounds = array<i64: 1, 256, 128>}]} {
    %c16_i32 = arith.constant 16 : i32
    %0 = arith.muli %arg1, %c16_i32 : i32
    %c0 = arith.constant 0 : index
    %1 = arith.index_cast %0 : i32 to index
    %c0_0 = arith.constant 0 : index
    %c0_1 = arith.constant 0 : index
    %2 = vector.load %arg2[%c0, %1, %c0_0, %c0_1] : memref<1x18x18x32xbf16, #tpu.memory_space<vmem>>, vector<1x18x18x32xbf16>
    %3 = vector.shape_cast %2 : vector<1x18x18x32xbf16> to vector<18x18x32xbf16>
    %4 = arith.extf %3 : vector<18x18x32xbf16> to vector<18x18x32xf32>
    %c0_2 = arith.constant 0 : index
    %c0_3 = arith.constant 0 : index
    %c0_4 = arith.constant 0 : index
    %5 = vector.load %arg4[%c0_2, %c0_3, %c0_4] : memref<1x1x32xf32, #tpu.memory_space<vmem>>, vector<1x1x32xf32>
    %6 = vector.shape_cast %5 : vector<1x1x32xf32> to vector<1x32xf32>
    %7 = vector.shape_cast %6 : vector<1x32xf32> to vector<1x1x32xf32>
    %8 = vector.broadcast %7 : vector<1x1x32xf32> to vector<18x18x32xf32>
    %9 = arith.mulf %4, %8 : vector<18x18x32xf32>
    %c0_5 = arith.constant 0 : index
    %c0_6 = arith.constant 0 : index
    %c0_7 = arith.constant 0 : index
    %10 = vector.load %arg5[%c0_5, %c0_6, %c0_7] : memref<1x1x32xf32, #tpu.memory_space<vmem>>, vector<1x1x32xf32>
    %11 = vector.shape_cast %10 : vector<1x1x32xf32> to vector<1x32xf32>
    %12 = vector.shape_cast %11 : vector<1x32xf32> to vector<1x1x32xf32>
    %13 = vector.broadcast %12 : vector<1x1x32xf32> to vector<18x18x32xf32>
    %14 = arith.addf %9, %13 : vector<18x18x32xf32>
    %cst = arith.constant 0.000000e+00 : f32
    %15 = vector.broadcast %cst : f32 to vector<18x18x32xf32>
    %16 = arith.maximumf %14, %15 : vector<18x18x32xf32>
    %cst_8 = arith.constant 0.000000e+00 : f32
    %17 = vector.broadcast %cst_8 : f32 to vector<18x1x32xf32>
    %18 = vector.extract_strided_slice %16 {offsets = [0, 1, 0], sizes = [18, 16, 32], strides = [1, 1, 1]} : vector<18x18x32xf32> to vector<18x16x32xf32>
    %19 = tpu.concatenate %17, %18, %17 in 1 : vector<18x1x32xf32>, vector<18x16x32xf32>, vector<18x1x32xf32> -> vector<18x18x32xf32>
    %c0_i32 = arith.constant 0 : i32
    %20 = arith.cmpi sgt, %arg1, %c0_i32 : i32
    %21 = arith.extui %20 : i1 to i32
    %22 = arith.sitofp %21 : i32 to f32
    %c0_i32_9 = arith.constant 0 : i32
    %23 = arith.cmpi slt, %arg1, %c0_i32_9 : i32
    %24 = arith.extui %23 : i1 to i32
    %25 = arith.sitofp %24 : i32 to f32
    %26 = vector.extract_strided_slice %19 {offsets = [0, 0, 0], sizes = [1, 18, 32], strides = [1, 1, 1]} : vector<18x18x32xf32> to vector<1x18x32xf32>
    %27 = vector.broadcast %22 : f32 to vector<1x18x32xf32>
    %28 = arith.mulf %26, %27 : vector<1x18x32xf32>
    %29 = vector.extract_strided_slice %19 {offsets = [1, 0, 0], sizes = [16, 18, 32], strides = [1, 1, 1]} : vector<18x18x32xf32> to vector<16x18x32xf32>
    %30 = vector.extract_strided_slice %19 {offsets = [17, 0, 0], sizes = [1, 18, 32], strides = [1, 1, 1]} : vector<18x18x32xf32> to vector<1x18x32xf32>
    %31 = vector.broadcast %25 : f32 to vector<1x18x32xf32>
    %32 = arith.mulf %30, %31 : vector<1x18x32xf32>
    %33 = tpu.concatenate %28, %29, %32 in 0 : vector<1x18x32xf32>, vector<16x18x32xf32>, vector<1x18x32xf32> -> vector<18x18x32xf32>
    %34 = arith.truncf %33 : vector<18x18x32xf32> to vector<18x18x32xbf16>
    %35 = vector.extract_strided_slice %34 {offsets = [0, 0, 0], sizes = [16, 16, 32], strides = [1, 1, 1]} : vector<18x18x32xbf16> to vector<16x16x32xbf16>
    %36 = vector.extract_strided_slice %34 {offsets = [0, 1, 0], sizes = [16, 16, 32], strides = [1, 1, 1]} : vector<18x18x32xbf16> to vector<16x16x32xbf16>
    %37 = vector.extract_strided_slice %34 {offsets = [0, 2, 0], sizes = [16, 16, 32], strides = [1, 1, 1]} : vector<18x18x32xbf16> to vector<16x16x32xbf16>
    %38 = vector.extract_strided_slice %34 {offsets = [1, 0, 0], sizes = [16, 16, 32], strides = [1, 1, 1]} : vector<18x18x32xbf16> to vector<16x16x32xbf16>
    %39 = vector.extract_strided_slice %34 {offsets = [1, 1, 0], sizes = [16, 16, 32], strides = [1, 1, 1]} : vector<18x18x32xbf16> to vector<16x16x32xbf16>
    %40 = vector.extract_strided_slice %34 {offsets = [1, 2, 0], sizes = [16, 16, 32], strides = [1, 1, 1]} : vector<18x18x32xbf16> to vector<16x16x32xbf16>
    %41 = vector.extract_strided_slice %34 {offsets = [2, 0, 0], sizes = [16, 16, 32], strides = [1, 1, 1]} : vector<18x18x32xbf16> to vector<16x16x32xbf16>
    %42 = vector.extract_strided_slice %34 {offsets = [2, 1, 0], sizes = [16, 16, 32], strides = [1, 1, 1]} : vector<18x18x32xbf16> to vector<16x16x32xbf16>
    %43 = vector.extract_strided_slice %34 {offsets = [2, 2, 0], sizes = [16, 16, 32], strides = [1, 1, 1]} : vector<18x18x32xbf16> to vector<16x16x32xbf16>
    %44 = tpu.concatenate %35, %36, %37, %38, %39, %40, %41, %42, %43 in 2 : vector<16x16x32xbf16>, vector<16x16x32xbf16>, vector<16x16x32xbf16>, vector<16x16x32xbf16>, vector<16x16x32xbf16>, vector<16x16x32xbf16>, vector<16x16x32xbf16>, vector<16x16x32xbf16>, vector<16x16x32xbf16> -> vector<16x16x288xbf16>
    %45 = vector.shape_cast %44 : vector<16x16x288xbf16> to vector<256x288xbf16>
    %c0_10 = arith.constant 0 : index
    %c0_11 = arith.constant 0 : index
    %46 = vector.load %arg3[%c0_10, %c0_11] : memref<288x128xbf16, #tpu.memory_space<vmem>>, vector<288x128xbf16>
    %cst_12 = arith.constant dense<0.000000e+00> : vector<256x128xf32>
    %47 = tpu.matmul %45, %46, %cst_12 {dimension_numbers = #tpu.dot_dimension_numbers<[1], [0], [0], [1], [0, 0, 1, 1], [], []>} : vector<256x288xbf16>, vector<288x128xbf16>, vector<256x128xf32> -> vector<256x128xf32>
    %c0_13 = arith.constant 0 : index
    %c0_14 = arith.constant 0 : index
    %48 = vector.load %arg6[%c0_13, %c0_14] : memref<1x128xf32, #tpu.memory_space<vmem>>, vector<1x128xf32>
    %49 = vector.broadcast %48 : vector<1x128xf32> to vector<256x128xf32>
    %50 = arith.addf %47, %49 : vector<256x128xf32>
    %51 = tpu.iota {dimensions = array<i32: 1>} : vector<256x128xi32>
    %c32_i32 = arith.constant 32 : i32
    %52 = vector.broadcast %c32_i32 : i32 to vector<256x128xi32>
    %53 = arith.cmpi slt, %51, %52 : vector<256x128xi32>
    %cst_15 = arith.constant 0.000000e+00 : f32
    %54 = vector.broadcast %cst_15 : f32 to vector<256x128xf32>
    %55 = arith.maximumf %50, %54 : vector<256x128xf32>
    %56 = arith.select %53, %55, %50 : vector<256x128xi1>, vector<256x128xf32>
    %c32_i32_16 = arith.constant 32 : i32
    %57 = vector.broadcast %c32_i32_16 : i32 to vector<256x128xi32>
    %58 = arith.cmpi sge, %51, %57 : vector<256x128xi32>
    %c36_i32 = arith.constant 36 : i32
    %59 = vector.broadcast %c36_i32 : i32 to vector<256x128xi32>
    %60 = arith.cmpi slt, %51, %59 : vector<256x128xi32>
    %61 = arith.andi %58, %60 : vector<256x128xi1>
    %cst_17 = arith.constant 0.000000e+00 : f32
    %62 = vector.broadcast %cst_17 : f32 to vector<256x128xf32>
    %63 = arith.select %61, %56, %62 : vector<256x128xi1>, vector<256x128xf32>
    %64 = math.exp %63 : vector<256x128xf32>
    %65 = arith.select %61, %64, %56 : vector<256x128xi1>, vector<256x128xf32>
    %66 = arith.truncf %65 : vector<256x128xf32> to vector<256x128xbf16>
    %c0_18 = arith.constant 0 : index
    %c0_19 = arith.constant 0 : index
    %c0_20 = arith.constant 0 : index
    %67 = vector.load %arg7[%c0_18, %c0_19, %c0_20] : memref<1x256x128xbf16, #tpu.memory_space<vmem>>, vector<1x256x128xbf16>
    %68 = vector.shape_cast %67 : vector<1x256x128xbf16> to vector<256x128xbf16>
    %69 = vector.shape_cast %66 : vector<256x128xbf16> to vector<1x256x128xbf16>
    tpu.vector_store %arg7[%c0_18, %c0_19, %c0_20], %69 {strides = array<i32>} : memref<1x256x128xbf16, #tpu.memory_space<vmem>>, vector<1x256x128xbf16>,
    return
  }
  func.func @transform_0(%arg0: i32, %arg1: i32) -> (i32, i32, i32, i32) {
    %c0_i32 = arith.constant 0 : i32
    %c0_i32_0 = arith.constant 0 : i32
    %c0_i32_1 = arith.constant 0 : i32
    %c0_i32_2 = arith.constant 0 : i32
    return %arg0, %c0_i32, %c0_i32_0, %c0_i32_1 : i32, i32, i32, i32
  }
  func.func @transform_1(%arg0: i32, %arg1: i32) -> (i32, i32) {
    %c0_i32 = arith.constant 0 : i32
    %c0_i32_0 = arith.constant 0 : i32
    %c0_i32_1 = arith.constant 0 : i32
    return %c0_i32, %c0_i32_0 : i32, i32
  }
  func.func @transform_2(%arg0: i32, %arg1: i32) -> (i32, i32, i32) {
    %c0_i32 = arith.constant 0 : i32
    %c0_i32_0 = arith.constant 0 : i32
    %c0_i32_1 = arith.constant 0 : i32
    return %arg0, %c0_i32, %c0_i32_0 : i32, i32, i32
  }
  func.func @transform_3(%arg0: i32, %arg1: i32) -> (i32, i32, i32) {
    %c0_i32 = arith.constant 0 : i32
    %c0_i32_0 = arith.constant 0 : i32
    %c0_i32_1 = arith.constant 0 : i32
    return %arg0, %c0_i32, %c0_i32_0 : i32, i32, i32
  }
  func.func @transform_4(%arg0: i32, %arg1: i32) -> (i32, i32) {
    %c0_i32 = arith.constant 0 : i32
    %c0_i32_0 = arith.constant 0 : i32
    %c0_i32_1 = arith.constant 0 : i32
    return %c0_i32, %c0_i32_0 : i32, i32
  }
  func.func @transform_5(%arg0: i32, %arg1: i32) -> (i32, i32, i32) {
    %c0_i32 = arith.constant 0 : i32
    %c0_i32_0 = arith.constant 0 : i32
    return %arg0, %arg1, %c0_i32 : i32, i32, i32
  }
}

module attributes {stable_mosaic.version = 11 : i64} {
  func.func @kernel(%arg0: i32, %arg1: i32, %arg2: memref<1x256x128xbf16, #tpu.memory_space<vmem>>, %arg3: memref<128x128xbf16, #tpu.memory_space<vmem>>, %arg4: memref<1x128xf32, #tpu.memory_space<vmem>>, %arg5: memref<1x256x128xf32, #tpu.memory_space<vmem>>) attributes {dimension_semantics = [#tpu.dimension_semantics<parallel>, #tpu.dimension_semantics<parallel>], iteration_bounds = array<i64: 2, 1>, scalar_prefetch = 0 : i64, scratch_operands = 0 : i64, tpu.core_type = #tpu.core_type<tc>, window_params = [{transform_indices = @transform_0, window_bounds = array<i64: 1, 256, 128>}, {pipeline_mode = #tpu.pipeline_mode<synchronous>, transform_indices = @transform_1, window_bounds = array<i64: 128, 128>}, {pipeline_mode = #tpu.pipeline_mode<synchronous>, transform_indices = @transform_2, window_bounds = array<i64: 1, 128>}, {transform_indices = @transform_3, window_bounds = array<i64: 1, 256, 128>}]} {
    %c0 = arith.constant 0 : index
    %c0_0 = arith.constant 0 : index
    %c0_1 = arith.constant 0 : index
    %0 = vector.load %arg2[%c0, %c0_0, %c0_1] : memref<1x256x128xbf16, #tpu.memory_space<vmem>>, vector<1x256x128xbf16>
    %1 = vector.shape_cast %0 : vector<1x256x128xbf16> to vector<256x128xbf16>
    %c0_2 = arith.constant 0 : index
    %c0_3 = arith.constant 0 : index
    %2 = vector.load %arg3[%c0_2, %c0_3] : memref<128x128xbf16, #tpu.memory_space<vmem>>, vector<128x128xbf16>
    %cst = arith.constant dense<0.000000e+00> : vector<256x128xf32>
    %3 = tpu.matmul %1, %2, %cst {dimension_numbers = #tpu.dot_dimension_numbers<[1], [0], [0], [1], [0, 0, 1, 1], [], []>} : vector<256x128xbf16>, vector<128x128xbf16>, vector<256x128xf32> -> vector<256x128xf32>
    %c0_4 = arith.constant 0 : index
    %c0_5 = arith.constant 0 : index
    %4 = vector.load %arg4[%c0_4, %c0_5] : memref<1x128xf32, #tpu.memory_space<vmem>>, vector<1x128xf32>
    %5 = vector.broadcast %4 : vector<1x128xf32> to vector<256x128xf32>
    %6 = arith.addf %3, %5 : vector<256x128xf32>
    %c0_6 = arith.constant 0 : index
    %c0_7 = arith.constant 0 : index
    %c0_8 = arith.constant 0 : index
    %7 = vector.load %arg5[%c0_6, %c0_7, %c0_8] : memref<1x256x128xf32, #tpu.memory_space<vmem>>, vector<1x256x128xf32>
    %8 = vector.shape_cast %7 : vector<1x256x128xf32> to vector<256x128xf32>
    %9 = vector.shape_cast %6 : vector<256x128xf32> to vector<1x256x128xf32>
    tpu.vector_store %arg5[%c0_6, %c0_7, %c0_8], %9 {strides = array<i32>} : memref<1x256x128xf32, #tpu.memory_space<vmem>>, vector<1x256x128xf32>,
    return
  }
  func.func @transform_0(%arg0: i32, %arg1: i32) -> (i32, i32, i32) {
    %c0_i32 = arith.constant 0 : i32
    %c0_i32_0 = arith.constant 0 : i32
    return %arg0, %arg1, %c0_i32 : i32, i32, i32
  }
  func.func @transform_1(%arg0: i32, %arg1: i32) -> (i32, i32) {
    %c0_i32 = arith.constant 0 : i32
    %c0_i32_0 = arith.constant 0 : i32
    %c0_i32_1 = arith.constant 0 : i32
    return %c0_i32, %c0_i32_0 : i32, i32
  }
  func.func @transform_2(%arg0: i32, %arg1: i32) -> (i32, i32) {
    %c0_i32 = arith.constant 0 : i32
    %c0_i32_0 = arith.constant 0 : i32
    %c0_i32_1 = arith.constant 0 : i32
    return %c0_i32, %c0_i32_0 : i32, i32
  }
  func.func @transform_3(%arg0: i32, %arg1: i32) -> (i32, i32, i32) {
    %c0_i32 = arith.constant 0 : i32
    %c0_i32_0 = arith.constant 0 : i32
    return %arg0, %arg1, %c0_i32 : i32, i32, i32
  }
}

module attributes {stable_mosaic.version = 11 : i64} {
  func.func @kernel(%arg0: i32, %arg1: i32, %arg2: memref<1x256x288xbf16, #tpu.memory_space<vmem>>, %arg3: memref<288x32xbf16, #tpu.memory_space<vmem>>, %arg4: memref<1x32xf32, #tpu.memory_space<vmem>>, %arg5: memref<1x256x32xbf16, #tpu.memory_space<vmem>>) attributes {dimension_semantics = [#tpu.dimension_semantics<parallel>, #tpu.dimension_semantics<parallel>], iteration_bounds = array<i64: 2, 1>, scalar_prefetch = 0 : i64, scratch_operands = 0 : i64, tpu.core_type = #tpu.core_type<tc>, window_params = [{transform_indices = @transform_0, window_bounds = array<i64: 1, 256, 288>}, {pipeline_mode = #tpu.pipeline_mode<synchronous>, transform_indices = @transform_1, window_bounds = array<i64: 288, 32>}, {pipeline_mode = #tpu.pipeline_mode<synchronous>, transform_indices = @transform_2, window_bounds = array<i64: 1, 32>}, {transform_indices = @transform_3, window_bounds = array<i64: 1, 256, 32>}]} {
    %c0 = arith.constant 0 : index
    %c0_0 = arith.constant 0 : index
    %c0_1 = arith.constant 0 : index
    %0 = vector.load %arg2[%c0, %c0_0, %c0_1] : memref<1x256x288xbf16, #tpu.memory_space<vmem>>, vector<1x256x288xbf16>
    %1 = vector.shape_cast %0 : vector<1x256x288xbf16> to vector<256x288xbf16>
    %c0_2 = arith.constant 0 : index
    %c0_3 = arith.constant 0 : index
    %2 = vector.load %arg3[%c0_2, %c0_3] : memref<288x32xbf16, #tpu.memory_space<vmem>>, vector<288x32xbf16>
    %cst = arith.constant dense<0.000000e+00> : vector<256x32xf32>
    %3 = tpu.matmul %1, %2, %cst {dimension_numbers = #tpu.dot_dimension_numbers<[1], [0], [0], [1], [0, 0, 1, 1], [], []>} : vector<256x288xbf16>, vector<288x32xbf16>, vector<256x32xf32> -> vector<256x32xf32>
    %c0_4 = arith.constant 0 : index
    %c0_5 = arith.constant 0 : index
    %4 = vector.load %arg4[%c0_4, %c0_5] : memref<1x32xf32, #tpu.memory_space<vmem>>, vector<1x32xf32>
    %5 = vector.broadcast %4 : vector<1x32xf32> to vector<256x32xf32>
    %6 = arith.addf %3, %5 : vector<256x32xf32>
    %7 = arith.truncf %6 : vector<256x32xf32> to vector<256x32xbf16>
    %c0_6 = arith.constant 0 : index
    %c0_7 = arith.constant 0 : index
    %c0_8 = arith.constant 0 : index
    %8 = vector.load %arg5[%c0_6, %c0_7, %c0_8] : memref<1x256x32xbf16, #tpu.memory_space<vmem>>, vector<1x256x32xbf16>
    %9 = vector.shape_cast %8 : vector<1x256x32xbf16> to vector<256x32xbf16>
    %10 = vector.shape_cast %7 : vector<256x32xbf16> to vector<1x256x32xbf16>
    tpu.vector_store %arg5[%c0_6, %c0_7, %c0_8], %10 {strides = array<i32>} : memref<1x256x32xbf16, #tpu.memory_space<vmem>>, vector<1x256x32xbf16>,
    return
  }
  func.func @transform_0(%arg0: i32, %arg1: i32) -> (i32, i32, i32) {
    %c0_i32 = arith.constant 0 : i32
    %c0_i32_0 = arith.constant 0 : i32
    return %arg0, %arg1, %c0_i32 : i32, i32, i32
  }
  func.func @transform_1(%arg0: i32, %arg1: i32) -> (i32, i32) {
    %c0_i32 = arith.constant 0 : i32
    %c0_i32_0 = arith.constant 0 : i32
    %c0_i32_1 = arith.constant 0 : i32
    return %c0_i32, %c0_i32_0 : i32, i32
  }
  func.func @transform_2(%arg0: i32, %arg1: i32) -> (i32, i32) {
    %c0_i32 = arith.constant 0 : i32
    %c0_i32_0 = arith.constant 0 : i32
    %c0_i32_1 = arith.constant 0 : i32
    return %c0_i32, %c0_i32_0 : i32, i32
  }
  func.func @transform_3(%arg0: i32, %arg1: i32) -> (i32, i32, i32) {
    %c0_i32 = arith.constant 0 : i32
    %c0_i32_0 = arith.constant 0 : i32
    return %arg0, %arg1, %c0_i32 : i32, i32, i32
  }
}

module attributes {stable_mosaic.version = 11 : i64} {
  func.func @kernel(%arg0: i32, %arg1: i32, %arg2: memref<1x18x18x32xbf16, #tpu.memory_space<vmem>>, %arg3: memref<288x128xbf16, #tpu.memory_space<vmem>>, %arg4: memref<1x1x32xf32, #tpu.memory_space<vmem>>, %arg5: memref<1x1x32xf32, #tpu.memory_space<vmem>>, %arg6: memref<1x128xf32, #tpu.memory_space<vmem>>, %arg7: memref<1x256x128xbf16, #tpu.memory_space<vmem>>) attributes {dimension_semantics = [#tpu.dimension_semantics<parallel>, #tpu.dimension_semantics<parallel>], iteration_bounds = array<i64: 2, 1>, scalar_prefetch = 0 : i64, scratch_operands = 0 : i64, tpu.core_type = #tpu.core_type<tc>, window_params = [{transform_indices = @transform_0, window_bounds = array<i64: 1, 18, 18, 32>}, {pipeline_mode = #tpu.pipeline_mode<synchronous>, transform_indices = @transform_1, window_bounds = array<i64: 288, 128>}, {transform_indices = @transform_2, window_bounds = array<i64: 1, 1, 32>}, {transform_indices = @transform_3, window_bounds = array<i64: 1, 1, 32>}, {pipeline_mode = #tpu.pipeline_mode<synchronous>, transform_indices = @transform_4, window_bounds = array<i64: 1, 128>}, {transform_indices = @transform_5, window_bounds = array<i64: 1, 256, 128>}]} {
    %c16_i32 = arith.constant 16 : i32
    %0 = arith.muli %arg1, %c16_i32 : i32
    %c0 = arith.constant 0 : index
    %1 = arith.index_cast %0 : i32 to index
    %c0_0 = arith.constant 0 : index
    %c0_1 = arith.constant 0 : index
    %2 = vector.load %arg2[%c0, %1, %c0_0, %c0_1] : memref<1x18x18x32xbf16, #tpu.memory_space<vmem>>, vector<1x18x18x32xbf16>
    %3 = vector.shape_cast %2 : vector<1x18x18x32xbf16> to vector<18x18x32xbf16>
    %4 = arith.extf %3 : vector<18x18x32xbf16> to vector<18x18x32xf32>
    %c0_2 = arith.constant 0 : index
    %c0_3 = arith.constant 0 : index
    %c0_4 = arith.constant 0 : index
    %5 = vector.load %arg4[%c0_2, %c0_3, %c0_4] : memref<1x1x32xf32, #tpu.memory_space<vmem>>, vector<1x1x32xf32>
    %6 = vector.shape_cast %5 : vector<1x1x32xf32> to vector<1x32xf32>
    %7 = vector.shape_cast %6 : vector<1x32xf32> to vector<1x1x32xf32>
    %8 = vector.broadcast %7 : vector<1x1x32xf32> to vector<18x18x32xf32>
    %9 = arith.mulf %4, %8 : vector<18x18x32xf32>
    %c0_5 = arith.constant 0 : index
    %c0_6 = arith.constant 0 : index
    %c0_7 = arith.constant 0 : index
    %10 = vector.load %arg5[%c0_5, %c0_6, %c0_7] : memref<1x1x32xf32, #tpu.memory_space<vmem>>, vector<1x1x32xf32>
    %11 = vector.shape_cast %10 : vector<1x1x32xf32> to vector<1x32xf32>
    %12 = vector.shape_cast %11 : vector<1x32xf32> to vector<1x1x32xf32>
    %13 = vector.broadcast %12 : vector<1x1x32xf32> to vector<18x18x32xf32>
    %14 = arith.addf %9, %13 : vector<18x18x32xf32>
    %cst = arith.constant 0.000000e+00 : f32
    %15 = vector.broadcast %cst : f32 to vector<18x18x32xf32>
    %16 = arith.maximumf %14, %15 : vector<18x18x32xf32>
    %cst_8 = arith.constant 0.000000e+00 : f32
    %17 = vector.broadcast %cst_8 : f32 to vector<18x1x32xf32>
    %18 = vector.extract_strided_slice %16 {offsets = [0, 1, 0], sizes = [18, 16, 32], strides = [1, 1, 1]} : vector<18x18x32xf32> to vector<18x16x32xf32>
    %19 = tpu.concatenate %17, %18, %17 in 1 : vector<18x1x32xf32>, vector<18x16x32xf32>, vector<18x1x32xf32> -> vector<18x18x32xf32>
    %c0_i32 = arith.constant 0 : i32
    %20 = arith.cmpi sgt, %arg1, %c0_i32 : i32
    %21 = arith.extui %20 : i1 to i32
    %22 = arith.sitofp %21 : i32 to f32
    %c0_i32_9 = arith.constant 0 : i32
    %23 = arith.cmpi slt, %arg1, %c0_i32_9 : i32
    %24 = arith.extui %23 : i1 to i32
    %25 = arith.sitofp %24 : i32 to f32
    %26 = vector.extract_strided_slice %19 {offsets = [0, 0, 0], sizes = [1, 18, 32], strides = [1, 1, 1]} : vector<18x18x32xf32> to vector<1x18x32xf32>
    %27 = vector.broadcast %22 : f32 to vector<1x18x32xf32>
    %28 = arith.mulf %26, %27 : vector<1x18x32xf32>
    %29 = vector.extract_strided_slice %19 {offsets = [1, 0, 0], sizes = [16, 18, 32], strides = [1, 1, 1]} : vector<18x18x32xf32> to vector<16x18x32xf32>
    %30 = vector.extract_strided_slice %19 {offsets = [17, 0, 0], sizes = [1, 18, 32], strides = [1, 1, 1]} : vector<18x18x32xf32> to vector<1x18x32xf32>
    %31 = vector.broadcast %25 : f32 to vector<1x18x32xf32>
    %32 = arith.mulf %30, %31 : vector<1x18x32xf32>
    %33 = tpu.concatenate %28, %29, %32 in 0 : vector<1x18x32xf32>, vector<16x18x32xf32>, vector<1x18x32xf32> -> vector<18x18x32xf32>
    %34 = arith.truncf %33 : vector<18x18x32xf32> to vector<18x18x32xbf16>
    %35 = vector.extract_strided_slice %34 {offsets = [0, 0, 0], sizes = [16, 16, 32], strides = [1, 1, 1]} : vector<18x18x32xbf16> to vector<16x16x32xbf16>
    %36 = vector.extract_strided_slice %34 {offsets = [0, 1, 0], sizes = [16, 16, 32], strides = [1, 1, 1]} : vector<18x18x32xbf16> to vector<16x16x32xbf16>
    %37 = vector.extract_strided_slice %34 {offsets = [0, 2, 0], sizes = [16, 16, 32], strides = [1, 1, 1]} : vector<18x18x32xbf16> to vector<16x16x32xbf16>
    %38 = vector.extract_strided_slice %34 {offsets = [1, 0, 0], sizes = [16, 16, 32], strides = [1, 1, 1]} : vector<18x18x32xbf16> to vector<16x16x32xbf16>
    %39 = vector.extract_strided_slice %34 {offsets = [1, 1, 0], sizes = [16, 16, 32], strides = [1, 1, 1]} : vector<18x18x32xbf16> to vector<16x16x32xbf16>
    %40 = vector.extract_strided_slice %34 {offsets = [1, 2, 0], sizes = [16, 16, 32], strides = [1, 1, 1]} : vector<18x18x32xbf16> to vector<16x16x32xbf16>
    %41 = vector.extract_strided_slice %34 {offsets = [2, 0, 0], sizes = [16, 16, 32], strides = [1, 1, 1]} : vector<18x18x32xbf16> to vector<16x16x32xbf16>
    %42 = vector.extract_strided_slice %34 {offsets = [2, 1, 0], sizes = [16, 16, 32], strides = [1, 1, 1]} : vector<18x18x32xbf16> to vector<16x16x32xbf16>
    %43 = vector.extract_strided_slice %34 {offsets = [2, 2, 0], sizes = [16, 16, 32], strides = [1, 1, 1]} : vector<18x18x32xbf16> to vector<16x16x32xbf16>
    %44 = tpu.concatenate %35, %36, %37, %38, %39, %40, %41, %42, %43 in 2 : vector<16x16x32xbf16>, vector<16x16x32xbf16>, vector<16x16x32xbf16>, vector<16x16x32xbf16>, vector<16x16x32xbf16>, vector<16x16x32xbf16>, vector<16x16x32xbf16>, vector<16x16x32xbf16>, vector<16x16x32xbf16> -> vector<16x16x288xbf16>
    %45 = vector.shape_cast %44 : vector<16x16x288xbf16> to vector<256x288xbf16>
    %c0_10 = arith.constant 0 : index
    %c0_11 = arith.constant 0 : index
    %46 = vector.load %arg3[%c0_10, %c0_11] : memref<288x128xbf16, #tpu.memory_space<vmem>>, vector<288x128xbf16>
    %cst_12 = arith.constant dense<0.000000e+00> : vector<256x128xf32>
    %47 = tpu.matmul %45, %46, %cst_12 {dimension_numbers = #tpu.dot_dimension_numbers<[1], [0], [0], [1], [0, 0, 1, 1], [], []>} : vector<256x288xbf16>, vector<288x128xbf16>, vector<256x128xf32> -> vector<256x128xf32>
    %c0_13 = arith.constant 0 : index
    %c0_14 = arith.constant 0 : index
    %48 = vector.load %arg6[%c0_13, %c0_14] : memref<1x128xf32, #tpu.memory_space<vmem>>, vector<1x128xf32>
    %49 = vector.broadcast %48 : vector<1x128xf32> to vector<256x128xf32>
    %50 = arith.addf %47, %49 : vector<256x128xf32>
    %51 = arith.truncf %50 : vector<256x128xf32> to vector<256x128xbf16>
    %c0_15 = arith.constant 0 : index
    %c0_16 = arith.constant 0 : index
    %c0_17 = arith.constant 0 : index
    %52 = vector.load %arg7[%c0_15, %c0_16, %c0_17] : memref<1x256x128xbf16, #tpu.memory_space<vmem>>, vector<1x256x128xbf16>
    %53 = vector.shape_cast %52 : vector<1x256x128xbf16> to vector<256x128xbf16>
    %54 = vector.shape_cast %51 : vector<256x128xbf16> to vector<1x256x128xbf16>
    tpu.vector_store %arg7[%c0_15, %c0_16, %c0_17], %54 {strides = array<i32>} : memref<1x256x128xbf16, #tpu.memory_space<vmem>>, vector<1x256x128xbf16>,
    return
  }
  func.func @transform_0(%arg0: i32, %arg1: i32) -> (i32, i32, i32, i32) {
    %c0_i32 = arith.constant 0 : i32
    %c0_i32_0 = arith.constant 0 : i32
    %c0_i32_1 = arith.constant 0 : i32
    %c0_i32_2 = arith.constant 0 : i32
    return %arg0, %c0_i32, %c0_i32_0, %c0_i32_1 : i32, i32, i32, i32
  }
  func.func @transform_1(%arg0: i32, %arg1: i32) -> (i32, i32) {
    %c0_i32 = arith.constant 0 : i32
    %c0_i32_0 = arith.constant 0 : i32
    %c0_i32_1 = arith.constant 0 : i32
    return %c0_i32, %c0_i32_0 : i32, i32
  }
  func.func @transform_2(%arg0: i32, %arg1: i32) -> (i32, i32, i32) {
    %c0_i32 = arith.constant 0 : i32
    %c0_i32_0 = arith.constant 0 : i32
    %c0_i32_1 = arith.constant 0 : i32
    return %arg0, %c0_i32, %c0_i32_0 : i32, i32, i32
  }
  func.func @transform_3(%arg0: i32, %arg1: i32) -> (i32, i32, i32) {
    %c0_i32 = arith.constant 0 : i32
    %c0_i32_0 = arith.constant 0 : i32
    %c0_i32_1 = arith.constant 0 : i32
    return %arg0, %c0_i32, %c0_i32_0 : i32, i32, i32
  }
  func.func @transform_4(%arg0: i32, %arg1: i32) -> (i32, i32) {
    %c0_i32 = arith.constant 0 : i32
    %c0_i32_0 = arith.constant 0 : i32
    %c0_i32_1 = arith.constant 0 : i32
    return %c0_i32, %c0_i32_0 : i32, i32
  }
  func.func @transform_5(%arg0: i32, %arg1: i32) -> (i32, i32, i32) {
    %c0_i32 = arith.constant 0 : i32
    %c0_i32_0 = arith.constant 0 : i32
    return %arg0, %arg1, %c0_i32 : i32, i32, i32
  }
}

</mosaic_0001>

<llo_original>
// kernel: forward_single.12
$region0: #{forward_single.12}
  #allocation0 [shape = 'u32[]', space=smem, size = 0x4, offset = 0x4, fixed_abs, tag = 'smem constant byte address 0x4 - core index']
  #allocation1 [shape = 'u32[72,128]{1,0:T(1,128)}', space=vmem, size = 0x9000, scoped, tag = 'internal scratch']
  %s0 = inlined_call_operand.vmem [shape: bf16[2,18,18,32], index: 0, kind: input, shape index: {}]
  %s1 = inlined_call_operand.vmem [shape: bf16[288,32], index: 1, kind: input, shape index: {}]
  %s2 = inlined_call_operand.vmem [shape: bf16[2,256,32], index: 2, kind: output, shape index: {0}]
  %s3 = inlined_call_operand.vmem [shape: f32[2,1,2,32], index: 3, kind: output, shape index: {1}]
  %4 = xla_tuple %s2, %s3
  %s5 = sld [smem:[#allocation0]]
  $region49: #{forward_single.12} parent=0
    _
  %s7 = ssub.s32 1, %s5
  %s8 = scalar_select 0, %s7, %s5
  loop: start=0, step=1, limit=4
  $region2: #{forward_single.12} parent=0 // loop_pre_header
    _
  $region3: #{forward_single.12} parent=0 // loop_header
    %s10 = sphi 0, %s14
    %p11 = scmp.ge.s32.totalorder %s10, 4
    %s17 = sphi 0, %s29
    %s18 = sphi 0, %s25
    %s19 = sphi 0, %s17
    %s20 = sphi 0, %s18
    %s21 = sphi 0, %s19
    %s22 = sphi 0, %s20
    %s32 = sphi 0, %s34
    %s35 = sphi 0, %s32
    %s36 = sphi 0, %s35
    %s52 = sphi 0, %s36
    %s56 = sphi 0, %s56
    %s58 = sphi 0, %s56
    %s59 = sphi 0, %s58
    %s73 = sphi 0, %s59
    %s81 = sphi 0, %s83
    %s84 = sphi 0, %s81
    %s85 = sphi 0, %s84
    %s101 = sphi 0, %s85
    %s109 = sphi 0, %s111
    %s112 = sphi 0, %s109
    %s113 = sphi 0, %s112
    %s129 = sphi 0, %s113
  $region4: #{forward_single.12} parent=0 // loop_header_branch
    %13 = sbr.rel (%p11) target = $region8
  $region5: #{forward_single.12} parent=0 // loop_body
    %s15 = ssub.s32 %s10, 1
    %s16 = ssub.s32 %s10, 2
    %s23 = sadd.s32 1, %s18
    %p24 = scmp.ge.s32.totalorder %s23, 1
    %s25 = scalar_select %p24, 0, %s23
    %s26 = sadd.s32 1, %s17
    %s27 = scalar_select %p24, %s26, %s17
    %p28 = scmp.ge.s32.totalorder %s27, 2
    %s29 = scalar_select %p28, 0, %s27
    %s30 = ssub.s32 %s17, %s29
    %p31 = scmp.eq.s32.totalorder %s30, 0
    %s33 = sadd.s32 %s32, 1
    %s34 = scalar_select %p31, %s32, %s33
    %p37 = pneg %p31
    %p38 = scmp.eq.s32.totalorder %s10, 1
    %p39 = por %p37, %p38
    %p40 = scmp.ne.s32.totalorder %s32, %s35
    %p41 = scmp.eq.s32.totalorder %s10, 0
    %p42 = por %p40, %p41
    %p43 = scmp.ne.s32.totalorder %s32, %s35
    %p44 = scmp.eq.s32.totalorder %s15, 1
    %p45 = por %p43, %p44
    %p46 = scmp.ne.s32.totalorder %s35, %s36
    %p47 = scmp.eq.s32.totalorder %s15, 0
    %p48 = por %p46, %p47
    %p49 = scmp.ne.s32.totalorder %s35, %s36
    %p50 = scmp.eq.s32.totalorder %s16, 1
    %p51 = por %p49, %p50
    %p53 = scmp.ne.s32.totalorder %s36, %s52
    %p54 = scmp.eq.s32.totalorder %s16, 0
    %p55 = por %p53, %p54
    %s57 = sadd.s32 %s56, 1
    %p60 = scmp.eq.s32.totalorder %s10, 1
    %p61 = scmp.ne.s32.totalorder %s56, %s58
    %p62 = scmp.eq.s32.totalorder %s10, 0
    %p63 = por %p61, %p62
    %p64 = scmp.ne.s32.totalorder %s56, %s58
    %p65 = scmp.eq.s32.totalorder %s15, 1
    %p66 = por %p64, %p65
    %p67 = scmp.ne.s32.totalorder %s58, %s59
    %p68 = scmp.eq.s32.totalorder %s15, 0
    %p69 = por %p67, %p68
    %p70 = scmp.ne.s32.totalorder %s58, %s59
    %p71 = scmp.eq.s32.totalorder %s16, 1
    %p72 = por %p70, %p71
    %p74 = scmp.ne.s32.totalorder %s59, %s73
    %p75 = scmp.eq.s32.totalorder %s16, 0
    %p76 = por %p74, %p75
    %s77 = ssub.s32 %s17, %s29
    %s78 = ssub.s32 %s18, %s25
    %s79 = sor.u32 %s77, %s78
    %p80 = scmp.eq.s32.totalorder %s79, 0
    %s82 = sadd.s32 %s81, 1
    %s83 = scalar_select %p80, %s81, %s82
    %p86 = pneg %p80
    %p87 = scmp.eq.s32.totalorder %s10, 1
    %p88 = por %p86, %p87
    %p89 = scmp.ne.s32.totalorder %s81, %s84
    %p90 = scmp.eq.s32.totalorder %s10, 0
    %p91 = por %p89, %p90
    %p92 = scmp.ne.s32.totalorder %s81, %s84
    %p93 = scmp.eq.s32.totalorder %s15, 1
    %p94 = por %p92, %p93
    %p95 = scmp.ne.s32.totalorder %s84, %s85
    %p96 = scmp.eq.s32.totalorder %s15, 0
    %p97 = por %p95, %p96
    %p98 = scmp.ne.s32.totalorder %s84, %s85
    %p99 = scmp.eq.s32.totalorder %s16, 1
    %p100 = por %p98, %p99
    %p102 = scmp.ne.s32.totalorder %s85, %s101
    %p103 = scmp.eq.s32.totalorder %s16, 0
    %p104 = por %p102, %p103
    %s105 = ssub.s32 %s17, %s29
    %s106 = ssub.s32 %s18, %s25
    %s107 = sor.u32 %s105, %s106
    %p108 = scmp.eq.s32.totalorder %s107, 0
    %s110 = sadd.s32 %s109, 1
    %s111 = scalar_select %p108, %s109, %s110
    %p114 = pneg %p108
    %p115 = scmp.eq.s32.totalorder %s10, 1
    %p116 = por %p114, %p115
    %p117 = scmp.ne.s32.totalorder %s109, %s112
    %p118 = scmp.eq.s32.totalorder %s10, 0
    %p119 = por %p117, %p118
    %p120 = scmp.ne.s32.totalorder %s109, %s112
    %p121 = scmp.eq.s32.totalorder %s15, 1
    %p122 = por %p120, %p121
    %p123 = scmp.ne.s32.totalorder %s112, %s113
    %p124 = scmp.eq.s32.totalorder %s15, 0
    %p125 = por %p123, %p124
    %p126 = scmp.ne.s32.totalorder %s112, %s113
    %p127 = scmp.eq.s32.totalorder %s16, 1
    %p128 = por %p126, %p127
    %p130 = scmp.ne.s32.totalorder %s113, %s129
    %p131 = scmp.eq.s32.totalorder %s16, 0
    %p132 = por %p130, %p131
    %p133 = scmp.le.s32.totalorder 1, %s10
    %p134 = scmp.lt.s32.totalorder %s10, 3
    %p135 = pnand %p133, %p134
    %p136 = pneg %p135
    // Predicated region
    $region9: #{forward_single.12} parent=5 // pred_check
      _
    $region10: #{forward_single.12} parent=5 // pred_check_branch
      %138 = sbr.rel (%p135) target = $region12
    $region11: #{forward_single.12} parent=5 // pred_region
      %s139 = ssub.s32 %s10, 1
      // Predicated region
      $region13: #{forward_single.12} parent=11 // pred_check
        %p140 = pneg %p69
      $region14: #{forward_single.12} parent=11 // pred_check_branch
        %142 = sbr.rel (%p140) target = $region16
      $region15: #{forward_single.12} parent=11 // pred_region
        _
      $region16: #{forward_single.12} parent=11 // pred_fallthru
        _
    $region12: #{forward_single.12} parent=5 // pred_fallthru
      _
    %p143 = scmp.lt.s32.totalorder %s10, 2
    // Predicated region
    $region17: #{forward_single.12} parent=5 // pred_check
      %p144 = pneg %p143
    $region18: #{forward_single.12} parent=5 // pred_check_branch
      %146 = sbr.rel (%p144) target = $region20
    $region19: #{forward_single.12} parent=5 // pred_region
      // Predicated region
      $region21: #{forward_single.12} parent=19 // pred_check
        %p147 = pneg %p42
      $region22: #{forward_single.12} parent=19 // pred_check_branch
        %149 = sbr.rel (%p147) target = $region24
      $region23: #{forward_single.12} parent=19 // pred_region
        %p150 = scmp.lt.s32.totalorder %s17, 1
        %s151 = scalar_select %p150, %s17, 1
        %s152 = smul.addr %s151, 54
        %s153 = smul.addr %s152, 4
        %s154 = scalar_lea.vmem %s0, %s153
      $region24: #{forward_single.12} parent=19 // pred_fallthru
        _
    $region20: #{forward_single.12} parent=5 // pred_fallthru
      _
    %p155 = scmp.le.s32.totalorder 1, %s10
    %p156 = scmp.lt.s32.totalorder %s10, 3
    %p157 = pnand %p155, %p156
    %p158 = pneg %p157
    // Predicated region
    $region25: #{forward_single.12} parent=5 // pred_check
      _
    $region26: #{forward_single.12} parent=5 // pred_check_branch
      %160 = sbr.rel (%p157) target = $region28
    $region27: #{forward_single.12} parent=5 // pred_region
      %s161 = ssub.s32 %s10, 1
      %p162 = scmp.lt.s32.totalorder %s19, 1
      %s163 = scalar_select %p162, %s19, 1
      %s164 = smul.addr %s163, 54
      %s165 = smul.addr %s164, 4
      %s166 = scalar_lea.vmem %s0, %s165
      %p167 = pneg %p48
      %p168 = pneg %p45
      %p169 = pneg %p69
      %p170 = pneg %p66
      %p171 = pneg %p97
      %p172 = pneg %p94
      %s173 = smul.u32 32, %s20
      %p174 = scmp.lt.s32.totalorder %s19, 1
      %s175 = scalar_select %p174, %s19, 1
      %p176 = scmp.lt.s32.totalorder %s173, 31
      %s177 = scalar_select %p176, %s173, 31
      %s178 = smul.addr %s175, 32
      %s179 = sadd.s32 %s177, %s178
      %s180 = smul.addr %s179, 4
      %s181 = scalar_lea.vmem %s2, %s180
      %p182 = pneg %p125
      %p183 = pneg %p122
      %p184 = scmp.lt.s32.totalorder %s19, 1
      %s185 = scalar_select %p184, %s19, 1
      %p186 = scmp.lt.s32.totalorder %s20, 0
      %s187 = scalar_select %p186, %s20, 0
      %s188 = sadd.s32 %s187, %s185
      %s189 = smul.addr %s188, 2
      %s190 = scalar_lea.vmem %s3, %s189
      %p191 = scmp.lt.s32.totalorder %s19, 1
      %s192 = scalar_select %p191, %s19, 1
      %s193 = smul.addr %s192, 54
      %s194 = smul.addr %s193, 4
      %s195 = scalar_lea.vmem %s0, %s194
      %s196 = smul.u32 32, %s20
      %p197 = scmp.lt.s32.totalorder %s19, 1
      %s198 = scalar_select %p197, %s19, 1
      %p199 = scmp.lt.s32.totalorder %s196, 31
      %s200 = scalar_select %p199, %s196, 31
      %s201 = smul.addr %s198, 32
      %s202 = sadd.s32 %s200, %s201
      %s203 = smul.addr %s202, 4
      %s204 = scalar_lea.vmem %s2, %s203
      %s205 = smul.u32 32, %s20
      %p206 = scmp.lt.s32.totalorder %s19, 1
      %s207 = scalar_select %p206, %s19, 1
      %p208 = scmp.lt.s32.totalorder %s20, 0
      %s209 = scalar_select %p208, %s20, 0
      %s210 = sadd.s32 %s209, %s207
      %s211 = smul.addr %s210, 2
      %s212 = scalar_lea.vmem %s3, %s211
      %s214 = smul.u32 %s20, 16
      %s215 = smul.u32 %s214, 3
      %s216 = smul.addr %s215, 4
      %s217 = scalar_lea.vmem %s195, %s216
      %v218 = vld [vmem:[%s217] sm:$0xf]
      %v219 = vld [vmem:[%s217 + $0x4] sm:$0xf]
      %v220 = vld [vmem:[%s217 + $0x8] sm:$0x1]
      %v221 = vld [vmem:[%s217 + $0xc] sm:$0xf]
      %v222 = vld [vmem:[%s217 + $0x10] sm:$0xf]
      %v223 = vld [vmem:[%s217 + $0x14] sm:$0x1]
      %v224 = vld [vmem:[%s217 + $0x18] sm:$0xf]
      %v225 = vld [vmem:[%s217 + $0x1c] sm:$0xf]
      %v226 = vld [vmem:[%s217 + $0x20] sm:$0x1]
      %v227 = vld [vmem:[%s217 + $0x24] sm:$0xf]
      %v228 = vld [vmem:[%s217 + $0x28] sm:$0xf]
      %v229 = vld [vmem:[%s217 + $0x2c] sm:$0x1]
      %v230 = vld [vmem:[%s217 + $0x30] sm:$0xf]
      %v231 = vld [vmem:[%s217 + $0x34] sm:$0xf]
      %v232 = vld [vmem:[%s217 + $0x38] sm:$0x1]
      %v233 = vld [vmem:[%s217 + $0x3c] sm:$0xf]
      %v234 = vld [vmem:[%s217 + $0x40] sm:$0xf]
      %v235 = vld [vmem:[%s217 + $0x44] sm:$0x1]
      %v236 = vld [vmem:[%s217 + $0x48] sm:$0xf]
      %v237 = vld [vmem:[%s217 + $0x4c] sm:$0xf]
      %v238 = vld [vmem:[%s217 + $0x50] sm:$0x1]
      %v239 = vld [vmem:[%s217 + $0x54] sm:$0xf]
      %v240 = vld [vmem:[%s217 + $0x58] sm:$0xf]
      %v241 = vld [vmem:[%s217 + $0x5c] sm:$0x1]
      %v242 = vld [vmem:[%s217 + $0x60] sm:$0xf]
      %v243 = vld [vmem:[%s217 + $0x64] sm:$0xf]
      %v244 = vld [vmem:[%s217 + $0x68] sm:$0x1]
      %v245 = vld [vmem:[%s217 + $0x6c] sm:$0xf]
      %v246 = vld [vmem:[%s217 + $0x70] sm:$0xf]
      %v247 = vld [vmem:[%s217 + $0x74] sm:$0x1]
      %v248 = vld [vmem:[%s217 + $0x78] sm:$0xf]
      %v249 = vld [vmem:[%s217 + $0x7c] sm:$0xf]
      %v250 = vld [vmem:[%s217 + $0x80] sm:$0x1]
      %v251 = vld [vmem:[%s217 + $0x84] sm:$0xf]
      %v252 = vld [vmem:[%s217 + $0x88] sm:$0xf]
      %v253 = vld [vmem:[%s217 + $0x8c] sm:$0x1]
      %v254 = vld [vmem:[%s217 + $0x90] sm:$0xf]
      %v255 = vld [vmem:[%s217 + $0x94] sm:$0xf]
      %v256 = vld [vmem:[%s217 + $0x98] sm:$0x1]
      %v257 = vld [vmem:[%s217 + $0x9c] sm:$0xf]
      %v258 = vld [vmem:[%s217 + $0xa0] sm:$0xf]
      %v259 = vld [vmem:[%s217 + $0xa4] sm:$0x1]
      %v260 = vld [vmem:[%s217 + $0xa8] sm:$0xf]
      %v261 = vld [vmem:[%s217 + $0xac] sm:$0xf]
      %v262 = vld [vmem:[%s217 + $0xb0] sm:$0x1]
      %v263 = vld [vmem:[%s217 + $0xb4] sm:$0xf]
      %v264 = vld [vmem:[%s217 + $0xb8] sm:$0xf]
      %v265 = vld [vmem:[%s217 + $0xbc] sm:$0x1]
      %v266 = vld [vmem:[%s217 + $0xc0] sm:$0xf]
      %v267 = vld [vmem:[%s217 + $0xc4] sm:$0xf]
      %v268 = vld [vmem:[%s217 + $0xc8] sm:$0x1]
      %v269 = vld [vmem:[%s217 + $0xcc] sm:$0xf]
      %v270 = vld [vmem:[%s217 + $0xd0] sm:$0xf]
      %v271 = vld [vmem:[%s217 + $0xd4] sm:$0x1]
      %v304 = vunpack.c.l.b16 %v218
      %v305 = vunpack.c.l.b16 %v219
      %v306 = vunpack.c.l.b16 %v221
      %v307 = vunpack.c.l.b16 %v222
      %v308 = vunpack.c.l.b16 %v224
      %v309 = vunpack.c.l.b16 %v225
      %v310 = vunpack.c.l.b16 %v227
      %v311 = vunpack.c.l.b16 %v228
      %v312 = vunpack.c.l.b16 %v230
      %v313 = vunpack.c.l.b16 %v231
      %v314 = vunpack.c.l.b16 %v233
      %v315 = vunpack.c.l.b16 %v234
      %v316 = vunpack.c.l.b16 %v236
      %v317 = vunpack.c.l.b16 %v237
      %v318 = vunpack.c.l.b16 %v239
      %v319 = vunpack.c.l.b16 %v240
      %v320 = vunpack.c.l.b16 %v242
      %v321 = vunpack.c.l.b16 %v243
      %v322 = vunpack.c.l.b16 %v245
      %v323 = vunpack.c.l.b16 %v246
      %v324 = vunpack.c.l.b16 %v248
      %v325 = vunpack.c.l.b16 %v249
      %v326 = vunpack.c.l.b16 %v251
      %v327 = vunpack.c.l.b16 %v252
      %v328 = vunpack.c.l.b16 %v254
      %v329 = vunpack.c.l.b16 %v255
      %v330 = vunpack.c.l.b16 %v257
      %v331 = vunpack.c.l.b16 %v258
      %v332 = vunpack.c.l.b16 %v260
      %v333 = vunpack.c.l.b16 %v261
      %v334 = vunpack.c.l.b16 %v263
      %v335 = vunpack.c.l.b16 %v264
      %v336 = vpack.c.b16 %v305, %v304
      %v337 = vpack.c.b16 %v307, %v306
      %v338 = vpack.c.b16 %v309, %v308
      %v339 = vpack.c.b16 %v311, %v310
      %v340 = vpack.c.b16 %v313, %v312
      %v341 = vpack.c.b16 %v315, %v314
      %v342 = vpack.c.b16 %v317, %v316
      %v343 = vpack.c.b16 %v319, %v318
      %v344 = vpack.c.b16 %v321, %v320
      %v345 = vpack.c.b16 %v323, %v322
      %v346 = vpack.c.b16 %v325, %v324
      %v347 = vpack.c.b16 %v327, %v326
      %v348 = vpack.c.b16 %v329, %v328
      %v349 = vpack.c.b16 %v331, %v330
      %v350 = vpack.c.b16 %v333, %v332
      %v351 = vpack.c.b16 %v335, %v334
      %v368 = vunpack.c.l.b16 %v220
      %v369 = vunpack.c.l.b16 %v223
      %v370 = vunpack.c.l.b16 %v226
      %v371 = vunpack.c.l.b16 %v229
      %v372 = vunpack.c.l.b16 %v232
      %v373 = vunpack.c.l.b16 %v235
      %v374 = vunpack.c.l.b16 %v238
      %v375 = vunpack.c.l.b16 %v241
      %v376 = vunpack.c.l.b16 %v244
      %v377 = vunpack.c.l.b16 %v247
      %v378 = vunpack.c.l.b16 %v250
      %v379 = vunpack.c.l.b16 %v253
      %v380 = vunpack.c.l.b16 %v256
      %v381 = vunpack.c.l.b16 %v259
      %v382 = vunpack.c.l.b16 %v262
      %v383 = vunpack.c.l.b16 %v265
      %v384 = vpack.c.b16 %v368, %v368
      %v385 = vpack.c.b16 %v369, %v369
      %v386 = vpack.c.b16 %v370, %v370
      %v387 = vpack.c.b16 %v371, %v371
      %v388 = vpack.c.b16 %v372, %v372
      %v389 = vpack.c.b16 %v373, %v373
      %v390 = vpack.c.b16 %v374, %v374
      %v391 = vpack.c.b16 %v375, %v375
      %v392 = vpack.c.b16 %v376, %v376
      %v393 = vpack.c.b16 %v377, %v377
      %v394 = vpack.c.b16 %v378, %v378
      %v395 = vpack.c.b16 %v379, %v379
      %v396 = vpack.c.b16 %v380, %v380
      %v397 = vpack.c.b16 %v381, %v381
      %v398 = vpack.c.b16 %v382, %v382
      %v399 = vpack.c.b16 %v383, %v383
      %vm400 = vsmask.f32 7424
      %v402 = vshrl.u32 %v336, 16
      %v404 = vshll.u32 %v336, 16
      %v406 = vrot.slane %v404, 1
      %v407 = vor.u32 %v402, %v406
      %v409 = vshll.u32 %v384, 16
      %v411 = vrot.slane %v409, 1
      %v412 = vsel %vm400, %v407, %v411
      %v414 = vshrl.u32 %v337, 16
      %v416 = vshll.u32 %v337, 16
      %v418 = vrot.slane %v416, 1
      %v419 = vor.u32 %v414, %v418
      %v421 = vshll.u32 %v385, 16
      %v423 = vrot.slane %v421, 1
      %v424 = vsel %vm400, %v419, %v423
      %v426 = vshrl.u32 %v338, 16
      %v428 = vshll.u32 %v338, 16
      %v430 = vrot.slane %v428, 1
      %v431 = vor.u32 %v426, %v430
      %v433 = vshll.u32 %v386, 16
      %v435 = vrot.slane %v433, 1
      %v436 = vsel %vm400, %v431, %v435
      %v438 = vshrl.u32 %v339, 16
      %v440 = vshll.u32 %v339, 16
      %v442 = vrot.slane %v440, 1
      %v443 = vor.u32 %v438, %v442
      %v445 = vshll.u32 %v387, 16
      %v447 = vrot.slane %v445, 1
      %v448 = vsel %vm400, %v443, %v447
      %v450 = vshrl.u32 %v340, 16
      %v452 = vshll.u32 %v340, 16
      %v454 = vrot.slane %v452, 1
      %v455 = vor.u32 %v450, %v454
      %v457 = vshll.u32 %v388, 16
      %v459 = vrot.slane %v457, 1
      %v460 = vsel %vm400, %v455, %v459
      %v462 = vshrl.u32 %v341, 16
      %v464 = vshll.u32 %v341, 16
      %v466 = vrot.slane %v464, 1
      %v467 = vor.u32 %v462, %v466
      %v469 = vshll.u32 %v389, 16
      %v471 = vrot.slane %v469, 1
      %v472 = vsel %vm400, %v467, %v471
      %v474 = vshrl.u32 %v342, 16
      %v476 = vshll.u32 %v342, 16
      %v478 = vrot.slane %v476, 1
      %v479 = vor.u32 %v474, %v478
      %v481 = vshll.u32 %v390, 16
      %v483 = vrot.slane %v481, 1
      %v484 = vsel %vm400, %v479, %v483
      %v486 = vshrl.u32 %v343, 16
      %v488 = vshll.u32 %v343, 16
      %v490 = vrot.slane %v488, 1
      %v491 = vor.u32 %v486, %v490
      %v493 = vshll.u32 %v391, 16
      %v495 = vrot.slane %v493, 1
      %v496 = vsel %vm400, %v491, %v495
      %v498 = vshrl.u32 %v344, 16
      %v500 = vshll.u32 %v344, 16
      %v502 = vrot.slane %v500, 1
      %v503 = vor.u32 %v498, %v502
      %v505 = vshll.u32 %v392, 16
      %v507 = vrot.slane %v505, 1
      %v508 = vsel %vm400, %v503, %v507
      %v510 = vshrl.u32 %v345, 16
      %v512 = vshll.u32 %v345, 16
      %v514 = vrot.slane %v512, 1
      %v515 = vor.u32 %v510, %v514
      %v517 = vshll.u32 %v393, 16
      %v519 = vrot.slane %v517, 1
      %v520 = vsel %vm400, %v515, %v519
      %v522 = vshrl.u32 %v346, 16
      %v524 = vshll.u32 %v346, 16
      %v526 = vrot.slane %v524, 1
      %v527 = vor.u32 %v522, %v526
      %v529 = vshll.u32 %v394, 16
      %v531 = vrot.slane %v529, 1
      %v532 = vsel %vm400, %v527, %v531
      %v534 = vshrl.u32 %v347, 16
      %v536 = vshll.u32 %v347, 16
      %v538 = vrot.slane %v536, 1
      %v539 = vor.u32 %v534, %v538
      %v541 = vshll.u32 %v395, 16
      %v543 = vrot.slane %v541, 1
      %v544 = vsel %vm400, %v539, %v543
      %v546 = vshrl.u32 %v348, 16
      %v548 = vshll.u32 %v348, 16
      %v550 = vrot.slane %v548, 1
      %v551 = vor.u32 %v546, %v550
      %v553 = vshll.u32 %v396, 16
      %v555 = vrot.slane %v553, 1
      %v556 = vsel %vm400, %v551, %v555
      %v558 = vshrl.u32 %v349, 16
      %v560 = vshll.u32 %v349, 16
      %v562 = vrot.slane %v560, 1
      %v563 = vor.u32 %v558, %v562
      %v565 = vshll.u32 %v397, 16
      %v567 = vrot.slane %v565, 1
      %v568 = vsel %vm400, %v563, %v567
      %v570 = vshrl.u32 %v350, 16
      %v572 = vshll.u32 %v350, 16
      %v574 = vrot.slane %v572, 1
      %v575 = vor.u32 %v570, %v574
      %v577 = vshll.u32 %v398, 16
      %v579 = vrot.slane %v577, 1
      %v580 = vsel %vm400, %v575, %v579
      %v582 = vshrl.u32 %v351, 16
      %v584 = vshll.u32 %v351, 16
      %v586 = vrot.slane %v584, 1
      %v587 = vor.u32 %v582, %v586
      %v589 = vshll.u32 %v399, 16
      %v591 = vrot.slane %v589, 1
      %v592 = vsel %vm400, %v587, %v591
      %593 = vrot.lane.b32.xlu0 %v412, 32
      %v594 = vpop.permute.xlu0 %593
      %595 = vrot.lane.b32.xlu0 %v424, 32
      %v596 = vpop.permute.xlu0 %595
      %597 = vrot.lane.b32.xlu0 %v436, 32
      %v598 = vpop.permute.xlu0 %597
      %599 = vrot.lane.b32.xlu0 %v448, 32
      %v600 = vpop.permute.xlu0 %599
      %601 = vrot.lane.b32.xlu0 %v460, 32
      %v602 = vpop.permute.xlu0 %601
      %603 = vrot.lane.b32.xlu0 %v472, 32
      %v604 = vpop.permute.xlu0 %603
      %605 = vrot.lane.b32.xlu0 %v484, 32
      %v606 = vpop.permute.xlu0 %605
      %607 = vrot.lane.b32.xlu0 %v496, 32
      %v608 = vpop.permute.xlu0 %607
      %609 = vrot.lane.b32.xlu0 %v508, 32
      %v610 = vpop.permute.xlu0 %609
      %611 = vrot.lane.b32.xlu0 %v520, 32
      %v612 = vpop.permute.xlu0 %611
      %613 = vrot.lane.b32.xlu0 %v532, 32
      %v614 = vpop.permute.xlu0 %613
      %615 = vrot.lane.b32.xlu0 %v544, 32
      %v616 = vpop.permute.xlu0 %615
      %617 = vrot.lane.b32.xlu0 %v556, 32
      %v618 = vpop.permute.xlu0 %617
      %619 = vrot.lane.b32.xlu0 %v568, 32
      %v620 = vpop.permute.xlu0 %619
      %621 = vrot.lane.b32.xlu0 %v580, 32
      %v622 = vpop.permute.xlu0 %621
      %623 = vrot.lane.b32.xlu0 %v592, 32
      %v624 = vpop.permute.xlu0 %623
      %vm625 = vcmask 1046528
      %v626 = vrot.slane %v336, 1
      %v627 = vrot.slane %v384, 1
      %v628 = vsel %vm625, %v626, %v627
      %v629 = vrot.slane %v337, 1
      %v630 = vrot.slane %v385, 1
      %v631 = vsel %vm625, %v629, %v630
      %v632 = vrot.slane %v338, 1
      %v633 = vrot.slane %v386, 1
      %v634 = vsel %vm625, %v632, %v633
      %v635 = vrot.slane %v339, 1
      %v636 = vrot.slane %v387, 1
      %v637 = vsel %vm625, %v635, %v636
      %v638 = vrot.slane %v340, 1
      %v639 = vrot.slane %v388, 1
      %v640 = vsel %vm625, %v638, %v639
      %v641 = vrot.slane %v341, 1
      %v642 = vrot.slane %v389, 1
      %v643 = vsel %vm625, %v641, %v642
      %v644 = vrot.slane %v342, 1
      %v645 = vrot.slane %v390, 1
      %v646 = vsel %vm625, %v644, %v645
      %v647 = vrot.slane %v343, 1
      %v648 = vrot.slane %v391, 1
      %v649 = vsel %vm625, %v647, %v648
      %v650 = vrot.slane %v344, 1
      %v651 = vrot.slane %v392, 1
      %v652 = vsel %vm625, %v650, %v651
      %v653 = vrot.slane %v345, 1
      %v654 = vrot.slane %v393, 1
      %v655 = vsel %vm625, %v653, %v654
      %v656 = vrot.slane %v346, 1
      %v657 = vrot.slane %v394, 1
      %v658 = vsel %vm625, %v656, %v657
      %v659 = vrot.slane %v347, 1
      %v660 = vrot.slane %v395, 1
      %v661 = vsel %vm625, %v659, %v660
      %v662 = vrot.slane %v348, 1
      %v663 = vrot.slane %v396, 1
      %v664 = vsel %vm625, %v662, %v663
      %v665 = vrot.slane %v349, 1
      %v666 = vrot.slane %v397, 1
      %v667 = vsel %vm625, %v665, %v666
      %v668 = vrot.slane %v350, 1
      %v669 = vrot.slane %v398, 1
      %v670 = vsel %vm625, %v668, %v669
      %v671 = vrot.slane %v351, 1
      %v672 = vrot.slane %v399, 1
      %v673 = vsel %vm625, %v671, %v672
      %674 = vrot.lane.b32.xlu0 %v628, 64
      %v675 = vpop.permute.xlu0 %674
      %676 = vrot.lane.b32.xlu0 %v631, 64
      %v677 = vpop.permute.xlu0 %676
      %678 = vrot.lane.b32.xlu0 %v634, 64
      %v679 = vpop.permute.xlu0 %678
      %680 = vrot.lane.b32.xlu0 %v637, 64
      %v681 = vpop.permute.xlu0 %680
      %682 = vrot.lane.b32.xlu0 %v640, 64
      %v683 = vpop.permute.xlu0 %682
      %684 = vrot.lane.b32.xlu0 %v643, 64
      %v685 = vpop.permute.xlu0 %684
      %686 = vrot.lane.b32.xlu0 %v646, 64
      %v687 = vpop.permute.xlu0 %686
      %688 = vrot.lane.b32.xlu0 %v649, 64
      %v689 = vpop.permute.xlu0 %688
      %690 = vrot.lane.b32.xlu0 %v652, 64
      %v691 = vpop.permute.xlu0 %690
      %692 = vrot.lane.b32.xlu0 %v655, 64
      %v693 = vpop.permute.xlu0 %692
      %694 = vrot.lane.b32.xlu0 %v658, 64
      %v695 = vpop.permute.xlu0 %694
      %696 = vrot.lane.b32.xlu0 %v661, 64
      %v697 = vpop.permute.xlu0 %696
      %698 = vrot.lane.b32.xlu0 %v664, 64
      %v699 = vpop.permute.xlu0 %698
      %700 = vrot.lane.b32.xlu0 %v667, 64
      %v701 = vpop.permute.xlu0 %700
      %702 = vrot.lane.b32.xlu0 %v670, 64
      %v703 = vpop.permute.xlu0 %702
      %704 = vrot.lane.b32.xlu0 %v673, 64
      %v705 = vpop.permute.xlu0 %704
      %v708 = vunpack.c.l.b16 %v266
      %v709 = vunpack.c.l.b16 %v267
      %v710 = vpack.c.b16 %v709, %v708
      %711 = vrot.lane.b32.xlu0 %v337, 96
      %v712 = vpop.permute.xlu0 %711
      %713 = vrot.lane.b32.xlu0 %v338, 96
      %v714 = vpop.permute.xlu0 %713
      %715 = vrot.lane.b32.xlu0 %v339, 96
      %v716 = vpop.permute.xlu0 %715
      %717 = vrot.lane.b32.xlu0 %v340, 96
      %v718 = vpop.permute.xlu0 %717
      %719 = vrot.lane.b32.xlu0 %v341, 96
      %v720 = vpop.permute.xlu0 %719
      %721 = vrot.lane.b32.xlu0 %v342, 96
      %v722 = vpop.permute.xlu0 %721
      %723 = vrot.lane.b32.xlu0 %v343, 96
      %v724 = vpop.permute.xlu0 %723
      %725 = vrot.lane.b32.xlu0 %v344, 96
      %v726 = vpop.permute.xlu0 %725
      %727 = vrot.lane.b32.xlu0 %v345, 96
      %v728 = vpop.permute.xlu0 %727
      %729 = vrot.lane.b32.xlu0 %v346, 96
      %v730 = vpop.permute.xlu0 %729
      %731 = vrot.lane.b32.xlu0 %v347, 96
      %v732 = vpop.permute.xlu0 %731
      %733 = vrot.lane.b32.xlu0 %v348, 96
      %v734 = vpop.permute.xlu0 %733
      %735 = vrot.lane.b32.xlu0 %v349, 96
      %v736 = vpop.permute.xlu0 %735
      %737 = vrot.lane.b32.xlu0 %v350, 96
      %v738 = vpop.permute.xlu0 %737
      %739 = vrot.lane.b32.xlu0 %v351, 96
      %v740 = vpop.permute.xlu0 %739
      %741 = vrot.lane.b32.xlu0 %v710, 96
      %v742 = vpop.permute.xlu0 %741
      %v744 = vunpack.c.l.b16 %v268
      %v745 = vpack.c.b16 %v744, %v744
      %v747 = vshrl.u32 %v710, 16
      %v749 = vshll.u32 %v710, 16
      %v751 = vrot.slane %v749, 1
      %v752 = vor.u32 %v747, %v751
      %v754 = vshll.u32 %v745, 16
      %v756 = vrot.slane %v754, 1
      %v757 = vsel %vm400, %v752, %v756
      %v758 = vrot.slane %v710, 1
      %v759 = vrot.slane %v745, 1
      %v760 = vsel %vm625, %v758, %v759
      %761 = vrot.lane.b32.xlu0 %v631, 32
      %v762 = vpop.permute.xlu0 %761
      %763 = vrot.lane.b32.xlu0 %v634, 32
      %v764 = vpop.permute.xlu0 %763
      %765 = vrot.lane.b32.xlu0 %v637, 32
      %v766 = vpop.permute.xlu0 %765
      %767 = vrot.lane.b32.xlu0 %v640, 32
      %v768 = vpop.permute.xlu0 %767
      %769 = vrot.lane.b32.xlu0 %v643, 32
      %v770 = vpop.permute.xlu0 %769
      %771 = vrot.lane.b32.xlu0 %v646, 32
      %v772 = vpop.permute.xlu0 %771
      %773 = vrot.lane.b32.xlu0 %v649, 32
      %v774 = vpop.permute.xlu0 %773
      %775 = vrot.lane.b32.xlu0 %v652, 32
      %v776 = vpop.permute.xlu0 %775
      %777 = vrot.lane.b32.xlu0 %v655, 32
      %v778 = vpop.permute.xlu0 %777
      %779 = vrot.lane.b32.xlu0 %v658, 32
      %v780 = vpop.permute.xlu0 %779
      %781 = vrot.lane.b32.xlu0 %v661, 32
      %v782 = vpop.permute.xlu0 %781
      %783 = vrot.lane.b32.xlu0 %v664, 32
      %v784 = vpop.permute.xlu0 %783
      %785 = vrot.lane.b32.xlu0 %v667, 32
      %v786 = vpop.permute.xlu0 %785
      %787 = vrot.lane.b32.xlu0 %v670, 32
      %v788 = vpop.permute.xlu0 %787
      %789 = vrot.lane.b32.xlu0 %v673, 32
      %v790 = vpop.permute.xlu0 %789
      %791 = vrot.lane.b32.xlu0 %v760, 32
      %v792 = vpop.permute.xlu0 %791
      %v795 = vunpack.c.l.b16 %v269
      %v796 = vunpack.c.l.b16 %v270
      %v797 = vpack.c.b16 %v796, %v795
      %798 = vrot.lane.b32.xlu0 %v338, 64
      %v799 = vpop.permute.xlu0 %798
      %800 = vrot.lane.b32.xlu0 %v339, 64
      %v801 = vpop.permute.xlu0 %800
      %802 = vrot.lane.b32.xlu0 %v340, 64
      %v803 = vpop.permute.xlu0 %802
      %804 = vrot.lane.b32.xlu0 %v341, 64
      %v805 = vpop.permute.xlu0 %804
      %806 = vrot.lane.b32.xlu0 %v342, 64
      %v807 = vpop.permute.xlu0 %806
      %808 = vrot.lane.b32.xlu0 %v343, 64
      %v809 = vpop.permute.xlu0 %808
      %810 = vrot.lane.b32.xlu0 %v344, 64
      %v811 = vpop.permute.xlu0 %810
      %812 = vrot.lane.b32.xlu0 %v345, 64
      %v813 = vpop.permute.xlu0 %812
      %814 = vrot.lane.b32.xlu0 %v346, 64
      %v815 = vpop.permute.xlu0 %814
      %816 = vrot.lane.b32.xlu0 %v347, 64
      %v817 = vpop.permute.xlu0 %816
      %818 = vrot.lane.b32.xlu0 %v348, 64
      %v819 = vpop.permute.xlu0 %818
      %820 = vrot.lane.b32.xlu0 %v349, 64
      %v821 = vpop.permute.xlu0 %820
      %822 = vrot.lane.b32.xlu0 %v350, 64
      %v823 = vpop.permute.xlu0 %822
      %824 = vrot.lane.b32.xlu0 %v351, 64
      %v825 = vpop.permute.xlu0 %824
      %826 = vrot.lane.b32.xlu0 %v710, 64
      %v827 = vpop.permute.xlu0 %826
      %828 = vrot.lane.b32.xlu0 %v797, 64
      %v829 = vpop.permute.xlu0 %828
      %v831 = vunpack.c.l.b16 %v271
      %v832 = vpack.c.b16 %v831, %v831
      %v834 = vshrl.u32 %v797, 16
      %v836 = vshll.u32 %v797, 16
      %v838 = vrot.slane %v836, 1
      %v839 = vor.u32 %v834, %v838
      %v841 = vshll.u32 %v832, 16
      %v843 = vrot.slane %v841, 1
      %v844 = vsel %vm400, %v839, %v843
      %845 = vrot.lane.b32.xlu0 %v436, 96
      %v846 = vpop.permute.xlu0 %845
      %847 = vrot.lane.b32.xlu0 %v448, 96
      %v848 = vpop.permute.xlu0 %847
      %849 = vrot.lane.b32.xlu0 %v460, 96
      %v850 = vpop.permute.xlu0 %849
      %851 = vrot.lane.b32.xlu0 %v472, 96
      %v852 = vpop.permute.xlu0 %851
      %853 = vrot.lane.b32.xlu0 %v484, 96
      %v854 = vpop.permute.xlu0 %853
      %855 = vrot.lane.b32.xlu0 %v496, 96
      %v856 = vpop.permute.xlu0 %855
      %857 = vrot.lane.b32.xlu0 %v508, 96
      %v858 = vpop.permute.xlu0 %857
      %859 = vrot.lane.b32.xlu0 %v520, 96
      %v860 = vpop.permute.xlu0 %859
      %861 = vrot.lane.b32.xlu0 %v532, 96
      %v862 = vpop.permute.xlu0 %861
      %863 = vrot.lane.b32.xlu0 %v544, 96
      %v864 = vpop.permute.xlu0 %863
      %865 = vrot.lane.b32.xlu0 %v556, 96
      %v866 = vpop.permute.xlu0 %865
      %867 = vrot.lane.b32.xlu0 %v568, 96
      %v868 = vpop.permute.xlu0 %867
      %869 = vrot.lane.b32.xlu0 %v580, 96
      %v870 = vpop.permute.xlu0 %869
      %871 = vrot.lane.b32.xlu0 %v592, 96
      %v872 = vpop.permute.xlu0 %871
      %873 = vrot.lane.b32.xlu0 %v757, 96
      %v874 = vpop.permute.xlu0 %873
      %875 = vrot.lane.b32.xlu0 %v844, 96
      %v876 = vpop.permute.xlu0 %875
      %v877 = vrot.slane %v797, 1
      %v878 = vrot.slane %v832, 1
      %v879 = vsel %vm625, %v877, %v878
      %vm880 = vcmask 261120
      %v882 = vsel %vm880, %v336, %v594
      %v884 = vsel %vm880, %v337, %v596
      %v886 = vsel %vm880, %v338, %v598
      %v888 = vsel %vm880, %v339, %v600
      %v890 = vsel %vm880, %v340, %v602
      %v892 = vsel %vm880, %v341, %v604
      %v894 = vsel %vm880, %v342, %v606
      %v896 = vsel %vm880, %v343, %v608
      %v898 = vsel %vm880, %v344, %v610
      %v900 = vsel %vm880, %v345, %v612
      %v902 = vsel %vm880, %v346, %v614
      %v904 = vsel %vm880, %v347, %v616
      %v906 = vsel %vm880, %v348, %v618
      %v908 = vsel %vm880, %v349, %v620
      %v910 = vsel %vm880, %v350, %v622
      %v912 = vsel %vm880, %v351, %v624
      %vm913 = vcmask 523264
      %v915 = vsel %vm913, %v882, %v675
      %v917 = vsel %vm913, %v884, %v677
      %v919 = vsel %vm913, %v886, %v679
      %v921 = vsel %vm913, %v888, %v681
      %v923 = vsel %vm913, %v890, %v683
      %v925 = vsel %vm913, %v892, %v685
      %v927 = vsel %vm913, %v894, %v687
      %v929 = vsel %vm913, %v896, %v689
      %v931 = vsel %vm913, %v898, %v691
      %v933 = vsel %vm913, %v900, %v693
      %v935 = vsel %vm913, %v902, %v695
      %v937 = vsel %vm913, %v904, %v697
      %v939 = vsel %vm913, %v906, %v699
      %v941 = vsel %vm913, %v908, %v701
      %v943 = vsel %vm913, %v910, %v703
      %v945 = vsel %vm913, %v912, %v705
      %vm946 = vcmask 785408
      %v948 = vsel %vm946, %v915, %v712
      %v951 = vsel %vm946, %v917, %v714
      %v954 = vsel %vm946, %v919, %v716
      %v957 = vsel %vm946, %v921, %v718
      %v960 = vsel %vm946, %v923, %v720
      %v963 = vsel %vm946, %v925, %v722
      %v966 = vsel %vm946, %v927, %v724
      %v969 = vsel %vm946, %v929, %v726
      %v972 = vsel %vm946, %v931, %v728
      %v975 = vsel %vm946, %v933, %v730
      %v978 = vsel %vm946, %v935, %v732
      %v981 = vsel %vm946, %v937, %v734
      %v984 = vsel %vm946, %v939, %v736
      %v987 = vsel %vm946, %v941, %v738
      %v990 = vsel %vm946, %v943, %v740
      %v993 = vsel %vm946, %v945, %v742
      %v997 = vsel %vm880, %v424, %v762
      %v1000 = vsel %vm880, %v436, %v764
      %v1003 = vsel %vm880, %v448, %v766
      %v1006 = vsel %vm880, %v460, %v768
      %v1009 = vsel %vm880, %v472, %v770
      %v1012 = vsel %vm880, %v484, %v772
      %v1015 = vsel %vm880, %v496, %v774
      %v1018 = vsel %vm880, %v508, %v776
      %v1021 = vsel %vm880, %v520, %v778
      %v1024 = vsel %vm880, %v532, %v780
      %v1027 = vsel %vm880, %v544, %v782
      %v1030 = vsel %vm880, %v556, %v784
      %v1033 = vsel %vm880, %v568, %v786
      %v1036 = vsel %vm880, %v580, %v788
      %v1039 = vsel %vm880, %v592, %v790
      %v1042 = vsel %vm880, %v757, %v792
      %v1044 = vsel %vm913, %v997, %v799
      %v1046 = vsel %vm913, %v1000, %v801
      %v1048 = vsel %vm913, %v1003, %v803
      %v1050 = vsel %vm913, %v1006, %v805
      %v1052 = vsel %vm913, %v1009, %v807
      %v1054 = vsel %vm913, %v1012, %v809
      %v1056 = vsel %vm913, %v1015, %v811
      %v1058 = vsel %vm913, %v1018, %v813
      %v1060 = vsel %vm913, %v1021, %v815
      %v1062 = vsel %vm913, %v1024, %v817
      %v1064 = vsel %vm913, %v1027, %v819
      %v1066 = vsel %vm913, %v1030, %v821
      %v1068 = vsel %vm913, %v1033, %v823
      %v1070 = vsel %vm913, %v1036, %v825
      %v1072 = vsel %vm913, %v1039, %v827
      %v1074 = vsel %vm913, %v1042, %v829
      %v1076 = vsel %vm946, %v1044, %v846
      %v1079 = vsel %vm946, %v1046, %v848
      %v1082 = vsel %vm946, %v1048, %v850
      %v1085 = vsel %vm946, %v1050, %v852
      %v1088 = vsel %vm946, %v1052, %v854
      %v1091 = vsel %vm946, %v1054, %v856
      %v1094 = vsel %vm946, %v1056, %v858
      %v1097 = vsel %vm946, %v1058, %v860
      %v1100 = vsel %vm946, %v1060, %v862
      %v1103 = vsel %vm946, %v1062, %v864
      %v1106 = vsel %vm946, %v1064, %v866
      %v1109 = vsel %vm946, %v1066, %v868
      %v1112 = vsel %vm946, %v1068, %v870
      %v1115 = vsel %vm946, %v1070, %v872
      %v1118 = vsel %vm946, %v1072, %v874
      %v1121 = vsel %vm946, %v1074, %v876
      %v1123 = vld [vmem:[%s1] sm:$0xf]
      %v1124 = vld [vmem:[%s1 + $0x4] sm:$0xf]
      %v1125 = vld [vmem:[%s1 + $0x8] sm:$0xf]
      %v1126 = vld [vmem:[%s1 + $0xc] sm:$0xf]
      %v1127 = vld [vmem:[%s1 + $0x10] sm:$0xf]
      %v1128 = vld [vmem:[%s1 + $0x14] sm:$0xf]
      %v1129 = vld [vmem:[%s1 + $0x18] sm:$0xf]
      %v1130 = vld [vmem:[%s1 + $0x1c] sm:$0xf]
      %v1131 = vld [vmem:[%s1 + $0x20] sm:$0xf]
      %v1132 = vld [vmem:[%s1 + $0x24] sm:$0xf]
      %v1133 = vld [vmem:[%s1 + $0x28] sm:$0xf]
      %v1134 = vld [vmem:[%s1 + $0x2c] sm:$0xf]
      %v1135 = vld [vmem:[%s1 + $0x30] sm:$0xf]
      %v1136 = vld [vmem:[%s1 + $0x34] sm:$0xf]
      %v1137 = vld [vmem:[%s1 + $0x38] sm:$0xf]
      %v1138 = vld [vmem:[%s1 + $0x3c] sm:$0xf]
      %v1139 = vld [vmem:[%s1 + $0x40] sm:$0xf]
      %v1140 = vld [vmem:[%s1 + $0x44] sm:$0xf]
      %v1141 = vld [vmem:[%s1 + $0x48] sm:$0xf]
      %v1142 = vld [vmem:[%s1 + $0x4c] sm:$0xf]
      %v1143 = vld [vmem:[%s1 + $0x50] sm:$0xf]
      %v1144 = vld [vmem:[%s1 + $0x54] sm:$0xf]
      %v1145 = vld [vmem:[%s1 + $0x58] sm:$0xf]
      %v1146 = vld [vmem:[%s1 + $0x5c] sm:$0xf]
      %v1147 = vld [vmem:[%s1 + $0x60] sm:$0xf]
      %v1148 = vld [vmem:[%s1 + $0x64] sm:$0xf]
      %v1149 = vld [vmem:[%s1 + $0x68] sm:$0xf]
      %v1150 = vld [vmem:[%s1 + $0x6c] sm:$0xf]
      %v1151 = vld [vmem:[%s1 + $0x70] sm:$0xf]
      %v1152 = vld [vmem:[%s1 + $0x74] sm:$0xf]
      %v1153 = vld [vmem:[%s1 + $0x78] sm:$0xf]
      %v1154 = vld [vmem:[%s1 + $0x7c] sm:$0xf]
      %v1155 = vld [vmem:[%s1 + $0x80] sm:$0xf]
      %v1156 = vld [vmem:[%s1 + $0x84] sm:$0xf]
      %v1157 = vld [vmem:[%s1 + $0x88] sm:$0xf]
      %v1158 = vld [vmem:[%s1 + $0x8c] sm:$0xf]
      %v1195 = vunpack.c.l.b16 %v1123
      %v1196 = vunpack.c.l.b16 %v1124
      %v1197 = vunpack.c.l.b16 %v1125
      %v1198 = vunpack.c.l.b16 %v1126
      %v1199 = vunpack.c.l.b16 %v1127
      %v1200 = vunpack.c.l.b16 %v1128
      %v1201 = vunpack.c.l.b16 %v1129
      %v1202 = vunpack.c.l.b16 %v1130
      %v1203 = vunpack.c.l.b16 %v1131
      %v1204 = vunpack.c.l.b16 %v1132
      %v1205 = vunpack.c.l.b16 %v1133
      %v1206 = vunpack.c.l.b16 %v1134
      %v1207 = vunpack.c.l.b16 %v1135
      %v1208 = vunpack.c.l.b16 %v1136
      %v1209 = vunpack.c.l.b16 %v1137
      %v1210 = vunpack.c.l.b16 %v1138
      %v1211 = vunpack.c.l.b16 %v1139
      %v1212 = vunpack.c.l.b16 %v1140
      %v1213 = vunpack.c.l.b16 %v1141
      %v1214 = vunpack.c.l.b16 %v1142
      %v1215 = vunpack.c.l.b16 %v1143
      %v1216 = vunpack.c.l.b16 %v1144
      %v1217 = vunpack.c.l.b16 %v1145
      %v1218 = vunpack.c.l.b16 %v1146
      %v1219 = vunpack.c.l.b16 %v1147
      %v1220 = vunpack.c.l.b16 %v1148
      %v1221 = vunpack.c.l.b16 %v1149
      %v1222 = vunpack.c.l.b16 %v1150
      %v1223 = vunpack.c.l.b16 %v1151
      %v1224 = vunpack.c.l.b16 %v1152
      %v1225 = vunpack.c.l.b16 %v1153
      %v1226 = vunpack.c.l.b16 %v1154
      %v1227 = vunpack.c.l.b16 %v1155
      %v1228 = vunpack.c.l.b16 %v1156
      %v1229 = vunpack.c.l.b16 %v1157
      %v1230 = vunpack.c.l.b16 %v1158
      %v1231 = vpack.c.b16 %v1196, %v1195
      %v1232 = vpack.c.b16 %v1198, %v1197
      %v1233 = vpack.c.b16 %v1200, %v1199
      %v1234 = vpack.c.b16 %v1202, %v1201
      %v1235 = vpack.c.b16 %v1204, %v1203
      %v1236 = vpack.c.b16 %v1206, %v1205
      %v1237 = vpack.c.b16 %v1208, %v1207
      %v1238 = vpack.c.b16 %v1210, %v1209
      %v1239 = vpack.c.b16 %v1212, %v1211
      %v1240 = vpack.c.b16 %v1214, %v1213
      %v1241 = vpack.c.b16 %v1216, %v1215
      %v1242 = vpack.c.b16 %v1218, %v1217
      %v1243 = vpack.c.b16 %v1220, %v1219
      %v1244 = vpack.c.b16 %v1222, %v1221
      %v1245 = vpack.c.b16 %v1224, %v1223
      %v1246 = vpack.c.b16 %v1226, %v1225
      %v1247 = vpack.c.b16 %v1228, %v1227
      %v1248 = vpack.c.b16 %v1230, %v1229
      %v1268 = vsel %vm880, %v634, 0
      %v1271 = vsel %vm880, %v637, 0
      %v1274 = vsel %vm880, %v640, 0
      %v1277 = vsel %vm880, %v643, 0
      %v1280 = vsel %vm880, %v646, 0
      %v1283 = vsel %vm880, %v649, 0
      %v1286 = vsel %vm880, %v652, 0
      %v1289 = vsel %vm880, %v655, 0
      %v1292 = vsel %vm880, %v658, 0
      %v1295 = vsel %vm880, %v661, 0
      %v1298 = vsel %vm880, %v664, 0
      %v1301 = vsel %vm880, %v667, 0
      %v1304 = vsel %vm880, %v670, 0
      %v1307 = vsel %vm880, %v673, 0
      %v1310 = vsel %vm880, %v760, 0
      %v1313 = vsel %vm880, %v879, 0
      %1315 = vmatpush.bf16.msra.mxu0 %v1238
      %1316 = vmatpush.bf16.msra.mxu0 %v1237
      %1317 = vmatpush.bf16.msra.mxu0 %v1236
      %1318 = vmatpush.bf16.msra.mxu0 %v1235
      %1319 = vmatpush.bf16.msra.mxu0 %v1234
      %1320 = vmatpush.bf16.msra.mxu0 %v1233
      %1321 = vmatpush.bf16.msra.mxu0 %v1232
      %1322 = vmatpush.bf16.msra.mxu0 %v1231
      %1323 = vmatmul.bf16.gmra.mxu0 %v948
      %v1324 = vpop.f32.mrf.mxu0
      %v1325 = vadd.f32 0.0, %v1324
      %v1326 = vpop.f32.mrf.mxu0
      %v1327 = vadd.f32 0.0, %v1326
      %1328 = vmatmul.bf16.gmra.mxu0 %v951
      %v1329 = vpop.f32.mrf.mxu0
      %v1330 = vadd.f32 0.0, %v1329
      %v1331 = vpop.f32.mrf.mxu0
      %v1332 = vadd.f32 0.0, %v1331
      %1333 = vmatmul.bf16.gmra.mxu0 %v954
      %v1334 = vpop.f32.mrf.mxu0
      %v1335 = vadd.f32 0.0, %v1334
      %v1336 = vpop.f32.mrf.mxu0
      %v1337 = vadd.f32 0.0, %v1336
      %1338 = vmatmul.bf16.gmra.mxu0 %v957
      %v1339 = vpop.f32.mrf.mxu0
      %v1340 = vadd.f32 0.0, %v1339
      %v1341 = vpop.f32.mrf.mxu0
      %v1342 = vadd.f32 0.0, %v1341
      %1343 = vmatmul.bf16.gmra.mxu0 %v960
      %v1344 = vpop.f32.mrf.mxu0
      %v1345 = vadd.f32 0.0, %v1344
      %v1346 = vpop.f32.mrf.mxu0
      %v1347 = vadd.f32 0.0, %v1346
      %1348 = vmatmul.bf16.gmra.mxu0 %v963
      %v1349 = vpop.f32.mrf.mxu0
      %v1350 = vadd.f32 0.0, %v1349
      %v1351 = vpop.f32.mrf.mxu0
      %v1352 = vadd.f32 0.0, %v1351
      %1353 = vmatmul.bf16.gmra.mxu0 %v966
      %v1354 = vpop.f32.mrf.mxu0
      %v1355 = vadd.f32 0.0, %v1354
      %v1356 = vpop.f32.mrf.mxu0
      %v1357 = vadd.f32 0.0, %v1356
      %1358 = vmatmul.bf16.gmra.mxu0 %v969
      %v1359 = vpop.f32.mrf.mxu0
      %v1360 = vadd.f32 0.0, %v1359
      %v1361 = vpop.f32.mrf.mxu0
      %v1362 = vadd.f32 0.0, %v1361
      %1363 = vmatmul.bf16.gmra.mxu0 %v972
      %v1364 = vpop.f32.mrf.mxu0
      %v1365 = vadd.f32 0.0, %v1364
      %v1366 = vpop.f32.mrf.mxu0
      %v1367 = vadd.f32 0.0, %v1366
      %1368 = vmatmul.bf16.gmra.mxu0 %v975
      %v1369 = vpop.f32.mrf.mxu0
      %v1370 = vadd.f32 0.0, %v1369
      %v1371 = vpop.f32.mrf.mxu0
      %v1372 = vadd.f32 0.0, %v1371
      %1373 = vmatmul.bf16.gmra.mxu0 %v978
      %v1374 = vpop.f32.mrf.mxu0
      %v1375 = vadd.f32 0.0, %v1374
      %v1376 = vpop.f32.mrf.mxu0
      %v1377 = vadd.f32 0.0, %v1376
      %1378 = vmatmul.bf16.gmra.mxu0 %v981
      %v1379 = vpop.f32.mrf.mxu0
      %v1380 = vadd.f32 0.0, %v1379
      %v1381 = vpop.f32.mrf.mxu0
      %v1382 = vadd.f32 0.0, %v1381
      %1383 = vmatmul.bf16.gmra.mxu0 %v984
      %v1384 = vpop.f32.mrf.mxu0
      %v1385 = vadd.f32 0.0, %v1384
      %v1386 = vpop.f32.mrf.mxu0
      %v1387 = vadd.f32 0.0, %v1386
      %1388 = vmatmul.bf16.gmra.mxu0 %v987
      %v1389 = vpop.f32.mrf.mxu0
      %v1390 = vadd.f32 0.0, %v1389
      %v1391 = vpop.f32.mrf.mxu0
      %v1392 = vadd.f32 0.0, %v1391
      %1393 = vmatmul.bf16.gmra.mxu0 %v990
      %v1394 = vpop.f32.mrf.mxu0
      %v1395 = vadd.f32 0.0, %v1394
      %v1396 = vpop.f32.mrf.mxu0
      %v1397 = vadd.f32 0.0, %v1396
      %1398 = vmatmul.bf16.gmra.mxu0 %v993
      %v1399 = vpop.f32.mrf.mxu0
      %v1400 = vadd.f32 0.0, %v1399
      %v1401 = vpop.f32.mrf.mxu0
      %v1402 = vadd.f32 0.0, %v1401
      %1403 = vdwg.mxu0
      %1404 = vmatpush.bf16.msra.mxu0 %v1246
      %1405 = vmatpush.bf16.msra.mxu0 %v1245
      %1406 = vmatpush.bf16.msra.mxu0 %v1244
      %1407 = vmatpush.bf16.msra.mxu0 %v1243
      %1408 = vmatpush.bf16.msra.mxu0 %v1242
      %1409 = vmatpush.bf16.msra.mxu0 %v1241
      %1410 = vmatpush.bf16.msra.mxu0 %v1240
      %1411 = vmatpush.bf16.msra.mxu0 %v1239
      %1412 = vmatmul.bf16.gmra.mxu0 %v1076
      %v1413 = vpop.f32.mrf.mxu0
      %v1414 = vadd.f32 %v1325, %v1413
      %v1415 = vpop.f32.mrf.mxu0
      %v1416 = vadd.f32 %v1327, %v1415
      %1417 = vmatmul.bf16.gmra.mxu0 %v1079
      %v1418 = vpop.f32.mrf.mxu0
      %v1419 = vadd.f32 %v1330, %v1418
      %v1420 = vpop.f32.mrf.mxu0
      %v1421 = vadd.f32 %v1332, %v1420
      %1422 = vmatmul.bf16.gmra.mxu0 %v1082
      %v1423 = vpop.f32.mrf.mxu0
      %v1424 = vadd.f32 %v1335, %v1423
      %v1425 = vpop.f32.mrf.mxu0
      %v1426 = vadd.f32 %v1337, %v1425
      %1427 = vmatmul.bf16.gmra.mxu0 %v1085
      %v1428 = vpop.f32.mrf.mxu0
      %v1429 = vadd.f32 %v1340, %v1428
      %v1430 = vpop.f32.mrf.mxu0
      %v1431 = vadd.f32 %v1342, %v1430
      %1432 = vmatmul.bf16.gmra.mxu0 %v1088
      %v1433 = vpop.f32.mrf.mxu0
      %v1434 = vadd.f32 %v1345, %v1433
      %v1435 = vpop.f32.mrf.mxu0
      %v1436 = vadd.f32 %v1347, %v1435
      %1437 = vmatmul.bf16.gmra.mxu0 %v1091
      %v1438 = vpop.f32.mrf.mxu0
      %v1439 = vadd.f32 %v1350, %v1438
      %v1440 = vpop.f32.mrf.mxu0
      %v1441 = vadd.f32 %v1352, %v1440
      %1442 = vmatmul.bf16.gmra.mxu0 %v1094
      %v1443 = vpop.f32.mrf.mxu0
      %v1444 = vadd.f32 %v1355, %v1443
      %v1445 = vpop.f32.mrf.mxu0
      %v1446 = vadd.f32 %v1357, %v1445
      %1447 = vmatmul.bf16.gmra.mxu0 %v1097
      %v1448 = vpop.f32.mrf.mxu0
      %v1449 = vadd.f32 %v1360, %v1448
      %v1450 = vpop.f32.mrf.mxu0
      %v1451 = vadd.f32 %v1362, %v1450
      %1452 = vmatmul.bf16.gmra.mxu0 %v1100
      %v1453 = vpop.f32.mrf.mxu0
      %v1454 = vadd.f32 %v1365, %v1453
      %v1455 = vpop.f32.mrf.mxu0
      %v1456 = vadd.f32 %v1367, %v1455
      %1457 = vmatmul.bf16.gmra.mxu0 %v1103
      %v1458 = vpop.f32.mrf.mxu0
      %v1459 = vadd.f32 %v1370, %v1458
      %v1460 = vpop.f32.mrf.mxu0
      %v1461 = vadd.f32 %v1372, %v1460
      %1462 = vmatmul.bf16.gmra.mxu0 %v1106
      %v1463 = vpop.f32.mrf.mxu0
      %v1464 = vadd.f32 %v1375, %v1463
      %v1465 = vpop.f32.mrf.mxu0
      %v1466 = vadd.f32 %v1377, %v1465
      %1467 = vmatmul.bf16.gmra.mxu0 %v1109
      %v1468 = vpop.f32.mrf.mxu0
      %v1469 = vadd.f32 %v1380, %v1468
      %v1470 = vpop.f32.mrf.mxu0
      %v1471 = vadd.f32 %v1382, %v1470
      %1472 = vmatmul.bf16.gmra.mxu0 %v1112
      %v1473 = vpop.f32.mrf.mxu0
      %v1474 = vadd.f32 %v1385, %v1473
      %v1475 = vpop.f32.mrf.mxu0
      %v1476 = vadd.f32 %v1387, %v1475
      %1477 = vmatmul.bf16.gmra.mxu0 %v1115
      %v1478 = vpop.f32.mrf.mxu0
      %v1479 = vadd.f32 %v1390, %v1478
      %v1480 = vpop.f32.mrf.mxu0
      %v1481 = vadd.f32 %v1392, %v1480
      %1482 = vmatmul.bf16.gmra.mxu0 %v1118
      %v1483 = vpop.f32.mrf.mxu0
      %v1484 = vadd.f32 %v1395, %v1483
      %v1485 = vpop.f32.mrf.mxu0
      %v1486 = vadd.f32 %v1397, %v1485
      %1487 = vmatmul.bf16.gmra.mxu0 %v1121
      %v1488 = vpop.f32.mrf.mxu0
      %v1489 = vadd.f32 %v1400, %v1488
      %v1490 = vpop.f32.mrf.mxu0
      %v1491 = vadd.f32 %v1402, %v1490
      %1492 = vdwg.mxu0
      %1493 = vmatpush.bf16.msra.mxu0 0
      %1494 = vmatpush.bf16.msra.mxu0 0
      %1495 = vmatpush.bf16.msra.mxu0 0
      %1496 = vmatpush.bf16.msra.mxu0 0
      %1497 = vmatpush.bf16.msra.mxu0 0
      %1498 = vmatpush.bf16.msra.mxu0 0
      %1499 = vmatpush.bf16.msra.mxu0 %v1248
      %1500 = vmatpush.bf16.msra.mxu0 %v1247
      %1501 = vmatmul.bf16.gmra.mxu0 %v1268
      %v1502 = vpop.f32.mrf.mxu0
      %v1503 = vadd.f32 %v1414, %v1502
      %v1504 = vpop.f32.mrf.mxu0
      %v1505 = vadd.f32 %v1416, %v1504
      %1506 = vmatmul.bf16.gmra.mxu0 %v1271
      %v1507 = vpop.f32.mrf.mxu0
      %v1508 = vadd.f32 %v1419, %v1507
      %v1509 = vpop.f32.mrf.mxu0
      %v1510 = vadd.f32 %v1421, %v1509
      %1511 = vmatmul.bf16.gmra.mxu0 %v1274
      %v1512 = vpop.f32.mrf.mxu0
      %v1513 = vadd.f32 %v1424, %v1512
      %v1514 = vpop.f32.mrf.mxu0
      %v1515 = vadd.f32 %v1426, %v1514
      %1516 = vmatmul.bf16.gmra.mxu0 %v1277
      %v1517 = vpop.f32.mrf.mxu0
      %v1518 = vadd.f32 %v1429, %v1517
      %v1519 = vpop.f32.mrf.mxu0
      %v1520 = vadd.f32 %v1431, %v1519
      %1521 = vmatmul.bf16.gmra.mxu0 %v1280
      %v1522 = vpop.f32.mrf.mxu0
      %v1523 = vadd.f32 %v1434, %v1522
      %v1524 = vpop.f32.mrf.mxu0
      %v1525 = vadd.f32 %v1436, %v1524
      %1526 = vmatmul.bf16.gmra.mxu0 %v1283
      %v1527 = vpop.f32.mrf.mxu0
      %v1528 = vadd.f32 %v1439, %v1527
      %v1529 = vpop.f32.mrf.mxu0
      %v1530 = vadd.f32 %v1441, %v1529
      %1531 = vmatmul.bf16.gmra.mxu0 %v1286
      %v1532 = vpop.f32.mrf.mxu0
      %v1533 = vadd.f32 %v1444, %v1532
      %v1534 = vpop.f32.mrf.mxu0
      %v1535 = vadd.f32 %v1446, %v1534
      %1536 = vmatmul.bf16.gmra.mxu0 %v1289
      %v1537 = vpop.f32.mrf.mxu0
      %v1538 = vadd.f32 %v1449, %v1537
      %v1539 = vpop.f32.mrf.mxu0
      %v1540 = vadd.f32 %v1451, %v1539
      %1541 = vmatmul.bf16.gmra.mxu0 %v1292
      %v1542 = vpop.f32.mrf.mxu0
      %v1543 = vadd.f32 %v1454, %v1542
      %v1544 = vpop.f32.mrf.mxu0
      %v1545 = vadd.f32 %v1456, %v1544
      %1546 = vmatmul.bf16.gmra.mxu0 %v1295
      %v1547 = vpop.f32.mrf.mxu0
      %v1548 = vadd.f32 %v1459, %v1547
      %v1549 = vpop.f32.mrf.mxu0
      %v1550 = vadd.f32 %v1461, %v1549
      %1551 = vmatmul.bf16.gmra.mxu0 %v1298
      %v1552 = vpop.f32.mrf.mxu0
      %v1553 = vadd.f32 %v1464, %v1552
      %v1554 = vpop.f32.mrf.mxu0
      %v1555 = vadd.f32 %v1466, %v1554
      %1556 = vmatmul.bf16.gmra.mxu0 %v1301
      %v1557 = vpop.f32.mrf.mxu0
      %v1558 = vadd.f32 %v1469, %v1557
      %v1559 = vpop.f32.mrf.mxu0
      %v1560 = vadd.f32 %v1471, %v1559
      %1561 = vmatmul.bf16.gmra.mxu0 %v1304
      %v1562 = vpop.f32.mrf.mxu0
      %v1563 = vadd.f32 %v1474, %v1562
      %v1564 = vpop.f32.mrf.mxu0
      %v1565 = vadd.f32 %v1476, %v1564
      %1566 = vmatmul.bf16.gmra.mxu0 %v1307
      %v1567 = vpop.f32.mrf.mxu0
      %v1568 = vadd.f32 %v1479, %v1567
      %v1569 = vpop.f32.mrf.mxu0
      %v1570 = vadd.f32 %v1481, %v1569
      %1571 = vmatmul.bf16.gmra.mxu0 %v1310
      %v1572 = vpop.f32.mrf.mxu0
      %v1573 = vadd.f32 %v1484, %v1572
      %v1574 = vpop.f32.mrf.mxu0
      %v1575 = vadd.f32 %v1486, %v1574
      %1576 = vmatmul.bf16.gmra.mxu0 %v1313
      %v1577 = vpop.f32.mrf.mxu0
      %v1578 = vadd.f32 %v1489, %v1577
      %v1579 = vpop.f32.mrf.mxu0
      %v1580 = vadd.f32 %v1491, %v1579
      %1581 = vdwg.mxu0
      %v1582 = vpack.c.bf16 %v1503, %v1503
      %v1583 = vpack.c.bf16 %v1505, %v1505
      %v1584 = vpack.c.bf16 %v1508, %v1508
      %v1585 = vpack.c.bf16 %v1510, %v1510
      %v1586 = vpack.c.bf16 %v1513, %v1513
      %v1587 = vpack.c.bf16 %v1515, %v1515
      %v1588 = vpack.c.bf16 %v1518, %v1518
      %v1589 = vpack.c.bf16 %v1520, %v1520
      %v1590 = vpack.c.bf16 %v1523, %v1523
      %v1591 = vpack.c.bf16 %v1525, %v1525
      %v1592 = vpack.c.bf16 %v1528, %v1528
      %v1593 = vpack.c.bf16 %v1530, %v1530
      %v1594 = vpack.c.bf16 %v1533, %v1533
      %v1595 = vpack.c.bf16 %v1535, %v1535
      %v1596 = vpack.c.bf16 %v1538, %v1538
      %v1597 = vpack.c.bf16 %v1540, %v1540
      %v1598 = vpack.c.bf16 %v1543, %v1543
      %v1599 = vpack.c.bf16 %v1545, %v1545
      %v1600 = vpack.c.bf16 %v1548, %v1548
      %v1601 = vpack.c.bf16 %v1550, %v1550
      %v1602 = vpack.c.bf16 %v1553, %v1553
      %v1603 = vpack.c.bf16 %v1555, %v1555
      %v1604 = vpack.c.bf16 %v1558, %v1558
      %v1605 = vpack.c.bf16 %v1560, %v1560
      %v1606 = vpack.c.bf16 %v1563, %v1563
      %v1607 = vpack.c.bf16 %v1565, %v1565
      %v1608 = vpack.c.bf16 %v1568, %v1568
      %v1609 = vpack.c.bf16 %v1570, %v1570
      %v1610 = vpack.c.bf16 %v1573, %v1573
      %v1611 = vpack.c.bf16 %v1575, %v1575
      %v1612 = vpack.c.bf16 %v1578, %v1578
      %v1613 = vpack.c.bf16 %v1580, %v1580
      %vm1614 = vcmask 257024
      %1615 = vst.msk [vmem:[%s204] sm:$0xf] %vm1614, %v1582
      %1616 = vst.msk [vmem:[%s204 + $0x4] sm:$0xf] %vm1614, %v1583
      %1617 = vst.msk [vmem:[%s204 + $0x8] sm:$0xf] %vm1614, %v1584
      %1618 = vst.msk [vmem:[%s204 + $0xc] sm:$0xf] %vm1614, %v1585
      %1619 = vst.msk [vmem:[%s204 + $0x10] sm:$0xf] %vm1614, %v1586
      %1620 = vst.msk [vmem:[%s204 + $0x14] sm:$0xf] %vm1614, %v1587
      %1621 = vst.msk [vmem:[%s204 + $0x18] sm:$0xf] %vm1614, %v1588
      %1622 = vst.msk [vmem:[%s204 + $0x1c] sm:$0xf] %vm1614, %v1589
      %1623 = vst.msk [vmem:[%s204 + $0x20] sm:$0xf] %vm1614, %v1590
      %1624 = vst.msk [vmem:[%s204 + $0x24] sm:$0xf] %vm1614, %v1591
      %1625 = vst.msk [vmem:[%s204 + $0x28] sm:$0xf] %vm1614, %v1592
      %1626 = vst.msk [vmem:[%s204 + $0x2c] sm:$0xf] %vm1614, %v1593
      %1627 = vst.msk [vmem:[%s204 + $0x30] sm:$0xf] %vm1614, %v1594
      %1628 = vst.msk [vmem:[%s204 + $0x34] sm:$0xf] %vm1614, %v1595
      %1629 = vst.msk [vmem:[%s204 + $0x38] sm:$0xf] %vm1614, %v1596
      %1630 = vst.msk [vmem:[%s204 + $0x3c] sm:$0xf] %vm1614, %v1597
      %1631 = vst.msk [vmem:[%s204 + $0x40] sm:$0xf] %vm1614, %v1598
      %1632 = vst.msk [vmem:[%s204 + $0x44] sm:$0xf] %vm1614, %v1599
      %1633 = vst.msk [vmem:[%s204 + $0x48] sm:$0xf] %vm1614, %v1600
      %1634 = vst.msk [vmem:[%s204 + $0x4c] sm:$0xf] %vm1614, %v1601
      %1635 = vst.msk [vmem:[%s204 + $0x50] sm:$0xf] %vm1614, %v1602
      %1636 = vst.msk [vmem:[%s204 + $0x54] sm:$0xf] %vm1614, %v1603
      %1637 = vst.msk [vmem:[%s204 + $0x58] sm:$0xf] %vm1614, %v1604
      %1638 = vst.msk [vmem:[%s204 + $0x5c] sm:$0xf] %vm1614, %v1605
      %1639 = vst.msk [vmem:[%s204 + $0x60] sm:$0xf] %vm1614, %v1606
      %1640 = vst.msk [vmem:[%s204 + $0x64] sm:$0xf] %vm1614, %v1607
      %1641 = vst.msk [vmem:[%s204 + $0x68] sm:$0xf] %vm1614, %v1608
      %1642 = vst.msk [vmem:[%s204 + $0x6c] sm:$0xf] %vm1614, %v1609
      %1643 = vst.msk [vmem:[%s204 + $0x70] sm:$0xf] %vm1614, %v1610
      %1644 = vst.msk [vmem:[%s204 + $0x74] sm:$0xf] %vm1614, %v1611
      %1645 = vst.msk [vmem:[%s204 + $0x78] sm:$0xf] %vm1614, %v1612
      %1646 = vst.msk [vmem:[%s204 + $0x7c] sm:$0xf] %vm1614, %v1613
      %v1647 = vunpack.c.l.bf16 %v1582
      %v1648 = vunpack.c.l.bf16 %v1583
      %v1649 = vunpack.c.l.bf16 %v1584
      %v1650 = vunpack.c.l.bf16 %v1585
      %v1651 = vunpack.c.l.bf16 %v1586
      %v1652 = vunpack.c.l.bf16 %v1587
      %v1653 = vunpack.c.l.bf16 %v1588
      %v1654 = vunpack.c.l.bf16 %v1589
      %v1655 = vunpack.c.l.bf16 %v1590
      %v1656 = vunpack.c.l.bf16 %v1591
      %v1657 = vunpack.c.l.bf16 %v1592
      %v1658 = vunpack.c.l.bf16 %v1593
      %v1659 = vunpack.c.l.bf16 %v1594
      %v1660 = vunpack.c.l.bf16 %v1595
      %v1661 = vunpack.c.l.bf16 %v1596
      %v1662 = vunpack.c.l.bf16 %v1597
      %v1663 = vunpack.c.l.bf16 %v1598
      %v1664 = vunpack.c.l.bf16 %v1599
      %v1665 = vunpack.c.l.bf16 %v1600
      %v1666 = vunpack.c.l.bf16 %v1601
      %v1667 = vunpack.c.l.bf16 %v1602
      %v1668 = vunpack.c.l.bf16 %v1603
      %v1669 = vunpack.c.l.bf16 %v1604
      %v1670 = vunpack.c.l.bf16 %v1605
      %v1671 = vunpack.c.l.bf16 %v1606
      %v1672 = vunpack.c.l.bf16 %v1607
      %v1673 = vunpack.c.l.bf16 %v1608
      %v1674 = vunpack.c.l.bf16 %v1609
      %v1675 = vunpack.c.l.bf16 %v1610
      %v1676 = vunpack.c.l.bf16 %v1611
      %v1677 = vunpack.c.l.bf16 %v1612
      %v1678 = vunpack.c.l.bf16 %v1613
      %v1679 = vsel %vm880, %v1647, 0.0
      %v1680 = vsel %vm880, %v1648, 0.0
      %v1681 = vadd.f32 %v1679, %v1680
      %v1682 = vsel %vm880, %v1649, 0.0
      %v1683 = vadd.f32 %v1681, %v1682
      %v1684 = vsel %vm880, %v1650, 0.0
      %v1685 = vadd.f32 %v1683, %v1684
      %v1686 = vsel %vm880, %v1651, 0.0
      %v1687 = vadd.f32 %v1685, %v1686
      %v1688 = vsel %vm880, %v1652, 0.0
      %v1689 = vadd.f32 %v1687, %v1688
      %v1690 = vsel %vm880, %v1653, 0.0
      %v1691 = vadd.f32 %v1689, %v1690
      %v1692 = vsel %vm880, %v1654, 0.0
      %v1693 = vadd.f32 %v1691, %v1692
      %v1694 = vsel %vm880, %v1655, 0.0
      %v1695 = vadd.f32 %v1693, %v1694
      %v1696 = vsel %vm880, %v1656, 0.0
      %v1697 = vadd.f32 %v1695, %v1696
      %v1698 = vsel %vm880, %v1657, 0.0
      %v1699 = vadd.f32 %v1697, %v1698
      %v1700 = vsel %vm880, %v1658, 0.0
      %v1701 = vadd.f32 %v1699, %v1700
      %v1702 = vsel %vm880, %v1659, 0.0
      %v1703 = vadd.f32 %v1701, %v1702
      %v1704 = vsel %vm880, %v1660, 0.0
      %v1705 = vadd.f32 %v1703, %v1704
      %v1706 = vsel %vm880, %v1661, 0.0
      %v1707 = vadd.f32 %v1705, %v1706
      %v1708 = vsel %vm880, %v1662, 0.0
      %v1709 = vadd.f32 %v1707, %v1708
      %v1710 = vsel %vm880, %v1663, 0.0
      %v1711 = vadd.f32 %v1709, %v1710
      %v1712 = vsel %vm880, %v1664, 0.0
      %v1713 = vadd.f32 %v1711, %v1712
      %v1714 = vsel %vm880, %v1665, 0.0
      %v1715 = vadd.f32 %v1713, %v1714
      %v1716 = vsel %vm880, %v1666, 0.0
      %v1717 = vadd.f32 %v1715, %v1716
      %v1718 = vsel %vm880, %v1667, 0.0
      %v1719 = vadd.f32 %v1717, %v1718
      %v1720 = vsel %vm880, %v1668, 0.0
      %v1721 = vadd.f32 %v1719, %v1720
      %v1722 = vsel %vm880, %v1669, 0.0
      %v1723 = vadd.f32 %v1721, %v1722
      %v1724 = vsel %vm880, %v1670, 0.0
      %v1725 = vadd.f32 %v1723, %v1724
      %v1726 = vsel %vm880, %v1671, 0.0
      %v1727 = vadd.f32 %v1725, %v1726
      %v1728 = vsel %vm880, %v1672, 0.0
      %v1729 = vadd.f32 %v1727, %v1728
      %v1730 = vsel %vm880, %v1673, 0.0
      %v1731 = vadd.f32 %v1729, %v1730
      %v1732 = vsel %vm880, %v1674, 0.0
      %v1733 = vadd.f32 %v1731, %v1732
      %v1734 = vsel %vm880, %v1675, 0.0
      %v1735 = vadd.f32 %v1733, %v1734
      %v1736 = vsel %vm880, %v1676, 0.0
      %v1737 = vadd.f32 %v1735, %v1736
      %v1738 = vsel %vm880, %v1677, 0.0
      %v1739 = vadd.f32 %v1737, %v1738
      %v1740 = vsel %vm880, %v1678, 0.0
      %v1741 = vadd.f32 %v1739, %v1740
      %v1742 = vrot.slane %v1741, 4
      %v1743 = vadd.f32 %v1741, %v1742
      %v1744 = vrot.slane %v1743, 2
      %v1745 = vadd.f32 %v1743, %v1744
      %v1746 = vrot.slane %v1745, 1
      %v1747 = vadd.f32 %v1745, %v1746
      %v1748 = vmul.f32 %v1647, %v1647
      %v1749 = vmul.f32 %v1648, %v1648
      %v1750 = vmul.f32 %v1649, %v1649
      %v1751 = vmul.f32 %v1650, %v1650
      %v1752 = vmul.f32 %v1651, %v1651
      %v1753 = vmul.f32 %v1652, %v1652
      %v1754 = vmul.f32 %v1653, %v1653
      %v1755 = vmul.f32 %v1654, %v1654
      %v1756 = vmul.f32 %v1655, %v1655
      %v1757 = vmul.f32 %v1656, %v1656
      %v1758 = vmul.f32 %v1657, %v1657
      %v1759 = vmul.f32 %v1658, %v1658
      %v1760 = vmul.f32 %v1659, %v1659
      %v1761 = vmul.f32 %v1660, %v1660
      %v1762 = vmul.f32 %v1661, %v1661
      %v1763 = vmul.f32 %v1662, %v1662
      %v1764 = vmul.f32 %v1663, %v1663
      %v1765 = vmul.f32 %v1664, %v1664
      %v1766 = vmul.f32 %v1665, %v1665
      %v1767 = vmul.f32 %v1666, %v1666
      %v1768 = vmul.f32 %v1667, %v1667
      %v1769 = vmul.f32 %v1668, %v1668
      %v1770 = vmul.f32 %v1669, %v1669
      %v1771 = vmul.f32 %v1670, %v1670
      %v1772 = vmul.f32 %v1671, %v1671
      %v1773 = vmul.f32 %v1672, %v1672
      %v1774 = vmul.f32 %v1673, %v1673
      %v1775 = vmul.f32 %v1674, %v1674
      %v1776 = vmul.f32 %v1675, %v1675
      %v1777 = vmul.f32 %v1676, %v1676
      %v1778 = vmul.f32 %v1677, %v1677
      %v1779 = vmul.f32 %v1678, %v1678
      %v1780 = vsel %vm880, %v1748, 0.0
      %v1781 = vsel %vm880, %v1749, 0.0
      %v1782 = vadd.f32 %v1780, %v1781
      %v1783 = vsel %vm880, %v1750, 0.0
      %v1784 = vadd.f32 %v1782, %v1783
      %v1785 = vsel %vm880, %v1751, 0.0
      %v1786 = vadd.f32 %v1784, %v1785
      %v1787 = vsel %vm880, %v1752, 0.0
      %v1788 = vadd.f32 %v1786, %v1787
      %v1789 = vsel %vm880, %v1753, 0.0
      %v1790 = vadd.f32 %v1788, %v1789
      %v1791 = vsel %vm880, %v1754, 0.0
      %v1792 = vadd.f32 %v1790, %v1791
      %v1793 = vsel %vm880, %v1755, 0.0
      %v1794 = vadd.f32 %v1792, %v1793
      %v1795 = vsel %vm880, %v1756, 0.0
      %v1796 = vadd.f32 %v1794, %v1795
      %v1797 = vsel %vm880, %v1757, 0.0
      %v1798 = vadd.f32 %v1796, %v1797
      %v1799 = vsel %vm880, %v1758, 0.0
      %v1800 = vadd.f32 %v1798, %v1799
      %v1801 = vsel %vm880, %v1759, 0.0
      %v1802 = vadd.f32 %v1800, %v1801
      %v1803 = vsel %vm880, %v1760, 0.0
      %v1804 = vadd.f32 %v1802, %v1803
      %v1805 = vsel %vm880, %v1761, 0.0
      %v1806 = vadd.f32 %v1804, %v1805
      %v1807 = vsel %vm880, %v1762, 0.0
      %v1808 = vadd.f32 %v1806, %v1807
      %v1809 = vsel %vm880, %v1763, 0.0
      %v1810 = vadd.f32 %v1808, %v1809
      %v1811 = vsel %vm880, %v1764, 0.0
      %v1812 = vadd.f32 %v1810, %v1811
      %v1813 = vsel %vm880, %v1765, 0.0
      %v1814 = vadd.f32 %v1812, %v1813
      %v1815 = vsel %vm880, %v1766, 0.0
      %v1816 = vadd.f32 %v1814, %v1815
      %v1817 = vsel %vm880, %v1767, 0.0
      %v1818 = vadd.f32 %v1816, %v1817
      %v1819 = vsel %vm880, %v1768, 0.0
      %v1820 = vadd.f32 %v1818, %v1819
      %v1821 = vsel %vm880, %v1769, 0.0
      %v1822 = vadd.f32 %v1820, %v1821
      %v1823 = vsel %vm880, %v1770, 0.0
      %v1824 = vadd.f32 %v1822, %v1823
      %v1825 = vsel %vm880, %v1771, 0.0
      %v1826 = vadd.f32 %v1824, %v1825
      %v1827 = vsel %vm880, %v1772, 0.0
      %v1828 = vadd.f32 %v1826, %v1827
      %v1829 = vsel %vm880, %v1773, 0.0
      %v1830 = vadd.f32 %v1828, %v1829
      %v1831 = vsel %vm880, %v1774, 0.0
      %v1832 = vadd.f32 %v1830, %v1831
      %v1833 = vsel %vm880, %v1775, 0.0
      %v1834 = vadd.f32 %v1832, %v1833
      %v1835 = vsel %vm880, %v1776, 0.0
      %v1836 = vadd.f32 %v1834, %v1835
      %v1837 = vsel %vm880, %v1777, 0.0
      %v1838 = vadd.f32 %v1836, %v1837
      %v1839 = vsel %vm880, %v1778, 0.0
      %v1840 = vadd.f32 %v1838, %v1839
      %v1841 = vsel %vm880, %v1779, 0.0
      %v1842 = vadd.f32 %v1840, %v1841
      %v1843 = vrot.slane %v1842, 4
      %v1844 = vadd.f32 %v1842, %v1843
      %v1845 = vrot.slane %v1844, 2
      %v1846 = vadd.f32 %v1844, %v1845
      %v1847 = vrot.slane %v1846, 1
      %v1848 = vadd.f32 %v1846, %v1847
      %vm1849 = vcmask 1040384
      %v1850 = vsel %vm1849, %v1747, %v1848
      %vm1851 = vcmask 254976
      %1852 = vst.msk [vmem:[%s212] sm:$0x3] %vm1851, %v1850
      %s1853 = smul.u32 32, %s20
      %p1854 = scmp.lt.s32.totalorder %s19, 1
      %s1855 = scalar_select %p1854, %s19, 1
      %p1856 = scmp.lt.s32.totalorder %s1853, 31
      %s1857 = scalar_select %p1856, %s1853, 31
      %s1858 = smul.addr %s1855, 32
      %s1859 = sadd.s32 %s1857, %s1858
      %s1860 = smul.addr %s1859, 4
      %s1861 = scalar_lea.vmem %s2, %s1860
      %p1862 = scmp.lt.s32.totalorder %s19, 1
      %s1863 = scalar_select %p1862, %s19, 1
      %p1864 = scmp.lt.s32.totalorder %s20, 0
      %s1865 = scalar_select %p1864, %s20, 0
      %s1866 = sadd.s32 %s1865, %s1863
      %s1867 = smul.addr %s1866, 2
      %s1868 = scalar_lea.vmem %s3, %s1867
      // Predicated region
      $region29: #{forward_single.12} parent=27 // pred_check
        %p1869 = pneg %p94
      $region30: #{forward_single.12} parent=27 // pred_check_branch
        %1871 = sbr.rel (%p1869) target = $region32
      $region31: #{forward_single.12} parent=27 // pred_region
        %s1872 = smul.u32 32, %s20
      $region32: #{forward_single.12} parent=27 // pred_fallthru
        _
      // Predicated region
      $region33: #{forward_single.12} parent=27 // pred_check
        %p1873 = pneg %p122
      $region34: #{forward_single.12} parent=27 // pred_check_branch
        %1875 = sbr.rel (%p1873) target = $region36
      $region35: #{forward_single.12} parent=27 // pred_region
        _
      $region36: #{forward_single.12} parent=27 // pred_fallthru
        _
    $region28: #{forward_single.12} parent=5 // pred_fallthru
      _
    %p1876 = scmp.le.s32.totalorder 2, %s10
    // Predicated region
    $region37: #{forward_single.12} parent=5 // pred_check
      %p1877 = pneg %p1876
    $region38: #{forward_single.12} parent=5 // pred_check_branch
      %1879 = sbr.rel (%p1877) target = $region40
    $region39: #{forward_single.12} parent=5 // pred_region
      %s1880 = ssub.s32 %s10, 2
      // Predicated region
      $region41: #{forward_single.12} parent=39 // pred_check
        %p1881 = pneg %p100
      $region42: #{forward_single.12} parent=39 // pred_check_branch
        %1883 = sbr.rel (%p1881) target = $region44
      $region43: #{forward_single.12} parent=39 // pred_region
        %s1884 = smul.u32 32, %s22
        %p1885 = scmp.lt.s32.totalorder %s21, 1
        %s1886 = scalar_select %p1885, %s21, 1
        %p1887 = scmp.lt.s32.totalorder %s1884, 31
        %s1888 = scalar_select %p1887, %s1884, 31
        %s1889 = smul.addr %s1886, 32
        %s1890 = sadd.s32 %s1888, %s1889
        %s1891 = smul.addr %s1890, 4
        %s1892 = scalar_lea.vmem %s2, %s1891
      $region44: #{forward_single.12} parent=39 // pred_fallthru
        _
      // Predicated region
      $region45: #{forward_single.12} parent=39 // pred_check
        %p1893 = pneg %p128
      $region46: #{forward_single.12} parent=39 // pred_check_branch
        %1895 = sbr.rel (%p1893) target = $region48
      $region47: #{forward_single.12} parent=39 // pred_region
        %p1896 = scmp.lt.s32.totalorder %s21, 1
        %s1897 = scalar_select %p1896, %s21, 1
        %p1898 = scmp.lt.s32.totalorder %s22, 0
        %s1899 = scalar_select %p1898, %s22, 0
        %s1900 = sadd.s32 %s1899, %s1897
        %s1901 = smul.addr %s1900, 2
        %s1902 = scalar_lea.vmem %s3, %s1901
      $region48: #{forward_single.12} parent=39 // pred_fallthru
        _
    $region40: #{forward_single.12} parent=5 // pred_fallthru
      _
  $region6: #{forward_single.12} parent=0 // loop_footer
    %s14 = sadd.s32 1, %s10
  $region7: #{forward_single.12} parent=0 // loop_footer_branch
    %9 = sbr.rel target = $region3
  $region8: #{forward_single.12} parent=0 // loop_exit
    _

// kernel: forward_single.13
$region0: #{forward_single.13}
  #allocation0 [shape = 'u32[]', space=smem, size = 0x4, offset = 0x4, fixed_abs, tag = 'smem constant byte address 0x4 - core index']
  #allocation1 [shape = 'u32[72,128]{1,0:T(1,128)}', space=vmem, size = 0x9000, scoped, tag = 'internal scratch']
  %s0 = inlined_call_operand.vmem [shape: bf16[2,18,18,32], index: 0, kind: input, shape index: {}]
  %s1 = inlined_call_operand.vmem [shape: bf16[288,32], index: 1, kind: input, shape index: {}]
  %s2 = inlined_call_operand.vmem [shape: f32[2,1,32], index: 2, kind: input, shape index: {}]
  %s3 = inlined_call_operand.vmem [shape: f32[2,1,32], index: 3, kind: input, shape index: {}]
  %s4 = inlined_call_operand.vmem [shape: bf16[2,256,32], index: 4, kind: output, shape index: {0}]
  %s5 = inlined_call_operand.vmem [shape: f32[2,1,2,32], index: 5, kind: output, shape index: {1}]
  %6 = xla_tuple %s4, %s5
  %s7 = sld [smem:[#allocation0]]
  $region57: #{forward_single.13} parent=0
    _
  %s9 = ssub.s32 1, %s7
  %s10 = scalar_select 0, %s9, %s7
  loop: start=0, step=1, limit=4
  $region2: #{forward_single.13} parent=0 // loop_pre_header
    _
  $region3: #{forward_single.13} parent=0 // loop_header
    %s12 = sphi 0, %s16
    %p13 = scmp.ge.s32.totalorder %s12, 4
    %s19 = sphi 0, %s31
    %s20 = sphi 0, %s27
    %s21 = sphi 0, %s19
    %s22 = sphi 0, %s20
    %s23 = sphi 0, %s21
    %s24 = sphi 0, %s22
    %s34 = sphi 0, %s36
    %s37 = sphi 0, %s34
    %s38 = sphi 0, %s37
    %s54 = sphi 0, %s38
    %s58 = sphi 0, %s58
    %s60 = sphi 0, %s58
    %s61 = sphi 0, %s60
    %s75 = sphi 0, %s61
    %s81 = sphi 0, %s83
    %s84 = sphi 0, %s81
    %s85 = sphi 0, %s84
    %s101 = sphi 0, %s85
    %s107 = sphi 0, %s109
    %s110 = sphi 0, %s107
    %s111 = sphi 0, %s110
    %s127 = sphi 0, %s111
    %s135 = sphi 0, %s137
    %s138 = sphi 0, %s135
    %s139 = sphi 0, %s138
    %s155 = sphi 0, %s139
    %s163 = sphi 0, %s165
    %s166 = sphi 0, %s163
    %s167 = sphi 0, %s166
    %s183 = sphi 0, %s167
  $region4: #{forward_single.13} parent=0 // loop_header_branch
    %15 = sbr.rel (%p13) target = $region8
  $region5: #{forward_single.13} parent=0 // loop_body
    %s17 = ssub.s32 %s12, 1
    %s18 = ssub.s32 %s12, 2
    %s25 = sadd.s32 1, %s20
    %p26 = scmp.ge.s32.totalorder %s25, 1
    %s27 = scalar_select %p26, 0, %s25
    %s28 = sadd.s32 1, %s19
    %s29 = scalar_select %p26, %s28, %s19
    %p30 = scmp.ge.s32.totalorder %s29, 2
    %s31 = scalar_select %p30, 0, %s29
    %s32 = ssub.s32 %s19, %s31
    %p33 = scmp.eq.s32.totalorder %s32, 0
    %s35 = sadd.s32 %s34, 1
    %s36 = scalar_select %p33, %s34, %s35
    %p39 = pneg %p33
    %p40 = scmp.eq.s32.totalorder %s12, 1
    %p41 = por %p39, %p40
    %p42 = scmp.ne.s32.totalorder %s34, %s37
    %p43 = scmp.eq.s32.totalorder %s12, 0
    %p44 = por %p42, %p43
    %p45 = scmp.ne.s32.totalorder %s34, %s37
    %p46 = scmp.eq.s32.totalorder %s17, 1
    %p47 = por %p45, %p46
    %p48 = scmp.ne.s32.totalorder %s37, %s38
    %p49 = scmp.eq.s32.totalorder %s17, 0
    %p50 = por %p48, %p49
    %p51 = scmp.ne.s32.totalorder %s37, %s38
    %p52 = scmp.eq.s32.totalorder %s18, 1
    %p53 = por %p51, %p52
    %p55 = scmp.ne.s32.totalorder %s38, %s54
    %p56 = scmp.eq.s32.totalorder %s18, 0
    %p57 = por %p55, %p56
    %s59 = sadd.s32 %s58, 1
    %p62 = scmp.eq.s32.totalorder %s12, 1
    %p63 = scmp.ne.s32.totalorder %s58, %s60
    %p64 = scmp.eq.s32.totalorder %s12, 0
    %p65 = por %p63, %p64
    %p66 = scmp.ne.s32.totalorder %s58, %s60
    %p67 = scmp.eq.s32.totalorder %s17, 1
    %p68 = por %p66, %p67
    %p69 = scmp.ne.s32.totalorder %s60, %s61
    %p70 = scmp.eq.s32.totalorder %s17, 0
    %p71 = por %p69, %p70
    %p72 = scmp.ne.s32.totalorder %s60, %s61
    %p73 = scmp.eq.s32.totalorder %s18, 1
    %p74 = por %p72, %p73
    %p76 = scmp.ne.s32.totalorder %s61, %s75
    %p77 = scmp.eq.s32.totalorder %s18, 0
    %p78 = por %p76, %p77
    %s79 = ssub.s32 %s19, %s31
    %p80 = scmp.eq.s32.totalorder %s79, 0
    %s82 = sadd.s32 %s81, 1
    %s83 = scalar_select %p80, %s81, %s82
    %p86 = pneg %p80
    %p87 = scmp.eq.s32.totalorder %s12, 1
    %p88 = por %p86, %p87
    %p89 = scmp.ne.s32.totalorder %s81, %s84
    %p90 = scmp.eq.s32.totalorder %s12, 0
    %p91 = por %p89, %p90
    %p92 = scmp.ne.s32.totalorder %s81, %s84
    %p93 = scmp.eq.s32.totalorder %s17, 1
    %p94 = por %p92, %p93
    %p95 = scmp.ne.s32.totalorder %s84, %s85
    %p96 = scmp.eq.s32.totalorder %s17, 0
    %p97 = por %p95, %p96
    %p98 = scmp.ne.s32.totalorder %s84, %s85
    %p99 = scmp.eq.s32.totalorder %s18, 1
    %p100 = por %p98, %p99
    %p102 = scmp.ne.s32.totalorder %s85, %s101
    %p103 = scmp.eq.s32.totalorder %s18, 0
    %p104 = por %p102, %p103
    %s105 = ssub.s32 %s19, %s31
    %p106 = scmp.eq.s32.totalorder %s105, 0
    %s108 = sadd.s32 %s107, 1
    %s109 = scalar_select %p106, %s107, %s108
    %p112 = pneg %p106
    %p113 = scmp.eq.s32.totalorder %s12, 1
    %p114 = por %p112, %p113
    %p115 = scmp.ne.s32.totalorder %s107, %s110
    %p116 = scmp.eq.s32.totalorder %s12, 0
    %p117 = por %p115, %p116
    %p118 = scmp.ne.s32.totalorder %s107, %s110
    %p119 = scmp.eq.s32.totalorder %s17, 1
    %p120 = por %p118, %p119
    %p121 = scmp.ne.s32.totalorder %s110, %s111
    %p122 = scmp.eq.s32.totalorder %s17, 0
    %p123 = por %p121, %p122
    %p124 = scmp.ne.s32.totalorder %s110, %s111
    %p125 = scmp.eq.s32.totalorder %s18, 1
    %p126 = por %p124, %p125
    %p128 = scmp.ne.s32.totalorder %s111, %s127
    %p129 = scmp.eq.s32.totalorder %s18, 0
    %p130 = por %p128, %p129
    %s131 = ssub.s32 %s19, %s31
    %s132 = ssub.s32 %s20, %s27
    %s133 = sor.u32 %s131, %s132
    %p134 = scmp.eq.s32.totalorder %s133, 0
    %s136 = sadd.s32 %s135, 1
    %s137 = scalar_select %p134, %s135, %s136
    %p140 = pneg %p134
    %p141 = scmp.eq.s32.totalorder %s12, 1
    %p142 = por %p140, %p141
    %p143 = scmp.ne.s32.totalorder %s135, %s138
    %p144 = scmp.eq.s32.totalorder %s12, 0
    %p145 = por %p143, %p144
    %p146 = scmp.ne.s32.totalorder %s135, %s138
    %p147 = scmp.eq.s32.totalorder %s17, 1
    %p148 = por %p146, %p147
    %p149 = scmp.ne.s32.totalorder %s138, %s139
    %p150 = scmp.eq.s32.totalorder %s17, 0
    %p151 = por %p149, %p150
    %p152 = scmp.ne.s32.totalorder %s138, %s139
    %p153 = scmp.eq.s32.totalorder %s18, 1
    %p154 = por %p152, %p153
    %p156 = scmp.ne.s32.totalorder %s139, %s155
    %p157 = scmp.eq.s32.totalorder %s18, 0
    %p158 = por %p156, %p157
    %s159 = ssub.s32 %s19, %s31
    %s160 = ssub.s32 %s20, %s27
    %s161 = sor.u32 %s159, %s160
    %p162 = scmp.eq.s32.totalorder %s161, 0
    %s164 = sadd.s32 %s163, 1
    %s165 = scalar_select %p162, %s163, %s164
    %p168 = pneg %p162
    %p169 = scmp.eq.s32.totalorder %s12, 1
    %p170 = por %p168, %p169
    %p171 = scmp.ne.s32.totalorder %s163, %s166
    %p172 = scmp.eq.s32.totalorder %s12, 0
    %p173 = por %p171, %p172
    %p174 = scmp.ne.s32.totalorder %s163, %s166
    %p175 = scmp.eq.s32.totalorder %s17, 1
    %p176 = por %p174, %p175
    %p177 = scmp.ne.s32.totalorder %s166, %s167
    %p178 = scmp.eq.s32.totalorder %s17, 0
    %p179 = por %p177, %p178
    %p180 = scmp.ne.s32.totalorder %s166, %s167
    %p181 = scmp.eq.s32.totalorder %s18, 1
    %p182 = por %p180, %p181
    %p184 = scmp.ne.s32.totalorder %s167, %s183
    %p185 = scmp.eq.s32.totalorder %s18, 0
    %p186 = por %p184, %p185
    %p187 = scmp.le.s32.totalorder 1, %s12
    %p188 = scmp.lt.s32.totalorder %s12, 3
    %p189 = pnand %p187, %p188
    %p190 = pneg %p189
    // Predicated region
    $region9: #{forward_single.13} parent=5 // pred_check
      _
    $region10: #{forward_single.13} parent=5 // pred_check_branch
      %192 = sbr.rel (%p189) target = $region12
    $region11: #{forward_single.13} parent=5 // pred_region
      %s193 = ssub.s32 %s12, 1
      // Predicated region
      $region13: #{forward_single.13} parent=11 // pred_check
        %p194 = pneg %p71
      $region14: #{forward_single.13} parent=11 // pred_check_branch
        %196 = sbr.rel (%p194) target = $region16
      $region15: #{forward_single.13} parent=11 // pred_region
        _
      $region16: #{forward_single.13} parent=11 // pred_fallthru
        _
    $region12: #{forward_single.13} parent=5 // pred_fallthru
      _
    %p197 = scmp.lt.s32.totalorder %s12, 2
    // Predicated region
    $region17: #{forward_single.13} parent=5 // pred_check
      %p198 = pneg %p197
    $region18: #{forward_single.13} parent=5 // pred_check_branch
      %200 = sbr.rel (%p198) target = $region20
    $region19: #{forward_single.13} parent=5 // pred_region
      // Predicated region
      $region21: #{forward_single.13} parent=19 // pred_check
        %p201 = pneg %p44
      $region22: #{forward_single.13} parent=19 // pred_check_branch
        %203 = sbr.rel (%p201) target = $region24
      $region23: #{forward_single.13} parent=19 // pred_region
        %p204 = scmp.lt.s32.totalorder %s19, 1
        %s205 = scalar_select %p204, %s19, 1
        %s206 = smul.addr %s205, 54
        %s207 = smul.addr %s206, 4
        %s208 = scalar_lea.vmem %s0, %s207
      $region24: #{forward_single.13} parent=19 // pred_fallthru
        _
      // Predicated region
      $region25: #{forward_single.13} parent=19 // pred_check
        %p209 = pneg %p91
      $region26: #{forward_single.13} parent=19 // pred_check_branch
        %211 = sbr.rel (%p209) target = $region28
      $region27: #{forward_single.13} parent=19 // pred_region
        %p212 = scmp.lt.s32.totalorder %s19, 1
        %s213 = scalar_select %p212, %s19, 1
        %s214 = scalar_lea.vmem %s2, %s213
      $region28: #{forward_single.13} parent=19 // pred_fallthru
        _
      // Predicated region
      $region29: #{forward_single.13} parent=19 // pred_check
        %p215 = pneg %p117
      $region30: #{forward_single.13} parent=19 // pred_check_branch
        %217 = sbr.rel (%p215) target = $region32
      $region31: #{forward_single.13} parent=19 // pred_region
        %p218 = scmp.lt.s32.totalorder %s19, 1
        %s219 = scalar_select %p218, %s19, 1
        %s220 = scalar_lea.vmem %s3, %s219
      $region32: #{forward_single.13} parent=19 // pred_fallthru
        _
    $region20: #{forward_single.13} parent=5 // pred_fallthru
      _
    %p221 = scmp.le.s32.totalorder 1, %s12
    %p222 = scmp.lt.s32.totalorder %s12, 3
    %p223 = pnand %p221, %p222
    %p224 = pneg %p223
    // Predicated region
    $region33: #{forward_single.13} parent=5 // pred_check
      _
    $region34: #{forward_single.13} parent=5 // pred_check_branch
      %226 = sbr.rel (%p223) target = $region36
    $region35: #{forward_single.13} parent=5 // pred_region
      %s227 = ssub.s32 %s12, 1
      %p228 = scmp.lt.s32.totalorder %s21, 1
      %s229 = scalar_select %p228, %s21, 1
      %s230 = smul.addr %s229, 54
      %s231 = smul.addr %s230, 4
      %s232 = scalar_lea.vmem %s0, %s231
      %p233 = pneg %p50
      %p234 = pneg %p47
      %p235 = pneg %p71
      %p236 = pneg %p68
      %p237 = scmp.lt.s32.totalorder %s21, 1
      %s238 = scalar_select %p237, %s21, 1
      %s239 = scalar_lea.vmem %s2, %s238
      %p240 = pneg %p97
      %p241 = pneg %p94
      %p242 = scmp.lt.s32.totalorder %s21, 1
      %s243 = scalar_select %p242, %s21, 1
      %s244 = scalar_lea.vmem %s3, %s243
      %p245 = pneg %p123
      %p246 = pneg %p120
      %p247 = pneg %p151
      %p248 = pneg %p148
      %s249 = smul.u32 32, %s22
      %p250 = scmp.lt.s32.totalorder %s21, 1
      %s251 = scalar_select %p250, %s21, 1
      %p252 = scmp.lt.s32.totalorder %s249, 31
      %s253 = scalar_select %p252, %s249, 31
      %s254 = smul.addr %s251, 32
      %s255 = sadd.s32 %s253, %s254
      %s256 = smul.addr %s255, 4
      %s257 = scalar_lea.vmem %s4, %s256
      %p258 = pneg %p179
      %p259 = pneg %p176
      %p260 = scmp.lt.s32.totalorder %s21, 1
      %s261 = scalar_select %p260, %s21, 1
      %p262 = scmp.lt.s32.totalorder %s22, 0
      %s263 = scalar_select %p262, %s22, 0
      %s264 = sadd.s32 %s263, %s261
      %s265 = smul.addr %s264, 2
      %s266 = scalar_lea.vmem %s5, %s265
      %p267 = scmp.lt.s32.totalorder %s21, 1
      %s268 = scalar_select %p267, %s21, 1
      %s269 = smul.addr %s268, 54
      %s270 = smul.addr %s269, 4
      %s271 = scalar_lea.vmem %s0, %s270
      %p272 = scmp.lt.s32.totalorder %s21, 1
      %s273 = scalar_select %p272, %s21, 1
      %s274 = scalar_lea.vmem %s2, %s273
      %p275 = scmp.lt.s32.totalorder %s21, 1
      %s276 = scalar_select %p275, %s21, 1
      %s277 = scalar_lea.vmem %s3, %s276
      %s278 = smul.u32 32, %s22
      %p279 = scmp.lt.s32.totalorder %s21, 1
      %s280 = scalar_select %p279, %s21, 1
      %p281 = scmp.lt.s32.totalorder %s278, 31
      %s282 = scalar_select %p281, %s278, 31
      %s283 = smul.addr %s280, 32
      %s284 = sadd.s32 %s282, %s283
      %s285 = smul.addr %s284, 4
      %s286 = scalar_lea.vmem %s4, %s285
      %s287 = smul.u32 32, %s22
      %p288 = scmp.lt.s32.totalorder %s21, 1
      %s289 = scalar_select %p288, %s21, 1
      %p290 = scmp.lt.s32.totalorder %s22, 0
      %s291 = scalar_select %p290, %s22, 0
      %s292 = sadd.s32 %s291, %s289
      %s293 = smul.addr %s292, 2
      %s294 = scalar_lea.vmem %s5, %s293
      %s296 = smul.u32 %s22, 16
      %s297 = smul.u32 %s296, 3
      %s298 = smul.addr %s297, 4
      %s299 = scalar_lea.vmem %s271, %s298
      %v300 = vld [vmem:[%s299] sm:$0xf]
      %v301 = vld [vmem:[%s299 + $0x4] sm:$0xf]
      %v302 = vld [vmem:[%s299 + $0x8] sm:$0x1]
      %v303 = vld [vmem:[%s299 + $0xc] sm:$0xf]
      %v304 = vld [vmem:[%s299 + $0x10] sm:$0xf]
      %v305 = vld [vmem:[%s299 + $0x14] sm:$0x1]
      %v306 = vld [vmem:[%s299 + $0x18] sm:$0xf]
      %v307 = vld [vmem:[%s299 + $0x1c] sm:$0xf]
      %v308 = vld [vmem:[%s299 + $0x20] sm:$0x1]
      %v309 = vld [vmem:[%s299 + $0x24] sm:$0xf]
      %v310 = vld [vmem:[%s299 + $0x28] sm:$0xf]
      %v311 = vld [vmem:[%s299 + $0x2c] sm:$0x1]
      %v312 = vld [vmem:[%s299 + $0x30] sm:$0xf]
      %v313 = vld [vmem:[%s299 + $0x34] sm:$0xf]
      %v314 = vld [vmem:[%s299 + $0x38] sm:$0x1]
      %v315 = vld [vmem:[%s299 + $0x3c] sm:$0xf]
      %v316 = vld [vmem:[%s299 + $0x40] sm:$0xf]
      %v317 = vld [vmem:[%s299 + $0x44] sm:$0x1]
      %v318 = vld [vmem:[%s299 + $0x48] sm:$0xf]
      %v319 = vld [vmem:[%s299 + $0x4c] sm:$0xf]
      %v320 = vld [vmem:[%s299 + $0x50] sm:$0x1]
      %v321 = vld [vmem:[%s299 + $0x54] sm:$0xf]
      %v322 = vld [vmem:[%s299 + $0x58] sm:$0xf]
      %v323 = vld [vmem:[%s299 + $0x5c] sm:$0x1]
      %v324 = vld [vmem:[%s299 + $0x60] sm:$0xf]
      %v325 = vld [vmem:[%s299 + $0x64] sm:$0xf]
      %v326 = vld [vmem:[%s299 + $0x68] sm:$0x1]
      %v327 = vld [vmem:[%s299 + $0x6c] sm:$0xf]
      %v328 = vld [vmem:[%s299 + $0x70] sm:$0xf]
      %v329 = vld [vmem:[%s299 + $0x74] sm:$0x1]
      %v330 = vld [vmem:[%s299 + $0x78] sm:$0xf]
      %v331 = vld [vmem:[%s299 + $0x7c] sm:$0xf]
      %v332 = vld [vmem:[%s299 + $0x80] sm:$0x1]
      %v333 = vld [vmem:[%s299 + $0x84] sm:$0xf]
      %v334 = vld [vmem:[%s299 + $0x88] sm:$0xf]
      %v335 = vld [vmem:[%s299 + $0x8c] sm:$0x1]
      %v336 = vld [vmem:[%s299 + $0x90] sm:$0xf]
      %v337 = vld [vmem:[%s299 + $0x94] sm:$0xf]
      %v338 = vld [vmem:[%s299 + $0x98] sm:$0x1]
      %v339 = vld [vmem:[%s299 + $0x9c] sm:$0xf]
      %v340 = vld [vmem:[%s299 + $0xa0] sm:$0xf]
      %v341 = vld [vmem:[%s299 + $0xa4] sm:$0x1]
      %v342 = vld [vmem:[%s299 + $0xa8] sm:$0xf]
      %v343 = vld [vmem:[%s299 + $0xac] sm:$0xf]
      %v344 = vld [vmem:[%s299 + $0xb0] sm:$0x1]
      %v345 = vld [vmem:[%s299 + $0xb4] sm:$0xf]
      %v346 = vld [vmem:[%s299 + $0xb8] sm:$0xf]
      %v347 = vld [vmem:[%s299 + $0xbc] sm:$0x1]
      %v348 = vld [vmem:[%s299 + $0xc0] sm:$0xf]
      %v349 = vld [vmem:[%s299 + $0xc4] sm:$0xf]
      %v350 = vld [vmem:[%s299 + $0xc8] sm:$0x1]
      %v351 = vld [vmem:[%s299 + $0xcc] sm:$0xf]
      %v352 = vld [vmem:[%s299 + $0xd0] sm:$0xf]
      %v353 = vld [vmem:[%s299 + $0xd4] sm:$0x1]
      %v354 = vunpack.c.l.bf16 %v300
      %v355 = vunpack.c.l.bf16 %v301
      %v356 = vunpack.c.l.bf16 %v302
      %v357 = vunpack.c.l.bf16 %v303
      %v358 = vunpack.c.l.bf16 %v304
      %v359 = vunpack.c.l.bf16 %v305
      %v360 = vunpack.c.l.bf16 %v306
      %v361 = vunpack.c.l.bf16 %v307
      %v362 = vunpack.c.l.bf16 %v308
      %v363 = vunpack.c.l.bf16 %v309
      %v364 = vunpack.c.l.bf16 %v310
      %v365 = vunpack.c.l.bf16 %v311
      %v366 = vunpack.c.l.bf16 %v312
      %v367 = vunpack.c.l.bf16 %v313
      %v368 = vunpack.c.l.bf16 %v314
      %v369 = vunpack.c.l.bf16 %v315
      %v370 = vunpack.c.l.bf16 %v316
      %v371 = vunpack.c.l.bf16 %v317
      %v372 = vunpack.c.l.bf16 %v318
      %v373 = vunpack.c.l.bf16 %v319
      %v374 = vunpack.c.l.bf16 %v320
      %v375 = vunpack.c.l.bf16 %v321
      %v376 = vunpack.c.l.bf16 %v322
      %v377 = vunpack.c.l.bf16 %v323
      %v378 = vunpack.c.l.bf16 %v324
      %v379 = vunpack.c.l.bf16 %v325
      %v380 = vunpack.c.l.bf16 %v326
      %v381 = vunpack.c.l.bf16 %v327
      %v382 = vunpack.c.l.bf16 %v328
      %v383 = vunpack.c.l.bf16 %v329
      %v384 = vunpack.c.l.bf16 %v330
      %v385 = vunpack.c.l.bf16 %v331
      %v386 = vunpack.c.l.bf16 %v332
      %v387 = vunpack.c.l.bf16 %v333
      %v388 = vunpack.c.l.bf16 %v334
      %v389 = vunpack.c.l.bf16 %v335
      %v390 = vunpack.c.l.bf16 %v336
      %v391 = vunpack.c.l.bf16 %v337
      %v392 = vunpack.c.l.bf16 %v338
      %v393 = vunpack.c.l.bf16 %v339
      %v394 = vunpack.c.l.bf16 %v340
      %v395 = vunpack.c.l.bf16 %v341
      %v396 = vunpack.c.l.bf16 %v342
      %v397 = vunpack.c.l.bf16 %v343
      %v398 = vunpack.c.l.bf16 %v344
      %v399 = vunpack.c.l.bf16 %v345
      %v400 = vunpack.c.l.bf16 %v346
      %v401 = vunpack.c.l.bf16 %v347
      %v402 = vunpack.c.l.bf16 %v348
      %v403 = vunpack.c.l.bf16 %v349
      %v404 = vunpack.c.l.bf16 %v350
      %v405 = vunpack.c.l.bf16 %v351
      %v406 = vunpack.c.l.bf16 %v352
      %v407 = vunpack.c.l.bf16 %v353
      %v408 = vld [vmem:[%s274] sm:$0x1]
      %v410 = vperm.slane %v408, 0
      %v412 = vmul.f32 %v354, %v410
      %v413 = vmul.f32 %v355, %v410
      %v414 = vmul.f32 %v356, %v410
      %v415 = vmul.f32 %v357, %v410
      %v416 = vmul.f32 %v358, %v410
      %v417 = vmul.f32 %v359, %v410
      %v418 = vmul.f32 %v360, %v410
      %v419 = vmul.f32 %v361, %v410
      %v420 = vmul.f32 %v362, %v410
      %v421 = vmul.f32 %v363, %v410
      %v422 = vmul.f32 %v364, %v410
      %v423 = vmul.f32 %v365, %v410
      %v424 = vmul.f32 %v366, %v410
      %v425 = vmul.f32 %v367, %v410
      %v426 = vmul.f32 %v368, %v410
      %v427 = vmul.f32 %v369, %v410
      %v428 = vmul.f32 %v370, %v410
      %v429 = vmul.f32 %v371, %v410
      %v430 = vmul.f32 %v372, %v410
      %v431 = vmul.f32 %v373, %v410
      %v432 = vmul.f32 %v374, %v410
      %v433 = vmul.f32 %v375, %v410
      %v434 = vmul.f32 %v376, %v410
      %v435 = vmul.f32 %v377, %v410
      %v436 = vmul.f32 %v378, %v410
      %v437 = vmul.f32 %v379, %v410
      %v438 = vmul.f32 %v380, %v410
      %v439 = vmul.f32 %v381, %v410
      %v440 = vmul.f32 %v382, %v410
      %v441 = vmul.f32 %v383, %v410
      %v442 = vmul.f32 %v384, %v410
      %v443 = vmul.f32 %v385, %v410
      %v444 = vmul.f32 %v386, %v410
      %v445 = vmul.f32 %v387, %v410
      %v446 = vmul.f32 %v388, %v410
      %v447 = vmul.f32 %v389, %v410
      %v448 = vmul.f32 %v390, %v410
      %v449 = vmul.f32 %v391, %v410
      %v450 = vmul.f32 %v392, %v410
      %v451 = vmul.f32 %v393, %v410
      %v452 = vmul.f32 %v394, %v410
      %v453 = vmul.f32 %v395, %v410
      %v454 = vmul.f32 %v396, %v410
      %v455 = vmul.f32 %v397, %v410
      %v456 = vmul.f32 %v398, %v410
      %v457 = vmul.f32 %v399, %v410
      %v458 = vmul.f32 %v400, %v410
      %v459 = vmul.f32 %v401, %v410
      %v460 = vmul.f32 %v402, %v410
      %v461 = vmul.f32 %v403, %v410
      %v462 = vmul.f32 %v404, %v410
      %v463 = vmul.f32 %v405, %v410
      %v464 = vmul.f32 %v406, %v410
      %v465 = vmul.f32 %v407, %v410
      %v466 = vld [vmem:[%s277] sm:$0x1]
      %v468 = vperm.slane %v466, 0
      %v470 = vadd.f32 %v412, %v468
      %v471 = vadd.f32 %v413, %v468
      %v472 = vadd.f32 %v414, %v468
      %v473 = vadd.f32 %v415, %v468
      %v474 = vadd.f32 %v416, %v468
      %v475 = vadd.f32 %v417, %v468
      %v476 = vadd.f32 %v418, %v468
      %v477 = vadd.f32 %v419, %v468
      %v478 = vadd.f32 %v420, %v468
      %v479 = vadd.f32 %v421, %v468
      %v480 = vadd.f32 %v422, %v468
      %v481 = vadd.f32 %v423, %v468
      %v482 = vadd.f32 %v424, %v468
      %v483 = vadd.f32 %v425, %v468
      %v484 = vadd.f32 %v426, %v468
      %v485 = vadd.f32 %v427, %v468
      %v486 = vadd.f32 %v428, %v468
      %v487 = vadd.f32 %v429, %v468
      %v488 = vadd.f32 %v430, %v468
      %v489 = vadd.f32 %v431, %v468
      %v490 = vadd.f32 %v432, %v468
      %v491 = vadd.f32 %v433, %v468
      %v492 = vadd.f32 %v434, %v468
      %v493 = vadd.f32 %v435, %v468
      %v494 = vadd.f32 %v436, %v468
      %v495 = vadd.f32 %v437, %v468
      %v496 = vadd.f32 %v438, %v468
      %v497 = vadd.f32 %v439, %v468
      %v498 = vadd.f32 %v440, %v468
      %v499 = vadd.f32 %v441, %v468
      %v500 = vadd.f32 %v442, %v468
      %v501 = vadd.f32 %v443, %v468
      %v502 = vadd.f32 %v444, %v468
      %v503 = vadd.f32 %v445, %v468
      %v504 = vadd.f32 %v446, %v468
      %v505 = vadd.f32 %v447, %v468
      %v506 = vadd.f32 %v448, %v468
      %v507 = vadd.f32 %v449, %v468
      %v508 = vadd.f32 %v450, %v468
      %v509 = vadd.f32 %v451, %v468
      %v510 = vadd.f32 %v452, %v468
      %v511 = vadd.f32 %v453, %v468
      %v512 = vadd.f32 %v454, %v468
      %v513 = vadd.f32 %v455, %v468
      %v514 = vadd.f32 %v456, %v468
      %v515 = vadd.f32 %v457, %v468
      %v516 = vadd.f32 %v458, %v468
      %v517 = vadd.f32 %v459, %v468
      %v518 = vadd.f32 %v460, %v468
      %v519 = vadd.f32 %v461, %v468
      %v520 = vadd.f32 %v462, %v468
      %v521 = vadd.f32 %v463, %v468
      %v522 = vadd.f32 %v464, %v468
      %v523 = vadd.f32 %v465, %v468
      %v524 = vmax.f32 %v470, 0.0
      %v525 = vmax.f32 %v471, 0.0
      %v526 = vmax.f32 %v472, 0.0
      %v527 = vmax.f32 %v473, 0.0
      %v528 = vmax.f32 %v474, 0.0
      %v529 = vmax.f32 %v475, 0.0
      %v530 = vmax.f32 %v476, 0.0
      %v531 = vmax.f32 %v477, 0.0
      %v532 = vmax.f32 %v478, 0.0
      %v533 = vmax.f32 %v479, 0.0
      %v534 = vmax.f32 %v480, 0.0
      %v535 = vmax.f32 %v481, 0.0
      %v536 = vmax.f32 %v482, 0.0
      %v537 = vmax.f32 %v483, 0.0
      %v538 = vmax.f32 %v484, 0.0
      %v539 = vmax.f32 %v485, 0.0
      %v540 = vmax.f32 %v486, 0.0
      %v541 = vmax.f32 %v487, 0.0
      %v542 = vmax.f32 %v488, 0.0
      %v543 = vmax.f32 %v489, 0.0
      %v544 = vmax.f32 %v490, 0.0
      %v545 = vmax.f32 %v491, 0.0
      %v546 = vmax.f32 %v492, 0.0
      %v547 = vmax.f32 %v493, 0.0
      %v548 = vmax.f32 %v494, 0.0
      %v549 = vmax.f32 %v495, 0.0
      %v550 = vmax.f32 %v496, 0.0
      %v551 = vmax.f32 %v497, 0.0
      %v552 = vmax.f32 %v498, 0.0
      %v553 = vmax.f32 %v499, 0.0
      %v554 = vmax.f32 %v500, 0.0
      %v555 = vmax.f32 %v501, 0.0
      %v556 = vmax.f32 %v502, 0.0
      %v557 = vmax.f32 %v503, 0.0
      %v558 = vmax.f32 %v504, 0.0
      %v559 = vmax.f32 %v505, 0.0
      %v560 = vmax.f32 %v506, 0.0
      %v561 = vmax.f32 %v507, 0.0
      %v562 = vmax.f32 %v508, 0.0
      %v563 = vmax.f32 %v509, 0.0
      %v564 = vmax.f32 %v510, 0.0
      %v565 = vmax.f32 %v511, 0.0
      %v566 = vmax.f32 %v512, 0.0
      %v567 = vmax.f32 %v513, 0.0
      %v568 = vmax.f32 %v514, 0.0
      %v569 = vmax.f32 %v515, 0.0
      %v570 = vmax.f32 %v516, 0.0
      %v571 = vmax.f32 %v517, 0.0
      %v572 = vmax.f32 %v518, 0.0
      %v573 = vmax.f32 %v519, 0.0
      %v574 = vmax.f32 %v520, 0.0
      %v575 = vmax.f32 %v521, 0.0
      %v576 = vmax.f32 %v522, 0.0
      %v577 = vmax.f32 %v523, 0.0
      %vm578 = vcmask 1040384
      %v579 = vsel %vm578, 0.0, %v524
      %v580 = vsel %vm578, 0.0, %v527
      %v581 = vsel %vm578, 0.0, %v530
      %v582 = vsel %vm578, 0.0, %v533
      %v583 = vsel %vm578, 0.0, %v536
      %v584 = vsel %vm578, 0.0, %v539
      %v585 = vsel %vm578, 0.0, %v542
      %v586 = vsel %vm578, 0.0, %v545
      %v587 = vsel %vm578, 0.0, %v548
      %v588 = vsel %vm578, 0.0, %v551
      %v589 = vsel %vm578, 0.0, %v554
      %v590 = vsel %vm578, 0.0, %v557
      %v591 = vsel %vm578, 0.0, %v560
      %v592 = vsel %vm578, 0.0, %v563
      %v593 = vsel %vm578, 0.0, %v566
      %v594 = vsel %vm578, 0.0, %v569
      %v595 = vsel %vm578, 0.0, %v572
      %v596 = vsel %vm578, 0.0, %v575
      %v597 = vsel %vm578, %v526, 0.0
      %v598 = vsel %vm578, %v529, 0.0
      %v599 = vsel %vm578, %v532, 0.0
      %v600 = vsel %vm578, %v535, 0.0
      %v601 = vsel %vm578, %v538, 0.0
      %v602 = vsel %vm578, %v541, 0.0
      %v603 = vsel %vm578, %v544, 0.0
      %v604 = vsel %vm578, %v547, 0.0
      %v605 = vsel %vm578, %v550, 0.0
      %v606 = vsel %vm578, %v553, 0.0
      %v607 = vsel %vm578, %v556, 0.0
      %v608 = vsel %vm578, %v559, 0.0
      %v609 = vsel %vm578, %v562, 0.0
      %v610 = vsel %vm578, %v565, 0.0
      %v611 = vsel %vm578, %v568, 0.0
      %v612 = vsel %vm578, %v571, 0.0
      %v613 = vsel %vm578, %v574, 0.0
      %v614 = vsel %vm578, %v577, 0.0
      %p615 = scmp.gt.s32.totalorder %s22, 0
      %s616 = scalar_select %p615, 1, 0
      %s617 = scvt.s32.f32 %s616
      %p618 = scmp.lt.s32.totalorder %s22, 0
      %s619 = scalar_select %p618, 1, 0
      %s620 = scvt.s32.f32 %s619
      %v621 = vstv %s617
      %v622 = vmul.f32 %v579, %v621
      %v623 = vmul.f32 %v525, %v621
      %v624 = vmul.f32 %v597, %v621
      %v625 = vstv %s620
      %v626 = vmul.f32 %v596, %v625
      %v627 = vmul.f32 %v576, %v625
      %v628 = vmul.f32 %v614, %v625
      %v629 = vpack.c.bf16 %v622, %v622
      %v630 = vpack.c.bf16 %v623, %v623
      %v631 = vpack.c.bf16 %v624, %v624
      %v632 = vpack.c.bf16 %v580, %v580
      %v633 = vpack.c.bf16 %v528, %v528
      %v634 = vpack.c.bf16 %v598, %v598
      %v635 = vpack.c.bf16 %v581, %v581
      %v636 = vpack.c.bf16 %v531, %v531
      %v637 = vpack.c.bf16 %v599, %v599
      %v638 = vpack.c.bf16 %v582, %v582
      %v639 = vpack.c.bf16 %v534, %v534
      %v640 = vpack.c.bf16 %v600, %v600
      %v641 = vpack.c.bf16 %v583, %v583
      %v642 = vpack.c.bf16 %v537, %v537
      %v643 = vpack.c.bf16 %v601, %v601
      %v644 = vpack.c.bf16 %v584, %v584
      %v645 = vpack.c.bf16 %v540, %v540
      %v646 = vpack.c.bf16 %v602, %v602
      %v647 = vpack.c.bf16 %v585, %v585
      %v648 = vpack.c.bf16 %v543, %v543
      %v649 = vpack.c.bf16 %v603, %v603
      %v650 = vpack.c.bf16 %v586, %v586
      %v651 = vpack.c.bf16 %v546, %v546
      %v652 = vpack.c.bf16 %v604, %v604
      %v653 = vpack.c.bf16 %v587, %v587
      %v654 = vpack.c.bf16 %v549, %v549
      %v655 = vpack.c.bf16 %v605, %v605
      %v656 = vpack.c.bf16 %v588, %v588
      %v657 = vpack.c.bf16 %v552, %v552
      %v658 = vpack.c.bf16 %v606, %v606
      %v659 = vpack.c.bf16 %v589, %v589
      %v660 = vpack.c.bf16 %v555, %v555
      %v661 = vpack.c.bf16 %v607, %v607
      %v662 = vpack.c.bf16 %v590, %v590
      %v663 = vpack.c.bf16 %v558, %v558
      %v664 = vpack.c.bf16 %v608, %v608
      %v665 = vpack.c.bf16 %v591, %v591
      %v666 = vpack.c.bf16 %v561, %v561
      %v667 = vpack.c.bf16 %v609, %v609
      %v668 = vpack.c.bf16 %v592, %v592
      %v669 = vpack.c.bf16 %v564, %v564
      %v670 = vpack.c.bf16 %v610, %v610
      %v671 = vpack.c.bf16 %v593, %v593
      %v672 = vpack.c.bf16 %v567, %v567
      %v673 = vpack.c.bf16 %v611, %v611
      %v674 = vpack.c.bf16 %v594, %v594
      %v675 = vpack.c.bf16 %v570, %v570
      %v676 = vpack.c.bf16 %v612, %v612
      %v677 = vpack.c.bf16 %v595, %v595
      %v678 = vpack.c.bf16 %v573, %v573
      %v679 = vpack.c.bf16 %v613, %v613
      %v680 = vpack.c.bf16 %v626, %v626
      %v681 = vpack.c.bf16 %v627, %v627
      %v682 = vpack.c.bf16 %v628, %v628
      %v715 = vunpack.c.l.b16 %v629
      %v716 = vunpack.c.l.b16 %v630
      %v717 = vunpack.c.l.b16 %v632
      %v718 = vunpack.c.l.b16 %v633
      %v719 = vunpack.c.l.b16 %v635
      %v720 = vunpack.c.l.b16 %v636
      %v721 = vunpack.c.l.b16 %v638
      %v722 = vunpack.c.l.b16 %v639
      %v723 = vunpack.c.l.b16 %v641
      %v724 = vunpack.c.l.b16 %v642
      %v725 = vunpack.c.l.b16 %v644
      %v726 = vunpack.c.l.b16 %v645
      %v727 = vunpack.c.l.b16 %v647
      %v728 = vunpack.c.l.b16 %v648
      %v729 = vunpack.c.l.b16 %v650
      %v730 = vunpack.c.l.b16 %v651
      %v731 = vunpack.c.l.b16 %v653
      %v732 = vunpack.c.l.b16 %v654
      %v733 = vunpack.c.l.b16 %v656
      %v734 = vunpack.c.l.b16 %v657
      %v735 = vunpack.c.l.b16 %v659
      %v736 = vunpack.c.l.b16 %v660
      %v737 = vunpack.c.l.b16 %v662
      %v738 = vunpack.c.l.b16 %v663
      %v739 = vunpack.c.l.b16 %v665
      %v740 = vunpack.c.l.b16 %v666
      %v741 = vunpack.c.l.b16 %v668
      %v742 = vunpack.c.l.b16 %v669
      %v743 = vunpack.c.l.b16 %v671
      %v744 = vunpack.c.l.b16 %v672
      %v745 = vunpack.c.l.b16 %v674
      %v746 = vunpack.c.l.b16 %v675
      %v747 = vpack.c.b16 %v716, %v715
      %v748 = vpack.c.b16 %v718, %v717
      %v749 = vpack.c.b16 %v720, %v719
      %v750 = vpack.c.b16 %v722, %v721
      %v751 = vpack.c.b16 %v724, %v723
      %v752 = vpack.c.b16 %v726, %v725
      %v753 = vpack.c.b16 %v728, %v727
      %v754 = vpack.c.b16 %v730, %v729
      %v755 = vpack.c.b16 %v732, %v731
      %v756 = vpack.c.b16 %v734, %v733
      %v757 = vpack.c.b16 %v736, %v735
      %v758 = vpack.c.b16 %v738, %v737
      %v759 = vpack.c.b16 %v740, %v739
      %v760 = vpack.c.b16 %v742, %v741
      %v761 = vpack.c.b16 %v744, %v743
      %v762 = vpack.c.b16 %v746, %v745
      %v779 = vunpack.c.l.b16 %v631
      %v780 = vunpack.c.l.b16 %v634
      %v781 = vunpack.c.l.b16 %v637
      %v782 = vunpack.c.l.b16 %v640
      %v783 = vunpack.c.l.b16 %v643
      %v784 = vunpack.c.l.b16 %v646
      %v785 = vunpack.c.l.b16 %v649
      %v786 = vunpack.c.l.b16 %v652
      %v787 = vunpack.c.l.b16 %v655
      %v788 = vunpack.c.l.b16 %v658
      %v789 = vunpack.c.l.b16 %v661
      %v790 = vunpack.c.l.b16 %v664
      %v791 = vunpack.c.l.b16 %v667
      %v792 = vunpack.c.l.b16 %v670
      %v793 = vunpack.c.l.b16 %v673
      %v794 = vunpack.c.l.b16 %v676
      %v795 = vpack.c.b16 %v779, %v779
      %v796 = vpack.c.b16 %v780, %v780
      %v797 = vpack.c.b16 %v781, %v781
      %v798 = vpack.c.b16 %v782, %v782
      %v799 = vpack.c.b16 %v783, %v783
      %v800 = vpack.c.b16 %v784, %v784
      %v801 = vpack.c.b16 %v785, %v785
      %v802 = vpack.c.b16 %v786, %v786
      %v803 = vpack.c.b16 %v787, %v787
      %v804 = vpack.c.b16 %v788, %v788
      %v805 = vpack.c.b16 %v789, %v789
      %v806 = vpack.c.b16 %v790, %v790
      %v807 = vpack.c.b16 %v791, %v791
      %v808 = vpack.c.b16 %v792, %v792
      %v809 = vpack.c.b16 %v793, %v793
      %v810 = vpack.c.b16 %v794, %v794
      %vm811 = vsmask.f32 7424
      %v813 = vshrl.u32 %v747, 16
      %v815 = vshll.u32 %v747, 16
      %v817 = vrot.slane %v815, 1
      %v818 = vor.u32 %v813, %v817
      %v820 = vshll.u32 %v795, 16
      %v822 = vrot.slane %v820, 1
      %v823 = vsel %vm811, %v818, %v822
      %v825 = vshrl.u32 %v748, 16
      %v827 = vshll.u32 %v748, 16
      %v829 = vrot.slane %v827, 1
      %v830 = vor.u32 %v825, %v829
      %v832 = vshll.u32 %v796, 16
      %v834 = vrot.slane %v832, 1
      %v835 = vsel %vm811, %v830, %v834
      %v837 = vshrl.u32 %v749, 16
      %v839 = vshll.u32 %v749, 16
      %v841 = vrot.slane %v839, 1
      %v842 = vor.u32 %v837, %v841
      %v844 = vshll.u32 %v797, 16
      %v846 = vrot.slane %v844, 1
      %v847 = vsel %vm811, %v842, %v846
      %v849 = vshrl.u32 %v750, 16
      %v851 = vshll.u32 %v750, 16
      %v853 = vrot.slane %v851, 1
      %v854 = vor.u32 %v849, %v853
      %v856 = vshll.u32 %v798, 16
      %v858 = vrot.slane %v856, 1
      %v859 = vsel %vm811, %v854, %v858
      %v861 = vshrl.u32 %v751, 16
      %v863 = vshll.u32 %v751, 16
      %v865 = vrot.slane %v863, 1
      %v866 = vor.u32 %v861, %v865
      %v868 = vshll.u32 %v799, 16
      %v870 = vrot.slane %v868, 1
      %v871 = vsel %vm811, %v866, %v870
      %v873 = vshrl.u32 %v752, 16
      %v875 = vshll.u32 %v752, 16
      %v877 = vrot.slane %v875, 1
      %v878 = vor.u32 %v873, %v877
      %v880 = vshll.u32 %v800, 16
      %v882 = vrot.slane %v880, 1
      %v883 = vsel %vm811, %v878, %v882
      %v885 = vshrl.u32 %v753, 16
      %v887 = vshll.u32 %v753, 16
      %v889 = vrot.slane %v887, 1
      %v890 = vor.u32 %v885, %v889
      %v892 = vshll.u32 %v801, 16
      %v894 = vrot.slane %v892, 1
      %v895 = vsel %vm811, %v890, %v894
      %v897 = vshrl.u32 %v754, 16
      %v899 = vshll.u32 %v754, 16
      %v901 = vrot.slane %v899, 1
      %v902 = vor.u32 %v897, %v901
      %v904 = vshll.u32 %v802, 16
      %v906 = vrot.slane %v904, 1
      %v907 = vsel %vm811, %v902, %v906
      %v909 = vshrl.u32 %v755, 16
      %v911 = vshll.u32 %v755, 16
      %v913 = vrot.slane %v911, 1
      %v914 = vor.u32 %v909, %v913
      %v916 = vshll.u32 %v803, 16
      %v918 = vrot.slane %v916, 1
      %v919 = vsel %vm811, %v914, %v918
      %v921 = vshrl.u32 %v756, 16
      %v923 = vshll.u32 %v756, 16
      %v925 = vrot.slane %v923, 1
      %v926 = vor.u32 %v921, %v925
      %v928 = vshll.u32 %v804, 16
      %v930 = vrot.slane %v928, 1
      %v931 = vsel %vm811, %v926, %v930
      %v933 = vshrl.u32 %v757, 16
      %v935 = vshll.u32 %v757, 16
      %v937 = vrot.slane %v935, 1
      %v938 = vor.u32 %v933, %v937
      %v940 = vshll.u32 %v805, 16
      %v942 = vrot.slane %v940, 1
      %v943 = vsel %vm811, %v938, %v942
      %v945 = vshrl.u32 %v758, 16
      %v947 = vshll.u32 %v758, 16
      %v949 = vrot.slane %v947, 1
      %v950 = vor.u32 %v945, %v949
      %v952 = vshll.u32 %v806, 16
      %v954 = vrot.slane %v952, 1
      %v955 = vsel %vm811, %v950, %v954
      %v957 = vshrl.u32 %v759, 16
      %v959 = vshll.u32 %v759, 16
      %v961 = vrot.slane %v959, 1
      %v962 = vor.u32 %v957, %v961
      %v964 = vshll.u32 %v807, 16
      %v966 = vrot.slane %v964, 1
      %v967 = vsel %vm811, %v962, %v966
      %v969 = vshrl.u32 %v760, 16
      %v971 = vshll.u32 %v760, 16
      %v973 = vrot.slane %v971, 1
      %v974 = vor.u32 %v969, %v973
      %v976 = vshll.u32 %v808, 16
      %v978 = vrot.slane %v976, 1
      %v979 = vsel %vm811, %v974, %v978
      %v981 = vshrl.u32 %v761, 16
      %v983 = vshll.u32 %v761, 16
      %v985 = vrot.slane %v983, 1
      %v986 = vor.u32 %v981, %v985
      %v988 = vshll.u32 %v809, 16
      %v990 = vrot.slane %v988, 1
      %v991 = vsel %vm811, %v986, %v990
      %v993 = vshrl.u32 %v762, 16
      %v995 = vshll.u32 %v762, 16
      %v997 = vrot.slane %v995, 1
      %v998 = vor.u32 %v993, %v997
      %v1000 = vshll.u32 %v810, 16
      %v1002 = vrot.slane %v1000, 1
      %v1003 = vsel %vm811, %v998, %v1002
      %1004 = vrot.lane.b32.xlu0 %v823, 32
      %v1005 = vpop.permute.xlu0 %1004
      %1006 = vrot.lane.b32.xlu0 %v835, 32
      %v1007 = vpop.permute.xlu0 %1006
      %1008 = vrot.lane.b32.xlu0 %v847, 32
      %v1009 = vpop.permute.xlu0 %1008
      %1010 = vrot.lane.b32.xlu0 %v859, 32
      %v1011 = vpop.permute.xlu0 %1010
      %1012 = vrot.lane.b32.xlu0 %v871, 32
      %v1013 = vpop.permute.xlu0 %1012
      %1014 = vrot.lane.b32.xlu0 %v883, 32
      %v1015 = vpop.permute.xlu0 %1014
      %1016 = vrot.lane.b32.xlu0 %v895, 32
      %v1017 = vpop.permute.xlu0 %1016
      %1018 = vrot.lane.b32.xlu0 %v907, 32
      %v1019 = vpop.permute.xlu0 %1018
      %1020 = vrot.lane.b32.xlu0 %v919, 32
      %v1021 = vpop.permute.xlu0 %1020
      %1022 = vrot.lane.b32.xlu0 %v931, 32
      %v1023 = vpop.permute.xlu0 %1022
      %1024 = vrot.lane.b32.xlu0 %v943, 32
      %v1025 = vpop.permute.xlu0 %1024
      %1026 = vrot.lane.b32.xlu0 %v955, 32
      %v1027 = vpop.permute.xlu0 %1026
      %1028 = vrot.lane.b32.xlu0 %v967, 32
      %v1029 = vpop.permute.xlu0 %1028
      %1030 = vrot.lane.b32.xlu0 %v979, 32
      %v1031 = vpop.permute.xlu0 %1030
      %1032 = vrot.lane.b32.xlu0 %v991, 32
      %v1033 = vpop.permute.xlu0 %1032
      %1034 = vrot.lane.b32.xlu0 %v1003, 32
      %v1035 = vpop.permute.xlu0 %1034
      %vm1036 = vcmask 1046528
      %v1037 = vrot.slane %v747, 1
      %v1038 = vrot.slane %v795, 1
      %v1039 = vsel %vm1036, %v1037, %v1038
      %v1040 = vrot.slane %v748, 1
      %v1041 = vrot.slane %v796, 1
      %v1042 = vsel %vm1036, %v1040, %v1041
      %v1043 = vrot.slane %v749, 1
      %v1044 = vrot.slane %v797, 1
      %v1045 = vsel %vm1036, %v1043, %v1044
      %v1046 = vrot.slane %v750, 1
      %v1047 = vrot.slane %v798, 1
      %v1048 = vsel %vm1036, %v1046, %v1047
      %v1049 = vrot.slane %v751, 1
      %v1050 = vrot.slane %v799, 1
      %v1051 = vsel %vm1036, %v1049, %v1050
      %v1052 = vrot.slane %v752, 1
      %v1053 = vrot.slane %v800, 1
      %v1054 = vsel %vm1036, %v1052, %v1053
      %v1055 = vrot.slane %v753, 1
      %v1056 = vrot.slane %v801, 1
      %v1057 = vsel %vm1036, %v1055, %v1056
      %v1058 = vrot.slane %v754, 1
      %v1059 = vrot.slane %v802, 1
      %v1060 = vsel %vm1036, %v1058, %v1059
      %v1061 = vrot.slane %v755, 1
      %v1062 = vrot.slane %v803, 1
      %v1063 = vsel %vm1036, %v1061, %v1062
      %v1064 = vrot.slane %v756, 1
      %v1065 = vrot.slane %v804, 1
      %v1066 = vsel %vm1036, %v1064, %v1065
      %v1067 = vrot.slane %v757, 1
      %v1068 = vrot.slane %v805, 1
      %v1069 = vsel %vm1036, %v1067, %v1068
      %v1070 = vrot.slane %v758, 1
      %v1071 = vrot.slane %v806, 1
      %v1072 = vsel %vm1036, %v1070, %v1071
      %v1073 = vrot.slane %v759, 1
      %v1074 = vrot.slane %v807, 1
      %v1075 = vsel %vm1036, %v1073, %v1074
      %v1076 = vrot.slane %v760, 1
      %v1077 = vrot.slane %v808, 1
      %v1078 = vsel %vm1036, %v1076, %v1077
      %v1079 = vrot.slane %v761, 1
      %v1080 = vrot.slane %v809, 1
      %v1081 = vsel %vm1036, %v1079, %v1080
      %v1082 = vrot.slane %v762, 1
      %v1083 = vrot.slane %v810, 1
      %v1084 = vsel %vm1036, %v1082, %v1083
      %1085 = vrot.lane.b32.xlu0 %v1039, 64
      %v1086 = vpop.permute.xlu0 %1085
      %1087 = vrot.lane.b32.xlu0 %v1042, 64
      %v1088 = vpop.permute.xlu0 %1087
      %1089 = vrot.lane.b32.xlu0 %v1045, 64
      %v1090 = vpop.permute.xlu0 %1089
      %1091 = vrot.lane.b32.xlu0 %v1048, 64
      %v1092 = vpop.permute.xlu0 %1091
      %1093 = vrot.lane.b32.xlu0 %v1051, 64
      %v1094 = vpop.permute.xlu0 %1093
      %1095 = vrot.lane.b32.xlu0 %v1054, 64
      %v1096 = vpop.permute.xlu0 %1095
      %1097 = vrot.lane.b32.xlu0 %v1057, 64
      %v1098 = vpop.permute.xlu0 %1097
      %1099 = vrot.lane.b32.xlu0 %v1060, 64
      %v1100 = vpop.permute.xlu0 %1099
      %1101 = vrot.lane.b32.xlu0 %v1063, 64
      %v1102 = vpop.permute.xlu0 %1101
      %1103 = vrot.lane.b32.xlu0 %v1066, 64
      %v1104 = vpop.permute.xlu0 %1103
      %1105 = vrot.lane.b32.xlu0 %v1069, 64
      %v1106 = vpop.permute.xlu0 %1105
      %1107 = vrot.lane.b32.xlu0 %v1072, 64
      %v1108 = vpop.permute.xlu0 %1107
      %1109 = vrot.lane.b32.xlu0 %v1075, 64
      %v1110 = vpop.permute.xlu0 %1109
      %1111 = vrot.lane.b32.xlu0 %v1078, 64
      %v1112 = vpop.permute.xlu0 %1111
      %1113 = vrot.lane.b32.xlu0 %v1081, 64
      %v1114 = vpop.permute.xlu0 %1113
      %1115 = vrot.lane.b32.xlu0 %v1084, 64
      %v1116 = vpop.permute.xlu0 %1115
      %v1119 = vunpack.c.l.b16 %v677
      %v1120 = vunpack.c.l.b16 %v678
      %v1121 = vpack.c.b16 %v1120, %v1119
      %1122 = vrot.lane.b32.xlu0 %v748, 96
      %v1123 = vpop.permute.xlu0 %1122
      %1124 = vrot.lane.b32.xlu0 %v749, 96
      %v1125 = vpop.permute.xlu0 %1124
      %1126 = vrot.lane.b32.xlu0 %v750, 96
      %v1127 = vpop.permute.xlu0 %1126
      %1128 = vrot.lane.b32.xlu0 %v751, 96
      %v1129 = vpop.permute.xlu0 %1128
      %1130 = vrot.lane.b32.xlu0 %v752, 96
      %v1131 = vpop.permute.xlu0 %1130
      %1132 = vrot.lane.b32.xlu0 %v753, 96
      %v1133 = vpop.permute.xlu0 %1132
      %1134 = vrot.lane.b32.xlu0 %v754, 96
      %v1135 = vpop.permute.xlu0 %1134
      %1136 = vrot.lane.b32.xlu0 %v755, 96
      %v1137 = vpop.permute.xlu0 %1136
      %1138 = vrot.lane.b32.xlu0 %v756, 96
      %v1139 = vpop.permute.xlu0 %1138
      %1140 = vrot.lane.b32.xlu0 %v757, 96
      %v1141 = vpop.permute.xlu0 %1140
      %1142 = vrot.lane.b32.xlu0 %v758, 96
      %v1143 = vpop.permute.xlu0 %1142
      %1144 = vrot.lane.b32.xlu0 %v759, 96
      %v1145 = vpop.permute.xlu0 %1144
      %1146 = vrot.lane.b32.xlu0 %v760, 96
      %v1147 = vpop.permute.xlu0 %1146
      %1148 = vrot.lane.b32.xlu0 %v761, 96
      %v1149 = vpop.permute.xlu0 %1148
      %1150 = vrot.lane.b32.xlu0 %v762, 96
      %v1151 = vpop.permute.xlu0 %1150
      %1152 = vrot.lane.b32.xlu0 %v1121, 96
      %v1153 = vpop.permute.xlu0 %1152
      %v1155 = vunpack.c.l.b16 %v679
      %v1156 = vpack.c.b16 %v1155, %v1155
      %v1158 = vshrl.u32 %v1121, 16
      %v1160 = vshll.u32 %v1121, 16
      %v1162 = vrot.slane %v1160, 1
      %v1163 = vor.u32 %v1158, %v1162
      %v1165 = vshll.u32 %v1156, 16
      %v1167 = vrot.slane %v1165, 1
      %v1168 = vsel %vm811, %v1163, %v1167
      %v1169 = vrot.slane %v1121, 1
      %v1170 = vrot.slane %v1156, 1
      %v1171 = vsel %vm1036, %v1169, %v1170
      %1172 = vrot.lane.b32.xlu0 %v1042, 32
      %v1173 = vpop.permute.xlu0 %1172
      %1174 = vrot.lane.b32.xlu0 %v1045, 32
      %v1175 = vpop.permute.xlu0 %1174
      %1176 = vrot.lane.b32.xlu0 %v1048, 32
      %v1177 = vpop.permute.xlu0 %1176
      %1178 = vrot.lane.b32.xlu0 %v1051, 32
      %v1179 = vpop.permute.xlu0 %1178
      %1180 = vrot.lane.b32.xlu0 %v1054, 32
      %v1181 = vpop.permute.xlu0 %1180
      %1182 = vrot.lane.b32.xlu0 %v1057, 32
      %v1183 = vpop.permute.xlu0 %1182
      %1184 = vrot.lane.b32.xlu0 %v1060, 32
      %v1185 = vpop.permute.xlu0 %1184
      %1186 = vrot.lane.b32.xlu0 %v1063, 32
      %v1187 = vpop.permute.xlu0 %1186
      %1188 = vrot.lane.b32.xlu0 %v1066, 32
      %v1189 = vpop.permute.xlu0 %1188
      %1190 = vrot.lane.b32.xlu0 %v1069, 32
      %v1191 = vpop.permute.xlu0 %1190
      %1192 = vrot.lane.b32.xlu0 %v1072, 32
      %v1193 = vpop.permute.xlu0 %1192
      %1194 = vrot.lane.b32.xlu0 %v1075, 32
      %v1195 = vpop.permute.xlu0 %1194
      %1196 = vrot.lane.b32.xlu0 %v1078, 32
      %v1197 = vpop.permute.xlu0 %1196
      %1198 = vrot.lane.b32.xlu0 %v1081, 32
      %v1199 = vpop.permute.xlu0 %1198
      %1200 = vrot.lane.b32.xlu0 %v1084, 32
      %v1201 = vpop.permute.xlu0 %1200
      %1202 = vrot.lane.b32.xlu0 %v1171, 32
      %v1203 = vpop.permute.xlu0 %1202
      %v1206 = vunpack.c.l.b16 %v680
      %v1207 = vunpack.c.l.b16 %v681
      %v1208 = vpack.c.b16 %v1207, %v1206
      %1209 = vrot.lane.b32.xlu0 %v749, 64
      %v1210 = vpop.permute.xlu0 %1209
      %1211 = vrot.lane.b32.xlu0 %v750, 64
      %v1212 = vpop.permute.xlu0 %1211
      %1213 = vrot.lane.b32.xlu0 %v751, 64
      %v1214 = vpop.permute.xlu0 %1213
      %1215 = vrot.lane.b32.xlu0 %v752, 64
      %v1216 = vpop.permute.xlu0 %1215
      %1217 = vrot.lane.b32.xlu0 %v753, 64
      %v1218 = vpop.permute.xlu0 %1217
      %1219 = vrot.lane.b32.xlu0 %v754, 64
      %v1220 = vpop.permute.xlu0 %1219
      %1221 = vrot.lane.b32.xlu0 %v755, 64
      %v1222 = vpop.permute.xlu0 %1221
      %1223 = vrot.lane.b32.xlu0 %v756, 64
      %v1224 = vpop.permute.xlu0 %1223
      %1225 = vrot.lane.b32.xlu0 %v757, 64
      %v1226 = vpop.permute.xlu0 %1225
      %1227 = vrot.lane.b32.xlu0 %v758, 64
      %v1228 = vpop.permute.xlu0 %1227
      %1229 = vrot.lane.b32.xlu0 %v759, 64
      %v1230 = vpop.permute.xlu0 %1229
      %1231 = vrot.lane.b32.xlu0 %v760, 64
      %v1232 = vpop.permute.xlu0 %1231
      %1233 = vrot.lane.b32.xlu0 %v761, 64
      %v1234 = vpop.permute.xlu0 %1233
      %1235 = vrot.lane.b32.xlu0 %v762, 64
      %v1236 = vpop.permute.xlu0 %1235
      %1237 = vrot.lane.b32.xlu0 %v1121, 64
      %v1238 = vpop.permute.xlu0 %1237
      %1239 = vrot.lane.b32.xlu0 %v1208, 64
      %v1240 = vpop.permute.xlu0 %1239
      %v1242 = vunpack.c.l.b16 %v682
      %v1243 = vpack.c.b16 %v1242, %v1242
      %v1245 = vshrl.u32 %v1208, 16
      %v1247 = vshll.u32 %v1208, 16
      %v1249 = vrot.slane %v1247, 1
      %v1250 = vor.u32 %v1245, %v1249
      %v1252 = vshll.u32 %v1243, 16
      %v1254 = vrot.slane %v1252, 1
      %v1255 = vsel %vm811, %v1250, %v1254
      %1256 = vrot.lane.b32.xlu0 %v847, 96
      %v1257 = vpop.permute.xlu0 %1256
      %1258 = vrot.lane.b32.xlu0 %v859, 96
      %v1259 = vpop.permute.xlu0 %1258
      %1260 = vrot.lane.b32.xlu0 %v871, 96
      %v1261 = vpop.permute.xlu0 %1260
      %1262 = vrot.lane.b32.xlu0 %v883, 96
      %v1263 = vpop.permute.xlu0 %1262
      %1264 = vrot.lane.b32.xlu0 %v895, 96
      %v1265 = vpop.permute.xlu0 %1264
      %1266 = vrot.lane.b32.xlu0 %v907, 96
      %v1267 = vpop.permute.xlu0 %1266
      %1268 = vrot.lane.b32.xlu0 %v919, 96
      %v1269 = vpop.permute.xlu0 %1268
      %1270 = vrot.lane.b32.xlu0 %v931, 96
      %v1271 = vpop.permute.xlu0 %1270
      %1272 = vrot.lane.b32.xlu0 %v943, 96
      %v1273 = vpop.permute.xlu0 %1272
      %1274 = vrot.lane.b32.xlu0 %v955, 96
      %v1275 = vpop.permute.xlu0 %1274
      %1276 = vrot.lane.b32.xlu0 %v967, 96
      %v1277 = vpop.permute.xlu0 %1276
      %1278 = vrot.lane.b32.xlu0 %v979, 96
      %v1279 = vpop.permute.xlu0 %1278
      %1280 = vrot.lane.b32.xlu0 %v991, 96
      %v1281 = vpop.permute.xlu0 %1280
      %1282 = vrot.lane.b32.xlu0 %v1003, 96
      %v1283 = vpop.permute.xlu0 %1282
      %1284 = vrot.lane.b32.xlu0 %v1168, 96
      %v1285 = vpop.permute.xlu0 %1284
      %1286 = vrot.lane.b32.xlu0 %v1255, 96
      %v1287 = vpop.permute.xlu0 %1286
      %v1288 = vrot.slane %v1208, 1
      %v1289 = vrot.slane %v1243, 1
      %v1290 = vsel %vm1036, %v1288, %v1289
      %vm1291 = vcmask 261120
      %v1293 = vsel %vm1291, %v747, %v1005
      %v1295 = vsel %vm1291, %v748, %v1007
      %v1297 = vsel %vm1291, %v749, %v1009
      %v1299 = vsel %vm1291, %v750, %v1011
      %v1301 = vsel %vm1291, %v751, %v1013
      %v1303 = vsel %vm1291, %v752, %v1015
      %v1305 = vsel %vm1291, %v753, %v1017
      %v1307 = vsel %vm1291, %v754, %v1019
      %v1309 = vsel %vm1291, %v755, %v1021
      %v1311 = vsel %vm1291, %v756, %v1023
      %v1313 = vsel %vm1291, %v757, %v1025
      %v1315 = vsel %vm1291, %v758, %v1027
      %v1317 = vsel %vm1291, %v759, %v1029
      %v1319 = vsel %vm1291, %v760, %v1031
      %v1321 = vsel %vm1291, %v761, %v1033
      %v1323 = vsel %vm1291, %v762, %v1035
      %vm1324 = vcmask 523264
      %v1326 = vsel %vm1324, %v1293, %v1086
      %v1328 = vsel %vm1324, %v1295, %v1088
      %v1330 = vsel %vm1324, %v1297, %v1090
      %v1332 = vsel %vm1324, %v1299, %v1092
      %v1334 = vsel %vm1324, %v1301, %v1094
      %v1336 = vsel %vm1324, %v1303, %v1096
      %v1338 = vsel %vm1324, %v1305, %v1098
      %v1340 = vsel %vm1324, %v1307, %v1100
      %v1342 = vsel %vm1324, %v1309, %v1102
      %v1344 = vsel %vm1324, %v1311, %v1104
      %v1346 = vsel %vm1324, %v1313, %v1106
      %v1348 = vsel %vm1324, %v1315, %v1108
      %v1350 = vsel %vm1324, %v1317, %v1110
      %v1352 = vsel %vm1324, %v1319, %v1112
      %v1354 = vsel %vm1324, %v1321, %v1114
      %v1356 = vsel %vm1324, %v1323, %v1116
      %vm1357 = vcmask 785408
      %v1359 = vsel %vm1357, %v1326, %v1123
      %v1362 = vsel %vm1357, %v1328, %v1125
      %v1365 = vsel %vm1357, %v1330, %v1127
      %v1368 = vsel %vm1357, %v1332, %v1129
      %v1371 = vsel %vm1357, %v1334, %v1131
      %v1374 = vsel %vm1357, %v1336, %v1133
      %v1377 = vsel %vm1357, %v1338, %v1135
      %v1380 = vsel %vm1357, %v1340, %v1137
      %v1383 = vsel %vm1357, %v1342, %v1139
      %v1386 = vsel %vm1357, %v1344, %v1141
      %v1389 = vsel %vm1357, %v1346, %v1143
      %v1392 = vsel %vm1357, %v1348, %v1145
      %v1395 = vsel %vm1357, %v1350, %v1147
      %v1398 = vsel %vm1357, %v1352, %v1149
      %v1401 = vsel %vm1357, %v1354, %v1151
      %v1404 = vsel %vm1357, %v1356, %v1153
      %v1408 = vsel %vm1291, %v835, %v1173
      %v1411 = vsel %vm1291, %v847, %v1175
      %v1414 = vsel %vm1291, %v859, %v1177
      %v1417 = vsel %vm1291, %v871, %v1179
      %v1420 = vsel %vm1291, %v883, %v1181
      %v1423 = vsel %vm1291, %v895, %v1183
      %v1426 = vsel %vm1291, %v907, %v1185
      %v1429 = vsel %vm1291, %v919, %v1187
      %v1432 = vsel %vm1291, %v931, %v1189
      %v1435 = vsel %vm1291, %v943, %v1191
      %v1438 = vsel %vm1291, %v955, %v1193
      %v1441 = vsel %vm1291, %v967, %v1195
      %v1444 = vsel %vm1291, %v979, %v1197
      %v1447 = vsel %vm1291, %v991, %v1199
      %v1450 = vsel %vm1291, %v1003, %v1201
      %v1453 = vsel %vm1291, %v1168, %v1203
      %v1455 = vsel %vm1324, %v1408, %v1210
      %v1457 = vsel %vm1324, %v1411, %v1212
      %v1459 = vsel %vm1324, %v1414, %v1214
      %v1461 = vsel %vm1324, %v1417, %v1216
      %v1463 = vsel %vm1324, %v1420, %v1218
      %v1465 = vsel %vm1324, %v1423, %v1220
      %v1467 = vsel %vm1324, %v1426, %v1222
      %v1469 = vsel %vm1324, %v1429, %v1224
      %v1471 = vsel %vm1324, %v1432, %v1226
      %v1473 = vsel %vm1324, %v1435, %v1228
      %v1475 = vsel %vm1324, %v1438, %v1230
      %v1477 = vsel %vm1324, %v1441, %v1232
      %v1479 = vsel %vm1324, %v1444, %v1234
      %v1481 = vsel %vm1324, %v1447, %v1236
      %v1483 = vsel %vm1324, %v1450, %v1238
      %v1485 = vsel %vm1324, %v1453, %v1240
      %v1487 = vsel %vm1357, %v1455, %v1257
      %v1490 = vsel %vm1357, %v1457, %v1259
      %v1493 = vsel %vm1357, %v1459, %v1261
      %v1496 = vsel %vm1357, %v1461, %v1263
      %v1499 = vsel %vm1357, %v1463, %v1265
      %v1502 = vsel %vm1357, %v1465, %v1267
      %v1505 = vsel %vm1357, %v1467, %v1269
      %v1508 = vsel %vm1357, %v1469, %v1271
      %v1511 = vsel %vm1357, %v1471, %v1273
      %v1514 = vsel %vm1357, %v1473, %v1275
      %v1517 = vsel %vm1357, %v1475, %v1277
      %v1520 = vsel %vm1357, %v1477, %v1279
      %v1523 = vsel %vm1357, %v1479, %v1281
      %v1526 = vsel %vm1357, %v1481, %v1283
      %v1529 = vsel %vm1357, %v1483, %v1285
      %v1532 = vsel %vm1357, %v1485, %v1287
      %v1534 = vld [vmem:[%s1] sm:$0xf]
      %v1535 = vld [vmem:[%s1 + $0x4] sm:$0xf]
      %v1536 = vld [vmem:[%s1 + $0x8] sm:$0xf]
      %v1537 = vld [vmem:[%s1 + $0xc] sm:$0xf]
      %v1538 = vld [vmem:[%s1 + $0x10] sm:$0xf]
      %v1539 = vld [vmem:[%s1 + $0x14] sm:$0xf]
      %v1540 = vld [vmem:[%s1 + $0x18] sm:$0xf]
      %v1541 = vld [vmem:[%s1 + $0x1c] sm:$0xf]
      %v1542 = vld [vmem:[%s1 + $0x20] sm:$0xf]
      %v1543 = vld [vmem:[%s1 + $0x24] sm:$0xf]
      %v1544 = vld [vmem:[%s1 + $0x28] sm:$0xf]
      %v1545 = vld [vmem:[%s1 + $0x2c] sm:$0xf]
      %v1546 = vld [vmem:[%s1 + $0x30] sm:$0xf]
      %v1547 = vld [vmem:[%s1 + $0x34] sm:$0xf]
      %v1548 = vld [vmem:[%s1 + $0x38] sm:$0xf]
      %v1549 = vld [vmem:[%s1 + $0x3c] sm:$0xf]
      %v1550 = vld [vmem:[%s1 + $0x40] sm:$0xf]
      %v1551 = vld [vmem:[%s1 + $0x44] sm:$0xf]
      %v1552 = vld [vmem:[%s1 + $0x48] sm:$0xf]
      %v1553 = vld [vmem:[%s1 + $0x4c] sm:$0xf]
      %v1554 = vld [vmem:[%s1 + $0x50] sm:$0xf]
      %v1555 = vld [vmem:[%s1 + $0x54] sm:$0xf]
      %v1556 = vld [vmem:[%s1 + $0x58] sm:$0xf]
      %v1557 = vld [vmem:[%s1 + $0x5c] sm:$0xf]
      %v1558 = vld [vmem:[%s1 + $0x60] sm:$0xf]
      %v1559 = vld [vmem:[%s1 + $0x64] sm:$0xf]
      %v1560 = vld [vmem:[%s1 + $0x68] sm:$0xf]
      %v1561 = vld [vmem:[%s1 + $0x6c] sm:$0xf]
      %v1562 = vld [vmem:[%s1 + $0x70] sm:$0xf]
      %v1563 = vld [vmem:[%s1 + $0x74] sm:$0xf]
      %v1564 = vld [vmem:[%s1 + $0x78] sm:$0xf]
      %v1565 = vld [vmem:[%s1 + $0x7c] sm:$0xf]
      %v1566 = vld [vmem:[%s1 + $0x80] sm:$0xf]
      %v1567 = vld [vmem:[%s1 + $0x84] sm:$0xf]
      %v1568 = vld [vmem:[%s1 + $0x88] sm:$0xf]
      %v1569 = vld [vmem:[%s1 + $0x8c] sm:$0xf]
      %v1606 = vunpack.c.l.b16 %v1534
      %v1607 = vunpack.c.l.b16 %v1535
      %v1608 = vunpack.c.l.b16 %v1536
      %v1609 = vunpack.c.l.b16 %v1537
      %v1610 = vunpack.c.l.b16 %v1538
      %v1611 = vunpack.c.l.b16 %v1539
      %v1612 = vunpack.c.l.b16 %v1540
      %v1613 = vunpack.c.l.b16 %v1541
      %v1614 = vunpack.c.l.b16 %v1542
      %v1615 = vunpack.c.l.b16 %v1543
      %v1616 = vunpack.c.l.b16 %v1544
      %v1617 = vunpack.c.l.b16 %v1545
      %v1618 = vunpack.c.l.b16 %v1546
      %v1619 = vunpack.c.l.b16 %v1547
      %v1620 = vunpack.c.l.b16 %v1548
      %v1621 = vunpack.c.l.b16 %v1549
      %v1622 = vunpack.c.l.b16 %v1550
      %v1623 = vunpack.c.l.b16 %v1551
      %v1624 = vunpack.c.l.b16 %v1552
      %v1625 = vunpack.c.l.b16 %v1553
      %v1626 = vunpack.c.l.b16 %v1554
      %v1627 = vunpack.c.l.b16 %v1555
      %v1628 = vunpack.c.l.b16 %v1556
      %v1629 = vunpack.c.l.b16 %v1557
      %v1630 = vunpack.c.l.b16 %v1558
      %v1631 = vunpack.c.l.b16 %v1559
      %v1632 = vunpack.c.l.b16 %v1560
      %v1633 = vunpack.c.l.b16 %v1561
      %v1634 = vunpack.c.l.b16 %v1562
      %v1635 = vunpack.c.l.b16 %v1563
      %v1636 = vunpack.c.l.b16 %v1564
      %v1637 = vunpack.c.l.b16 %v1565
      %v1638 = vunpack.c.l.b16 %v1566
      %v1639 = vunpack.c.l.b16 %v1567
      %v1640 = vunpack.c.l.b16 %v1568
      %v1641 = vunpack.c.l.b16 %v1569
      %v1642 = vpack.c.b16 %v1607, %v1606
      %v1643 = vpack.c.b16 %v1609, %v1608
      %v1644 = vpack.c.b16 %v1611, %v1610
      %v1645 = vpack.c.b16 %v1613, %v1612
      %v1646 = vpack.c.b16 %v1615, %v1614
      %v1647 = vpack.c.b16 %v1617, %v1616
      %v1648 = vpack.c.b16 %v1619, %v1618
      %v1649 = vpack.c.b16 %v1621, %v1620
      %v1650 = vpack.c.b16 %v1623, %v1622
      %v1651 = vpack.c.b16 %v1625, %v1624
      %v1652 = vpack.c.b16 %v1627, %v1626
      %v1653 = vpack.c.b16 %v1629, %v1628
      %v1654 = vpack.c.b16 %v1631, %v1630
      %v1655 = vpack.c.b16 %v1633, %v1632
      %v1656 = vpack.c.b16 %v1635, %v1634
      %v1657 = vpack.c.b16 %v1637, %v1636
      %v1658 = vpack.c.b16 %v1639, %v1638
      %v1659 = vpack.c.b16 %v1641, %v1640
      %v1679 = vsel %vm1291, %v1045, 0
      %v1682 = vsel %vm1291, %v1048, 0
      %v1685 = vsel %vm1291, %v1051, 0
      %v1688 = vsel %vm1291, %v1054, 0
      %v1691 = vsel %vm1291, %v1057, 0
      %v1694 = vsel %vm1291, %v1060, 0
      %v1697 = vsel %vm1291, %v1063, 0
      %v1700 = vsel %vm1291, %v1066, 0
      %v1703 = vsel %vm1291, %v1069, 0
      %v1706 = vsel %vm1291, %v1072, 0
      %v1709 = vsel %vm1291, %v1075, 0
      %v1712 = vsel %vm1291, %v1078, 0
      %v1715 = vsel %vm1291, %v1081, 0
      %v1718 = vsel %vm1291, %v1084, 0
      %v1721 = vsel %vm1291, %v1171, 0
      %v1724 = vsel %vm1291, %v1290, 0
      %1726 = vmatpush.bf16.msra.mxu0 %v1649
      %1727 = vmatpush.bf16.msra.mxu0 %v1648
      %1728 = vmatpush.bf16.msra.mxu0 %v1647
      %1729 = vmatpush.bf16.msra.mxu0 %v1646
      %1730 = vmatpush.bf16.msra.mxu0 %v1645
      %1731 = vmatpush.bf16.msra.mxu0 %v1644
      %1732 = vmatpush.bf16.msra.mxu0 %v1643
      %1733 = vmatpush.bf16.msra.mxu0 %v1642
      %1734 = vmatmul.bf16.gmra.mxu0 %v1359
      %v1735 = vpop.f32.mrf.mxu0
      %v1736 = vadd.f32 0.0, %v1735
      %v1737 = vpop.f32.mrf.mxu0
      %v1738 = vadd.f32 0.0, %v1737
      %1739 = vmatmul.bf16.gmra.mxu0 %v1362
      %v1740 = vpop.f32.mrf.mxu0
      %v1741 = vadd.f32 0.0, %v1740
      %v1742 = vpop.f32.mrf.mxu0
      %v1743 = vadd.f32 0.0, %v1742
      %1744 = vmatmul.bf16.gmra.mxu0 %v1365
      %v1745 = vpop.f32.mrf.mxu0
      %v1746 = vadd.f32 0.0, %v1745
      %v1747 = vpop.f32.mrf.mxu0
      %v1748 = vadd.f32 0.0, %v1747
      %1749 = vmatmul.bf16.gmra.mxu0 %v1368
      %v1750 = vpop.f32.mrf.mxu0
      %v1751 = vadd.f32 0.0, %v1750
      %v1752 = vpop.f32.mrf.mxu0
      %v1753 = vadd.f32 0.0, %v1752
      %1754 = vmatmul.bf16.gmra.mxu0 %v1371
      %v1755 = vpop.f32.mrf.mxu0
      %v1756 = vadd.f32 0.0, %v1755
      %v1757 = vpop.f32.mrf.mxu0
      %v1758 = vadd.f32 0.0, %v1757
      %1759 = vmatmul.bf16.gmra.mxu0 %v1374
      %v1760 = vpop.f32.mrf.mxu0
      %v1761 = vadd.f32 0.0, %v1760
      %v1762 = vpop.f32.mrf.mxu0
      %v1763 = vadd.f32 0.0, %v1762
      %1764 = vmatmul.bf16.gmra.mxu0 %v1377
      %v1765 = vpop.f32.mrf.mxu0
      %v1766 = vadd.f32 0.0, %v1765
      %v1767 = vpop.f32.mrf.mxu0
      %v1768 = vadd.f32 0.0, %v1767
      %1769 = vmatmul.bf16.gmra.mxu0 %v1380
      %v1770 = vpop.f32.mrf.mxu0
      %v1771 = vadd.f32 0.0, %v1770
      %v1772 = vpop.f32.mrf.mxu0
      %v1773 = vadd.f32 0.0, %v1772
      %1774 = vmatmul.bf16.gmra.mxu0 %v1383
      %v1775 = vpop.f32.mrf.mxu0
      %v1776 = vadd.f32 0.0, %v1775
      %v1777 = vpop.f32.mrf.mxu0
      %v1778 = vadd.f32 0.0, %v1777
      %1779 = vmatmul.bf16.gmra.mxu0 %v1386
      %v1780 = vpop.f32.mrf.mxu0
      %v1781 = vadd.f32 0.0, %v1780
      %v1782 = vpop.f32.mrf.mxu0
      %v1783 = vadd.f32 0.0, %v1782
      %1784 = vmatmul.bf16.gmra.mxu0 %v1389
      %v1785 = vpop.f32.mrf.mxu0
      %v1786 = vadd.f32 0.0, %v1785
      %v1787 = vpop.f32.mrf.mxu0
      %v1788 = vadd.f32 0.0, %v1787
      %1789 = vmatmul.bf16.gmra.mxu0 %v1392
      %v1790 = vpop.f32.mrf.mxu0
      %v1791 = vadd.f32 0.0, %v1790
      %v1792 = vpop.f32.mrf.mxu0
      %v1793 = vadd.f32 0.0, %v1792
      %1794 = vmatmul.bf16.gmra.mxu0 %v1395
      %v1795 = vpop.f32.mrf.mxu0
      %v1796 = vadd.f32 0.0, %v1795
      %v1797 = vpop.f32.mrf.mxu0
      %v1798 = vadd.f32 0.0, %v1797
      %1799 = vmatmul.bf16.gmra.mxu0 %v1398
      %v1800 = vpop.f32.mrf.mxu0
      %v1801 = vadd.f32 0.0, %v1800
      %v1802 = vpop.f32.mrf.mxu0
      %v1803 = vadd.f32 0.0, %v1802
      %1804 = vmatmul.bf16.gmra.mxu0 %v1401
      %v1805 = vpop.f32.mrf.mxu0
      %v1806 = vadd.f32 0.0, %v1805
      %v1807 = vpop.f32.mrf.mxu0
      %v1808 = vadd.f32 0.0, %v1807
      %1809 = vmatmul.bf16.gmra.mxu0 %v1404
      %v1810 = vpop.f32.mrf.mxu0
      %v1811 = vadd.f32 0.0, %v1810
      %v1812 = vpop.f32.mrf.mxu0
      %v1813 = vadd.f32 0.0, %v1812
      %1814 = vdwg.mxu0
      %1815 = vmatpush.bf16.msra.mxu0 %v1657
      %1816 = vmatpush.bf16.msra.mxu0 %v1656
      %1817 = vmatpush.bf16.msra.mxu0 %v1655
      %1818 = vmatpush.bf16.msra.mxu0 %v1654
      %1819 = vmatpush.bf16.msra.mxu0 %v1653
      %1820 = vmatpush.bf16.msra.mxu0 %v1652
      %1821 = vmatpush.bf16.msra.mxu0 %v1651
      %1822 = vmatpush.bf16.msra.mxu0 %v1650
      %1823 = vmatmul.bf16.gmra.mxu0 %v1487
      %v1824 = vpop.f32.mrf.mxu0
      %v1825 = vadd.f32 %v1736, %v1824
      %v1826 = vpop.f32.mrf.mxu0
      %v1827 = vadd.f32 %v1738, %v1826
      %1828 = vmatmul.bf16.gmra.mxu0 %v1490
      %v1829 = vpop.f32.mrf.mxu0
      %v1830 = vadd.f32 %v1741, %v1829
      %v1831 = vpop.f32.mrf.mxu0
      %v1832 = vadd.f32 %v1743, %v1831
      %1833 = vmatmul.bf16.gmra.mxu0 %v1493
      %v1834 = vpop.f32.mrf.mxu0
      %v1835 = vadd.f32 %v1746, %v1834
      %v1836 = vpop.f32.mrf.mxu0
      %v1837 = vadd.f32 %v1748, %v1836
      %1838 = vmatmul.bf16.gmra.mxu0 %v1496
      %v1839 = vpop.f32.mrf.mxu0
      %v1840 = vadd.f32 %v1751, %v1839
      %v1841 = vpop.f32.mrf.mxu0
      %v1842 = vadd.f32 %v1753, %v1841
      %1843 = vmatmul.bf16.gmra.mxu0 %v1499
      %v1844 = vpop.f32.mrf.mxu0
      %v1845 = vadd.f32 %v1756, %v1844
      %v1846 = vpop.f32.mrf.mxu0
      %v1847 = vadd.f32 %v1758, %v1846
      %1848 = vmatmul.bf16.gmra.mxu0 %v1502
      %v1849 = vpop.f32.mrf.mxu0
      %v1850 = vadd.f32 %v1761, %v1849
      %v1851 = vpop.f32.mrf.mxu0
      %v1852 = vadd.f32 %v1763, %v1851
      %1853 = vmatmul.bf16.gmra.mxu0 %v1505
      %v1854 = vpop.f32.mrf.mxu0
      %v1855 = vadd.f32 %v1766, %v1854
      %v1856 = vpop.f32.mrf.mxu0
      %v1857 = vadd.f32 %v1768, %v1856
      %1858 = vmatmul.bf16.gmra.mxu0 %v1508
      %v1859 = vpop.f32.mrf.mxu0
      %v1860 = vadd.f32 %v1771, %v1859
      %v1861 = vpop.f32.mrf.mxu0
      %v1862 = vadd.f32 %v1773, %v1861
      %1863 = vmatmul.bf16.gmra.mxu0 %v1511
      %v1864 = vpop.f32.mrf.mxu0
      %v1865 = vadd.f32 %v1776, %v1864
      %v1866 = vpop.f32.mrf.mxu0
      %v1867 = vadd.f32 %v1778, %v1866
      %1868 = vmatmul.bf16.gmra.mxu0 %v1514
      %v1869 = vpop.f32.mrf.mxu0
      %v1870 = vadd.f32 %v1781, %v1869
      %v1871 = vpop.f32.mrf.mxu0
      %v1872 = vadd.f32 %v1783, %v1871
      %1873 = vmatmul.bf16.gmra.mxu0 %v1517
      %v1874 = vpop.f32.mrf.mxu0
      %v1875 = vadd.f32 %v1786, %v1874
      %v1876 = vpop.f32.mrf.mxu0
      %v1877 = vadd.f32 %v1788, %v1876
      %1878 = vmatmul.bf16.gmra.mxu0 %v1520
      %v1879 = vpop.f32.mrf.mxu0
      %v1880 = vadd.f32 %v1791, %v1879
      %v1881 = vpop.f32.mrf.mxu0
      %v1882 = vadd.f32 %v1793, %v1881
      %1883 = vmatmul.bf16.gmra.mxu0 %v1523
      %v1884 = vpop.f32.mrf.mxu0
      %v1885 = vadd.f32 %v1796, %v1884
      %v1886 = vpop.f32.mrf.mxu0
      %v1887 = vadd.f32 %v1798, %v1886
      %1888 = vmatmul.bf16.gmra.mxu0 %v1526
      %v1889 = vpop.f32.mrf.mxu0
      %v1890 = vadd.f32 %v1801, %v1889
      %v1891 = vpop.f32.mrf.mxu0
      %v1892 = vadd.f32 %v1803, %v1891
      %1893 = vmatmul.bf16.gmra.mxu0 %v1529
      %v1894 = vpop.f32.mrf.mxu0
      %v1895 = vadd.f32 %v1806, %v1894
      %v1896 = vpop.f32.mrf.mxu0
      %v1897 = vadd.f32 %v1808, %v1896
      %1898 = vmatmul.bf16.gmra.mxu0 %v1532
      %v1899 = vpop.f32.mrf.mxu0
      %v1900 = vadd.f32 %v1811, %v1899
      %v1901 = vpop.f32.mrf.mxu0
      %v1902 = vadd.f32 %v1813, %v1901
      %1903 = vdwg.mxu0
      %1904 = vmatpush.bf16.msra.mxu0 0
      %1905 = vmatpush.bf16.msra.mxu0 0
      %1906 = vmatpush.bf16.msra.mxu0 0
      %1907 = vmatpush.bf16.msra.mxu0 0
      %1908 = vmatpush.bf16.msra.mxu0 0
      %1909 = vmatpush.bf16.msra.mxu0 0
      %1910 = vmatpush.bf16.msra.mxu0 %v1659
      %1911 = vmatpush.bf16.msra.mxu0 %v1658
      %1912 = vmatmul.bf16.gmra.mxu0 %v1679
      %v1913 = vpop.f32.mrf.mxu0
      %v1914 = vadd.f32 %v1825, %v1913
      %v1915 = vpop.f32.mrf.mxu0
      %v1916 = vadd.f32 %v1827, %v1915
      %1917 = vmatmul.bf16.gmra.mxu0 %v1682
      %v1918 = vpop.f32.mrf.mxu0
      %v1919 = vadd.f32 %v1830, %v1918
      %v1920 = vpop.f32.mrf.mxu0
      %v1921 = vadd.f32 %v1832, %v1920
      %1922 = vmatmul.bf16.gmra.mxu0 %v1685
      %v1923 = vpop.f32.mrf.mxu0
      %v1924 = vadd.f32 %v1835, %v1923
      %v1925 = vpop.f32.mrf.mxu0
      %v1926 = vadd.f32 %v1837, %v1925
      %1927 = vmatmul.bf16.gmra.mxu0 %v1688
      %v1928 = vpop.f32.mrf.mxu0
      %v1929 = vadd.f32 %v1840, %v1928
      %v1930 = vpop.f32.mrf.mxu0
      %v1931 = vadd.f32 %v1842, %v1930
      %1932 = vmatmul.bf16.gmra.mxu0 %v1691
      %v1933 = vpop.f32.mrf.mxu0
      %v1934 = vadd.f32 %v1845, %v1933
      %v1935 = vpop.f32.mrf.mxu0
      %v1936 = vadd.f32 %v1847, %v1935
      %1937 = vmatmul.bf16.gmra.mxu0 %v1694
      %v1938 = vpop.f32.mrf.mxu0
      %v1939 = vadd.f32 %v1850, %v1938
      %v1940 = vpop.f32.mrf.mxu0
      %v1941 = vadd.f32 %v1852, %v1940
      %1942 = vmatmul.bf16.gmra.mxu0 %v1697
      %v1943 = vpop.f32.mrf.mxu0
      %v1944 = vadd.f32 %v1855, %v1943
      %v1945 = vpop.f32.mrf.mxu0
      %v1946 = vadd.f32 %v1857, %v1945
      %1947 = vmatmul.bf16.gmra.mxu0 %v1700
      %v1948 = vpop.f32.mrf.mxu0
      %v1949 = vadd.f32 %v1860, %v1948
      %v1950 = vpop.f32.mrf.mxu0
      %v1951 = vadd.f32 %v1862, %v1950
      %1952 = vmatmul.bf16.gmra.mxu0 %v1703
      %v1953 = vpop.f32.mrf.mxu0
      %v1954 = vadd.f32 %v1865, %v1953
      %v1955 = vpop.f32.mrf.mxu0
      %v1956 = vadd.f32 %v1867, %v1955
      %1957 = vmatmul.bf16.gmra.mxu0 %v1706
      %v1958 = vpop.f32.mrf.mxu0
      %v1959 = vadd.f32 %v1870, %v1958
      %v1960 = vpop.f32.mrf.mxu0
      %v1961 = vadd.f32 %v1872, %v1960
      %1962 = vmatmul.bf16.gmra.mxu0 %v1709
      %v1963 = vpop.f32.mrf.mxu0
      %v1964 = vadd.f32 %v1875, %v1963
      %v1965 = vpop.f32.mrf.mxu0
      %v1966 = vadd.f32 %v1877, %v1965
      %1967 = vmatmul.bf16.gmra.mxu0 %v1712
      %v1968 = vpop.f32.mrf.mxu0
      %v1969 = vadd.f32 %v1880, %v1968
      %v1970 = vpop.f32.mrf.mxu0
      %v1971 = vadd.f32 %v1882, %v1970
      %1972 = vmatmul.bf16.gmra.mxu0 %v1715
      %v1973 = vpop.f32.mrf.mxu0
      %v1974 = vadd.f32 %v1885, %v1973
      %v1975 = vpop.f32.mrf.mxu0
      %v1976 = vadd.f32 %v1887, %v1975
      %1977 = vmatmul.bf16.gmra.mxu0 %v1718
      %v1978 = vpop.f32.mrf.mxu0
      %v1979 = vadd.f32 %v1890, %v1978
      %v1980 = vpop.f32.mrf.mxu0
      %v1981 = vadd.f32 %v1892, %v1980
      %1982 = vmatmul.bf16.gmra.mxu0 %v1721
      %v1983 = vpop.f32.mrf.mxu0
      %v1984 = vadd.f32 %v1895, %v1983
      %v1985 = vpop.f32.mrf.mxu0
      %v1986 = vadd.f32 %v1897, %v1985
      %1987 = vmatmul.bf16.gmra.mxu0 %v1724
      %v1988 = vpop.f32.mrf.mxu0
      %v1989 = vadd.f32 %v1900, %v1988
      %v1990 = vpop.f32.mrf.mxu0
      %v1991 = vadd.f32 %v1902, %v1990
      %1992 = vdwg.mxu0
      %v1993 = vpack.c.bf16 %v1914, %v1914
      %v1994 = vpack.c.bf16 %v1916, %v1916
      %v1995 = vpack.c.bf16 %v1919, %v1919
      %v1996 = vpack.c.bf16 %v1921, %v1921
      %v1997 = vpack.c.bf16 %v1924, %v1924
      %v1998 = vpack.c.bf16 %v1926, %v1926
      %v1999 = vpack.c.bf16 %v1929, %v1929
      %v2000 = vpack.c.bf16 %v1931, %v1931
      %v2001 = vpack.c.bf16 %v1934, %v1934
      %v2002 = vpack.c.bf16 %v1936, %v1936
      %v2003 = vpack.c.bf16 %v1939, %v1939
      %v2004 = vpack.c.bf16 %v1941, %v1941
      %v2005 = vpack.c.bf16 %v1944, %v1944
      %v2006 = vpack.c.bf16 %v1946, %v1946
      %v2007 = vpack.c.bf16 %v1949, %v1949
      %v2008 = vpack.c.bf16 %v1951, %v1951
      %v2009 = vpack.c.bf16 %v1954, %v1954
      %v2010 = vpack.c.bf16 %v1956, %v1956
      %v2011 = vpack.c.bf16 %v1959, %v1959
      %v2012 = vpack.c.bf16 %v1961, %v1961
      %v2013 = vpack.c.bf16 %v1964, %v1964
      %v2014 = vpack.c.bf16 %v1966, %v1966
      %v2015 = vpack.c.bf16 %v1969, %v1969
      %v2016 = vpack.c.bf16 %v1971, %v1971
      %v2017 = vpack.c.bf16 %v1974, %v1974
      %v2018 = vpack.c.bf16 %v1976, %v1976
      %v2019 = vpack.c.bf16 %v1979, %v1979
      %v2020 = vpack.c.bf16 %v1981, %v1981
      %v2021 = vpack.c.bf16 %v1984, %v1984
      %v2022 = vpack.c.bf16 %v1986, %v1986
      %v2023 = vpack.c.bf16 %v1989, %v1989
      %v2024 = vpack.c.bf16 %v1991, %v1991
      %vm2025 = vcmask 257024
      %2026 = vst.msk [vmem:[%s286] sm:$0xf] %vm2025, %v1993
      %2027 = vst.msk [vmem:[%s286 + $0x4] sm:$0xf] %vm2025, %v1994
      %2028 = vst.msk [vmem:[%s286 + $0x8] sm:$0xf] %vm2025, %v1995
      %2029 = vst.msk [vmem:[%s286 + $0xc] sm:$0xf] %vm2025, %v1996
      %2030 = vst.msk [vmem:[%s286 + $0x10] sm:$0xf] %vm2025, %v1997
      %2031 = vst.msk [vmem:[%s286 + $0x14] sm:$0xf] %vm2025, %v1998
      %2032 = vst.msk [vmem:[%s286 + $0x18] sm:$0xf] %vm2025, %v1999
      %2033 = vst.msk [vmem:[%s286 + $0x1c] sm:$0xf] %vm2025, %v2000
      %2034 = vst.msk [vmem:[%s286 + $0x20] sm:$0xf] %vm2025, %v2001
      %2035 = vst.msk [vmem:[%s286 + $0x24] sm:$0xf] %vm2025, %v2002
      %2036 = vst.msk [vmem:[%s286 + $0x28] sm:$0xf] %vm2025, %v2003
      %2037 = vst.msk [vmem:[%s286 + $0x2c] sm:$0xf] %vm2025, %v2004
      %2038 = vst.msk [vmem:[%s286 + $0x30] sm:$0xf] %vm2025, %v2005
      %2039 = vst.msk [vmem:[%s286 + $0x34] sm:$0xf] %vm2025, %v2006
      %2040 = vst.msk [vmem:[%s286 + $0x38] sm:$0xf] %vm2025, %v2007
      %2041 = vst.msk [vmem:[%s286 + $0x3c] sm:$0xf] %vm2025, %v2008
      %2042 = vst.msk [vmem:[%s286 + $0x40] sm:$0xf] %vm2025, %v2009
      %2043 = vst.msk [vmem:[%s286 + $0x44] sm:$0xf] %vm2025, %v2010
      %2044 = vst.msk [vmem:[%s286 + $0x48] sm:$0xf] %vm2025, %v2011
      %2045 = vst.msk [vmem:[%s286 + $0x4c] sm:$0xf] %vm2025, %v2012
      %2046 = vst.msk [vmem:[%s286 + $0x50] sm:$0xf] %vm2025, %v2013
      %2047 = vst.msk [vmem:[%s286 + $0x54] sm:$0xf] %vm2025, %v2014
      %2048 = vst.msk [vmem:[%s286 + $0x58] sm:$0xf] %vm2025, %v2015
      %2049 = vst.msk [vmem:[%s286 + $0x5c] sm:$0xf] %vm2025, %v2016
      %2050 = vst.msk [vmem:[%s286 + $0x60] sm:$0xf] %vm2025, %v2017
      %2051 = vst.msk [vmem:[%s286 + $0x64] sm:$0xf] %vm2025, %v2018
      %2052 = vst.msk [vmem:[%s286 + $0x68] sm:$0xf] %vm2025, %v2019
      %2053 = vst.msk [vmem:[%s286 + $0x6c] sm:$0xf] %vm2025, %v2020
      %2054 = vst.msk [vmem:[%s286 + $0x70] sm:$0xf] %vm2025, %v2021
      %2055 = vst.msk [vmem:[%s286 + $0x74] sm:$0xf] %vm2025, %v2022
      %2056 = vst.msk [vmem:[%s286 + $0x78] sm:$0xf] %vm2025, %v2023
      %2057 = vst.msk [vmem:[%s286 + $0x7c] sm:$0xf] %vm2025, %v2024
      %v2058 = vunpack.c.l.bf16 %v1993
      %v2059 = vunpack.c.l.bf16 %v1994
      %v2060 = vunpack.c.l.bf16 %v1995
      %v2061 = vunpack.c.l.bf16 %v1996
      %v2062 = vunpack.c.l.bf16 %v1997
      %v2063 = vunpack.c.l.bf16 %v1998
      %v2064 = vunpack.c.l.bf16 %v1999
      %v2065 = vunpack.c.l.bf16 %v2000
      %v2066 = vunpack.c.l.bf16 %v2001
      %v2067 = vunpack.c.l.bf16 %v2002
      %v2068 = vunpack.c.l.bf16 %v2003
      %v2069 = vunpack.c.l.bf16 %v2004
      %v2070 = vunpack.c.l.bf16 %v2005
      %v2071 = vunpack.c.l.bf16 %v2006
      %v2072 = vunpack.c.l.bf16 %v2007
      %v2073 = vunpack.c.l.bf16 %v2008
      %v2074 = vunpack.c.l.bf16 %v2009
      %v2075 = vunpack.c.l.bf16 %v2010
      %v2076 = vunpack.c.l.bf16 %v2011
      %v2077 = vunpack.c.l.bf16 %v2012
      %v2078 = vunpack.c.l.bf16 %v2013
      %v2079 = vunpack.c.l.bf16 %v2014
      %v2080 = vunpack.c.l.bf16 %v2015
      %v2081 = vunpack.c.l.bf16 %v2016
      %v2082 = vunpack.c.l.bf16 %v2017
      %v2083 = vunpack.c.l.bf16 %v2018
      %v2084 = vunpack.c.l.bf16 %v2019
      %v2085 = vunpack.c.l.bf16 %v2020
      %v2086 = vunpack.c.l.bf16 %v2021
      %v2087 = vunpack.c.l.bf16 %v2022
      %v2088 = vunpack.c.l.bf16 %v2023
      %v2089 = vunpack.c.l.bf16 %v2024
      %v2090 = vsel %vm1291, %v2058, 0.0
      %v2091 = vsel %vm1291, %v2059, 0.0
      %v2092 = vadd.f32 %v2090, %v2091
      %v2093 = vsel %vm1291, %v2060, 0.0
      %v2094 = vadd.f32 %v2092, %v2093
      %v2095 = vsel %vm1291, %v2061, 0.0
      %v2096 = vadd.f32 %v2094, %v2095
      %v2097 = vsel %vm1291, %v2062, 0.0
      %v2098 = vadd.f32 %v2096, %v2097
      %v2099 = vsel %vm1291, %v2063, 0.0
      %v2100 = vadd.f32 %v2098, %v2099
      %v2101 = vsel %vm1291, %v2064, 0.0
      %v2102 = vadd.f32 %v2100, %v2101
      %v2103 = vsel %vm1291, %v2065, 0.0
      %v2104 = vadd.f32 %v2102, %v2103
      %v2105 = vsel %vm1291, %v2066, 0.0
      %v2106 = vadd.f32 %v2104, %v2105
      %v2107 = vsel %vm1291, %v2067, 0.0
      %v2108 = vadd.f32 %v2106, %v2107
      %v2109 = vsel %vm1291, %v2068, 0.0
      %v2110 = vadd.f32 %v2108, %v2109
      %v2111 = vsel %vm1291, %v2069, 0.0
      %v2112 = vadd.f32 %v2110, %v2111
      %v2113 = vsel %vm1291, %v2070, 0.0
      %v2114 = vadd.f32 %v2112, %v2113
      %v2115 = vsel %vm1291, %v2071, 0.0
      %v2116 = vadd.f32 %v2114, %v2115
      %v2117 = vsel %vm1291, %v2072, 0.0
      %v2118 = vadd.f32 %v2116, %v2117
      %v2119 = vsel %vm1291, %v2073, 0.0
      %v2120 = vadd.f32 %v2118, %v2119
      %v2121 = vsel %vm1291, %v2074, 0.0
      %v2122 = vadd.f32 %v2120, %v2121
      %v2123 = vsel %vm1291, %v2075, 0.0
      %v2124 = vadd.f32 %v2122, %v2123
      %v2125 = vsel %vm1291, %v2076, 0.0
      %v2126 = vadd.f32 %v2124, %v2125
      %v2127 = vsel %vm1291, %v2077, 0.0
      %v2128 = vadd.f32 %v2126, %v2127
      %v2129 = vsel %vm1291, %v2078, 0.0
      %v2130 = vadd.f32 %v2128, %v2129
      %v2131 = vsel %vm1291, %v2079, 0.0
      %v2132 = vadd.f32 %v2130, %v2131
      %v2133 = vsel %vm1291, %v2080, 0.0
      %v2134 = vadd.f32 %v2132, %v2133
      %v2135 = vsel %vm1291, %v2081, 0.0
      %v2136 = vadd.f32 %v2134, %v2135
      %v2137 = vsel %vm1291, %v2082, 0.0
      %v2138 = vadd.f32 %v2136, %v2137
      %v2139 = vsel %vm1291, %v2083, 0.0
      %v2140 = vadd.f32 %v2138, %v2139
      %v2141 = vsel %vm1291, %v2084, 0.0
      %v2142 = vadd.f32 %v2140, %v2141
      %v2143 = vsel %vm1291, %v2085, 0.0
      %v2144 = vadd.f32 %v2142, %v2143
      %v2145 = vsel %vm1291, %v2086, 0.0
      %v2146 = vadd.f32 %v2144, %v2145
      %v2147 = vsel %vm1291, %v2087, 0.0
      %v2148 = vadd.f32 %v2146, %v2147
      %v2149 = vsel %vm1291, %v2088, 0.0
      %v2150 = vadd.f32 %v2148, %v2149
      %v2151 = vsel %vm1291, %v2089, 0.0
      %v2152 = vadd.f32 %v2150, %v2151
      %v2153 = vrot.slane %v2152, 4
      %v2154 = vadd.f32 %v2152, %v2153
      %v2155 = vrot.slane %v2154, 2
      %v2156 = vadd.f32 %v2154, %v2155
      %v2157 = vrot.slane %v2156, 1
      %v2158 = vadd.f32 %v2156, %v2157
      %v2159 = vmul.f32 %v2058, %v2058
      %v2160 = vmul.f32 %v2059, %v2059
      %v2161 = vmul.f32 %v2060, %v2060
      %v2162 = vmul.f32 %v2061, %v2061
      %v2163 = vmul.f32 %v2062, %v2062
      %v2164 = vmul.f32 %v2063, %v2063
      %v2165 = vmul.f32 %v2064, %v2064
      %v2166 = vmul.f32 %v2065, %v2065
      %v2167 = vmul.f32 %v2066, %v2066
      %v2168 = vmul.f32 %v2067, %v2067
      %v2169 = vmul.f32 %v2068, %v2068
      %v2170 = vmul.f32 %v2069, %v2069
      %v2171 = vmul.f32 %v2070, %v2070
      %v2172 = vmul.f32 %v2071, %v2071
      %v2173 = vmul.f32 %v2072, %v2072
      %v2174 = vmul.f32 %v2073, %v2073
      %v2175 = vmul.f32 %v2074, %v2074
      %v2176 = vmul.f32 %v2075, %v2075
      %v2177 = vmul.f32 %v2076, %v2076
      %v2178 = vmul.f32 %v2077, %v2077
      %v2179 = vmul.f32 %v2078, %v2078
      %v2180 = vmul.f32 %v2079, %v2079
      %v2181 = vmul.f32 %v2080, %v2080
      %v2182 = vmul.f32 %v2081, %v2081
      %v2183 = vmul.f32 %v2082, %v2082
      %v2184 = vmul.f32 %v2083, %v2083
      %v2185 = vmul.f32 %v2084, %v2084
      %v2186 = vmul.f32 %v2085, %v2085
      %v2187 = vmul.f32 %v2086, %v2086
      %v2188 = vmul.f32 %v2087, %v2087
      %v2189 = vmul.f32 %v2088, %v2088
      %v2190 = vmul.f32 %v2089, %v2089
      %v2191 = vsel %vm1291, %v2159, 0.0
      %v2192 = vsel %vm1291, %v2160, 0.0
      %v2193 = vadd.f32 %v2191, %v2192
      %v2194 = vsel %vm1291, %v2161, 0.0
      %v2195 = vadd.f32 %v2193, %v2194
      %v2196 = vsel %vm1291, %v2162, 0.0
      %v2197 = vadd.f32 %v2195, %v2196
      %v2198 = vsel %vm1291, %v2163, 0.0
      %v2199 = vadd.f32 %v2197, %v2198
      %v2200 = vsel %vm1291, %v2164, 0.0
      %v2201 = vadd.f32 %v2199, %v2200
      %v2202 = vsel %vm1291, %v2165, 0.0
      %v2203 = vadd.f32 %v2201, %v2202
      %v2204 = vsel %vm1291, %v2166, 0.0
      %v2205 = vadd.f32 %v2203, %v2204
      %v2206 = vsel %vm1291, %v2167, 0.0
      %v2207 = vadd.f32 %v2205, %v2206
      %v2208 = vsel %vm1291, %v2168, 0.0
      %v2209 = vadd.f32 %v2207, %v2208
      %v2210 = vsel %vm1291, %v2169, 0.0
      %v2211 = vadd.f32 %v2209, %v2210
      %v2212 = vsel %vm1291, %v2170, 0.0
      %v2213 = vadd.f32 %v2211, %v2212
      %v2214 = vsel %vm1291, %v2171, 0.0
      %v2215 = vadd.f32 %v2213, %v2214
      %v2216 = vsel %vm1291, %v2172, 0.0
      %v2217 = vadd.f32 %v2215, %v2216
      %v2218 = vsel %vm1291, %v2173, 0.0
      %v2219 = vadd.f32 %v2217, %v2218
      %v2220 = vsel %vm1291, %v2174, 0.0
      %v2221 = vadd.f32 %v2219, %v2220
      %v2222 = vsel %vm1291, %v2175, 0.0
      %v2223 = vadd.f32 %v2221, %v2222
      %v2224 = vsel %vm1291, %v2176, 0.0
      %v2225 = vadd.f32 %v2223, %v2224
      %v2226 = vsel %vm1291, %v2177, 0.0
      %v2227 = vadd.f32 %v2225, %v2226
      %v2228 = vsel %vm1291, %v2178, 0.0
      %v2229 = vadd.f32 %v2227, %v2228
      %v2230 = vsel %vm1291, %v2179, 0.0
      %v2231 = vadd.f32 %v2229, %v2230
      %v2232 = vsel %vm1291, %v2180, 0.0
      %v2233 = vadd.f32 %v2231, %v2232
      %v2234 = vsel %vm1291, %v2181, 0.0
      %v2235 = vadd.f32 %v2233, %v2234
      %v2236 = vsel %vm1291, %v2182, 0.0
      %v2237 = vadd.f32 %v2235, %v2236
      %v2238 = vsel %vm1291, %v2183, 0.0
      %v2239 = vadd.f32 %v2237, %v2238
      %v2240 = vsel %vm1291, %v2184, 0.0
      %v2241 = vadd.f32 %v2239, %v2240
      %v2242 = vsel %vm1291, %v2185, 0.0
      %v2243 = vadd.f32 %v2241, %v2242
      %v2244 = vsel %vm1291, %v2186, 0.0
      %v2245 = vadd.f32 %v2243, %v2244
      %v2246 = vsel %vm1291, %v2187, 0.0
      %v2247 = vadd.f32 %v2245, %v2246
      %v2248 = vsel %vm1291, %v2188, 0.0
      %v2249 = vadd.f32 %v2247, %v2248
      %v2250 = vsel %vm1291, %v2189, 0.0
      %v2251 = vadd.f32 %v2249, %v2250
      %v2252 = vsel %vm1291, %v2190, 0.0
      %v2253 = vadd.f32 %v2251, %v2252
      %v2254 = vrot.slane %v2253, 4
      %v2255 = vadd.f32 %v2253, %v2254
      %v2256 = vrot.slane %v2255, 2
      %v2257 = vadd.f32 %v2255, %v2256
      %v2258 = vrot.slane %v2257, 1
      %v2259 = vadd.f32 %v2257, %v2258
      %v2260 = vsel %vm578, %v2158, %v2259
      %vm2261 = vcmask 254976
      %2262 = vst.msk [vmem:[%s294] sm:$0x3] %vm2261, %v2260
      %s2263 = smul.u32 32, %s22
      %p2264 = scmp.lt.s32.totalorder %s21, 1
      %s2265 = scalar_select %p2264, %s21, 1
      %p2266 = scmp.lt.s32.totalorder %s2263, 31
      %s2267 = scalar_select %p2266, %s2263, 31
      %s2268 = smul.addr %s2265, 32
      %s2269 = sadd.s32 %s2267, %s2268
      %s2270 = smul.addr %s2269, 4
      %s2271 = scalar_lea.vmem %s4, %s2270
      %p2272 = scmp.lt.s32.totalorder %s21, 1
      %s2273 = scalar_select %p2272, %s21, 1
      %p2274 = scmp.lt.s32.totalorder %s22, 0
      %s2275 = scalar_select %p2274, %s22, 0
      %s2276 = sadd.s32 %s2275, %s2273
      %s2277 = smul.addr %s2276, 2
      %s2278 = scalar_lea.vmem %s5, %s2277
      // Predicated region
      $region37: #{forward_single.13} parent=35 // pred_check
        %p2279 = pneg %p148
      $region38: #{forward_single.13} parent=35 // pred_check_branch
        %2281 = sbr.rel (%p2279) target = $region40
      $region39: #{forward_single.13} parent=35 // pred_region
        %s2282 = smul.u32 32, %s22
      $region40: #{forward_single.13} parent=35 // pred_fallthru
        _
      // Predicated region
      $region41: #{forward_single.13} parent=35 // pred_check
        %p2283 = pneg %p176
      $region42: #{forward_single.13} parent=35 // pred_check_branch
        %2285 = sbr.rel (%p2283) target = $region44
      $region43: #{forward_single.13} parent=35 // pred_region
        _
      $region44: #{forward_single.13} parent=35 // pred_fallthru
        _
    $region36: #{forward_single.13} parent=5 // pred_fallthru
      _
    %p2286 = scmp.le.s32.totalorder 2, %s12
    // Predicated region
    $region45: #{forward_single.13} parent=5 // pred_check
      %p2287 = pneg %p2286
    $region46: #{forward_single.13} parent=5 // pred_check_branch
      %2289 = sbr.rel (%p2287) target = $region48
    $region47: #{forward_single.13} parent=5 // pred_region
      %s2290 = ssub.s32 %s12, 2
      // Predicated region
      $region49: #{forward_single.13} parent=47 // pred_check
        %p2291 = pneg %p154
      $region50: #{forward_single.13} parent=47 // pred_check_branch
        %2293 = sbr.rel (%p2291) target = $region52
      $region51: #{forward_single.13} parent=47 // pred_region
        %s2294 = smul.u32 32, %s24
        %p2295 = scmp.lt.s32.totalorder %s23, 1
        %s2296 = scalar_select %p2295, %s23, 1
        %p2297 = scmp.lt.s32.totalorder %s2294, 31
        %s2298 = scalar_select %p2297, %s2294, 31
        %s2299 = smul.addr %s2296, 32
        %s2300 = sadd.s32 %s2298, %s2299
        %s2301 = smul.addr %s2300, 4
        %s2302 = scalar_lea.vmem %s4, %s2301
      $region52: #{forward_single.13} parent=47 // pred_fallthru
        _
      // Predicated region
      $region53: #{forward_single.13} parent=47 // pred_check
        %p2303 = pneg %p182
      $region54: #{forward_single.13} parent=47 // pred_check_branch
        %2305 = sbr.rel (%p2303) target = $region56
      $region55: #{forward_single.13} parent=47 // pred_region
        %p2306 = scmp.lt.s32.totalorder %s23, 1
        %s2307 = scalar_select %p2306, %s23, 1
        %p2308 = scmp.lt.s32.totalorder %s24, 0
        %s2309 = scalar_select %p2308, %s24, 0
        %s2310 = sadd.s32 %s2309, %s2307
        %s2311 = smul.addr %s2310, 2
        %s2312 = scalar_lea.vmem %s5, %s2311
      $region56: #{forward_single.13} parent=47 // pred_fallthru
        _
    $region48: #{forward_single.13} parent=5 // pred_fallthru
      _
  $region6: #{forward_single.13} parent=0 // loop_footer
    %s16 = sadd.s32 1, %s12
  $region7: #{forward_single.13} parent=0 // loop_footer_branch
    %11 = sbr.rel target = $region3
  $region8: #{forward_single.13} parent=0 // loop_exit
    _

// kernel: forward_single.16
$region0: #{forward_single.16}
  #allocation0 [shape = 'u32[]', space=smem, size = 0x4, offset = 0x4, fixed_abs, tag = 'smem constant byte address 0x4 - core index']
  #allocation1 [shape = 'u32[72,128]{1,0:T(1,128)}', space=vmem, size = 0x9000, scoped, tag = 'internal scratch']
  %s0 = inlined_call_operand.vmem [shape: bf16[2,18,18,32], index: 0, kind: input, shape index: {}]
  %s1 = inlined_call_operand.vmem [shape: bf16[288,128], index: 1, kind: input, shape index: {}]
  %s2 = inlined_call_operand.vmem [shape: f32[2,1,32], index: 2, kind: input, shape index: {}]
  %s3 = inlined_call_operand.vmem [shape: f32[2,1,32], index: 3, kind: input, shape index: {}]
  %s4 = inlined_call_operand.vmem [shape: f32[1,128], index: 4, kind: input, shape index: {}]
  %s5 = inlined_call_operand.vmem [shape: bf16[2,256,128], index: 5, kind: output, shape index: {}]
  %s6 = sld [smem:[#allocation0]]
  $region53: #{forward_single.16} parent=0
    _
  %s8 = ssub.s32 1, %s6
  %s9 = scalar_select 0, %s8, %s6
  loop: start=0, step=1, limit=4
  $region2: #{forward_single.16} parent=0 // loop_pre_header
    _
  $region3: #{forward_single.16} parent=0 // loop_header
    %s11 = sphi 0, %s15
    %p12 = scmp.ge.s32.totalorder %s11, 4
    %s18 = sphi 0, %s30
    %s19 = sphi 0, %s26
    %s20 = sphi 0, %s18
    %s21 = sphi 0, %s19
    %s22 = sphi 0, %s20
    %s23 = sphi 0, %s21
    %s33 = sphi 0, %s35
    %s36 = sphi 0, %s33
    %s37 = sphi 0, %s36
    %s53 = sphi 0, %s37
    %s57 = sphi 0, %s57
    %s59 = sphi 0, %s57
    %s60 = sphi 0, %s59
    %s74 = sphi 0, %s60
    %s80 = sphi 0, %s82
    %s83 = sphi 0, %s80
    %s84 = sphi 0, %s83
    %s100 = sphi 0, %s84
    %s106 = sphi 0, %s108
    %s109 = sphi 0, %s106
    %s110 = sphi 0, %s109
    %s126 = sphi 0, %s110
    %s130 = sphi 0, %s130
    %s132 = sphi 0, %s130
    %s133 = sphi 0, %s132
    %s147 = sphi 0, %s133
    %s155 = sphi 0, %s157
    %s158 = sphi 0, %s155
    %s159 = sphi 0, %s158
    %s175 = sphi 0, %s159
  $region4: #{forward_single.16} parent=0 // loop_header_branch
    %14 = sbr.rel (%p12) target = $region8
  $region5: #{forward_single.16} parent=0 // loop_body
    %s16 = ssub.s32 %s11, 1
    %s17 = ssub.s32 %s11, 2
    %s24 = sadd.s32 1, %s19
    %p25 = scmp.ge.s32.totalorder %s24, 1
    %s26 = scalar_select %p25, 0, %s24
    %s27 = sadd.s32 1, %s18
    %s28 = scalar_select %p25, %s27, %s18
    %p29 = scmp.ge.s32.totalorder %s28, 2
    %s30 = scalar_select %p29, 0, %s28
    %s31 = ssub.s32 %s18, %s30
    %p32 = scmp.eq.s32.totalorder %s31, 0
    %s34 = sadd.s32 %s33, 1
    %s35 = scalar_select %p32, %s33, %s34
    %p38 = pneg %p32
    %p39 = scmp.eq.s32.totalorder %s11, 1
    %p40 = por %p38, %p39
    %p41 = scmp.ne.s32.totalorder %s33, %s36
    %p42 = scmp.eq.s32.totalorder %s11, 0
    %p43 = por %p41, %p42
    %p44 = scmp.ne.s32.totalorder %s33, %s36
    %p45 = scmp.eq.s32.totalorder %s16, 1
    %p46 = por %p44, %p45
    %p47 = scmp.ne.s32.totalorder %s36, %s37
    %p48 = scmp.eq.s32.totalorder %s16, 0
    %p49 = por %p47, %p48
    %p50 = scmp.ne.s32.totalorder %s36, %s37
    %p51 = scmp.eq.s32.totalorder %s17, 1
    %p52 = por %p50, %p51
    %p54 = scmp.ne.s32.totalorder %s37, %s53
    %p55 = scmp.eq.s32.totalorder %s17, 0
    %p56 = por %p54, %p55
    %s58 = sadd.s32 %s57, 1
    %p61 = scmp.eq.s32.totalorder %s11, 1
    %p62 = scmp.ne.s32.totalorder %s57, %s59
    %p63 = scmp.eq.s32.totalorder %s11, 0
    %p64 = por %p62, %p63
    %p65 = scmp.ne.s32.totalorder %s57, %s59
    %p66 = scmp.eq.s32.totalorder %s16, 1
    %p67 = por %p65, %p66
    %p68 = scmp.ne.s32.totalorder %s59, %s60
    %p69 = scmp.eq.s32.totalorder %s16, 0
    %p70 = por %p68, %p69
    %p71 = scmp.ne.s32.totalorder %s59, %s60
    %p72 = scmp.eq.s32.totalorder %s17, 1
    %p73 = por %p71, %p72
    %p75 = scmp.ne.s32.totalorder %s60, %s74
    %p76 = scmp.eq.s32.totalorder %s17, 0
    %p77 = por %p75, %p76
    %s78 = ssub.s32 %s18, %s30
    %p79 = scmp.eq.s32.totalorder %s78, 0
    %s81 = sadd.s32 %s80, 1
    %s82 = scalar_select %p79, %s80, %s81
    %p85 = pneg %p79
    %p86 = scmp.eq.s32.totalorder %s11, 1
    %p87 = por %p85, %p86
    %p88 = scmp.ne.s32.totalorder %s80, %s83
    %p89 = scmp.eq.s32.totalorder %s11, 0
    %p90 = por %p88, %p89
    %p91 = scmp.ne.s32.totalorder %s80, %s83
    %p92 = scmp.eq.s32.totalorder %s16, 1
    %p93 = por %p91, %p92
    %p94 = scmp.ne.s32.totalorder %s83, %s84
    %p95 = scmp.eq.s32.totalorder %s16, 0
    %p96 = por %p94, %p95
    %p97 = scmp.ne.s32.totalorder %s83, %s84
    %p98 = scmp.eq.s32.totalorder %s17, 1
    %p99 = por %p97, %p98
    %p101 = scmp.ne.s32.totalorder %s84, %s100
    %p102 = scmp.eq.s32.totalorder %s17, 0
    %p103 = por %p101, %p102
    %s104 = ssub.s32 %s18, %s30
    %p105 = scmp.eq.s32.totalorder %s104, 0
    %s107 = sadd.s32 %s106, 1
    %s108 = scalar_select %p105, %s106, %s107
    %p111 = pneg %p105
    %p112 = scmp.eq.s32.totalorder %s11, 1
    %p113 = por %p111, %p112
    %p114 = scmp.ne.s32.totalorder %s106, %s109
    %p115 = scmp.eq.s32.totalorder %s11, 0
    %p116 = por %p114, %p115
    %p117 = scmp.ne.s32.totalorder %s106, %s109
    %p118 = scmp.eq.s32.totalorder %s16, 1
    %p119 = por %p117, %p118
    %p120 = scmp.ne.s32.totalorder %s109, %s110
    %p121 = scmp.eq.s32.totalorder %s16, 0
    %p122 = por %p120, %p121
    %p123 = scmp.ne.s32.totalorder %s109, %s110
    %p124 = scmp.eq.s32.totalorder %s17, 1
    %p125 = por %p123, %p124
    %p127 = scmp.ne.s32.totalorder %s110, %s126
    %p128 = scmp.eq.s32.totalorder %s17, 0
    %p129 = por %p127, %p128
    %s131 = sadd.s32 %s130, 1
    %p134 = scmp.eq.s32.totalorder %s11, 1
    %p135 = scmp.ne.s32.totalorder %s130, %s132
    %p136 = scmp.eq.s32.totalorder %s11, 0
    %p137 = por %p135, %p136
    %p138 = scmp.ne.s32.totalorder %s130, %s132
    %p139 = scmp.eq.s32.totalorder %s16, 1
    %p140 = por %p138, %p139
    %p141 = scmp.ne.s32.totalorder %s132, %s133
    %p142 = scmp.eq.s32.totalorder %s16, 0
    %p143 = por %p141, %p142
    %p144 = scmp.ne.s32.totalorder %s132, %s133
    %p145 = scmp.eq.s32.totalorder %s17, 1
    %p146 = por %p144, %p145
    %p148 = scmp.ne.s32.totalorder %s133, %s147
    %p149 = scmp.eq.s32.totalorder %s17, 0
    %p150 = por %p148, %p149
    %s151 = ssub.s32 %s18, %s30
    %s152 = ssub.s32 %s19, %s26
    %s153 = sor.u32 %s151, %s152
    %p154 = scmp.eq.s32.totalorder %s153, 0
    %s156 = sadd.s32 %s155, 1
    %s157 = scalar_select %p154, %s155, %s156
    %p160 = pneg %p154
    %p161 = scmp.eq.s32.totalorder %s11, 1
    %p162 = por %p160, %p161
    %p163 = scmp.ne.s32.totalorder %s155, %s158
    %p164 = scmp.eq.s32.totalorder %s11, 0
    %p165 = por %p163, %p164
    %p166 = scmp.ne.s32.totalorder %s155, %s158
    %p167 = scmp.eq.s32.totalorder %s16, 1
    %p168 = por %p166, %p167
    %p169 = scmp.ne.s32.totalorder %s158, %s159
    %p170 = scmp.eq.s32.totalorder %s16, 0
    %p171 = por %p169, %p170
    %p172 = scmp.ne.s32.totalorder %s158, %s159
    %p173 = scmp.eq.s32.totalorder %s17, 1
    %p174 = por %p172, %p173
    %p176 = scmp.ne.s32.totalorder %s159, %s175
    %p177 = scmp.eq.s32.totalorder %s17, 0
    %p178 = por %p176, %p177
    %p179 = scmp.le.s32.totalorder 1, %s11
    %p180 = scmp.lt.s32.totalorder %s11, 3
    %p181 = pnand %p179, %p180
    %p182 = pneg %p181
    // Predicated region
    $region9: #{forward_single.16} parent=5 // pred_check
      _
    $region10: #{forward_single.16} parent=5 // pred_check_branch
      %184 = sbr.rel (%p181) target = $region12
    $region11: #{forward_single.16} parent=5 // pred_region
      %s185 = ssub.s32 %s11, 1
      // Predicated region
      $region13: #{forward_single.16} parent=11 // pred_check
        %p186 = pneg %p70
      $region14: #{forward_single.16} parent=11 // pred_check_branch
        %188 = sbr.rel (%p186) target = $region16
      $region15: #{forward_single.16} parent=11 // pred_region
        _
      $region16: #{forward_single.16} parent=11 // pred_fallthru
        _
      // Predicated region
      $region17: #{forward_single.16} parent=11 // pred_check
        %p189 = pneg %p143
      $region18: #{forward_single.16} parent=11 // pred_check_branch
        %191 = sbr.rel (%p189) target = $region20
      $region19: #{forward_single.16} parent=11 // pred_region
        _
      $region20: #{forward_single.16} parent=11 // pred_fallthru
        _
    $region12: #{forward_single.16} parent=5 // pred_fallthru
      _
    %p192 = scmp.lt.s32.totalorder %s11, 2
    // Predicated region
    $region21: #{forward_single.16} parent=5 // pred_check
      %p193 = pneg %p192
    $region22: #{forward_single.16} parent=5 // pred_check_branch
      %195 = sbr.rel (%p193) target = $region24
    $region23: #{forward_single.16} parent=5 // pred_region
      // Predicated region
      $region25: #{forward_single.16} parent=23 // pred_check
        %p196 = pneg %p43
      $region26: #{forward_single.16} parent=23 // pred_check_branch
        %198 = sbr.rel (%p196) target = $region28
      $region27: #{forward_single.16} parent=23 // pred_region
        %p199 = scmp.lt.s32.totalorder %s18, 1
        %s200 = scalar_select %p199, %s18, 1
        %s201 = smul.addr %s200, 54
        %s202 = smul.addr %s201, 4
        %s203 = scalar_lea.vmem %s0, %s202
      $region28: #{forward_single.16} parent=23 // pred_fallthru
        _
      // Predicated region
      $region29: #{forward_single.16} parent=23 // pred_check
        %p204 = pneg %p90
      $region30: #{forward_single.16} parent=23 // pred_check_branch
        %206 = sbr.rel (%p204) target = $region32
      $region31: #{forward_single.16} parent=23 // pred_region
        %p207 = scmp.lt.s32.totalorder %s18, 1
        %s208 = scalar_select %p207, %s18, 1
        %s209 = scalar_lea.vmem %s2, %s208
      $region32: #{forward_single.16} parent=23 // pred_fallthru
        _
      // Predicated region
      $region33: #{forward_single.16} parent=23 // pred_check
        %p210 = pneg %p116
      $region34: #{forward_single.16} parent=23 // pred_check_branch
        %212 = sbr.rel (%p210) target = $region36
      $region35: #{forward_single.16} parent=23 // pred_region
        %p213 = scmp.lt.s32.totalorder %s18, 1
        %s214 = scalar_select %p213, %s18, 1
        %s215 = scalar_lea.vmem %s3, %s214
      $region36: #{forward_single.16} parent=23 // pred_fallthru
        _
    $region24: #{forward_single.16} parent=5 // pred_fallthru
      _
    %p216 = scmp.le.s32.totalorder 1, %s11
    %p217 = scmp.lt.s32.totalorder %s11, 3
    %p218 = pnand %p216, %p217
    %p219 = pneg %p218
    // Predicated region
    $region37: #{forward_single.16} parent=5 // pred_check
      _
    $region38: #{forward_single.16} parent=5 // pred_check_branch
      %221 = sbr.rel (%p218) target = $region40
    $region39: #{forward_single.16} parent=5 // pred_region
      %s222 = ssub.s32 %s11, 1
      %p223 = scmp.lt.s32.totalorder %s20, 1
      %s224 = scalar_select %p223, %s20, 1
      %s225 = smul.addr %s224, 54
      %s226 = smul.addr %s225, 4
      %s227 = scalar_lea.vmem %s0, %s226
      %p228 = pneg %p49
      %p229 = pneg %p46
      %p230 = pneg %p70
      %p231 = pneg %p67
      %p232 = scmp.lt.s32.totalorder %s20, 1
      %s233 = scalar_select %p232, %s20, 1
      %s234 = scalar_lea.vmem %s2, %s233
      %p235 = pneg %p96
      %p236 = pneg %p93
      %p237 = scmp.lt.s32.totalorder %s20, 1
      %s238 = scalar_select %p237, %s20, 1
      %s239 = scalar_lea.vmem %s3, %s238
      %p240 = pneg %p122
      %p241 = pneg %p119
      %p242 = pneg %p143
      %p243 = pneg %p140
      %p244 = pneg %p171
      %p245 = pneg %p168
      %s246 = smul.u32 32, %s21
      %p247 = scmp.lt.s32.totalorder %s20, 1
      %s248 = scalar_select %p247, %s20, 1
      %p249 = scmp.lt.s32.totalorder %s246, 31
      %s250 = scalar_select %p249, %s246, 31
      %s251 = smul.addr %s248, 32
      %s252 = sadd.s32 %s250, %s251
      %s253 = smul.addr %s252, 4
      %s254 = scalar_lea.vmem %s5, %s253
      %p255 = scmp.lt.s32.totalorder %s20, 1
      %s256 = scalar_select %p255, %s20, 1
      %s257 = smul.addr %s256, 54
      %s258 = smul.addr %s257, 4
      %s259 = scalar_lea.vmem %s0, %s258
      %p260 = scmp.lt.s32.totalorder %s20, 1
      %s261 = scalar_select %p260, %s20, 1
      %s262 = scalar_lea.vmem %s2, %s261
      %p263 = scmp.lt.s32.totalorder %s20, 1
      %s264 = scalar_select %p263, %s20, 1
      %s265 = scalar_lea.vmem %s3, %s264
      %s266 = smul.u32 32, %s21
      %p267 = scmp.lt.s32.totalorder %s20, 1
      %s268 = scalar_select %p267, %s20, 1
      %p269 = scmp.lt.s32.totalorder %s266, 31
      %s270 = scalar_select %p269, %s266, 31
      %s271 = smul.addr %s268, 32
      %s272 = sadd.s32 %s270, %s271
      %s273 = smul.addr %s272, 4
      %s274 = scalar_lea.vmem %s5, %s273
      %s275 = smul.u32 32, %s21
      %s277 = smul.u32 %s21, 16
      %s278 = smul.u32 %s277, 3
      %s279 = smul.addr %s278, 4
      %s280 = scalar_lea.vmem %s259, %s279
      %v281 = vld [vmem:[%s280] sm:$0xf]
      %v282 = vld [vmem:[%s280 + $0x4] sm:$0xf]
      %v283 = vld [vmem:[%s280 + $0x8] sm:$0x1]
      %v284 = vld [vmem:[%s280 + $0xc] sm:$0xf]
      %v285 = vld [vmem:[%s280 + $0x10] sm:$0xf]
      %v286 = vld [vmem:[%s280 + $0x14] sm:$0x1]
      %v287 = vld [vmem:[%s280 + $0x18] sm:$0xf]
      %v288 = vld [vmem:[%s280 + $0x1c] sm:$0xf]
      %v289 = vld [vmem:[%s280 + $0x20] sm:$0x1]
      %v290 = vld [vmem:[%s280 + $0x24] sm:$0xf]
      %v291 = vld [vmem:[%s280 + $0x28] sm:$0xf]
      %v292 = vld [vmem:[%s280 + $0x2c] sm:$0x1]
      %v293 = vld [vmem:[%s280 + $0x30] sm:$0xf]
      %v294 = vld [vmem:[%s280 + $0x34] sm:$0xf]
      %v295 = vld [vmem:[%s280 + $0x38] sm:$0x1]
      %v296 = vld [vmem:[%s280 + $0x3c] sm:$0xf]
      %v297 = vld [vmem:[%s280 + $0x40] sm:$0xf]
      %v298 = vld [vmem:[%s280 + $0x44] sm:$0x1]
      %v299 = vld [vmem:[%s280 + $0x48] sm:$0xf]
      %v300 = vld [vmem:[%s280 + $0x4c] sm:$0xf]
      %v301 = vld [vmem:[%s280 + $0x50] sm:$0x1]
      %v302 = vld [vmem:[%s280 + $0x54] sm:$0xf]
      %v303 = vld [vmem:[%s280 + $0x58] sm:$0xf]
      %v304 = vld [vmem:[%s280 + $0x5c] sm:$0x1]
      %v305 = vld [vmem:[%s280 + $0x60] sm:$0xf]
      %v306 = vld [vmem:[%s280 + $0x64] sm:$0xf]
      %v307 = vld [vmem:[%s280 + $0x68] sm:$0x1]
      %v308 = vld [vmem:[%s280 + $0x6c] sm:$0xf]
      %v309 = vld [vmem:[%s280 + $0x70] sm:$0xf]
      %v310 = vld [vmem:[%s280 + $0x74] sm:$0x1]
      %v311 = vld [vmem:[%s280 + $0x78] sm:$0xf]
      %v312 = vld [vmem:[%s280 + $0x7c] sm:$0xf]
      %v313 = vld [vmem:[%s280 + $0x80] sm:$0x1]
      %v314 = vld [vmem:[%s280 + $0x84] sm:$0xf]
      %v315 = vld [vmem:[%s280 + $0x88] sm:$0xf]
      %v316 = vld [vmem:[%s280 + $0x8c] sm:$0x1]
      %v317 = vld [vmem:[%s280 + $0x90] sm:$0xf]
      %v318 = vld [vmem:[%s280 + $0x94] sm:$0xf]
      %v319 = vld [vmem:[%s280 + $0x98] sm:$0x1]
      %v320 = vld [vmem:[%s280 + $0x9c] sm:$0xf]
      %v321 = vld [vmem:[%s280 + $0xa0] sm:$0xf]
      %v322 = vld [vmem:[%s280 + $0xa4] sm:$0x1]
      %v323 = vld [vmem:[%s280 + $0xa8] sm:$0xf]
      %v324 = vld [vmem:[%s280 + $0xac] sm:$0xf]
      %v325 = vld [vmem:[%s280 + $0xb0] sm:$0x1]
      %v326 = vld [vmem:[%s280 + $0xb4] sm:$0xf]
      %v327 = vld [vmem:[%s280 + $0xb8] sm:$0xf]
      %v328 = vld [vmem:[%s280 + $0xbc] sm:$0x1]
      %v329 = vld [vmem:[%s280 + $0xc0] sm:$0xf]
      %v330 = vld [vmem:[%s280 + $0xc4] sm:$0xf]
      %v331 = vld [vmem:[%s280 + $0xc8] sm:$0x1]
      %v332 = vld [vmem:[%s280 + $0xcc] sm:$0xf]
      %v333 = vld [vmem:[%s280 + $0xd0] sm:$0xf]
      %v334 = vld [vmem:[%s280 + $0xd4] sm:$0x1]
      %v335 = vunpack.c.l.bf16 %v281
      %v336 = vunpack.c.l.bf16 %v282
      %v337 = vunpack.c.l.bf16 %v283
      %v338 = vunpack.c.l.bf16 %v284
      %v339 = vunpack.c.l.bf16 %v285
      %v340 = vunpack.c.l.bf16 %v286
      %v341 = vunpack.c.l.bf16 %v287
      %v342 = vunpack.c.l.bf16 %v288
      %v343 = vunpack.c.l.bf16 %v289
      %v344 = vunpack.c.l.bf16 %v290
      %v345 = vunpack.c.l.bf16 %v291
      %v346 = vunpack.c.l.bf16 %v292
      %v347 = vunpack.c.l.bf16 %v293
      %v348 = vunpack.c.l.bf16 %v294
      %v349 = vunpack.c.l.bf16 %v295
      %v350 = vunpack.c.l.bf16 %v296
      %v351 = vunpack.c.l.bf16 %v297
      %v352 = vunpack.c.l.bf16 %v298
      %v353 = vunpack.c.l.bf16 %v299
      %v354 = vunpack.c.l.bf16 %v300
      %v355 = vunpack.c.l.bf16 %v301
      %v356 = vunpack.c.l.bf16 %v302
      %v357 = vunpack.c.l.bf16 %v303
      %v358 = vunpack.c.l.bf16 %v304
      %v359 = vunpack.c.l.bf16 %v305
      %v360 = vunpack.c.l.bf16 %v306
      %v361 = vunpack.c.l.bf16 %v307
      %v362 = vunpack.c.l.bf16 %v308
      %v363 = vunpack.c.l.bf16 %v309
      %v364 = vunpack.c.l.bf16 %v310
      %v365 = vunpack.c.l.bf16 %v311
      %v366 = vunpack.c.l.bf16 %v312
      %v367 = vunpack.c.l.bf16 %v313
      %v368 = vunpack.c.l.bf16 %v314
      %v369 = vunpack.c.l.bf16 %v315
      %v370 = vunpack.c.l.bf16 %v316
      %v371 = vunpack.c.l.bf16 %v317
      %v372 = vunpack.c.l.bf16 %v318
      %v373 = vunpack.c.l.bf16 %v319
      %v374 = vunpack.c.l.bf16 %v320
      %v375 = vunpack.c.l.bf16 %v321
      %v376 = vunpack.c.l.bf16 %v322
      %v377 = vunpack.c.l.bf16 %v323
      %v378 = vunpack.c.l.bf16 %v324
      %v379 = vunpack.c.l.bf16 %v325
      %v380 = vunpack.c.l.bf16 %v326
      %v381 = vunpack.c.l.bf16 %v327
      %v382 = vunpack.c.l.bf16 %v328
      %v383 = vunpack.c.l.bf16 %v329
      %v384 = vunpack.c.l.bf16 %v330
      %v385 = vunpack.c.l.bf16 %v331
      %v386 = vunpack.c.l.bf16 %v332
      %v387 = vunpack.c.l.bf16 %v333
      %v388 = vunpack.c.l.bf16 %v334
      %v389 = vld [vmem:[%s262] sm:$0x1]
      %v391 = vperm.slane %v389, 0
      %v393 = vmul.f32 %v335, %v391
      %v394 = vmul.f32 %v336, %v391
      %v395 = vmul.f32 %v337, %v391
      %v396 = vmul.f32 %v338, %v391
      %v397 = vmul.f32 %v339, %v391
      %v398 = vmul.f32 %v340, %v391
      %v399 = vmul.f32 %v341, %v391
      %v400 = vmul.f32 %v342, %v391
      %v401 = vmul.f32 %v343, %v391
      %v402 = vmul.f32 %v344, %v391
      %v403 = vmul.f32 %v345, %v391
      %v404 = vmul.f32 %v346, %v391
      %v405 = vmul.f32 %v347, %v391
      %v406 = vmul.f32 %v348, %v391
      %v407 = vmul.f32 %v349, %v391
      %v408 = vmul.f32 %v350, %v391
      %v409 = vmul.f32 %v351, %v391
      %v410 = vmul.f32 %v352, %v391
      %v411 = vmul.f32 %v353, %v391
      %v412 = vmul.f32 %v354, %v391
      %v413 = vmul.f32 %v355, %v391
      %v414 = vmul.f32 %v356, %v391
      %v415 = vmul.f32 %v357, %v391
      %v416 = vmul.f32 %v358, %v391
      %v417 = vmul.f32 %v359, %v391
      %v418 = vmul.f32 %v360, %v391
      %v419 = vmul.f32 %v361, %v391
      %v420 = vmul.f32 %v362, %v391
      %v421 = vmul.f32 %v363, %v391
      %v422 = vmul.f32 %v364, %v391
      %v423 = vmul.f32 %v365, %v391
      %v424 = vmul.f32 %v366, %v391
      %v425 = vmul.f32 %v367, %v391
      %v426 = vmul.f32 %v368, %v391
      %v427 = vmul.f32 %v369, %v391
      %v428 = vmul.f32 %v370, %v391
      %v429 = vmul.f32 %v371, %v391
      %v430 = vmul.f32 %v372, %v391
      %v431 = vmul.f32 %v373, %v391
      %v432 = vmul.f32 %v374, %v391
      %v433 = vmul.f32 %v375, %v391
      %v434 = vmul.f32 %v376, %v391
      %v435 = vmul.f32 %v377, %v391
      %v436 = vmul.f32 %v378, %v391
      %v437 = vmul.f32 %v379, %v391
      %v438 = vmul.f32 %v380, %v391
      %v439 = vmul.f32 %v381, %v391
      %v440 = vmul.f32 %v382, %v391
      %v441 = vmul.f32 %v383, %v391
      %v442 = vmul.f32 %v384, %v391
      %v443 = vmul.f32 %v385, %v391
      %v444 = vmul.f32 %v386, %v391
      %v445 = vmul.f32 %v387, %v391
      %v446 = vmul.f32 %v388, %v391
      %v447 = vld [vmem:[%s265] sm:$0x1]
      %v449 = vperm.slane %v447, 0
      %v451 = vadd.f32 %v393, %v449
      %v452 = vadd.f32 %v394, %v449
      %v453 = vadd.f32 %v395, %v449
      %v454 = vadd.f32 %v396, %v449
      %v455 = vadd.f32 %v397, %v449
      %v456 = vadd.f32 %v398, %v449
      %v457 = vadd.f32 %v399, %v449
      %v458 = vadd.f32 %v400, %v449
      %v459 = vadd.f32 %v401, %v449
      %v460 = vadd.f32 %v402, %v449
      %v461 = vadd.f32 %v403, %v449
      %v462 = vadd.f32 %v404, %v449
      %v463 = vadd.f32 %v405, %v449
      %v464 = vadd.f32 %v406, %v449
      %v465 = vadd.f32 %v407, %v449
      %v466 = vadd.f32 %v408, %v449
      %v467 = vadd.f32 %v409, %v449
      %v468 = vadd.f32 %v410, %v449
      %v469 = vadd.f32 %v411, %v449
      %v470 = vadd.f32 %v412, %v449
      %v471 = vadd.f32 %v413, %v449
      %v472 = vadd.f32 %v414, %v449
      %v473 = vadd.f32 %v415, %v449
      %v474 = vadd.f32 %v416, %v449
      %v475 = vadd.f32 %v417, %v449
      %v476 = vadd.f32 %v418, %v449
      %v477 = vadd.f32 %v419, %v449
      %v478 = vadd.f32 %v420, %v449
      %v479 = vadd.f32 %v421, %v449
      %v480 = vadd.f32 %v422, %v449
      %v481 = vadd.f32 %v423, %v449
      %v482 = vadd.f32 %v424, %v449
      %v483 = vadd.f32 %v425, %v449
      %v484 = vadd.f32 %v426, %v449
      %v485 = vadd.f32 %v427, %v449
      %v486 = vadd.f32 %v428, %v449
      %v487 = vadd.f32 %v429, %v449
      %v488 = vadd.f32 %v430, %v449
      %v489 = vadd.f32 %v431, %v449
      %v490 = vadd.f32 %v432, %v449
      %v491 = vadd.f32 %v433, %v449
      %v492 = vadd.f32 %v434, %v449
      %v493 = vadd.f32 %v435, %v449
      %v494 = vadd.f32 %v436, %v449
      %v495 = vadd.f32 %v437, %v449
      %v496 = vadd.f32 %v438, %v449
      %v497 = vadd.f32 %v439, %v449
      %v498 = vadd.f32 %v440, %v449
      %v499 = vadd.f32 %v441, %v449
      %v500 = vadd.f32 %v442, %v449
      %v501 = vadd.f32 %v443, %v449
      %v502 = vadd.f32 %v444, %v449
      %v503 = vadd.f32 %v445, %v449
      %v504 = vadd.f32 %v446, %v449
      %v505 = vmax.f32 %v451, 0.0
      %v506 = vmax.f32 %v452, 0.0
      %v507 = vmax.f32 %v453, 0.0
      %v508 = vmax.f32 %v454, 0.0
      %v509 = vmax.f32 %v455, 0.0
      %v510 = vmax.f32 %v456, 0.0
      %v511 = vmax.f32 %v457, 0.0
      %v512 = vmax.f32 %v458, 0.0
      %v513 = vmax.f32 %v459, 0.0
      %v514 = vmax.f32 %v460, 0.0
      %v515 = vmax.f32 %v461, 0.0
      %v516 = vmax.f32 %v462, 0.0
      %v517 = vmax.f32 %v463, 0.0
      %v518 = vmax.f32 %v464, 0.0
      %v519 = vmax.f32 %v465, 0.0
      %v520 = vmax.f32 %v466, 0.0
      %v521 = vmax.f32 %v467, 0.0
      %v522 = vmax.f32 %v468, 0.0
      %v523 = vmax.f32 %v469, 0.0
      %v524 = vmax.f32 %v470, 0.0
      %v525 = vmax.f32 %v471, 0.0
      %v526 = vmax.f32 %v472, 0.0
      %v527 = vmax.f32 %v473, 0.0
      %v528 = vmax.f32 %v474, 0.0
      %v529 = vmax.f32 %v475, 0.0
      %v530 = vmax.f32 %v476, 0.0
      %v531 = vmax.f32 %v477, 0.0
      %v532 = vmax.f32 %v478, 0.0
      %v533 = vmax.f32 %v479, 0.0
      %v534 = vmax.f32 %v480, 0.0
      %v535 = vmax.f32 %v481, 0.0
      %v536 = vmax.f32 %v482, 0.0
      %v537 = vmax.f32 %v483, 0.0
      %v538 = vmax.f32 %v484, 0.0
      %v539 = vmax.f32 %v485, 0.0
      %v540 = vmax.f32 %v486, 0.0
      %v541 = vmax.f32 %v487, 0.0
      %v542 = vmax.f32 %v488, 0.0
      %v543 = vmax.f32 %v489, 0.0
      %v544 = vmax.f32 %v490, 0.0
      %v545 = vmax.f32 %v491, 0.0
      %v546 = vmax.f32 %v492, 0.0
      %v547 = vmax.f32 %v493, 0.0
      %v548 = vmax.f32 %v494, 0.0
      %v549 = vmax.f32 %v495, 0.0
      %v550 = vmax.f32 %v496, 0.0
      %v551 = vmax.f32 %v497, 0.0
      %v552 = vmax.f32 %v498, 0.0
      %v553 = vmax.f32 %v499, 0.0
      %v554 = vmax.f32 %v500, 0.0
      %v555 = vmax.f32 %v501, 0.0
      %v556 = vmax.f32 %v502, 0.0
      %v557 = vmax.f32 %v503, 0.0
      %v558 = vmax.f32 %v504, 0.0
      %vm559 = vcmask 1040384
      %v560 = vsel %vm559, 0.0, %v505
      %v561 = vsel %vm559, 0.0, %v508
      %v562 = vsel %vm559, 0.0, %v511
      %v563 = vsel %vm559, 0.0, %v514
      %v564 = vsel %vm559, 0.0, %v517
      %v565 = vsel %vm559, 0.0, %v520
      %v566 = vsel %vm559, 0.0, %v523
      %v567 = vsel %vm559, 0.0, %v526
      %v568 = vsel %vm559, 0.0, %v529
      %v569 = vsel %vm559, 0.0, %v532
      %v570 = vsel %vm559, 0.0, %v535
      %v571 = vsel %vm559, 0.0, %v538
      %v572 = vsel %vm559, 0.0, %v541
      %v573 = vsel %vm559, 0.0, %v544
      %v574 = vsel %vm559, 0.0, %v547
      %v575 = vsel %vm559, 0.0, %v550
      %v576 = vsel %vm559, 0.0, %v553
      %v577 = vsel %vm559, 0.0, %v556
      %v578 = vsel %vm559, %v507, 0.0
      %v579 = vsel %vm559, %v510, 0.0
      %v580 = vsel %vm559, %v513, 0.0
      %v581 = vsel %vm559, %v516, 0.0
      %v582 = vsel %vm559, %v519, 0.0
      %v583 = vsel %vm559, %v522, 0.0
      %v584 = vsel %vm559, %v525, 0.0
      %v585 = vsel %vm559, %v528, 0.0
      %v586 = vsel %vm559, %v531, 0.0
      %v587 = vsel %vm559, %v534, 0.0
      %v588 = vsel %vm559, %v537, 0.0
      %v589 = vsel %vm559, %v540, 0.0
      %v590 = vsel %vm559, %v543, 0.0
      %v591 = vsel %vm559, %v546, 0.0
      %v592 = vsel %vm559, %v549, 0.0
      %v593 = vsel %vm559, %v552, 0.0
      %v594 = vsel %vm559, %v555, 0.0
      %v595 = vsel %vm559, %v558, 0.0
      %p596 = scmp.gt.s32.totalorder %s21, 0
      %s597 = scalar_select %p596, 1, 0
      %s598 = scvt.s32.f32 %s597
      %p599 = scmp.lt.s32.totalorder %s21, 0
      %s600 = scalar_select %p599, 1, 0
      %s601 = scvt.s32.f32 %s600
      %v602 = vstv %s598
      %v603 = vmul.f32 %v560, %v602
      %v604 = vmul.f32 %v506, %v602
      %v605 = vmul.f32 %v578, %v602
      %v606 = vstv %s601
      %v607 = vmul.f32 %v577, %v606
      %v608 = vmul.f32 %v557, %v606
      %v609 = vmul.f32 %v595, %v606
      %v610 = vpack.c.bf16 %v603, %v603
      %v611 = vpack.c.bf16 %v604, %v604
      %v612 = vpack.c.bf16 %v605, %v605
      %v613 = vpack.c.bf16 %v561, %v561
      %v614 = vpack.c.bf16 %v509, %v509
      %v615 = vpack.c.bf16 %v579, %v579
      %v616 = vpack.c.bf16 %v562, %v562
      %v617 = vpack.c.bf16 %v512, %v512
      %v618 = vpack.c.bf16 %v580, %v580
      %v619 = vpack.c.bf16 %v563, %v563
      %v620 = vpack.c.bf16 %v515, %v515
      %v621 = vpack.c.bf16 %v581, %v581
      %v622 = vpack.c.bf16 %v564, %v564
      %v623 = vpack.c.bf16 %v518, %v518
      %v624 = vpack.c.bf16 %v582, %v582
      %v625 = vpack.c.bf16 %v565, %v565
      %v626 = vpack.c.bf16 %v521, %v521
      %v627 = vpack.c.bf16 %v583, %v583
      %v628 = vpack.c.bf16 %v566, %v566
      %v629 = vpack.c.bf16 %v524, %v524
      %v630 = vpack.c.bf16 %v584, %v584
      %v631 = vpack.c.bf16 %v567, %v567
      %v632 = vpack.c.bf16 %v527, %v527
      %v633 = vpack.c.bf16 %v585, %v585
      %v634 = vpack.c.bf16 %v568, %v568
      %v635 = vpack.c.bf16 %v530, %v530
      %v636 = vpack.c.bf16 %v586, %v586
      %v637 = vpack.c.bf16 %v569, %v569
      %v638 = vpack.c.bf16 %v533, %v533
      %v639 = vpack.c.bf16 %v587, %v587
      %v640 = vpack.c.bf16 %v570, %v570
      %v641 = vpack.c.bf16 %v536, %v536
      %v642 = vpack.c.bf16 %v588, %v588
      %v643 = vpack.c.bf16 %v571, %v571
      %v644 = vpack.c.bf16 %v539, %v539
      %v645 = vpack.c.bf16 %v589, %v589
      %v646 = vpack.c.bf16 %v572, %v572
      %v647 = vpack.c.bf16 %v542, %v542
      %v648 = vpack.c.bf16 %v590, %v590
      %v649 = vpack.c.bf16 %v573, %v573
      %v650 = vpack.c.bf16 %v545, %v545
      %v651 = vpack.c.bf16 %v591, %v591
      %v652 = vpack.c.bf16 %v574, %v574
      %v653 = vpack.c.bf16 %v548, %v548
      %v654 = vpack.c.bf16 %v592, %v592
      %v655 = vpack.c.bf16 %v575, %v575
      %v656 = vpack.c.bf16 %v551, %v551
      %v657 = vpack.c.bf16 %v593, %v593
      %v658 = vpack.c.bf16 %v576, %v576
      %v659 = vpack.c.bf16 %v554, %v554
      %v660 = vpack.c.bf16 %v594, %v594
      %v661 = vpack.c.bf16 %v607, %v607
      %v662 = vpack.c.bf16 %v608, %v608
      %v663 = vpack.c.bf16 %v609, %v609
      %v696 = vunpack.c.l.b16 %v610
      %v697 = vunpack.c.l.b16 %v611
      %v698 = vunpack.c.l.b16 %v613
      %v699 = vunpack.c.l.b16 %v614
      %v700 = vunpack.c.l.b16 %v616
      %v701 = vunpack.c.l.b16 %v617
      %v702 = vunpack.c.l.b16 %v619
      %v703 = vunpack.c.l.b16 %v620
      %v704 = vunpack.c.l.b16 %v622
      %v705 = vunpack.c.l.b16 %v623
      %v706 = vunpack.c.l.b16 %v625
      %v707 = vunpack.c.l.b16 %v626
      %v708 = vunpack.c.l.b16 %v628
      %v709 = vunpack.c.l.b16 %v629
      %v710 = vunpack.c.l.b16 %v631
      %v711 = vunpack.c.l.b16 %v632
      %v712 = vunpack.c.l.b16 %v634
      %v713 = vunpack.c.l.b16 %v635
      %v714 = vunpack.c.l.b16 %v637
      %v715 = vunpack.c.l.b16 %v638
      %v716 = vunpack.c.l.b16 %v640
      %v717 = vunpack.c.l.b16 %v641
      %v718 = vunpack.c.l.b16 %v643
      %v719 = vunpack.c.l.b16 %v644
      %v720 = vunpack.c.l.b16 %v646
      %v721 = vunpack.c.l.b16 %v647
      %v722 = vunpack.c.l.b16 %v649
      %v723 = vunpack.c.l.b16 %v650
      %v724 = vunpack.c.l.b16 %v652
      %v725 = vunpack.c.l.b16 %v653
      %v726 = vunpack.c.l.b16 %v655
      %v727 = vunpack.c.l.b16 %v656
      %v728 = vpack.c.b16 %v697, %v696
      %v729 = vpack.c.b16 %v699, %v698
      %v730 = vpack.c.b16 %v701, %v700
      %v731 = vpack.c.b16 %v703, %v702
      %v732 = vpack.c.b16 %v705, %v704
      %v733 = vpack.c.b16 %v707, %v706
      %v734 = vpack.c.b16 %v709, %v708
      %v735 = vpack.c.b16 %v711, %v710
      %v736 = vpack.c.b16 %v713, %v712
      %v737 = vpack.c.b16 %v715, %v714
      %v738 = vpack.c.b16 %v717, %v716
      %v739 = vpack.c.b16 %v719, %v718
      %v740 = vpack.c.b16 %v721, %v720
      %v741 = vpack.c.b16 %v723, %v722
      %v742 = vpack.c.b16 %v725, %v724
      %v743 = vpack.c.b16 %v727, %v726
      %v760 = vunpack.c.l.b16 %v612
      %v761 = vunpack.c.l.b16 %v615
      %v762 = vunpack.c.l.b16 %v618
      %v763 = vunpack.c.l.b16 %v621
      %v764 = vunpack.c.l.b16 %v624
      %v765 = vunpack.c.l.b16 %v627
      %v766 = vunpack.c.l.b16 %v630
      %v767 = vunpack.c.l.b16 %v633
      %v768 = vunpack.c.l.b16 %v636
      %v769 = vunpack.c.l.b16 %v639
      %v770 = vunpack.c.l.b16 %v642
      %v771 = vunpack.c.l.b16 %v645
      %v772 = vunpack.c.l.b16 %v648
      %v773 = vunpack.c.l.b16 %v651
      %v774 = vunpack.c.l.b16 %v654
      %v775 = vunpack.c.l.b16 %v657
      %v776 = vpack.c.b16 %v760, %v760
      %v777 = vpack.c.b16 %v761, %v761
      %v778 = vpack.c.b16 %v762, %v762
      %v779 = vpack.c.b16 %v763, %v763
      %v780 = vpack.c.b16 %v764, %v764
      %v781 = vpack.c.b16 %v765, %v765
      %v782 = vpack.c.b16 %v766, %v766
      %v783 = vpack.c.b16 %v767, %v767
      %v784 = vpack.c.b16 %v768, %v768
      %v785 = vpack.c.b16 %v769, %v769
      %v786 = vpack.c.b16 %v770, %v770
      %v787 = vpack.c.b16 %v771, %v771
      %v788 = vpack.c.b16 %v772, %v772
      %v789 = vpack.c.b16 %v773, %v773
      %v790 = vpack.c.b16 %v774, %v774
      %v791 = vpack.c.b16 %v775, %v775
      %vm792 = vsmask.f32 7424
      %v794 = vshrl.u32 %v728, 16
      %v796 = vshll.u32 %v728, 16
      %v798 = vrot.slane %v796, 1
      %v799 = vor.u32 %v794, %v798
      %v801 = vshll.u32 %v776, 16
      %v803 = vrot.slane %v801, 1
      %v804 = vsel %vm792, %v799, %v803
      %v806 = vshrl.u32 %v729, 16
      %v808 = vshll.u32 %v729, 16
      %v810 = vrot.slane %v808, 1
      %v811 = vor.u32 %v806, %v810
      %v813 = vshll.u32 %v777, 16
      %v815 = vrot.slane %v813, 1
      %v816 = vsel %vm792, %v811, %v815
      %v818 = vshrl.u32 %v730, 16
      %v820 = vshll.u32 %v730, 16
      %v822 = vrot.slane %v820, 1
      %v823 = vor.u32 %v818, %v822
      %v825 = vshll.u32 %v778, 16
      %v827 = vrot.slane %v825, 1
      %v828 = vsel %vm792, %v823, %v827
      %v830 = vshrl.u32 %v731, 16
      %v832 = vshll.u32 %v731, 16
      %v834 = vrot.slane %v832, 1
      %v835 = vor.u32 %v830, %v834
      %v837 = vshll.u32 %v779, 16
      %v839 = vrot.slane %v837, 1
      %v840 = vsel %vm792, %v835, %v839
      %v842 = vshrl.u32 %v732, 16
      %v844 = vshll.u32 %v732, 16
      %v846 = vrot.slane %v844, 1
      %v847 = vor.u32 %v842, %v846
      %v849 = vshll.u32 %v780, 16
      %v851 = vrot.slane %v849, 1
      %v852 = vsel %vm792, %v847, %v851
      %v854 = vshrl.u32 %v733, 16
      %v856 = vshll.u32 %v733, 16
      %v858 = vrot.slane %v856, 1
      %v859 = vor.u32 %v854, %v858
      %v861 = vshll.u32 %v781, 16
      %v863 = vrot.slane %v861, 1
      %v864 = vsel %vm792, %v859, %v863
      %v866 = vshrl.u32 %v734, 16
      %v868 = vshll.u32 %v734, 16
      %v870 = vrot.slane %v868, 1
      %v871 = vor.u32 %v866, %v870
      %v873 = vshll.u32 %v782, 16
      %v875 = vrot.slane %v873, 1
      %v876 = vsel %vm792, %v871, %v875
      %v878 = vshrl.u32 %v735, 16
      %v880 = vshll.u32 %v735, 16
      %v882 = vrot.slane %v880, 1
      %v883 = vor.u32 %v878, %v882
      %v885 = vshll.u32 %v783, 16
      %v887 = vrot.slane %v885, 1
      %v888 = vsel %vm792, %v883, %v887
      %v890 = vshrl.u32 %v736, 16
      %v892 = vshll.u32 %v736, 16
      %v894 = vrot.slane %v892, 1
      %v895 = vor.u32 %v890, %v894
      %v897 = vshll.u32 %v784, 16
      %v899 = vrot.slane %v897, 1
      %v900 = vsel %vm792, %v895, %v899
      %v902 = vshrl.u32 %v737, 16
      %v904 = vshll.u32 %v737, 16
      %v906 = vrot.slane %v904, 1
      %v907 = vor.u32 %v902, %v906
      %v909 = vshll.u32 %v785, 16
      %v911 = vrot.slane %v909, 1
      %v912 = vsel %vm792, %v907, %v911
      %v914 = vshrl.u32 %v738, 16
      %v916 = vshll.u32 %v738, 16
      %v918 = vrot.slane %v916, 1
      %v919 = vor.u32 %v914, %v918
      %v921 = vshll.u32 %v786, 16
      %v923 = vrot.slane %v921, 1
      %v924 = vsel %vm792, %v919, %v923
      %v926 = vshrl.u32 %v739, 16
      %v928 = vshll.u32 %v739, 16
      %v930 = vrot.slane %v928, 1
      %v931 = vor.u32 %v926, %v930
      %v933 = vshll.u32 %v787, 16
      %v935 = vrot.slane %v933, 1
      %v936 = vsel %vm792, %v931, %v935
      %v938 = vshrl.u32 %v740, 16
      %v940 = vshll.u32 %v740, 16
      %v942 = vrot.slane %v940, 1
      %v943 = vor.u32 %v938, %v942
      %v945 = vshll.u32 %v788, 16
      %v947 = vrot.slane %v945, 1
      %v948 = vsel %vm792, %v943, %v947
      %v950 = vshrl.u32 %v741, 16
      %v952 = vshll.u32 %v741, 16
      %v954 = vrot.slane %v952, 1
      %v955 = vor.u32 %v950, %v954
      %v957 = vshll.u32 %v789, 16
      %v959 = vrot.slane %v957, 1
      %v960 = vsel %vm792, %v955, %v959
      %v962 = vshrl.u32 %v742, 16
      %v964 = vshll.u32 %v742, 16
      %v966 = vrot.slane %v964, 1
      %v967 = vor.u32 %v962, %v966
      %v969 = vshll.u32 %v790, 16
      %v971 = vrot.slane %v969, 1
      %v972 = vsel %vm792, %v967, %v971
      %v974 = vshrl.u32 %v743, 16
      %v976 = vshll.u32 %v743, 16
      %v978 = vrot.slane %v976, 1
      %v979 = vor.u32 %v974, %v978
      %v981 = vshll.u32 %v791, 16
      %v983 = vrot.slane %v981, 1
      %v984 = vsel %vm792, %v979, %v983
      %985 = vrot.lane.b32.xlu0 %v804, 32
      %v986 = vpop.permute.xlu0 %985
      %987 = vrot.lane.b32.xlu0 %v816, 32
      %v988 = vpop.permute.xlu0 %987
      %989 = vrot.lane.b32.xlu0 %v828, 32
      %v990 = vpop.permute.xlu0 %989
      %991 = vrot.lane.b32.xlu0 %v840, 32
      %v992 = vpop.permute.xlu0 %991
      %993 = vrot.lane.b32.xlu0 %v852, 32
      %v994 = vpop.permute.xlu0 %993
      %995 = vrot.lane.b32.xlu0 %v864, 32
      %v996 = vpop.permute.xlu0 %995
      %997 = vrot.lane.b32.xlu0 %v876, 32
      %v998 = vpop.permute.xlu0 %997
      %999 = vrot.lane.b32.xlu0 %v888, 32
      %v1000 = vpop.permute.xlu0 %999
      %1001 = vrot.lane.b32.xlu0 %v900, 32
      %v1002 = vpop.permute.xlu0 %1001
      %1003 = vrot.lane.b32.xlu0 %v912, 32
      %v1004 = vpop.permute.xlu0 %1003
      %1005 = vrot.lane.b32.xlu0 %v924, 32
      %v1006 = vpop.permute.xlu0 %1005
      %1007 = vrot.lane.b32.xlu0 %v936, 32
      %v1008 = vpop.permute.xlu0 %1007
      %1009 = vrot.lane.b32.xlu0 %v948, 32
      %v1010 = vpop.permute.xlu0 %1009
      %1011 = vrot.lane.b32.xlu0 %v960, 32
      %v1012 = vpop.permute.xlu0 %1011
      %1013 = vrot.lane.b32.xlu0 %v972, 32
      %v1014 = vpop.permute.xlu0 %1013
      %1015 = vrot.lane.b32.xlu0 %v984, 32
      %v1016 = vpop.permute.xlu0 %1015
      %vm1017 = vcmask 1046528
      %v1018 = vrot.slane %v728, 1
      %v1019 = vrot.slane %v776, 1
      %v1020 = vsel %vm1017, %v1018, %v1019
      %v1021 = vrot.slane %v729, 1
      %v1022 = vrot.slane %v777, 1
      %v1023 = vsel %vm1017, %v1021, %v1022
      %v1024 = vrot.slane %v730, 1
      %v1025 = vrot.slane %v778, 1
      %v1026 = vsel %vm1017, %v1024, %v1025
      %v1027 = vrot.slane %v731, 1
      %v1028 = vrot.slane %v779, 1
      %v1029 = vsel %vm1017, %v1027, %v1028
      %v1030 = vrot.slane %v732, 1
      %v1031 = vrot.slane %v780, 1
      %v1032 = vsel %vm1017, %v1030, %v1031
      %v1033 = vrot.slane %v733, 1
      %v1034 = vrot.slane %v781, 1
      %v1035 = vsel %vm1017, %v1033, %v1034
      %v1036 = vrot.slane %v734, 1
      %v1037 = vrot.slane %v782, 1
      %v1038 = vsel %vm1017, %v1036, %v1037
      %v1039 = vrot.slane %v735, 1
      %v1040 = vrot.slane %v783, 1
      %v1041 = vsel %vm1017, %v1039, %v1040
      %v1042 = vrot.slane %v736, 1
      %v1043 = vrot.slane %v784, 1
      %v1044 = vsel %vm1017, %v1042, %v1043
      %v1045 = vrot.slane %v737, 1
      %v1046 = vrot.slane %v785, 1
      %v1047 = vsel %vm1017, %v1045, %v1046
      %v1048 = vrot.slane %v738, 1
      %v1049 = vrot.slane %v786, 1
      %v1050 = vsel %vm1017, %v1048, %v1049
      %v1051 = vrot.slane %v739, 1
      %v1052 = vrot.slane %v787, 1
      %v1053 = vsel %vm1017, %v1051, %v1052
      %v1054 = vrot.slane %v740, 1
      %v1055 = vrot.slane %v788, 1
      %v1056 = vsel %vm1017, %v1054, %v1055
      %v1057 = vrot.slane %v741, 1
      %v1058 = vrot.slane %v789, 1
      %v1059 = vsel %vm1017, %v1057, %v1058
      %v1060 = vrot.slane %v742, 1
      %v1061 = vrot.slane %v790, 1
      %v1062 = vsel %vm1017, %v1060, %v1061
      %v1063 = vrot.slane %v743, 1
      %v1064 = vrot.slane %v791, 1
      %v1065 = vsel %vm1017, %v1063, %v1064
      %1066 = vrot.lane.b32.xlu0 %v1020, 64
      %v1067 = vpop.permute.xlu0 %1066
      %1068 = vrot.lane.b32.xlu0 %v1023, 64
      %v1069 = vpop.permute.xlu0 %1068
      %1070 = vrot.lane.b32.xlu0 %v1026, 64
      %v1071 = vpop.permute.xlu0 %1070
      %1072 = vrot.lane.b32.xlu0 %v1029, 64
      %v1073 = vpop.permute.xlu0 %1072
      %1074 = vrot.lane.b32.xlu0 %v1032, 64
      %v1075 = vpop.permute.xlu0 %1074
      %1076 = vrot.lane.b32.xlu0 %v1035, 64
      %v1077 = vpop.permute.xlu0 %1076
      %1078 = vrot.lane.b32.xlu0 %v1038, 64
      %v1079 = vpop.permute.xlu0 %1078
      %1080 = vrot.lane.b32.xlu0 %v1041, 64
      %v1081 = vpop.permute.xlu0 %1080
      %1082 = vrot.lane.b32.xlu0 %v1044, 64
      %v1083 = vpop.permute.xlu0 %1082
      %1084 = vrot.lane.b32.xlu0 %v1047, 64
      %v1085 = vpop.permute.xlu0 %1084
      %1086 = vrot.lane.b32.xlu0 %v1050, 64
      %v1087 = vpop.permute.xlu0 %1086
      %1088 = vrot.lane.b32.xlu0 %v1053, 64
      %v1089 = vpop.permute.xlu0 %1088
      %1090 = vrot.lane.b32.xlu0 %v1056, 64
      %v1091 = vpop.permute.xlu0 %1090
      %1092 = vrot.lane.b32.xlu0 %v1059, 64
      %v1093 = vpop.permute.xlu0 %1092
      %1094 = vrot.lane.b32.xlu0 %v1062, 64
      %v1095 = vpop.permute.xlu0 %1094
      %1096 = vrot.lane.b32.xlu0 %v1065, 64
      %v1097 = vpop.permute.xlu0 %1096
      %v1100 = vunpack.c.l.b16 %v658
      %v1101 = vunpack.c.l.b16 %v659
      %v1102 = vpack.c.b16 %v1101, %v1100
      %1103 = vrot.lane.b32.xlu0 %v729, 96
      %v1104 = vpop.permute.xlu0 %1103
      %1105 = vrot.lane.b32.xlu0 %v730, 96
      %v1106 = vpop.permute.xlu0 %1105
      %1107 = vrot.lane.b32.xlu0 %v731, 96
      %v1108 = vpop.permute.xlu0 %1107
      %1109 = vrot.lane.b32.xlu0 %v732, 96
      %v1110 = vpop.permute.xlu0 %1109
      %1111 = vrot.lane.b32.xlu0 %v733, 96
      %v1112 = vpop.permute.xlu0 %1111
      %1113 = vrot.lane.b32.xlu0 %v734, 96
      %v1114 = vpop.permute.xlu0 %1113
      %1115 = vrot.lane.b32.xlu0 %v735, 96
      %v1116 = vpop.permute.xlu0 %1115
      %1117 = vrot.lane.b32.xlu0 %v736, 96
      %v1118 = vpop.permute.xlu0 %1117
      %1119 = vrot.lane.b32.xlu0 %v737, 96
      %v1120 = vpop.permute.xlu0 %1119
      %1121 = vrot.lane.b32.xlu0 %v738, 96
      %v1122 = vpop.permute.xlu0 %1121
      %1123 = vrot.lane.b32.xlu0 %v739, 96
      %v1124 = vpop.permute.xlu0 %1123
      %1125 = vrot.lane.b32.xlu0 %v740, 96
      %v1126 = vpop.permute.xlu0 %1125
      %1127 = vrot.lane.b32.xlu0 %v741, 96
      %v1128 = vpop.permute.xlu0 %1127
      %1129 = vrot.lane.b32.xlu0 %v742, 96
      %v1130 = vpop.permute.xlu0 %1129
      %1131 = vrot.lane.b32.xlu0 %v743, 96
      %v1132 = vpop.permute.xlu0 %1131
      %1133 = vrot.lane.b32.xlu0 %v1102, 96
      %v1134 = vpop.permute.xlu0 %1133
      %v1136 = vunpack.c.l.b16 %v660
      %v1137 = vpack.c.b16 %v1136, %v1136
      %v1139 = vshrl.u32 %v1102, 16
      %v1141 = vshll.u32 %v1102, 16
      %v1143 = vrot.slane %v1141, 1
      %v1144 = vor.u32 %v1139, %v1143
      %v1146 = vshll.u32 %v1137, 16
      %v1148 = vrot.slane %v1146, 1
      %v1149 = vsel %vm792, %v1144, %v1148
      %v1150 = vrot.slane %v1102, 1
      %v1151 = vrot.slane %v1137, 1
      %v1152 = vsel %vm1017, %v1150, %v1151
      %1153 = vrot.lane.b32.xlu0 %v1023, 32
      %v1154 = vpop.permute.xlu0 %1153
      %1155 = vrot.lane.b32.xlu0 %v1026, 32
      %v1156 = vpop.permute.xlu0 %1155
      %1157 = vrot.lane.b32.xlu0 %v1029, 32
      %v1158 = vpop.permute.xlu0 %1157
      %1159 = vrot.lane.b32.xlu0 %v1032, 32
      %v1160 = vpop.permute.xlu0 %1159
      %1161 = vrot.lane.b32.xlu0 %v1035, 32
      %v1162 = vpop.permute.xlu0 %1161
      %1163 = vrot.lane.b32.xlu0 %v1038, 32
      %v1164 = vpop.permute.xlu0 %1163
      %1165 = vrot.lane.b32.xlu0 %v1041, 32
      %v1166 = vpop.permute.xlu0 %1165
      %1167 = vrot.lane.b32.xlu0 %v1044, 32
      %v1168 = vpop.permute.xlu0 %1167
      %1169 = vrot.lane.b32.xlu0 %v1047, 32
      %v1170 = vpop.permute.xlu0 %1169
      %1171 = vrot.lane.b32.xlu0 %v1050, 32
      %v1172 = vpop.permute.xlu0 %1171
      %1173 = vrot.lane.b32.xlu0 %v1053, 32
      %v1174 = vpop.permute.xlu0 %1173
      %1175 = vrot.lane.b32.xlu0 %v1056, 32
      %v1176 = vpop.permute.xlu0 %1175
      %1177 = vrot.lane.b32.xlu0 %v1059, 32
      %v1178 = vpop.permute.xlu0 %1177
      %1179 = vrot.lane.b32.xlu0 %v1062, 32
      %v1180 = vpop.permute.xlu0 %1179
      %1181 = vrot.lane.b32.xlu0 %v1065, 32
      %v1182 = vpop.permute.xlu0 %1181
      %1183 = vrot.lane.b32.xlu0 %v1152, 32
      %v1184 = vpop.permute.xlu0 %1183
      %v1187 = vunpack.c.l.b16 %v661
      %v1188 = vunpack.c.l.b16 %v662
      %v1189 = vpack.c.b16 %v1188, %v1187
      %1190 = vrot.lane.b32.xlu0 %v730, 64
      %v1191 = vpop.permute.xlu0 %1190
      %1192 = vrot.lane.b32.xlu0 %v731, 64
      %v1193 = vpop.permute.xlu0 %1192
      %1194 = vrot.lane.b32.xlu0 %v732, 64
      %v1195 = vpop.permute.xlu0 %1194
      %1196 = vrot.lane.b32.xlu0 %v733, 64
      %v1197 = vpop.permute.xlu0 %1196
      %1198 = vrot.lane.b32.xlu0 %v734, 64
      %v1199 = vpop.permute.xlu0 %1198
      %1200 = vrot.lane.b32.xlu0 %v735, 64
      %v1201 = vpop.permute.xlu0 %1200
      %1202 = vrot.lane.b32.xlu0 %v736, 64
      %v1203 = vpop.permute.xlu0 %1202
      %1204 = vrot.lane.b32.xlu0 %v737, 64
      %v1205 = vpop.permute.xlu0 %1204
      %1206 = vrot.lane.b32.xlu0 %v738, 64
      %v1207 = vpop.permute.xlu0 %1206
      %1208 = vrot.lane.b32.xlu0 %v739, 64
      %v1209 = vpop.permute.xlu0 %1208
      %1210 = vrot.lane.b32.xlu0 %v740, 64
      %v1211 = vpop.permute.xlu0 %1210
      %1212 = vrot.lane.b32.xlu0 %v741, 64
      %v1213 = vpop.permute.xlu0 %1212
      %1214 = vrot.lane.b32.xlu0 %v742, 64
      %v1215 = vpop.permute.xlu0 %1214
      %1216 = vrot.lane.b32.xlu0 %v743, 64
      %v1217 = vpop.permute.xlu0 %1216
      %1218 = vrot.lane.b32.xlu0 %v1102, 64
      %v1219 = vpop.permute.xlu0 %1218
      %1220 = vrot.lane.b32.xlu0 %v1189, 64
      %v1221 = vpop.permute.xlu0 %1220
      %v1223 = vunpack.c.l.b16 %v663
      %v1224 = vpack.c.b16 %v1223, %v1223
      %v1226 = vshrl.u32 %v1189, 16
      %v1228 = vshll.u32 %v1189, 16
      %v1230 = vrot.slane %v1228, 1
      %v1231 = vor.u32 %v1226, %v1230
      %v1233 = vshll.u32 %v1224, 16
      %v1235 = vrot.slane %v1233, 1
      %v1236 = vsel %vm792, %v1231, %v1235
      %1237 = vrot.lane.b32.xlu0 %v828, 96
      %v1238 = vpop.permute.xlu0 %1237
      %1239 = vrot.lane.b32.xlu0 %v840, 96
      %v1240 = vpop.permute.xlu0 %1239
      %1241 = vrot.lane.b32.xlu0 %v852, 96
      %v1242 = vpop.permute.xlu0 %1241
      %1243 = vrot.lane.b32.xlu0 %v864, 96
      %v1244 = vpop.permute.xlu0 %1243
      %1245 = vrot.lane.b32.xlu0 %v876, 96
      %v1246 = vpop.permute.xlu0 %1245
      %1247 = vrot.lane.b32.xlu0 %v888, 96
      %v1248 = vpop.permute.xlu0 %1247
      %1249 = vrot.lane.b32.xlu0 %v900, 96
      %v1250 = vpop.permute.xlu0 %1249
      %1251 = vrot.lane.b32.xlu0 %v912, 96
      %v1252 = vpop.permute.xlu0 %1251
      %1253 = vrot.lane.b32.xlu0 %v924, 96
      %v1254 = vpop.permute.xlu0 %1253
      %1255 = vrot.lane.b32.xlu0 %v936, 96
      %v1256 = vpop.permute.xlu0 %1255
      %1257 = vrot.lane.b32.xlu0 %v948, 96
      %v1258 = vpop.permute.xlu0 %1257
      %1259 = vrot.lane.b32.xlu0 %v960, 96
      %v1260 = vpop.permute.xlu0 %1259
      %1261 = vrot.lane.b32.xlu0 %v972, 96
      %v1262 = vpop.permute.xlu0 %1261
      %1263 = vrot.lane.b32.xlu0 %v984, 96
      %v1264 = vpop.permute.xlu0 %1263
      %1265 = vrot.lane.b32.xlu0 %v1149, 96
      %v1266 = vpop.permute.xlu0 %1265
      %1267 = vrot.lane.b32.xlu0 %v1236, 96
      %v1268 = vpop.permute.xlu0 %1267
      %v1269 = vrot.slane %v1189, 1
      %v1270 = vrot.slane %v1224, 1
      %v1271 = vsel %vm1017, %v1269, %v1270
      %vm1272 = vcmask 261120
      %v1274 = vsel %vm1272, %v728, %v986
      %v1276 = vsel %vm1272, %v729, %v988
      %v1278 = vsel %vm1272, %v730, %v990
      %v1280 = vsel %vm1272, %v731, %v992
      %v1282 = vsel %vm1272, %v732, %v994
      %v1284 = vsel %vm1272, %v733, %v996
      %v1286 = vsel %vm1272, %v734, %v998
      %v1288 = vsel %vm1272, %v735, %v1000
      %v1290 = vsel %vm1272, %v736, %v1002
      %v1292 = vsel %vm1272, %v737, %v1004
      %v1294 = vsel %vm1272, %v738, %v1006
      %v1296 = vsel %vm1272, %v739, %v1008
      %v1298 = vsel %vm1272, %v740, %v1010
      %v1300 = vsel %vm1272, %v741, %v1012
      %v1302 = vsel %vm1272, %v742, %v1014
      %v1304 = vsel %vm1272, %v743, %v1016
      %vm1305 = vcmask 523264
      %v1307 = vsel %vm1305, %v1274, %v1067
      %v1309 = vsel %vm1305, %v1276, %v1069
      %v1311 = vsel %vm1305, %v1278, %v1071
      %v1313 = vsel %vm1305, %v1280, %v1073
      %v1315 = vsel %vm1305, %v1282, %v1075
      %v1317 = vsel %vm1305, %v1284, %v1077
      %v1319 = vsel %vm1305, %v1286, %v1079
      %v1321 = vsel %vm1305, %v1288, %v1081
      %v1323 = vsel %vm1305, %v1290, %v1083
      %v1325 = vsel %vm1305, %v1292, %v1085
      %v1327 = vsel %vm1305, %v1294, %v1087
      %v1329 = vsel %vm1305, %v1296, %v1089
      %v1331 = vsel %vm1305, %v1298, %v1091
      %v1333 = vsel %vm1305, %v1300, %v1093
      %v1335 = vsel %vm1305, %v1302, %v1095
      %v1337 = vsel %vm1305, %v1304, %v1097
      %vm1338 = vcmask 785408
      %v1340 = vsel %vm1338, %v1307, %v1104
      %v1343 = vsel %vm1338, %v1309, %v1106
      %v1346 = vsel %vm1338, %v1311, %v1108
      %v1349 = vsel %vm1338, %v1313, %v1110
      %v1352 = vsel %vm1338, %v1315, %v1112
      %v1355 = vsel %vm1338, %v1317, %v1114
      %v1358 = vsel %vm1338, %v1319, %v1116
      %v1361 = vsel %vm1338, %v1321, %v1118
      %v1364 = vsel %vm1338, %v1323, %v1120
      %v1367 = vsel %vm1338, %v1325, %v1122
      %v1370 = vsel %vm1338, %v1327, %v1124
      %v1373 = vsel %vm1338, %v1329, %v1126
      %v1376 = vsel %vm1338, %v1331, %v1128
      %v1379 = vsel %vm1338, %v1333, %v1130
      %v1382 = vsel %vm1338, %v1335, %v1132
      %v1385 = vsel %vm1338, %v1337, %v1134
      %v1389 = vsel %vm1272, %v816, %v1154
      %v1392 = vsel %vm1272, %v828, %v1156
      %v1395 = vsel %vm1272, %v840, %v1158
      %v1398 = vsel %vm1272, %v852, %v1160
      %v1401 = vsel %vm1272, %v864, %v1162
      %v1404 = vsel %vm1272, %v876, %v1164
      %v1407 = vsel %vm1272, %v888, %v1166
      %v1410 = vsel %vm1272, %v900, %v1168
      %v1413 = vsel %vm1272, %v912, %v1170
      %v1416 = vsel %vm1272, %v924, %v1172
      %v1419 = vsel %vm1272, %v936, %v1174
      %v1422 = vsel %vm1272, %v948, %v1176
      %v1425 = vsel %vm1272, %v960, %v1178
      %v1428 = vsel %vm1272, %v972, %v1180
      %v1431 = vsel %vm1272, %v984, %v1182
      %v1434 = vsel %vm1272, %v1149, %v1184
      %v1436 = vsel %vm1305, %v1389, %v1191
      %v1438 = vsel %vm1305, %v1392, %v1193
      %v1440 = vsel %vm1305, %v1395, %v1195
      %v1442 = vsel %vm1305, %v1398, %v1197
      %v1444 = vsel %vm1305, %v1401, %v1199
      %v1446 = vsel %vm1305, %v1404, %v1201
      %v1448 = vsel %vm1305, %v1407, %v1203
      %v1450 = vsel %vm1305, %v1410, %v1205
      %v1452 = vsel %vm1305, %v1413, %v1207
      %v1454 = vsel %vm1305, %v1416, %v1209
      %v1456 = vsel %vm1305, %v1419, %v1211
      %v1458 = vsel %vm1305, %v1422, %v1213
      %v1460 = vsel %vm1305, %v1425, %v1215
      %v1462 = vsel %vm1305, %v1428, %v1217
      %v1464 = vsel %vm1305, %v1431, %v1219
      %v1466 = vsel %vm1305, %v1434, %v1221
      %v1468 = vsel %vm1338, %v1436, %v1238
      %v1471 = vsel %vm1338, %v1438, %v1240
      %v1474 = vsel %vm1338, %v1440, %v1242
      %v1477 = vsel %vm1338, %v1442, %v1244
      %v1480 = vsel %vm1338, %v1444, %v1246
      %v1483 = vsel %vm1338, %v1446, %v1248
      %v1486 = vsel %vm1338, %v1448, %v1250
      %v1489 = vsel %vm1338, %v1450, %v1252
      %v1492 = vsel %vm1338, %v1452, %v1254
      %v1495 = vsel %vm1338, %v1454, %v1256
      %v1498 = vsel %vm1338, %v1456, %v1258
      %v1501 = vsel %vm1338, %v1458, %v1260
      %v1504 = vsel %vm1338, %v1460, %v1262
      %v1507 = vsel %vm1338, %v1462, %v1264
      %v1510 = vsel %vm1338, %v1464, %v1266
      %v1513 = vsel %vm1338, %v1466, %v1268
      %v1515 = vld [vmem:[%s1] sm:$0xf]
      %v1516 = vld [vmem:[%s1 + $0x4] sm:$0xf]
      %v1517 = vld [vmem:[%s1 + $0x8] sm:$0xf]
      %v1518 = vld [vmem:[%s1 + $0xc] sm:$0xf]
      %v1519 = vld [vmem:[%s1 + $0x10] sm:$0xf]
      %v1520 = vld [vmem:[%s1 + $0x14] sm:$0xf]
      %v1521 = vld [vmem:[%s1 + $0x18] sm:$0xf]
      %v1522 = vld [vmem:[%s1 + $0x1c] sm:$0xf]
      %v1523 = vld [vmem:[%s1 + $0x20] sm:$0xf]
      %v1524 = vld [vmem:[%s1 + $0x24] sm:$0xf]
      %v1525 = vld [vmem:[%s1 + $0x28] sm:$0xf]
      %v1526 = vld [vmem:[%s1 + $0x2c] sm:$0xf]
      %v1527 = vld [vmem:[%s1 + $0x30] sm:$0xf]
      %v1528 = vld [vmem:[%s1 + $0x34] sm:$0xf]
      %v1529 = vld [vmem:[%s1 + $0x38] sm:$0xf]
      %v1530 = vld [vmem:[%s1 + $0x3c] sm:$0xf]
      %v1531 = vld [vmem:[%s1 + $0x40] sm:$0xf]
      %v1532 = vld [vmem:[%s1 + $0x44] sm:$0xf]
      %v1533 = vld [vmem:[%s1 + $0x48] sm:$0xf]
      %v1534 = vld [vmem:[%s1 + $0x4c] sm:$0xf]
      %v1535 = vld [vmem:[%s1 + $0x50] sm:$0xf]
      %v1536 = vld [vmem:[%s1 + $0x54] sm:$0xf]
      %v1537 = vld [vmem:[%s1 + $0x58] sm:$0xf]
      %v1538 = vld [vmem:[%s1 + $0x5c] sm:$0xf]
      %v1539 = vld [vmem:[%s1 + $0x60] sm:$0xf]
      %v1540 = vld [vmem:[%s1 + $0x64] sm:$0xf]
      %v1541 = vld [vmem:[%s1 + $0x68] sm:$0xf]
      %v1542 = vld [vmem:[%s1 + $0x6c] sm:$0xf]
      %v1543 = vld [vmem:[%s1 + $0x70] sm:$0xf]
      %v1544 = vld [vmem:[%s1 + $0x74] sm:$0xf]
      %v1545 = vld [vmem:[%s1 + $0x78] sm:$0xf]
      %v1546 = vld [vmem:[%s1 + $0x7c] sm:$0xf]
      %v1547 = vld [vmem:[%s1 + $0x80] sm:$0xf]
      %v1548 = vld [vmem:[%s1 + $0x84] sm:$0xf]
      %v1549 = vld [vmem:[%s1 + $0x88] sm:$0xf]
      %v1550 = vld [vmem:[%s1 + $0x8c] sm:$0xf]
      %v1551 = vld [vmem:[%s4] sm:$0x1]
      %v1553 = vperm.slane %v1551, 0
      %v1591 = vunpack.c.l.b16 %v1515
      %v1592 = vunpack.c.l.b16 %v1516
      %v1593 = vunpack.c.l.b16 %v1517
      %v1594 = vunpack.c.l.b16 %v1518
      %v1595 = vunpack.c.l.b16 %v1519
      %v1596 = vunpack.c.l.b16 %v1520
      %v1597 = vunpack.c.l.b16 %v1521
      %v1598 = vunpack.c.l.b16 %v1522
      %v1599 = vunpack.c.l.b16 %v1523
      %v1600 = vunpack.c.l.b16 %v1524
      %v1601 = vunpack.c.l.b16 %v1525
      %v1602 = vunpack.c.l.b16 %v1526
      %v1603 = vunpack.c.l.b16 %v1527
      %v1604 = vunpack.c.l.b16 %v1528
      %v1605 = vunpack.c.l.b16 %v1529
      %v1606 = vunpack.c.l.b16 %v1530
      %v1607 = vunpack.c.l.b16 %v1531
      %v1608 = vunpack.c.l.b16 %v1532
      %v1609 = vunpack.c.l.b16 %v1533
      %v1610 = vunpack.c.l.b16 %v1534
      %v1611 = vunpack.c.l.b16 %v1535
      %v1612 = vunpack.c.l.b16 %v1536
      %v1613 = vunpack.c.l.b16 %v1537
      %v1614 = vunpack.c.l.b16 %v1538
      %v1615 = vunpack.c.l.b16 %v1539
      %v1616 = vunpack.c.l.b16 %v1540
      %v1617 = vunpack.c.l.b16 %v1541
      %v1618 = vunpack.c.l.b16 %v1542
      %v1619 = vunpack.c.l.b16 %v1543
      %v1620 = vunpack.c.l.b16 %v1544
      %v1621 = vunpack.c.l.b16 %v1545
      %v1622 = vunpack.c.l.b16 %v1546
      %v1623 = vunpack.c.l.b16 %v1547
      %v1624 = vunpack.c.l.b16 %v1548
      %v1625 = vunpack.c.l.b16 %v1549
      %v1626 = vunpack.c.l.b16 %v1550
      %v1627 = vpack.c.b16 %v1592, %v1591
      %v1628 = vpack.c.b16 %v1594, %v1593
      %v1629 = vpack.c.b16 %v1596, %v1595
      %v1630 = vpack.c.b16 %v1598, %v1597
      %v1631 = vpack.c.b16 %v1600, %v1599
      %v1632 = vpack.c.b16 %v1602, %v1601
      %v1633 = vpack.c.b16 %v1604, %v1603
      %v1634 = vpack.c.b16 %v1606, %v1605
      %v1635 = vpack.c.b16 %v1608, %v1607
      %v1636 = vpack.c.b16 %v1610, %v1609
      %v1637 = vpack.c.b16 %v1612, %v1611
      %v1638 = vpack.c.b16 %v1614, %v1613
      %v1639 = vpack.c.b16 %v1616, %v1615
      %v1640 = vpack.c.b16 %v1618, %v1617
      %v1641 = vpack.c.b16 %v1620, %v1619
      %v1642 = vpack.c.b16 %v1622, %v1621
      %v1643 = vpack.c.b16 %v1624, %v1623
      %v1644 = vpack.c.b16 %v1626, %v1625
      %v1664 = vsel %vm1272, %v1026, 0
      %v1667 = vsel %vm1272, %v1029, 0
      %v1670 = vsel %vm1272, %v1032, 0
      %v1673 = vsel %vm1272, %v1035, 0
      %v1676 = vsel %vm1272, %v1038, 0
      %v1679 = vsel %vm1272, %v1041, 0
      %v1682 = vsel %vm1272, %v1044, 0
      %v1685 = vsel %vm1272, %v1047, 0
      %v1688 = vsel %vm1272, %v1050, 0
      %v1691 = vsel %vm1272, %v1053, 0
      %v1694 = vsel %vm1272, %v1056, 0
      %v1697 = vsel %vm1272, %v1059, 0
      %v1700 = vsel %vm1272, %v1062, 0
      %v1703 = vsel %vm1272, %v1065, 0
      %v1706 = vsel %vm1272, %v1152, 0
      %v1709 = vsel %vm1272, %v1271, 0
      %1711 = vmatpush.bf16.msra.mxu0 %v1634
      %1712 = vmatpush.bf16.msra.mxu0 %v1633
      %1713 = vmatpush.bf16.msra.mxu0 %v1632
      %1714 = vmatpush.bf16.msra.mxu0 %v1631
      %1715 = vmatpush.bf16.msra.mxu0 %v1630
      %1716 = vmatpush.bf16.msra.mxu0 %v1629
      %1717 = vmatpush.bf16.msra.mxu0 %v1628
      %1718 = vmatpush.bf16.msra.mxu0 %v1627
      %1719 = vmatmul.bf16.gmra.mxu0 %v1340
      %v1720 = vpop.f32.mrf.mxu0
      %v1721 = vadd.f32 %v1553, %v1720
      %v1722 = vpop.f32.mrf.mxu0
      %v1723 = vadd.f32 %v1553, %v1722
      %1724 = vmatmul.bf16.gmra.mxu0 %v1343
      %v1725 = vpop.f32.mrf.mxu0
      %v1726 = vadd.f32 %v1553, %v1725
      %v1727 = vpop.f32.mrf.mxu0
      %v1728 = vadd.f32 %v1553, %v1727
      %1729 = vmatmul.bf16.gmra.mxu0 %v1346
      %v1730 = vpop.f32.mrf.mxu0
      %v1731 = vadd.f32 %v1553, %v1730
      %v1732 = vpop.f32.mrf.mxu0
      %v1733 = vadd.f32 %v1553, %v1732
      %1734 = vmatmul.bf16.gmra.mxu0 %v1349
      %v1735 = vpop.f32.mrf.mxu0
      %v1736 = vadd.f32 %v1553, %v1735
      %v1737 = vpop.f32.mrf.mxu0
      %v1738 = vadd.f32 %v1553, %v1737
      %1739 = vmatmul.bf16.gmra.mxu0 %v1352
      %v1740 = vpop.f32.mrf.mxu0
      %v1741 = vadd.f32 %v1553, %v1740
      %v1742 = vpop.f32.mrf.mxu0
      %v1743 = vadd.f32 %v1553, %v1742
      %1744 = vmatmul.bf16.gmra.mxu0 %v1355
      %v1745 = vpop.f32.mrf.mxu0
      %v1746 = vadd.f32 %v1553, %v1745
      %v1747 = vpop.f32.mrf.mxu0
      %v1748 = vadd.f32 %v1553, %v1747
      %1749 = vmatmul.bf16.gmra.mxu0 %v1358
      %v1750 = vpop.f32.mrf.mxu0
      %v1751 = vadd.f32 %v1553, %v1750
      %v1752 = vpop.f32.mrf.mxu0
      %v1753 = vadd.f32 %v1553, %v1752
      %1754 = vmatmul.bf16.gmra.mxu0 %v1361
      %v1755 = vpop.f32.mrf.mxu0
      %v1756 = vadd.f32 %v1553, %v1755
      %v1757 = vpop.f32.mrf.mxu0
      %v1758 = vadd.f32 %v1553, %v1757
      %1759 = vmatmul.bf16.gmra.mxu0 %v1364
      %v1760 = vpop.f32.mrf.mxu0
      %v1761 = vadd.f32 %v1553, %v1760
      %v1762 = vpop.f32.mrf.mxu0
      %v1763 = vadd.f32 %v1553, %v1762
      %1764 = vmatmul.bf16.gmra.mxu0 %v1367
      %v1765 = vpop.f32.mrf.mxu0
      %v1766 = vadd.f32 %v1553, %v1765
      %v1767 = vpop.f32.mrf.mxu0
      %v1768 = vadd.f32 %v1553, %v1767
      %1769 = vmatmul.bf16.gmra.mxu0 %v1370
      %v1770 = vpop.f32.mrf.mxu0
      %v1771 = vadd.f32 %v1553, %v1770
      %v1772 = vpop.f32.mrf.mxu0
      %v1773 = vadd.f32 %v1553, %v1772
      %1774 = vmatmul.bf16.gmra.mxu0 %v1373
      %v1775 = vpop.f32.mrf.mxu0
      %v1776 = vadd.f32 %v1553, %v1775
      %v1777 = vpop.f32.mrf.mxu0
      %v1778 = vadd.f32 %v1553, %v1777
      %1779 = vmatmul.bf16.gmra.mxu0 %v1376
      %v1780 = vpop.f32.mrf.mxu0
      %v1781 = vadd.f32 %v1553, %v1780
      %v1782 = vpop.f32.mrf.mxu0
      %v1783 = vadd.f32 %v1553, %v1782
      %1784 = vmatmul.bf16.gmra.mxu0 %v1379
      %v1785 = vpop.f32.mrf.mxu0
      %v1786 = vadd.f32 %v1553, %v1785
      %v1787 = vpop.f32.mrf.mxu0
      %v1788 = vadd.f32 %v1553, %v1787
      %1789 = vmatmul.bf16.gmra.mxu0 %v1382
      %v1790 = vpop.f32.mrf.mxu0
      %v1791 = vadd.f32 %v1553, %v1790
      %v1792 = vpop.f32.mrf.mxu0
      %v1793 = vadd.f32 %v1553, %v1792
      %1794 = vmatmul.bf16.gmra.mxu0 %v1385
      %v1795 = vpop.f32.mrf.mxu0
      %v1796 = vadd.f32 %v1553, %v1795
      %v1797 = vpop.f32.mrf.mxu0
      %v1798 = vadd.f32 %v1553, %v1797
      %1799 = vdwg.mxu0
      %1800 = vmatpush.bf16.msra.mxu0 %v1642
      %1801 = vmatpush.bf16.msra.mxu0 %v1641
      %1802 = vmatpush.bf16.msra.mxu0 %v1640
      %1803 = vmatpush.bf16.msra.mxu0 %v1639
      %1804 = vmatpush.bf16.msra.mxu0 %v1638
      %1805 = vmatpush.bf16.msra.mxu0 %v1637
      %1806 = vmatpush.bf16.msra.mxu0 %v1636
      %1807 = vmatpush.bf16.msra.mxu0 %v1635
      %1808 = vmatmul.bf16.gmra.mxu0 %v1468
      %v1809 = vpop.f32.mrf.mxu0
      %v1810 = vadd.f32 %v1721, %v1809
      %v1811 = vpop.f32.mrf.mxu0
      %v1812 = vadd.f32 %v1723, %v1811
      %1813 = vmatmul.bf16.gmra.mxu0 %v1471
      %v1814 = vpop.f32.mrf.mxu0
      %v1815 = vadd.f32 %v1726, %v1814
      %v1816 = vpop.f32.mrf.mxu0
      %v1817 = vadd.f32 %v1728, %v1816
      %1818 = vmatmul.bf16.gmra.mxu0 %v1474
      %v1819 = vpop.f32.mrf.mxu0
      %v1820 = vadd.f32 %v1731, %v1819
      %v1821 = vpop.f32.mrf.mxu0
      %v1822 = vadd.f32 %v1733, %v1821
      %1823 = vmatmul.bf16.gmra.mxu0 %v1477
      %v1824 = vpop.f32.mrf.mxu0
      %v1825 = vadd.f32 %v1736, %v1824
      %v1826 = vpop.f32.mrf.mxu0
      %v1827 = vadd.f32 %v1738, %v1826
      %1828 = vmatmul.bf16.gmra.mxu0 %v1480
      %v1829 = vpop.f32.mrf.mxu0
      %v1830 = vadd.f32 %v1741, %v1829
      %v1831 = vpop.f32.mrf.mxu0
      %v1832 = vadd.f32 %v1743, %v1831
      %1833 = vmatmul.bf16.gmra.mxu0 %v1483
      %v1834 = vpop.f32.mrf.mxu0
      %v1835 = vadd.f32 %v1746, %v1834
      %v1836 = vpop.f32.mrf.mxu0
      %v1837 = vadd.f32 %v1748, %v1836
      %1838 = vmatmul.bf16.gmra.mxu0 %v1486
      %v1839 = vpop.f32.mrf.mxu0
      %v1840 = vadd.f32 %v1751, %v1839
      %v1841 = vpop.f32.mrf.mxu0
      %v1842 = vadd.f32 %v1753, %v1841
      %1843 = vmatmul.bf16.gmra.mxu0 %v1489
      %v1844 = vpop.f32.mrf.mxu0
      %v1845 = vadd.f32 %v1756, %v1844
      %v1846 = vpop.f32.mrf.mxu0
      %v1847 = vadd.f32 %v1758, %v1846
      %1848 = vmatmul.bf16.gmra.mxu0 %v1492
      %v1849 = vpop.f32.mrf.mxu0
      %v1850 = vadd.f32 %v1761, %v1849
      %v1851 = vpop.f32.mrf.mxu0
      %v1852 = vadd.f32 %v1763, %v1851
      %1853 = vmatmul.bf16.gmra.mxu0 %v1495
      %v1854 = vpop.f32.mrf.mxu0
      %v1855 = vadd.f32 %v1766, %v1854
      %v1856 = vpop.f32.mrf.mxu0
      %v1857 = vadd.f32 %v1768, %v1856
      %1858 = vmatmul.bf16.gmra.mxu0 %v1498
      %v1859 = vpop.f32.mrf.mxu0
      %v1860 = vadd.f32 %v1771, %v1859
      %v1861 = vpop.f32.mrf.mxu0
      %v1862 = vadd.f32 %v1773, %v1861
      %1863 = vmatmul.bf16.gmra.mxu0 %v1501
      %v1864 = vpop.f32.mrf.mxu0
      %v1865 = vadd.f32 %v1776, %v1864
      %v1866 = vpop.f32.mrf.mxu0
      %v1867 = vadd.f32 %v1778, %v1866
      %1868 = vmatmul.bf16.gmra.mxu0 %v1504
      %v1869 = vpop.f32.mrf.mxu0
      %v1870 = vadd.f32 %v1781, %v1869
      %v1871 = vpop.f32.mrf.mxu0
      %v1872 = vadd.f32 %v1783, %v1871
      %1873 = vmatmul.bf16.gmra.mxu0 %v1507
      %v1874 = vpop.f32.mrf.mxu0
      %v1875 = vadd.f32 %v1786, %v1874
      %v1876 = vpop.f32.mrf.mxu0
      %v1877 = vadd.f32 %v1788, %v1876
      %1878 = vmatmul.bf16.gmra.mxu0 %v1510
      %v1879 = vpop.f32.mrf.mxu0
      %v1880 = vadd.f32 %v1791, %v1879
      %v1881 = vpop.f32.mrf.mxu0
      %v1882 = vadd.f32 %v1793, %v1881
      %1883 = vmatmul.bf16.gmra.mxu0 %v1513
      %v1884 = vpop.f32.mrf.mxu0
      %v1885 = vadd.f32 %v1796, %v1884
      %v1886 = vpop.f32.mrf.mxu0
      %v1887 = vadd.f32 %v1798, %v1886
      %1888 = vdwg.mxu0
      %1889 = vmatpush.bf16.msra.mxu0 0
      %1890 = vmatpush.bf16.msra.mxu0 0
      %1891 = vmatpush.bf16.msra.mxu0 0
      %1892 = vmatpush.bf16.msra.mxu0 0
      %1893 = vmatpush.bf16.msra.mxu0 0
      %1894 = vmatpush.bf16.msra.mxu0 0
      %1895 = vmatpush.bf16.msra.mxu0 %v1644
      %1896 = vmatpush.bf16.msra.mxu0 %v1643
      %1897 = vmatmul.bf16.gmra.mxu0 %v1664
      %v1898 = vpop.f32.mrf.mxu0
      %v1899 = vadd.f32 %v1810, %v1898
      %v1900 = vpop.f32.mrf.mxu0
      %v1901 = vadd.f32 %v1812, %v1900
      %1902 = vmatmul.bf16.gmra.mxu0 %v1667
      %v1903 = vpop.f32.mrf.mxu0
      %v1904 = vadd.f32 %v1815, %v1903
      %v1905 = vpop.f32.mrf.mxu0
      %v1906 = vadd.f32 %v1817, %v1905
      %1907 = vmatmul.bf16.gmra.mxu0 %v1670
      %v1908 = vpop.f32.mrf.mxu0
      %v1909 = vadd.f32 %v1820, %v1908
      %v1910 = vpop.f32.mrf.mxu0
      %v1911 = vadd.f32 %v1822, %v1910
      %1912 = vmatmul.bf16.gmra.mxu0 %v1673
      %v1913 = vpop.f32.mrf.mxu0
      %v1914 = vadd.f32 %v1825, %v1913
      %v1915 = vpop.f32.mrf.mxu0
      %v1916 = vadd.f32 %v1827, %v1915
      %1917 = vmatmul.bf16.gmra.mxu0 %v1676
      %v1918 = vpop.f32.mrf.mxu0
      %v1919 = vadd.f32 %v1830, %v1918
      %v1920 = vpop.f32.mrf.mxu0
      %v1921 = vadd.f32 %v1832, %v1920
      %1922 = vmatmul.bf16.gmra.mxu0 %v1679
      %v1923 = vpop.f32.mrf.mxu0
      %v1924 = vadd.f32 %v1835, %v1923
      %v1925 = vpop.f32.mrf.mxu0
      %v1926 = vadd.f32 %v1837, %v1925
      %1927 = vmatmul.bf16.gmra.mxu0 %v1682
      %v1928 = vpop.f32.mrf.mxu0
      %v1929 = vadd.f32 %v1840, %v1928
      %v1930 = vpop.f32.mrf.mxu0
      %v1931 = vadd.f32 %v1842, %v1930
      %1932 = vmatmul.bf16.gmra.mxu0 %v1685
      %v1933 = vpop.f32.mrf.mxu0
      %v1934 = vadd.f32 %v1845, %v1933
      %v1935 = vpop.f32.mrf.mxu0
      %v1936 = vadd.f32 %v1847, %v1935
      %1937 = vmatmul.bf16.gmra.mxu0 %v1688
      %v1938 = vpop.f32.mrf.mxu0
      %v1939 = vadd.f32 %v1850, %v1938
      %v1940 = vpop.f32.mrf.mxu0
      %v1941 = vadd.f32 %v1852, %v1940
      %1942 = vmatmul.bf16.gmra.mxu0 %v1691
      %v1943 = vpop.f32.mrf.mxu0
      %v1944 = vadd.f32 %v1855, %v1943
      %v1945 = vpop.f32.mrf.mxu0
      %v1946 = vadd.f32 %v1857, %v1945
      %1947 = vmatmul.bf16.gmra.mxu0 %v1694
      %v1948 = vpop.f32.mrf.mxu0
      %v1949 = vadd.f32 %v1860, %v1948
      %v1950 = vpop.f32.mrf.mxu0
      %v1951 = vadd.f32 %v1862, %v1950
      %1952 = vmatmul.bf16.gmra.mxu0 %v1697
      %v1953 = vpop.f32.mrf.mxu0
      %v1954 = vadd.f32 %v1865, %v1953
      %v1955 = vpop.f32.mrf.mxu0
      %v1956 = vadd.f32 %v1867, %v1955
      %1957 = vmatmul.bf16.gmra.mxu0 %v1700
      %v1958 = vpop.f32.mrf.mxu0
      %v1959 = vadd.f32 %v1870, %v1958
      %v1960 = vpop.f32.mrf.mxu0
      %v1961 = vadd.f32 %v1872, %v1960
      %1962 = vmatmul.bf16.gmra.mxu0 %v1703
      %v1963 = vpop.f32.mrf.mxu0
      %v1964 = vadd.f32 %v1875, %v1963
      %v1965 = vpop.f32.mrf.mxu0
      %v1966 = vadd.f32 %v1877, %v1965
      %1967 = vmatmul.bf16.gmra.mxu0 %v1706
      %v1968 = vpop.f32.mrf.mxu0
      %v1969 = vadd.f32 %v1880, %v1968
      %v1970 = vpop.f32.mrf.mxu0
      %v1971 = vadd.f32 %v1882, %v1970
      %1972 = vmatmul.bf16.gmra.mxu0 %v1709
      %v1973 = vpop.f32.mrf.mxu0
      %v1974 = vadd.f32 %v1885, %v1973
      %v1975 = vpop.f32.mrf.mxu0
      %v1976 = vadd.f32 %v1887, %v1975
      %1977 = vdwg.mxu0
      %v1978 = vlaneseq
      %v1979 = vand.u32 %v1978, 127
      %vm1980 = vcmp.lt.s32.totalorder %v1979, 32
      %v1981 = vmax.f32 %v1899, 0.0
      %v1982 = vmax.f32 %v1901, 0.0
      %v1983 = vmax.f32 %v1904, 0.0
      %v1984 = vmax.f32 %v1906, 0.0
      %v1985 = vmax.f32 %v1909, 0.0
      %v1986 = vmax.f32 %v1911, 0.0
      %v1987 = vmax.f32 %v1914, 0.0
      %v1988 = vmax.f32 %v1916, 0.0
      %v1989 = vmax.f32 %v1919, 0.0
      %v1990 = vmax.f32 %v1921, 0.0
      %v1991 = vmax.f32 %v1924, 0.0
      %v1992 = vmax.f32 %v1926, 0.0
      %v1993 = vmax.f32 %v1929, 0.0
      %v1994 = vmax.f32 %v1931, 0.0
      %v1995 = vmax.f32 %v1934, 0.0
      %v1996 = vmax.f32 %v1936, 0.0
      %v1997 = vmax.f32 %v1939, 0.0
      %v1998 = vmax.f32 %v1941, 0.0
      %v1999 = vmax.f32 %v1944, 0.0
      %v2000 = vmax.f32 %v1946, 0.0
      %v2001 = vmax.f32 %v1949, 0.0
      %v2002 = vmax.f32 %v1951, 0.0
      %v2003 = vmax.f32 %v1954, 0.0
      %v2004 = vmax.f32 %v1956, 0.0
      %v2005 = vmax.f32 %v1959, 0.0
      %v2006 = vmax.f32 %v1961, 0.0
      %v2007 = vmax.f32 %v1964, 0.0
      %v2008 = vmax.f32 %v1966, 0.0
      %v2009 = vmax.f32 %v1969, 0.0
      %v2010 = vmax.f32 %v1971, 0.0
      %v2011 = vmax.f32 %v1974, 0.0
      %v2012 = vmax.f32 %v1976, 0.0
      %v2013 = vsel %vm1980, %v1981, %v1899
      %v2014 = vsel %vm1980, %v1982, %v1901
      %v2015 = vsel %vm1980, %v1983, %v1904
      %v2016 = vsel %vm1980, %v1984, %v1906
      %v2017 = vsel %vm1980, %v1985, %v1909
      %v2018 = vsel %vm1980, %v1986, %v1911
      %v2019 = vsel %vm1980, %v1987, %v1914
      %v2020 = vsel %vm1980, %v1988, %v1916
      %v2021 = vsel %vm1980, %v1989, %v1919
      %v2022 = vsel %vm1980, %v1990, %v1921
      %v2023 = vsel %vm1980, %v1991, %v1924
      %v2024 = vsel %vm1980, %v1992, %v1926
      %v2025 = vsel %vm1980, %v1993, %v1929
      %v2026 = vsel %vm1980, %v1994, %v1931
      %v2027 = vsel %vm1980, %v1995, %v1934
      %v2028 = vsel %vm1980, %v1996, %v1936
      %v2029 = vsel %vm1980, %v1997, %v1939
      %v2030 = vsel %vm1980, %v1998, %v1941
      %v2031 = vsel %vm1980, %v1999, %v1944
      %v2032 = vsel %vm1980, %v2000, %v1946
      %v2033 = vsel %vm1980, %v2001, %v1949
      %v2034 = vsel %vm1980, %v2002, %v1951
      %v2035 = vsel %vm1980, %v2003, %v1954
      %v2036 = vsel %vm1980, %v2004, %v1956
      %v2037 = vsel %vm1980, %v2005, %v1959
      %v2038 = vsel %vm1980, %v2006, %v1961
      %v2039 = vsel %vm1980, %v2007, %v1964
      %v2040 = vsel %vm1980, %v2008, %v1966
      %v2041 = vsel %vm1980, %v2009, %v1969
      %v2042 = vsel %vm1980, %v2010, %v1971
      %v2043 = vsel %vm1980, %v2011, %v1974
      %v2044 = vsel %vm1980, %v2012, %v1976
      %vm2045 = vcmp.ge.s32.totalorder %v1979, 32
      %vm2046 = vcmp.lt.s32.totalorder %v1979, 36
      %vm2047 = vmand %vm2045, %vm2046
      %v2048 = vsel %vm2047, %v2013, 0.0
      %v2049 = vsel %vm2047, %v2014, 0.0
      %v2050 = vsel %vm2047, %v2015, 0.0
      %v2051 = vsel %vm2047, %v2016, 0.0
      %v2052 = vsel %vm2047, %v2017, 0.0
      %v2053 = vsel %vm2047, %v2018, 0.0
      %v2054 = vsel %vm2047, %v2019, 0.0
      %v2055 = vsel %vm2047, %v2020, 0.0
      %v2056 = vsel %vm2047, %v2021, 0.0
      %v2057 = vsel %vm2047, %v2022, 0.0
      %v2058 = vsel %vm2047, %v2023, 0.0
      %v2059 = vsel %vm2047, %v2024, 0.0
      %v2060 = vsel %vm2047, %v2025, 0.0
      %v2061 = vsel %vm2047, %v2026, 0.0
      %v2062 = vsel %vm2047, %v2027, 0.0
      %v2063 = vsel %vm2047, %v2028, 0.0
      %v2064 = vsel %vm2047, %v2029, 0.0
      %v2065 = vsel %vm2047, %v2030, 0.0
      %v2066 = vsel %vm2047, %v2031, 0.0
      %v2067 = vsel %vm2047, %v2032, 0.0
      %v2068 = vsel %vm2047, %v2033, 0.0
      %v2069 = vsel %vm2047, %v2034, 0.0
      %v2070 = vsel %vm2047, %v2035, 0.0
      %v2071 = vsel %vm2047, %v2036, 0.0
      %v2072 = vsel %vm2047, %v2037, 0.0
      %v2073 = vsel %vm2047, %v2038, 0.0
      %v2074 = vsel %vm2047, %v2039, 0.0
      %v2075 = vsel %vm2047, %v2040, 0.0
      %v2076 = vsel %vm2047, %v2041, 0.0
      %v2077 = vsel %vm2047, %v2042, 0.0
      %v2078 = vsel %vm2047, %v2043, 0.0
      %v2079 = vsel %vm2047, %v2044, 0.0
      %v2080 = vmul.f32 %v2048, 1.442695
      %v2081 = vpow.pop %v2080
      %v2082 = vmul.f32 %v2049, 1.442695
      %v2083 = vpow.pop %v2082
      %v2084 = vmul.f32 %v2050, 1.442695
      %v2085 = vpow.pop %v2084
      %v2086 = vmul.f32 %v2051, 1.442695
      %v2087 = vpow.pop %v2086
      %v2088 = vmul.f32 %v2052, 1.442695
      %v2089 = vpow.pop %v2088
      %v2090 = vmul.f32 %v2053, 1.442695
      %v2091 = vpow.pop %v2090
      %v2092 = vmul.f32 %v2054, 1.442695
      %v2093 = vpow.pop %v2092
      %v2094 = vmul.f32 %v2055, 1.442695
      %v2095 = vpow.pop %v2094
      %v2096 = vmul.f32 %v2056, 1.442695
      %v2097 = vpow.pop %v2096
      %v2098 = vmul.f32 %v2057, 1.442695
      %v2099 = vpow.pop %v2098
      %v2100 = vmul.f32 %v2058, 1.442695
      %v2101 = vpow.pop %v2100
      %v2102 = vmul.f32 %v2059, 1.442695
      %v2103 = vpow.pop %v2102
      %v2104 = vmul.f32 %v2060, 1.442695
      %v2105 = vpow.pop %v2104
      %v2106 = vmul.f32 %v2061, 1.442695
      %v2107 = vpow.pop %v2106
      %v2108 = vmul.f32 %v2062, 1.442695
      %v2109 = vpow.pop %v2108
      %v2110 = vmul.f32 %v2063, 1.442695
      %v2111 = vpow.pop %v2110
      %v2112 = vmul.f32 %v2064, 1.442695
      %v2113 = vpow.pop %v2112
      %v2114 = vmul.f32 %v2065, 1.442695
      %v2115 = vpow.pop %v2114
      %v2116 = vmul.f32 %v2066, 1.442695
      %v2117 = vpow.pop %v2116
      %v2118 = vmul.f32 %v2067, 1.442695
      %v2119 = vpow.pop %v2118
      %v2120 = vmul.f32 %v2068, 1.442695
      %v2121 = vpow.pop %v2120
      %v2122 = vmul.f32 %v2069, 1.442695
      %v2123 = vpow.pop %v2122
      %v2124 = vmul.f32 %v2070, 1.442695
      %v2125 = vpow.pop %v2124
      %v2126 = vmul.f32 %v2071, 1.442695
      %v2127 = vpow.pop %v2126
      %v2128 = vmul.f32 %v2072, 1.442695
      %v2129 = vpow.pop %v2128
      %v2130 = vmul.f32 %v2073, 1.442695
      %v2131 = vpow.pop %v2130
      %v2132 = vmul.f32 %v2074, 1.442695
      %v2133 = vpow.pop %v2132
      %v2134 = vmul.f32 %v2075, 1.442695
      %v2135 = vpow.pop %v2134
      %v2136 = vmul.f32 %v2076, 1.442695
      %v2137 = vpow.pop %v2136
      %v2138 = vmul.f32 %v2077, 1.442695
      %v2139 = vpow.pop %v2138
      %v2140 = vmul.f32 %v2078, 1.442695
      %v2141 = vpow.pop %v2140
      %v2142 = vmul.f32 %v2079, 1.442695
      %v2143 = vpow.pop %v2142
      %v2144 = vsel %vm2047, %v2081, %v2013
      %v2145 = vsel %vm2047, %v2083, %v2014
      %v2146 = vsel %vm2047, %v2085, %v2015
      %v2147 = vsel %vm2047, %v2087, %v2016
      %v2148 = vsel %vm2047, %v2089, %v2017
      %v2149 = vsel %vm2047, %v2091, %v2018
      %v2150 = vsel %vm2047, %v2093, %v2019
      %v2151 = vsel %vm2047, %v2095, %v2020
      %v2152 = vsel %vm2047, %v2097, %v2021
      %v2153 = vsel %vm2047, %v2099, %v2022
      %v2154 = vsel %vm2047, %v2101, %v2023
      %v2155 = vsel %vm2047, %v2103, %v2024
      %v2156 = vsel %vm2047, %v2105, %v2025
      %v2157 = vsel %vm2047, %v2107, %v2026
      %v2158 = vsel %vm2047, %v2109, %v2027
      %v2159 = vsel %vm2047, %v2111, %v2028
      %v2160 = vsel %vm2047, %v2113, %v2029
      %v2161 = vsel %vm2047, %v2115, %v2030
      %v2162 = vsel %vm2047, %v2117, %v2031
      %v2163 = vsel %vm2047, %v2119, %v2032
      %v2164 = vsel %vm2047, %v2121, %v2033
      %v2165 = vsel %vm2047, %v2123, %v2034
      %v2166 = vsel %vm2047, %v2125, %v2035
      %v2167 = vsel %vm2047, %v2127, %v2036
      %v2168 = vsel %vm2047, %v2129, %v2037
      %v2169 = vsel %vm2047, %v2131, %v2038
      %v2170 = vsel %vm2047, %v2133, %v2039
      %v2171 = vsel %vm2047, %v2135, %v2040
      %v2172 = vsel %vm2047, %v2137, %v2041
      %v2173 = vsel %vm2047, %v2139, %v2042
      %v2174 = vsel %vm2047, %v2141, %v2043
      %v2175 = vsel %vm2047, %v2143, %v2044
      %v2176 = vpack.c.bf16 %v2144, %v2144
      %v2177 = vpack.c.bf16 %v2145, %v2145
      %v2178 = vpack.c.bf16 %v2146, %v2146
      %v2179 = vpack.c.bf16 %v2147, %v2147
      %v2180 = vpack.c.bf16 %v2148, %v2148
      %v2181 = vpack.c.bf16 %v2149, %v2149
      %v2182 = vpack.c.bf16 %v2150, %v2150
      %v2183 = vpack.c.bf16 %v2151, %v2151
      %v2184 = vpack.c.bf16 %v2152, %v2152
      %v2185 = vpack.c.bf16 %v2153, %v2153
      %v2186 = vpack.c.bf16 %v2154, %v2154
      %v2187 = vpack.c.bf16 %v2155, %v2155
      %v2188 = vpack.c.bf16 %v2156, %v2156
      %v2189 = vpack.c.bf16 %v2157, %v2157
      %v2190 = vpack.c.bf16 %v2158, %v2158
      %v2191 = vpack.c.bf16 %v2159, %v2159
      %v2192 = vpack.c.bf16 %v2160, %v2160
      %v2193 = vpack.c.bf16 %v2161, %v2161
      %v2194 = vpack.c.bf16 %v2162, %v2162
      %v2195 = vpack.c.bf16 %v2163, %v2163
      %v2196 = vpack.c.bf16 %v2164, %v2164
      %v2197 = vpack.c.bf16 %v2165, %v2165
      %v2198 = vpack.c.bf16 %v2166, %v2166
      %v2199 = vpack.c.bf16 %v2167, %v2167
      %v2200 = vpack.c.bf16 %v2168, %v2168
      %v2201 = vpack.c.bf16 %v2169, %v2169
      %v2202 = vpack.c.bf16 %v2170, %v2170
      %v2203 = vpack.c.bf16 %v2171, %v2171
      %v2204 = vpack.c.bf16 %v2172, %v2172
      %v2205 = vpack.c.bf16 %v2173, %v2173
      %v2206 = vpack.c.bf16 %v2174, %v2174
      %v2207 = vpack.c.bf16 %v2175, %v2175
      %2208 = vst [vmem:[%s274] sm:$0xf] %v2176
      %2209 = vst [vmem:[%s274 + $0x4] sm:$0xf] %v2177
      %2210 = vst [vmem:[%s274 + $0x8] sm:$0xf] %v2178
      %2211 = vst [vmem:[%s274 + $0xc] sm:$0xf] %v2179
      %2212 = vst [vmem:[%s274 + $0x10] sm:$0xf] %v2180
      %2213 = vst [vmem:[%s274 + $0x14] sm:$0xf] %v2181
      %2214 = vst [vmem:[%s274 + $0x18] sm:$0xf] %v2182
      %2215 = vst [vmem:[%s274 + $0x1c] sm:$0xf] %v2183
      %2216 = vst [vmem:[%s274 + $0x20] sm:$0xf] %v2184
      %2217 = vst [vmem:[%s274 + $0x24] sm:$0xf] %v2185
      %2218 = vst [vmem:[%s274 + $0x28] sm:$0xf] %v2186
      %2219 = vst [vmem:[%s274 + $0x2c] sm:$0xf] %v2187
      %2220 = vst [vmem:[%s274 + $0x30] sm:$0xf] %v2188
      %2221 = vst [vmem:[%s274 + $0x34] sm:$0xf] %v2189
      %2222 = vst [vmem:[%s274 + $0x38] sm:$0xf] %v2190
      %2223 = vst [vmem:[%s274 + $0x3c] sm:$0xf] %v2191
      %2224 = vst [vmem:[%s274 + $0x40] sm:$0xf] %v2192
      %2225 = vst [vmem:[%s274 + $0x44] sm:$0xf] %v2193
      %2226 = vst [vmem:[%s274 + $0x48] sm:$0xf] %v2194
      %2227 = vst [vmem:[%s274 + $0x4c] sm:$0xf] %v2195
      %2228 = vst [vmem:[%s274 + $0x50] sm:$0xf] %v2196
      %2229 = vst [vmem:[%s274 + $0x54] sm:$0xf] %v2197
      %2230 = vst [vmem:[%s274 + $0x58] sm:$0xf] %v2198
      %2231 = vst [vmem:[%s274 + $0x5c] sm:$0xf] %v2199
      %2232 = vst [vmem:[%s274 + $0x60] sm:$0xf] %v2200
      %2233 = vst [vmem:[%s274 + $0x64] sm:$0xf] %v2201
      %2234 = vst [vmem:[%s274 + $0x68] sm:$0xf] %v2202
      %2235 = vst [vmem:[%s274 + $0x6c] sm:$0xf] %v2203
      %2236 = vst [vmem:[%s274 + $0x70] sm:$0xf] %v2204
      %2237 = vst [vmem:[%s274 + $0x74] sm:$0xf] %v2205
      %2238 = vst [vmem:[%s274 + $0x78] sm:$0xf] %v2206
      %2239 = vst [vmem:[%s274 + $0x7c] sm:$0xf] %v2207
      %s2240 = smul.u32 32, %s21
      %p2241 = scmp.lt.s32.totalorder %s20, 1
      %s2242 = scalar_select %p2241, %s20, 1
      %p2243 = scmp.lt.s32.totalorder %s2240, 31
      %s2244 = scalar_select %p2243, %s2240, 31
      %s2245 = smul.addr %s2242, 32
      %s2246 = sadd.s32 %s2244, %s2245
      %s2247 = smul.addr %s2246, 4
      %s2248 = scalar_lea.vmem %s5, %s2247
      // Predicated region
      $region41: #{forward_single.16} parent=39 // pred_check
        %p2249 = pneg %p168
      $region42: #{forward_single.16} parent=39 // pred_check_branch
        %2251 = sbr.rel (%p2249) target = $region44
      $region43: #{forward_single.16} parent=39 // pred_region
        %s2252 = smul.u32 32, %s21
      $region44: #{forward_single.16} parent=39 // pred_fallthru
        _
    $region40: #{forward_single.16} parent=5 // pred_fallthru
      _
    %p2253 = scmp.le.s32.totalorder 2, %s11
    // Predicated region
    $region45: #{forward_single.16} parent=5 // pred_check
      %p2254 = pneg %p2253
    $region46: #{forward_single.16} parent=5 // pred_check_branch
      %2256 = sbr.rel (%p2254) target = $region48
    $region47: #{forward_single.16} parent=5 // pred_region
      %s2257 = ssub.s32 %s11, 2
      // Predicated region
      $region49: #{forward_single.16} parent=47 // pred_check
        %p2258 = pneg %p174
      $region50: #{forward_single.16} parent=47 // pred_check_branch
        %2260 = sbr.rel (%p2258) target = $region52
      $region51: #{forward_single.16} parent=47 // pred_region
        %s2261 = smul.u32 32, %s23
        %p2262 = scmp.lt.s32.totalorder %s22, 1
        %s2263 = scalar_select %p2262, %s22, 1
        %p2264 = scmp.lt.s32.totalorder %s2261, 31
        %s2265 = scalar_select %p2264, %s2261, 31
        %s2266 = smul.addr %s2263, 32
        %s2267 = sadd.s32 %s2265, %s2266
        %s2268 = smul.addr %s2267, 4
        %s2269 = scalar_lea.vmem %s5, %s2268
      $region52: #{forward_single.16} parent=47 // pred_fallthru
        _
    $region48: #{forward_single.16} parent=5 // pred_fallthru
      _
  $region6: #{forward_single.16} parent=0 // loop_footer
    %s15 = sadd.s32 1, %s11
  $region7: #{forward_single.16} parent=0 // loop_footer_branch
    %10 = sbr.rel target = $region3
  $region8: #{forward_single.16} parent=0 // loop_exit
    _

// kernel: forward_single.17
$region0: #{forward_single.17}
  #allocation0 [shape = 'u32[]', space=smem, size = 0x4, offset = 0x4, fixed_abs, tag = 'smem constant byte address 0x4 - core index']
  #allocation1 [shape = 'u32[72,128]{1,0:T(1,128)}', space=vmem, size = 0x9000, scoped, tag = 'internal scratch']
  %s0 = inlined_call_operand.vmem [shape: bf16[2,256,128], index: 0, kind: input, shape index: {}]
  %s1 = inlined_call_operand.vmem [shape: bf16[128,128], index: 1, kind: input, shape index: {}]
  %s2 = inlined_call_operand.vmem [shape: f32[1,128], index: 2, kind: input, shape index: {}]
  %s3 = inlined_call_operand.vmem [shape: f32[2,256,128], index: 3, kind: output, shape index: {}]
  %s4 = sld [smem:[#allocation0]]
  $region45: #{forward_single.17} parent=0
    _
  %s6 = ssub.s32 1, %s4
  %s7 = scalar_select 0, %s6, %s4
  loop: start=0, step=1, limit=4
  $region2: #{forward_single.17} parent=0 // loop_pre_header
    _
  $region3: #{forward_single.17} parent=0 // loop_header
    %s9 = sphi 0, %s13
    %p10 = scmp.ge.s32.totalorder %s9, 4
    %s16 = sphi 0, %s28
    %s17 = sphi 0, %s24
    %s18 = sphi 0, %s16
    %s19 = sphi 0, %s17
    %s20 = sphi 0, %s18
    %s21 = sphi 0, %s19
    %s33 = sphi 0, %s35
    %s36 = sphi 0, %s33
    %s37 = sphi 0, %s36
    %s53 = sphi 0, %s37
    %s57 = sphi 0, %s57
    %s59 = sphi 0, %s57
    %s60 = sphi 0, %s59
    %s74 = sphi 0, %s60
    %s78 = sphi 0, %s78
    %s80 = sphi 0, %s78
    %s81 = sphi 0, %s80
    %s95 = sphi 0, %s81
    %s103 = sphi 0, %s105
    %s106 = sphi 0, %s103
    %s107 = sphi 0, %s106
    %s123 = sphi 0, %s107
  $region4: #{forward_single.17} parent=0 // loop_header_branch
    %12 = sbr.rel (%p10) target = $region8
  $region5: #{forward_single.17} parent=0 // loop_body
    %s14 = ssub.s32 %s9, 1
    %s15 = ssub.s32 %s9, 2
    %s22 = sadd.s32 1, %s17
    %p23 = scmp.ge.s32.totalorder %s22, 1
    %s24 = scalar_select %p23, 0, %s22
    %s25 = sadd.s32 1, %s16
    %s26 = scalar_select %p23, %s25, %s16
    %p27 = scmp.ge.s32.totalorder %s26, 2
    %s28 = scalar_select %p27, 0, %s26
    %s29 = ssub.s32 %s16, %s28
    %s30 = ssub.s32 %s17, %s24
    %s31 = sor.u32 %s29, %s30
    %p32 = scmp.eq.s32.totalorder %s31, 0
    %s34 = sadd.s32 %s33, 1
    %s35 = scalar_select %p32, %s33, %s34
    %p38 = pneg %p32
    %p39 = scmp.eq.s32.totalorder %s9, 1
    %p40 = por %p38, %p39
    %p41 = scmp.ne.s32.totalorder %s33, %s36
    %p42 = scmp.eq.s32.totalorder %s9, 0
    %p43 = por %p41, %p42
    %p44 = scmp.ne.s32.totalorder %s33, %s36
    %p45 = scmp.eq.s32.totalorder %s14, 1
    %p46 = por %p44, %p45
    %p47 = scmp.ne.s32.totalorder %s36, %s37
    %p48 = scmp.eq.s32.totalorder %s14, 0
    %p49 = por %p47, %p48
    %p50 = scmp.ne.s32.totalorder %s36, %s37
    %p51 = scmp.eq.s32.totalorder %s15, 1
    %p52 = por %p50, %p51
    %p54 = scmp.ne.s32.totalorder %s37, %s53
    %p55 = scmp.eq.s32.totalorder %s15, 0
    %p56 = por %p54, %p55
    %s58 = sadd.s32 %s57, 1
    %p61 = scmp.eq.s32.totalorder %s9, 1
    %p62 = scmp.ne.s32.totalorder %s57, %s59
    %p63 = scmp.eq.s32.totalorder %s9, 0
    %p64 = por %p62, %p63
    %p65 = scmp.ne.s32.totalorder %s57, %s59
    %p66 = scmp.eq.s32.totalorder %s14, 1
    %p67 = por %p65, %p66
    %p68 = scmp.ne.s32.totalorder %s59, %s60
    %p69 = scmp.eq.s32.totalorder %s14, 0
    %p70 = por %p68, %p69
    %p71 = scmp.ne.s32.totalorder %s59, %s60
    %p72 = scmp.eq.s32.totalorder %s15, 1
    %p73 = por %p71, %p72
    %p75 = scmp.ne.s32.totalorder %s60, %s74
    %p76 = scmp.eq.s32.totalorder %s15, 0
    %p77 = por %p75, %p76
    %s79 = sadd.s32 %s78, 1
    %p82 = scmp.eq.s32.totalorder %s9, 1
    %p83 = scmp.ne.s32.totalorder %s78, %s80
    %p84 = scmp.eq.s32.totalorder %s9, 0
    %p85 = por %p83, %p84
    %p86 = scmp.ne.s32.totalorder %s78, %s80
    %p87 = scmp.eq.s32.totalorder %s14, 1
    %p88 = por %p86, %p87
    %p89 = scmp.ne.s32.totalorder %s80, %s81
    %p90 = scmp.eq.s32.totalorder %s14, 0
    %p91 = por %p89, %p90
    %p92 = scmp.ne.s32.totalorder %s80, %s81
    %p93 = scmp.eq.s32.totalorder %s15, 1
    %p94 = por %p92, %p93
    %p96 = scmp.ne.s32.totalorder %s81, %s95
    %p97 = scmp.eq.s32.totalorder %s15, 0
    %p98 = por %p96, %p97
    %s99 = ssub.s32 %s16, %s28
    %s100 = ssub.s32 %s17, %s24
    %s101 = sor.u32 %s99, %s100
    %p102 = scmp.eq.s32.totalorder %s101, 0
    %s104 = sadd.s32 %s103, 1
    %s105 = scalar_select %p102, %s103, %s104
    %p108 = pneg %p102
    %p109 = scmp.eq.s32.totalorder %s9, 1
    %p110 = por %p108, %p109
    %p111 = scmp.ne.s32.totalorder %s103, %s106
    %p112 = scmp.eq.s32.totalorder %s9, 0
    %p113 = por %p111, %p112
    %p114 = scmp.ne.s32.totalorder %s103, %s106
    %p115 = scmp.eq.s32.totalorder %s14, 1
    %p116 = por %p114, %p115
    %p117 = scmp.ne.s32.totalorder %s106, %s107
    %p118 = scmp.eq.s32.totalorder %s14, 0
    %p119 = por %p117, %p118
    %p120 = scmp.ne.s32.totalorder %s106, %s107
    %p121 = scmp.eq.s32.totalorder %s15, 1
    %p122 = por %p120, %p121
    %p124 = scmp.ne.s32.totalorder %s107, %s123
    %p125 = scmp.eq.s32.totalorder %s15, 0
    %p126 = por %p124, %p125
    %p127 = scmp.le.s32.totalorder 1, %s9
    %p128 = scmp.lt.s32.totalorder %s9, 3
    %p129 = pnand %p127, %p128
    %p130 = pneg %p129
    // Predicated region
    $region9: #{forward_single.17} parent=5 // pred_check
      _
    $region10: #{forward_single.17} parent=5 // pred_check_branch
      %132 = sbr.rel (%p129) target = $region12
    $region11: #{forward_single.17} parent=5 // pred_region
      %s133 = ssub.s32 %s9, 1
      // Predicated region
      $region13: #{forward_single.17} parent=11 // pred_check
        %p134 = pneg %p70
      $region14: #{forward_single.17} parent=11 // pred_check_branch
        %136 = sbr.rel (%p134) target = $region16
      $region15: #{forward_single.17} parent=11 // pred_region
        _
      $region16: #{forward_single.17} parent=11 // pred_fallthru
        _
      // Predicated region
      $region17: #{forward_single.17} parent=11 // pred_check
        %p137 = pneg %p91
      $region18: #{forward_single.17} parent=11 // pred_check_branch
        %139 = sbr.rel (%p137) target = $region20
      $region19: #{forward_single.17} parent=11 // pred_region
        _
      $region20: #{forward_single.17} parent=11 // pred_fallthru
        _
    $region12: #{forward_single.17} parent=5 // pred_fallthru
      _
    %p140 = scmp.lt.s32.totalorder %s9, 2
    // Predicated region
    $region21: #{forward_single.17} parent=5 // pred_check
      %p141 = pneg %p140
    $region22: #{forward_single.17} parent=5 // pred_check_branch
      %143 = sbr.rel (%p141) target = $region24
    $region23: #{forward_single.17} parent=5 // pred_region
      // Predicated region
      $region25: #{forward_single.17} parent=23 // pred_check
        %p144 = pneg %p43
      $region26: #{forward_single.17} parent=23 // pred_check_branch
        %146 = sbr.rel (%p144) target = $region28
      $region27: #{forward_single.17} parent=23 // pred_region
        %s147 = smul.u32 32, %s17
        %p148 = scmp.lt.s32.totalorder %s16, 1
        %s149 = scalar_select %p148, %s16, 1
        %p150 = scmp.lt.s32.totalorder %s147, 31
        %s151 = scalar_select %p150, %s147, 31
        %s152 = smul.addr %s149, 32
        %s153 = sadd.s32 %s151, %s152
        %s154 = smul.addr %s153, 4
        %s155 = scalar_lea.vmem %s0, %s154
        %s156 = smul.u32 32, %s17
      $region28: #{forward_single.17} parent=23 // pred_fallthru
        _
    $region24: #{forward_single.17} parent=5 // pred_fallthru
      _
    %p157 = scmp.le.s32.totalorder 1, %s9
    %p158 = scmp.lt.s32.totalorder %s9, 3
    %p159 = pnand %p157, %p158
    %p160 = pneg %p159
    // Predicated region
    $region29: #{forward_single.17} parent=5 // pred_check
      _
    $region30: #{forward_single.17} parent=5 // pred_check_branch
      %162 = sbr.rel (%p159) target = $region32
    $region31: #{forward_single.17} parent=5 // pred_region
      %s163 = ssub.s32 %s9, 1
      %s164 = smul.u32 32, %s19
      %p165 = scmp.lt.s32.totalorder %s18, 1
      %s166 = scalar_select %p165, %s18, 1
      %p167 = scmp.lt.s32.totalorder %s164, 31
      %s168 = scalar_select %p167, %s164, 31
      %s169 = smul.addr %s166, 32
      %s170 = sadd.s32 %s168, %s169
      %s171 = smul.addr %s170, 4
      %s172 = scalar_lea.vmem %s0, %s171
      %p173 = pneg %p49
      %p174 = pneg %p46
      %p175 = pneg %p70
      %p176 = pneg %p67
      %p177 = pneg %p91
      %p178 = pneg %p88
      %p179 = pneg %p119
      %p180 = pneg %p116
      %s181 = smul.u32 32, %s19
      %p182 = scmp.lt.s32.totalorder %s18, 1
      %s183 = scalar_select %p182, %s18, 1
      %p184 = scmp.lt.s32.totalorder %s181, 31
      %s185 = scalar_select %p184, %s181, 31
      %s186 = smul.addr %s183, 32
      %s187 = sadd.s32 %s185, %s186
      %s188 = smul.addr %s187, 8
      %s189 = scalar_lea.vmem %s3, %s188
      %s190 = smul.u32 32, %s19
      %p191 = scmp.lt.s32.totalorder %s18, 1
      %s192 = scalar_select %p191, %s18, 1
      %p193 = scmp.lt.s32.totalorder %s190, 31
      %s194 = scalar_select %p193, %s190, 31
      %s195 = smul.addr %s192, 32
      %s196 = sadd.s32 %s194, %s195
      %s197 = smul.addr %s196, 4
      %s198 = scalar_lea.vmem %s0, %s197
      %s199 = smul.u32 32, %s19
      %s200 = smul.u32 32, %s19
      %p201 = scmp.lt.s32.totalorder %s18, 1
      %s202 = scalar_select %p201, %s18, 1
      %p203 = scmp.lt.s32.totalorder %s200, 31
      %s204 = scalar_select %p203, %s200, 31
      %s205 = smul.addr %s202, 32
      %s206 = sadd.s32 %s204, %s205
      %s207 = smul.addr %s206, 8
      %s208 = scalar_lea.vmem %s3, %s207
      %s209 = smul.u32 32, %s19
      %v210 = vld [vmem:[%s198] sm:$0xf]
      %v211 = vld [vmem:[%s198 + $0x4] sm:$0xf]
      %v212 = vld [vmem:[%s198 + $0x8] sm:$0xf]
      %v213 = vld [vmem:[%s198 + $0xc] sm:$0xf]
      %v214 = vld [vmem:[%s198 + $0x10] sm:$0xf]
      %v215 = vld [vmem:[%s198 + $0x14] sm:$0xf]
      %v216 = vld [vmem:[%s198 + $0x18] sm:$0xf]
      %v217 = vld [vmem:[%s198 + $0x1c] sm:$0xf]
      %v218 = vld [vmem:[%s198 + $0x20] sm:$0xf]
      %v219 = vld [vmem:[%s198 + $0x24] sm:$0xf]
      %v220 = vld [vmem:[%s198 + $0x28] sm:$0xf]
      %v221 = vld [vmem:[%s198 + $0x2c] sm:$0xf]
      %v222 = vld [vmem:[%s198 + $0x30] sm:$0xf]
      %v223 = vld [vmem:[%s198 + $0x34] sm:$0xf]
      %v224 = vld [vmem:[%s198 + $0x38] sm:$0xf]
      %v225 = vld [vmem:[%s198 + $0x3c] sm:$0xf]
      %v226 = vld [vmem:[%s198 + $0x40] sm:$0xf]
      %v227 = vld [vmem:[%s198 + $0x44] sm:$0xf]
      %v228 = vld [vmem:[%s198 + $0x48] sm:$0xf]
      %v229 = vld [vmem:[%s198 + $0x4c] sm:$0xf]
      %v230 = vld [vmem:[%s198 + $0x50] sm:$0xf]
      %v231 = vld [vmem:[%s198 + $0x54] sm:$0xf]
      %v232 = vld [vmem:[%s198 + $0x58] sm:$0xf]
      %v233 = vld [vmem:[%s198 + $0x5c] sm:$0xf]
      %v234 = vld [vmem:[%s198 + $0x60] sm:$0xf]
      %v235 = vld [vmem:[%s198 + $0x64] sm:$0xf]
      %v236 = vld [vmem:[%s198 + $0x68] sm:$0xf]
      %v237 = vld [vmem:[%s198 + $0x6c] sm:$0xf]
      %v238 = vld [vmem:[%s198 + $0x70] sm:$0xf]
      %v239 = vld [vmem:[%s198 + $0x74] sm:$0xf]
      %v240 = vld [vmem:[%s198 + $0x78] sm:$0xf]
      %v241 = vld [vmem:[%s198 + $0x7c] sm:$0xf]
      %v242 = vld [vmem:[%s1] sm:$0xf]
      %v243 = vld [vmem:[%s1 + $0x4] sm:$0xf]
      %v244 = vld [vmem:[%s1 + $0x8] sm:$0xf]
      %v245 = vld [vmem:[%s1 + $0xc] sm:$0xf]
      %v246 = vld [vmem:[%s1 + $0x10] sm:$0xf]
      %v247 = vld [vmem:[%s1 + $0x14] sm:$0xf]
      %v248 = vld [vmem:[%s1 + $0x18] sm:$0xf]
      %v249 = vld [vmem:[%s1 + $0x1c] sm:$0xf]
      %v250 = vld [vmem:[%s1 + $0x20] sm:$0xf]
      %v251 = vld [vmem:[%s1 + $0x24] sm:$0xf]
      %v252 = vld [vmem:[%s1 + $0x28] sm:$0xf]
      %v253 = vld [vmem:[%s1 + $0x2c] sm:$0xf]
      %v254 = vld [vmem:[%s1 + $0x30] sm:$0xf]
      %v255 = vld [vmem:[%s1 + $0x34] sm:$0xf]
      %v256 = vld [vmem:[%s1 + $0x38] sm:$0xf]
      %v257 = vld [vmem:[%s1 + $0x3c] sm:$0xf]
      %v258 = vld [vmem:[%s2] sm:$0x1]
      %v260 = vperm.slane %v258, 0
      %v294 = vunpack.c.l.b16 %v210
      %v295 = vunpack.c.l.b16 %v211
      %v296 = vunpack.c.l.b16 %v212
      %v297 = vunpack.c.l.b16 %v213
      %v298 = vunpack.c.l.b16 %v214
      %v299 = vunpack.c.l.b16 %v215
      %v300 = vunpack.c.l.b16 %v216
      %v301 = vunpack.c.l.b16 %v217
      %v302 = vunpack.c.l.b16 %v218
      %v303 = vunpack.c.l.b16 %v219
      %v304 = vunpack.c.l.b16 %v220
      %v305 = vunpack.c.l.b16 %v221
      %v306 = vunpack.c.l.b16 %v222
      %v307 = vunpack.c.l.b16 %v223
      %v308 = vunpack.c.l.b16 %v224
      %v309 = vunpack.c.l.b16 %v225
      %v310 = vunpack.c.l.b16 %v226
      %v311 = vunpack.c.l.b16 %v227
      %v312 = vunpack.c.l.b16 %v228
      %v313 = vunpack.c.l.b16 %v229
      %v314 = vunpack.c.l.b16 %v230
      %v315 = vunpack.c.l.b16 %v231
      %v316 = vunpack.c.l.b16 %v232
      %v317 = vunpack.c.l.b16 %v233
      %v318 = vunpack.c.l.b16 %v234
      %v319 = vunpack.c.l.b16 %v235
      %v320 = vunpack.c.l.b16 %v236
      %v321 = vunpack.c.l.b16 %v237
      %v322 = vunpack.c.l.b16 %v238
      %v323 = vunpack.c.l.b16 %v239
      %v324 = vunpack.c.l.b16 %v240
      %v325 = vunpack.c.l.b16 %v241
      %v326 = vpack.c.b16 %v295, %v294
      %v327 = vpack.c.b16 %v297, %v296
      %v328 = vpack.c.b16 %v299, %v298
      %v329 = vpack.c.b16 %v301, %v300
      %v330 = vpack.c.b16 %v303, %v302
      %v331 = vpack.c.b16 %v305, %v304
      %v332 = vpack.c.b16 %v307, %v306
      %v333 = vpack.c.b16 %v309, %v308
      %v334 = vpack.c.b16 %v311, %v310
      %v335 = vpack.c.b16 %v313, %v312
      %v336 = vpack.c.b16 %v315, %v314
      %v337 = vpack.c.b16 %v317, %v316
      %v338 = vpack.c.b16 %v319, %v318
      %v339 = vpack.c.b16 %v321, %v320
      %v340 = vpack.c.b16 %v323, %v322
      %v341 = vpack.c.b16 %v325, %v324
      %v374 = vunpack.c.l.b16 %v242
      %v375 = vunpack.c.l.b16 %v243
      %v376 = vunpack.c.l.b16 %v244
      %v377 = vunpack.c.l.b16 %v245
      %v378 = vunpack.c.l.b16 %v246
      %v379 = vunpack.c.l.b16 %v247
      %v380 = vunpack.c.l.b16 %v248
      %v381 = vunpack.c.l.b16 %v249
      %v382 = vunpack.c.l.b16 %v250
      %v383 = vunpack.c.l.b16 %v251
      %v384 = vunpack.c.l.b16 %v252
      %v385 = vunpack.c.l.b16 %v253
      %v386 = vunpack.c.l.b16 %v254
      %v387 = vunpack.c.l.b16 %v255
      %v388 = vunpack.c.l.b16 %v256
      %v389 = vunpack.c.l.b16 %v257
      %v390 = vpack.c.b16 %v375, %v374
      %v391 = vpack.c.b16 %v377, %v376
      %v392 = vpack.c.b16 %v379, %v378
      %v393 = vpack.c.b16 %v381, %v380
      %v394 = vpack.c.b16 %v383, %v382
      %v395 = vpack.c.b16 %v385, %v384
      %v396 = vpack.c.b16 %v387, %v386
      %v397 = vpack.c.b16 %v389, %v388
      %406 = vmatpush.bf16.msra.mxu0 %v397
      %407 = vmatpush.bf16.msra.mxu0 %v396
      %408 = vmatpush.bf16.msra.mxu0 %v395
      %409 = vmatpush.bf16.msra.mxu0 %v394
      %410 = vmatpush.bf16.msra.mxu0 %v393
      %411 = vmatpush.bf16.msra.mxu0 %v392
      %412 = vmatpush.bf16.msra.mxu0 %v391
      %413 = vmatpush.bf16.msra.mxu0 %v390
      %414 = vmatmul.bf16.gmra.mxu0 %v326
      %v415 = vpop.f32.mrf.mxu0
      %v416 = vadd.f32 %v260, %v415
      %v417 = vpop.f32.mrf.mxu0
      %v418 = vadd.f32 %v260, %v417
      %419 = vmatmul.bf16.gmra.mxu0 %v327
      %v420 = vpop.f32.mrf.mxu0
      %v421 = vadd.f32 %v260, %v420
      %v422 = vpop.f32.mrf.mxu0
      %v423 = vadd.f32 %v260, %v422
      %424 = vmatmul.bf16.gmra.mxu0 %v328
      %v425 = vpop.f32.mrf.mxu0
      %v426 = vadd.f32 %v260, %v425
      %v427 = vpop.f32.mrf.mxu0
      %v428 = vadd.f32 %v260, %v427
      %429 = vmatmul.bf16.gmra.mxu0 %v329
      %v430 = vpop.f32.mrf.mxu0
      %v431 = vadd.f32 %v260, %v430
      %v432 = vpop.f32.mrf.mxu0
      %v433 = vadd.f32 %v260, %v432
      %434 = vmatmul.bf16.gmra.mxu0 %v330
      %v435 = vpop.f32.mrf.mxu0
      %v436 = vadd.f32 %v260, %v435
      %v437 = vpop.f32.mrf.mxu0
      %v438 = vadd.f32 %v260, %v437
      %439 = vmatmul.bf16.gmra.mxu0 %v331
      %v440 = vpop.f32.mrf.mxu0
      %v441 = vadd.f32 %v260, %v440
      %v442 = vpop.f32.mrf.mxu0
      %v443 = vadd.f32 %v260, %v442
      %444 = vmatmul.bf16.gmra.mxu0 %v332
      %v445 = vpop.f32.mrf.mxu0
      %v446 = vadd.f32 %v260, %v445
      %v447 = vpop.f32.mrf.mxu0
      %v448 = vadd.f32 %v260, %v447
      %449 = vmatmul.bf16.gmra.mxu0 %v333
      %v450 = vpop.f32.mrf.mxu0
      %v451 = vadd.f32 %v260, %v450
      %v452 = vpop.f32.mrf.mxu0
      %v453 = vadd.f32 %v260, %v452
      %454 = vmatmul.bf16.gmra.mxu0 %v334
      %v455 = vpop.f32.mrf.mxu0
      %v456 = vadd.f32 %v260, %v455
      %v457 = vpop.f32.mrf.mxu0
      %v458 = vadd.f32 %v260, %v457
      %459 = vmatmul.bf16.gmra.mxu0 %v335
      %v460 = vpop.f32.mrf.mxu0
      %v461 = vadd.f32 %v260, %v460
      %v462 = vpop.f32.mrf.mxu0
      %v463 = vadd.f32 %v260, %v462
      %464 = vmatmul.bf16.gmra.mxu0 %v336
      %v465 = vpop.f32.mrf.mxu0
      %v466 = vadd.f32 %v260, %v465
      %v467 = vpop.f32.mrf.mxu0
      %v468 = vadd.f32 %v260, %v467
      %469 = vmatmul.bf16.gmra.mxu0 %v337
      %v470 = vpop.f32.mrf.mxu0
      %v471 = vadd.f32 %v260, %v470
      %v472 = vpop.f32.mrf.mxu0
      %v473 = vadd.f32 %v260, %v472
      %474 = vmatmul.bf16.gmra.mxu0 %v338
      %v475 = vpop.f32.mrf.mxu0
      %v476 = vadd.f32 %v260, %v475
      %v477 = vpop.f32.mrf.mxu0
      %v478 = vadd.f32 %v260, %v477
      %479 = vmatmul.bf16.gmra.mxu0 %v339
      %v480 = vpop.f32.mrf.mxu0
      %v481 = vadd.f32 %v260, %v480
      %v482 = vpop.f32.mrf.mxu0
      %v483 = vadd.f32 %v260, %v482
      %484 = vmatmul.bf16.gmra.mxu0 %v340
      %v485 = vpop.f32.mrf.mxu0
      %v486 = vadd.f32 %v260, %v485
      %v487 = vpop.f32.mrf.mxu0
      %v488 = vadd.f32 %v260, %v487
      %489 = vmatmul.bf16.gmra.mxu0 %v341
      %v490 = vpop.f32.mrf.mxu0
      %v491 = vadd.f32 %v260, %v490
      %v492 = vpop.f32.mrf.mxu0
      %v493 = vadd.f32 %v260, %v492
      %494 = vdwg.mxu0
      %495 = vst [vmem:[%s208] sm:$0xff] %v416
      %496 = vst [vmem:[%s208 + $0x8] sm:$0xff] %v418
      %497 = vst [vmem:[%s208 + $0x10] sm:$0xff] %v421
      %498 = vst [vmem:[%s208 + $0x18] sm:$0xff] %v423
      %499 = vst [vmem:[%s208 + $0x20] sm:$0xff] %v426
      %500 = vst [vmem:[%s208 + $0x28] sm:$0xff] %v428
      %501 = vst [vmem:[%s208 + $0x30] sm:$0xff] %v431
      %502 = vst [vmem:[%s208 + $0x38] sm:$0xff] %v433
      %503 = vst [vmem:[%s208 + $0x40] sm:$0xff] %v436
      %504 = vst [vmem:[%s208 + $0x48] sm:$0xff] %v438
      %505 = vst [vmem:[%s208 + $0x50] sm:$0xff] %v441
      %506 = vst [vmem:[%s208 + $0x58] sm:$0xff] %v443
      %507 = vst [vmem:[%s208 + $0x60] sm:$0xff] %v446
      %508 = vst [vmem:[%s208 + $0x68] sm:$0xff] %v448
      %509 = vst [vmem:[%s208 + $0x70] sm:$0xff] %v451
      %510 = vst [vmem:[%s208 + $0x78] sm:$0xff] %v453
      %511 = vst [vmem:[%s208 + $0x80] sm:$0xff] %v456
      %512 = vst [vmem:[%s208 + $0x88] sm:$0xff] %v458
      %513 = vst [vmem:[%s208 + $0x90] sm:$0xff] %v461
      %514 = vst [vmem:[%s208 + $0x98] sm:$0xff] %v463
      %515 = vst [vmem:[%s208 + $0xa0] sm:$0xff] %v466
      %516 = vst [vmem:[%s208 + $0xa8] sm:$0xff] %v468
      %517 = vst [vmem:[%s208 + $0xb0] sm:$0xff] %v471
      %518 = vst [vmem:[%s208 + $0xb8] sm:$0xff] %v473
      %519 = vst [vmem:[%s208 + $0xc0] sm:$0xff] %v476
      %520 = vst [vmem:[%s208 + $0xc8] sm:$0xff] %v478
      %521 = vst [vmem:[%s208 + $0xd0] sm:$0xff] %v481
      %522 = vst [vmem:[%s208 + $0xd8] sm:$0xff] %v483
      %523 = vst [vmem:[%s208 + $0xe0] sm:$0xff] %v486
      %524 = vst [vmem:[%s208 + $0xe8] sm:$0xff] %v488
      %525 = vst [vmem:[%s208 + $0xf0] sm:$0xff] %v491
      %526 = vst [vmem:[%s208 + $0xf8] sm:$0xff] %v493
      %s527 = smul.u32 32, %s19
      %p528 = scmp.lt.s32.totalorder %s18, 1
      %s529 = scalar_select %p528, %s18, 1
      %p530 = scmp.lt.s32.totalorder %s527, 31
      %s531 = scalar_select %p530, %s527, 31
      %s532 = smul.addr %s529, 32
      %s533 = sadd.s32 %s531, %s532
      %s534 = smul.addr %s533, 8
      %s535 = scalar_lea.vmem %s3, %s534
      // Predicated region
      $region33: #{forward_single.17} parent=31 // pred_check
        %p536 = pneg %p116
      $region34: #{forward_single.17} parent=31 // pred_check_branch
        %538 = sbr.rel (%p536) target = $region36
      $region35: #{forward_single.17} parent=31 // pred_region
        %s539 = smul.u32 32, %s19
      $region36: #{forward_single.17} parent=31 // pred_fallthru
        _
    $region32: #{forward_single.17} parent=5 // pred_fallthru
      _
    %p540 = scmp.le.s32.totalorder 2, %s9
    // Predicated region
    $region37: #{forward_single.17} parent=5 // pred_check
      %p541 = pneg %p540
    $region38: #{forward_single.17} parent=5 // pred_check_branch
      %543 = sbr.rel (%p541) target = $region40
    $region39: #{forward_single.17} parent=5 // pred_region
      %s544 = ssub.s32 %s9, 2
      // Predicated region
      $region41: #{forward_single.17} parent=39 // pred_check
        %p545 = pneg %p122
      $region42: #{forward_single.17} parent=39 // pred_check_branch
        %547 = sbr.rel (%p545) target = $region44
      $region43: #{forward_single.17} parent=39 // pred_region
        %s548 = smul.u32 32, %s21
        %p549 = scmp.lt.s32.totalorder %s20, 1
        %s550 = scalar_select %p549, %s20, 1
        %p551 = scmp.lt.s32.totalorder %s548, 31
        %s552 = scalar_select %p551, %s548, 31
        %s553 = smul.addr %s550, 32
        %s554 = sadd.s32 %s552, %s553
        %s555 = smul.addr %s554, 8
        %s556 = scalar_lea.vmem %s3, %s555
      $region44: #{forward_single.17} parent=39 // pred_fallthru
        _
    $region40: #{forward_single.17} parent=5 // pred_fallthru
      _
  $region6: #{forward_single.17} parent=0 // loop_footer
    %s13 = sadd.s32 1, %s9
  $region7: #{forward_single.17} parent=0 // loop_footer_branch
    %8 = sbr.rel target = $region3
  $region8: #{forward_single.17} parent=0 // loop_exit
    _

// kernel: forward_single.18
$region0: #{forward_single.18}
  #allocation0 [shape = 'u32[]', space=smem, size = 0x4, offset = 0x4, fixed_abs, tag = 'smem constant byte address 0x4 - core index']
  #allocation1 [shape = 'u32[72,128]{1,0:T(1,128)}', space=vmem, size = 0x9000, scoped, tag = 'internal scratch']
  %s0 = inlined_call_operand.vmem [shape: bf16[2,256,288], index: 0, kind: input, shape index: {}]
  %s1 = inlined_call_operand.vmem [shape: bf16[288,32], index: 1, kind: input, shape index: {}]
  %s2 = inlined_call_operand.vmem [shape: f32[1,32], index: 2, kind: input, shape index: {}]
  %s3 = inlined_call_operand.vmem [shape: bf16[2,256,32], index: 3, kind: output, shape index: {}]
  %s4 = sld [smem:[#allocation0]]
  $region45: #{forward_single.18} parent=0
    _
  %s6 = ssub.s32 1, %s4
  %s7 = scalar_select 0, %s6, %s4
  loop: start=0, step=1, limit=4
  $region2: #{forward_single.18} parent=0 // loop_pre_header
    _
  $region3: #{forward_single.18} parent=0 // loop_header
    %s9 = sphi 0, %s13
    %p10 = scmp.ge.s32.totalorder %s9, 4
    %s16 = sphi 0, %s28
    %s17 = sphi 0, %s24
    %s18 = sphi 0, %s16
    %s19 = sphi 0, %s17
    %s20 = sphi 0, %s18
    %s21 = sphi 0, %s19
    %s33 = sphi 0, %s35
    %s36 = sphi 0, %s33
    %s37 = sphi 0, %s36
    %s53 = sphi 0, %s37
    %s57 = sphi 0, %s57
    %s59 = sphi 0, %s57
    %s60 = sphi 0, %s59
    %s74 = sphi 0, %s60
    %s78 = sphi 0, %s78
    %s80 = sphi 0, %s78
    %s81 = sphi 0, %s80
    %s95 = sphi 0, %s81
    %s103 = sphi 0, %s105
    %s106 = sphi 0, %s103
    %s107 = sphi 0, %s106
    %s123 = sphi 0, %s107
  $region4: #{forward_single.18} parent=0 // loop_header_branch
    %12 = sbr.rel (%p10) target = $region8
  $region5: #{forward_single.18} parent=0 // loop_body
    %s14 = ssub.s32 %s9, 1
    %s15 = ssub.s32 %s9, 2
    %s22 = sadd.s32 1, %s17
    %p23 = scmp.ge.s32.totalorder %s22, 1
    %s24 = scalar_select %p23, 0, %s22
    %s25 = sadd.s32 1, %s16
    %s26 = scalar_select %p23, %s25, %s16
    %p27 = scmp.ge.s32.totalorder %s26, 2
    %s28 = scalar_select %p27, 0, %s26
    %s29 = ssub.s32 %s16, %s28
    %s30 = ssub.s32 %s17, %s24
    %s31 = sor.u32 %s29, %s30
    %p32 = scmp.eq.s32.totalorder %s31, 0
    %s34 = sadd.s32 %s33, 1
    %s35 = scalar_select %p32, %s33, %s34
    %p38 = pneg %p32
    %p39 = scmp.eq.s32.totalorder %s9, 1
    %p40 = por %p38, %p39
    %p41 = scmp.ne.s32.totalorder %s33, %s36
    %p42 = scmp.eq.s32.totalorder %s9, 0
    %p43 = por %p41, %p42
    %p44 = scmp.ne.s32.totalorder %s33, %s36
    %p45 = scmp.eq.s32.totalorder %s14, 1
    %p46 = por %p44, %p45
    %p47 = scmp.ne.s32.totalorder %s36, %s37
    %p48 = scmp.eq.s32.totalorder %s14, 0
    %p49 = por %p47, %p48
    %p50 = scmp.ne.s32.totalorder %s36, %s37
    %p51 = scmp.eq.s32.totalorder %s15, 1
    %p52 = por %p50, %p51
    %p54 = scmp.ne.s32.totalorder %s37, %s53
    %p55 = scmp.eq.s32.totalorder %s15, 0
    %p56 = por %p54, %p55
    %s58 = sadd.s32 %s57, 1
    %p61 = scmp.eq.s32.totalorder %s9, 1
    %p62 = scmp.ne.s32.totalorder %s57, %s59
    %p63 = scmp.eq.s32.totalorder %s9, 0
    %p64 = por %p62, %p63
    %p65 = scmp.ne.s32.totalorder %s57, %s59
    %p66 = scmp.eq.s32.totalorder %s14, 1
    %p67 = por %p65, %p66
    %p68 = scmp.ne.s32.totalorder %s59, %s60
    %p69 = scmp.eq.s32.totalorder %s14, 0
    %p70 = por %p68, %p69
    %p71 = scmp.ne.s32.totalorder %s59, %s60
    %p72 = scmp.eq.s32.totalorder %s15, 1
    %p73 = por %p71, %p72
    %p75 = scmp.ne.s32.totalorder %s60, %s74
    %p76 = scmp.eq.s32.totalorder %s15, 0
    %p77 = por %p75, %p76
    %s79 = sadd.s32 %s78, 1
    %p82 = scmp.eq.s32.totalorder %s9, 1
    %p83 = scmp.ne.s32.totalorder %s78, %s80
    %p84 = scmp.eq.s32.totalorder %s9, 0
    %p85 = por %p83, %p84
    %p86 = scmp.ne.s32.totalorder %s78, %s80
    %p87 = scmp.eq.s32.totalorder %s14, 1
    %p88 = por %p86, %p87
    %p89 = scmp.ne.s32.totalorder %s80, %s81
    %p90 = scmp.eq.s32.totalorder %s14, 0
    %p91 = por %p89, %p90
    %p92 = scmp.ne.s32.totalorder %s80, %s81
    %p93 = scmp.eq.s32.totalorder %s15, 1
    %p94 = por %p92, %p93
    %p96 = scmp.ne.s32.totalorder %s81, %s95
    %p97 = scmp.eq.s32.totalorder %s15, 0
    %p98 = por %p96, %p97
    %s99 = ssub.s32 %s16, %s28
    %s100 = ssub.s32 %s17, %s24
    %s101 = sor.u32 %s99, %s100
    %p102 = scmp.eq.s32.totalorder %s101, 0
    %s104 = sadd.s32 %s103, 1
    %s105 = scalar_select %p102, %s103, %s104
    %p108 = pneg %p102
    %p109 = scmp.eq.s32.totalorder %s9, 1
    %p110 = por %p108, %p109
    %p111 = scmp.ne.s32.totalorder %s103, %s106
    %p112 = scmp.eq.s32.totalorder %s9, 0
    %p113 = por %p111, %p112
    %p114 = scmp.ne.s32.totalorder %s103, %s106
    %p115 = scmp.eq.s32.totalorder %s14, 1
    %p116 = por %p114, %p115
    %p117 = scmp.ne.s32.totalorder %s106, %s107
    %p118 = scmp.eq.s32.totalorder %s14, 0
    %p119 = por %p117, %p118
    %p120 = scmp.ne.s32.totalorder %s106, %s107
    %p121 = scmp.eq.s32.totalorder %s15, 1
    %p122 = por %p120, %p121
    %p124 = scmp.ne.s32.totalorder %s107, %s123
    %p125 = scmp.eq.s32.totalorder %s15, 0
    %p126 = por %p124, %p125
    %p127 = scmp.le.s32.totalorder 1, %s9
    %p128 = scmp.lt.s32.totalorder %s9, 3
    %p129 = pnand %p127, %p128
    %p130 = pneg %p129
    // Predicated region
    $region9: #{forward_single.18} parent=5 // pred_check
      _
    $region10: #{forward_single.18} parent=5 // pred_check_branch
      %132 = sbr.rel (%p129) target = $region12
    $region11: #{forward_single.18} parent=5 // pred_region
      %s133 = ssub.s32 %s9, 1
      // Predicated region
      $region13: #{forward_single.18} parent=11 // pred_check
        %p134 = pneg %p70
      $region14: #{forward_single.18} parent=11 // pred_check_branch
        %136 = sbr.rel (%p134) target = $region16
      $region15: #{forward_single.18} parent=11 // pred_region
        _
      $region16: #{forward_single.18} parent=11 // pred_fallthru
        _
      // Predicated region
      $region17: #{forward_single.18} parent=11 // pred_check
        %p137 = pneg %p91
      $region18: #{forward_single.18} parent=11 // pred_check_branch
        %139 = sbr.rel (%p137) target = $region20
      $region19: #{forward_single.18} parent=11 // pred_region
        _
      $region20: #{forward_single.18} parent=11 // pred_fallthru
        _
    $region12: #{forward_single.18} parent=5 // pred_fallthru
      _
    %p140 = scmp.lt.s32.totalorder %s9, 2
    // Predicated region
    $region21: #{forward_single.18} parent=5 // pred_check
      %p141 = pneg %p140
    $region22: #{forward_single.18} parent=5 // pred_check_branch
      %143 = sbr.rel (%p141) target = $region24
    $region23: #{forward_single.18} parent=5 // pred_region
      // Predicated region
      $region25: #{forward_single.18} parent=23 // pred_check
        %p144 = pneg %p43
      $region26: #{forward_single.18} parent=23 // pred_check_branch
        %146 = sbr.rel (%p144) target = $region28
      $region27: #{forward_single.18} parent=23 // pred_region
        %s147 = smul.u32 32, %s17
        %p148 = scmp.lt.s32.totalorder %s16, 1
        %s149 = scalar_select %p148, %s16, 1
        %p150 = scmp.lt.s32.totalorder %s147, 31
        %s151 = scalar_select %p150, %s147, 31
        %s152 = smul.addr %s151, 3
        %s153 = smul.addr %s149, 96
        %s154 = sadd.s32 %s152, %s153
        %s155 = smul.addr %s154, 4
        %s156 = scalar_lea.vmem %s0, %s155
        %s157 = smul.u32 32, %s17
      $region28: #{forward_single.18} parent=23 // pred_fallthru
        _
    $region24: #{forward_single.18} parent=5 // pred_fallthru
      _
    %p158 = scmp.le.s32.totalorder 1, %s9
    %p159 = scmp.lt.s32.totalorder %s9, 3
    %p160 = pnand %p158, %p159
    %p161 = pneg %p160
    // Predicated region
    $region29: #{forward_single.18} parent=5 // pred_check
      _
    $region30: #{forward_single.18} parent=5 // pred_check_branch
      %163 = sbr.rel (%p160) target = $region32
    $region31: #{forward_single.18} parent=5 // pred_region
      %s164 = ssub.s32 %s9, 1
      %s165 = smul.u32 32, %s19
      %p166 = scmp.lt.s32.totalorder %s18, 1
      %s167 = scalar_select %p166, %s18, 1
      %p168 = scmp.lt.s32.totalorder %s165, 31
      %s169 = scalar_select %p168, %s165, 31
      %s170 = smul.addr %s169, 3
      %s171 = smul.addr %s167, 96
      %s172 = sadd.s32 %s170, %s171
      %s173 = smul.addr %s172, 4
      %s174 = scalar_lea.vmem %s0, %s173
      %p175 = pneg %p49
      %p176 = pneg %p46
      %p177 = pneg %p70
      %p178 = pneg %p67
      %p179 = pneg %p91
      %p180 = pneg %p88
      %p181 = pneg %p119
      %p182 = pneg %p116
      %s183 = smul.u32 32, %s19
      %p184 = scmp.lt.s32.totalorder %s18, 1
      %s185 = scalar_select %p184, %s18, 1
      %p186 = scmp.lt.s32.totalorder %s183, 31
      %s187 = scalar_select %p186, %s183, 31
      %s188 = smul.addr %s185, 32
      %s189 = sadd.s32 %s187, %s188
      %s190 = smul.addr %s189, 4
      %s191 = scalar_lea.vmem %s3, %s190
      %s192 = smul.u32 32, %s19
      %p193 = scmp.lt.s32.totalorder %s18, 1
      %s194 = scalar_select %p193, %s18, 1
      %p195 = scmp.lt.s32.totalorder %s192, 31
      %s196 = scalar_select %p195, %s192, 31
      %s197 = smul.addr %s196, 3
      %s198 = smul.addr %s194, 96
      %s199 = sadd.s32 %s197, %s198
      %s200 = smul.addr %s199, 4
      %s201 = scalar_lea.vmem %s0, %s200
      %s202 = smul.u32 32, %s19
      %s203 = smul.u32 32, %s19
      %p204 = scmp.lt.s32.totalorder %s18, 1
      %s205 = scalar_select %p204, %s18, 1
      %p206 = scmp.lt.s32.totalorder %s203, 31
      %s207 = scalar_select %p206, %s203, 31
      %s208 = smul.addr %s205, 32
      %s209 = sadd.s32 %s207, %s208
      %s210 = smul.addr %s209, 4
      %s211 = scalar_lea.vmem %s3, %s210
      %s212 = smul.u32 32, %s19
      %v214 = vld [vmem:[%s201] sm:$0xff]
      %v215 = vld [vmem:[%s201 + $0x8] sm:$0xf]
      %v216 = vld [vmem:[%s201 + $0xc] sm:$0xff]
      %v217 = vld [vmem:[%s201 + $0x14] sm:$0xf]
      %v218 = vld [vmem:[%s201 + $0x18] sm:$0xff]
      %v219 = vld [vmem:[%s201 + $0x20] sm:$0xf]
      %v220 = vld [vmem:[%s201 + $0x24] sm:$0xff]
      %v221 = vld [vmem:[%s201 + $0x2c] sm:$0xf]
      %v222 = vld [vmem:[%s201 + $0x30] sm:$0xff]
      %v223 = vld [vmem:[%s201 + $0x38] sm:$0xf]
      %v224 = vld [vmem:[%s201 + $0x3c] sm:$0xff]
      %v225 = vld [vmem:[%s201 + $0x44] sm:$0xf]
      %v226 = vld [vmem:[%s201 + $0x48] sm:$0xff]
      %v227 = vld [vmem:[%s201 + $0x50] sm:$0xf]
      %v228 = vld [vmem:[%s201 + $0x54] sm:$0xff]
      %v229 = vld [vmem:[%s201 + $0x5c] sm:$0xf]
      %v230 = vld [vmem:[%s201 + $0x60] sm:$0xff]
      %v231 = vld [vmem:[%s201 + $0x68] sm:$0xf]
      %v232 = vld [vmem:[%s201 + $0x6c] sm:$0xff]
      %v233 = vld [vmem:[%s201 + $0x74] sm:$0xf]
      %v234 = vld [vmem:[%s201 + $0x78] sm:$0xff]
      %v235 = vld [vmem:[%s201 + $0x80] sm:$0xf]
      %v236 = vld [vmem:[%s201 + $0x84] sm:$0xff]
      %v237 = vld [vmem:[%s201 + $0x8c] sm:$0xf]
      %v238 = vld [vmem:[%s201 + $0x90] sm:$0xff]
      %v239 = vld [vmem:[%s201 + $0x98] sm:$0xf]
      %v240 = vld [vmem:[%s201 + $0x9c] sm:$0xff]
      %v241 = vld [vmem:[%s201 + $0xa4] sm:$0xf]
      %v242 = vld [vmem:[%s201 + $0xa8] sm:$0xff]
      %v243 = vld [vmem:[%s201 + $0xb0] sm:$0xf]
      %v244 = vld [vmem:[%s201 + $0xb4] sm:$0xff]
      %v245 = vld [vmem:[%s201 + $0xbc] sm:$0xf]
      %v246 = vld [vmem:[%s201 + $0xc0] sm:$0xff]
      %v247 = vld [vmem:[%s201 + $0xc8] sm:$0xf]
      %v248 = vld [vmem:[%s201 + $0xcc] sm:$0xff]
      %v249 = vld [vmem:[%s201 + $0xd4] sm:$0xf]
      %v250 = vld [vmem:[%s201 + $0xd8] sm:$0xff]
      %v251 = vld [vmem:[%s201 + $0xe0] sm:$0xf]
      %v252 = vld [vmem:[%s201 + $0xe4] sm:$0xff]
      %v253 = vld [vmem:[%s201 + $0xec] sm:$0xf]
      %v254 = vld [vmem:[%s201 + $0xf0] sm:$0xff]
      %v255 = vld [vmem:[%s201 + $0xf8] sm:$0xf]
      %v256 = vld [vmem:[%s201 + $0xfc] sm:$0xff]
      %v257 = vld [vmem:[%s201 + $0x104] sm:$0xf]
      %v258 = vld [vmem:[%s201 + $0x108] sm:$0xff]
      %v259 = vld [vmem:[%s201 + $0x110] sm:$0xf]
      %v260 = vld [vmem:[%s201 + $0x114] sm:$0xff]
      %v261 = vld [vmem:[%s201 + $0x11c] sm:$0xf]
      %v262 = vld [vmem:[%s201 + $0x120] sm:$0xff]
      %v263 = vld [vmem:[%s201 + $0x128] sm:$0xf]
      %v264 = vld [vmem:[%s201 + $0x12c] sm:$0xff]
      %v265 = vld [vmem:[%s201 + $0x134] sm:$0xf]
      %v266 = vld [vmem:[%s201 + $0x138] sm:$0xff]
      %v267 = vld [vmem:[%s201 + $0x140] sm:$0xf]
      %v268 = vld [vmem:[%s201 + $0x144] sm:$0xff]
      %v269 = vld [vmem:[%s201 + $0x14c] sm:$0xf]
      %v270 = vld [vmem:[%s201 + $0x150] sm:$0xff]
      %v271 = vld [vmem:[%s201 + $0x158] sm:$0xf]
      %v272 = vld [vmem:[%s201 + $0x15c] sm:$0xff]
      %v273 = vld [vmem:[%s201 + $0x164] sm:$0xf]
      %v274 = vld [vmem:[%s201 + $0x168] sm:$0xff]
      %v275 = vld [vmem:[%s201 + $0x170] sm:$0xf]
      %v276 = vld [vmem:[%s201 + $0x174] sm:$0xff]
      %v277 = vld [vmem:[%s201 + $0x17c] sm:$0xf]
      %v278 = vld [vmem:[%s1] sm:$0xf]
      %v279 = vld [vmem:[%s1 + $0x4] sm:$0xf]
      %v280 = vld [vmem:[%s1 + $0x8] sm:$0xf]
      %v281 = vld [vmem:[%s1 + $0xc] sm:$0xf]
      %v282 = vld [vmem:[%s1 + $0x10] sm:$0xf]
      %v283 = vld [vmem:[%s1 + $0x14] sm:$0xf]
      %v284 = vld [vmem:[%s1 + $0x18] sm:$0xf]
      %v285 = vld [vmem:[%s1 + $0x1c] sm:$0xf]
      %v286 = vld [vmem:[%s1 + $0x20] sm:$0xf]
      %v287 = vld [vmem:[%s1 + $0x24] sm:$0xf]
      %v288 = vld [vmem:[%s1 + $0x28] sm:$0xf]
      %v289 = vld [vmem:[%s1 + $0x2c] sm:$0xf]
      %v290 = vld [vmem:[%s1 + $0x30] sm:$0xf]
      %v291 = vld [vmem:[%s1 + $0x34] sm:$0xf]
      %v292 = vld [vmem:[%s1 + $0x38] sm:$0xf]
      %v293 = vld [vmem:[%s1 + $0x3c] sm:$0xf]
      %v294 = vld [vmem:[%s1 + $0x40] sm:$0xf]
      %v295 = vld [vmem:[%s1 + $0x44] sm:$0xf]
      %v296 = vld [vmem:[%s1 + $0x48] sm:$0xf]
      %v297 = vld [vmem:[%s1 + $0x4c] sm:$0xf]
      %v298 = vld [vmem:[%s1 + $0x50] sm:$0xf]
      %v299 = vld [vmem:[%s1 + $0x54] sm:$0xf]
      %v300 = vld [vmem:[%s1 + $0x58] sm:$0xf]
      %v301 = vld [vmem:[%s1 + $0x5c] sm:$0xf]
      %v302 = vld [vmem:[%s1 + $0x60] sm:$0xf]
      %v303 = vld [vmem:[%s1 + $0x64] sm:$0xf]
      %v304 = vld [vmem:[%s1 + $0x68] sm:$0xf]
      %v305 = vld [vmem:[%s1 + $0x6c] sm:$0xf]
      %v306 = vld [vmem:[%s1 + $0x70] sm:$0xf]
      %v307 = vld [vmem:[%s1 + $0x74] sm:$0xf]
      %v308 = vld [vmem:[%s1 + $0x78] sm:$0xf]
      %v309 = vld [vmem:[%s1 + $0x7c] sm:$0xf]
      %v310 = vld [vmem:[%s1 + $0x80] sm:$0xf]
      %v311 = vld [vmem:[%s1 + $0x84] sm:$0xf]
      %v312 = vld [vmem:[%s1 + $0x88] sm:$0xf]
      %v313 = vld [vmem:[%s1 + $0x8c] sm:$0xf]
      %v314 = vld [vmem:[%s2] sm:$0x1]
      %v316 = vperm.slane %v314, 0
      %v382 = vunpack.c.l.b16 %v214
      %v383 = vunpack.c.h.b16 %v214
      %v384 = vunpack.c.l.b16 %v215
      %v385 = vunpack.c.l.b16 %v216
      %v386 = vunpack.c.h.b16 %v216
      %v387 = vunpack.c.l.b16 %v217
      %v388 = vunpack.c.l.b16 %v218
      %v389 = vunpack.c.h.b16 %v218
      %v390 = vunpack.c.l.b16 %v219
      %v391 = vunpack.c.l.b16 %v220
      %v392 = vunpack.c.h.b16 %v220
      %v393 = vunpack.c.l.b16 %v221
      %v394 = vunpack.c.l.b16 %v222
      %v395 = vunpack.c.h.b16 %v222
      %v396 = vunpack.c.l.b16 %v223
      %v397 = vunpack.c.l.b16 %v224
      %v398 = vunpack.c.h.b16 %v224
      %v399 = vunpack.c.l.b16 %v225
      %v400 = vunpack.c.l.b16 %v226
      %v401 = vunpack.c.h.b16 %v226
      %v402 = vunpack.c.l.b16 %v227
      %v403 = vunpack.c.l.b16 %v228
      %v404 = vunpack.c.h.b16 %v228
      %v405 = vunpack.c.l.b16 %v229
      %v406 = vunpack.c.l.b16 %v230
      %v407 = vunpack.c.h.b16 %v230
      %v408 = vunpack.c.l.b16 %v231
      %v409 = vunpack.c.l.b16 %v232
      %v410 = vunpack.c.h.b16 %v232
      %v411 = vunpack.c.l.b16 %v233
      %v412 = vunpack.c.l.b16 %v234
      %v413 = vunpack.c.h.b16 %v234
      %v414 = vunpack.c.l.b16 %v235
      %v415 = vunpack.c.l.b16 %v236
      %v416 = vunpack.c.h.b16 %v236
      %v417 = vunpack.c.l.b16 %v237
      %v418 = vunpack.c.l.b16 %v238
      %v419 = vunpack.c.h.b16 %v238
      %v420 = vunpack.c.l.b16 %v239
      %v421 = vunpack.c.l.b16 %v240
      %v422 = vunpack.c.h.b16 %v240
      %v423 = vunpack.c.l.b16 %v241
      %v424 = vunpack.c.l.b16 %v242
      %v425 = vunpack.c.h.b16 %v242
      %v426 = vunpack.c.l.b16 %v243
      %v427 = vunpack.c.l.b16 %v244
      %v428 = vunpack.c.h.b16 %v244
      %v429 = vunpack.c.l.b16 %v245
      %v430 = vunpack.c.l.b16 %v246
      %v431 = vunpack.c.h.b16 %v246
      %v432 = vunpack.c.l.b16 %v247
      %v433 = vunpack.c.l.b16 %v248
      %v434 = vunpack.c.h.b16 %v248
      %v435 = vunpack.c.l.b16 %v249
      %v436 = vunpack.c.l.b16 %v250
      %v437 = vunpack.c.h.b16 %v250
      %v438 = vunpack.c.l.b16 %v251
      %v439 = vunpack.c.l.b16 %v252
      %v440 = vunpack.c.h.b16 %v252
      %v441 = vunpack.c.l.b16 %v253
      %v442 = vunpack.c.l.b16 %v254
      %v443 = vunpack.c.h.b16 %v254
      %v444 = vunpack.c.l.b16 %v255
      %v445 = vunpack.c.l.b16 %v256
      %v446 = vunpack.c.h.b16 %v256
      %v447 = vunpack.c.l.b16 %v257
      %v448 = vunpack.c.l.b16 %v258
      %v449 = vunpack.c.h.b16 %v258
      %v450 = vunpack.c.l.b16 %v259
      %v451 = vunpack.c.l.b16 %v260
      %v452 = vunpack.c.h.b16 %v260
      %v453 = vunpack.c.l.b16 %v261
      %v454 = vunpack.c.l.b16 %v262
      %v455 = vunpack.c.h.b16 %v262
      %v456 = vunpack.c.l.b16 %v263
      %v457 = vunpack.c.l.b16 %v264
      %v458 = vunpack.c.h.b16 %v264
      %v459 = vunpack.c.l.b16 %v265
      %v460 = vunpack.c.l.b16 %v266
      %v461 = vunpack.c.h.b16 %v266
      %v462 = vunpack.c.l.b16 %v267
      %v463 = vunpack.c.l.b16 %v268
      %v464 = vunpack.c.h.b16 %v268
      %v465 = vunpack.c.l.b16 %v269
      %v466 = vunpack.c.l.b16 %v270
      %v467 = vunpack.c.h.b16 %v270
      %v468 = vunpack.c.l.b16 %v271
      %v469 = vunpack.c.l.b16 %v272
      %v470 = vunpack.c.h.b16 %v272
      %v471 = vunpack.c.l.b16 %v273
      %v472 = vunpack.c.l.b16 %v274
      %v473 = vunpack.c.h.b16 %v274
      %v474 = vunpack.c.l.b16 %v275
      %v475 = vunpack.c.l.b16 %v276
      %v476 = vunpack.c.h.b16 %v276
      %v477 = vunpack.c.l.b16 %v277
      %v478 = vpack.c.b16 %v385, %v382
      %v479 = vpack.c.b16 %v386, %v383
      %v480 = vpack.c.b16 %v387, %v384
      %v481 = vpack.c.b16 %v391, %v388
      %v482 = vpack.c.b16 %v392, %v389
      %v483 = vpack.c.b16 %v393, %v390
      %v484 = vpack.c.b16 %v397, %v394
      %v485 = vpack.c.b16 %v398, %v395
      %v486 = vpack.c.b16 %v399, %v396
      %v487 = vpack.c.b16 %v403, %v400
      %v488 = vpack.c.b16 %v404, %v401
      %v489 = vpack.c.b16 %v405, %v402
      %v490 = vpack.c.b16 %v409, %v406
      %v491 = vpack.c.b16 %v410, %v407
      %v492 = vpack.c.b16 %v411, %v408
      %v493 = vpack.c.b16 %v415, %v412
      %v494 = vpack.c.b16 %v416, %v413
      %v495 = vpack.c.b16 %v417, %v414
      %v496 = vpack.c.b16 %v421, %v418
      %v497 = vpack.c.b16 %v422, %v419
      %v498 = vpack.c.b16 %v423, %v420
      %v499 = vpack.c.b16 %v427, %v424
      %v500 = vpack.c.b16 %v428, %v425
      %v501 = vpack.c.b16 %v429, %v426
      %v502 = vpack.c.b16 %v433, %v430
      %v503 = vpack.c.b16 %v434, %v431
      %v504 = vpack.c.b16 %v435, %v432
      %v505 = vpack.c.b16 %v439, %v436
      %v506 = vpack.c.b16 %v440, %v437
      %v507 = vpack.c.b16 %v441, %v438
      %v508 = vpack.c.b16 %v445, %v442
      %v509 = vpack.c.b16 %v446, %v443
      %v510 = vpack.c.b16 %v447, %v444
      %v511 = vpack.c.b16 %v451, %v448
      %v512 = vpack.c.b16 %v452, %v449
      %v513 = vpack.c.b16 %v453, %v450
      %v514 = vpack.c.b16 %v457, %v454
      %v515 = vpack.c.b16 %v458, %v455
      %v516 = vpack.c.b16 %v459, %v456
      %v517 = vpack.c.b16 %v463, %v460
      %v518 = vpack.c.b16 %v464, %v461
      %v519 = vpack.c.b16 %v465, %v462
      %v520 = vpack.c.b16 %v469, %v466
      %v521 = vpack.c.b16 %v470, %v467
      %v522 = vpack.c.b16 %v471, %v468
      %v523 = vpack.c.b16 %v475, %v472
      %v524 = vpack.c.b16 %v476, %v473
      %v525 = vpack.c.b16 %v477, %v474
      %v594 = vunpack.c.l.b16 %v278
      %v595 = vunpack.c.l.b16 %v279
      %v596 = vunpack.c.l.b16 %v280
      %v597 = vunpack.c.l.b16 %v281
      %v598 = vunpack.c.l.b16 %v282
      %v599 = vunpack.c.l.b16 %v283
      %v600 = vunpack.c.l.b16 %v284
      %v601 = vunpack.c.l.b16 %v285
      %v602 = vunpack.c.l.b16 %v286
      %v603 = vunpack.c.l.b16 %v287
      %v604 = vunpack.c.l.b16 %v288
      %v605 = vunpack.c.l.b16 %v289
      %v606 = vunpack.c.l.b16 %v290
      %v607 = vunpack.c.l.b16 %v291
      %v608 = vunpack.c.l.b16 %v292
      %v609 = vunpack.c.l.b16 %v293
      %v610 = vunpack.c.l.b16 %v294
      %v611 = vunpack.c.l.b16 %v295
      %v612 = vunpack.c.l.b16 %v296
      %v613 = vunpack.c.l.b16 %v297
      %v614 = vunpack.c.l.b16 %v298
      %v615 = vunpack.c.l.b16 %v299
      %v616 = vunpack.c.l.b16 %v300
      %v617 = vunpack.c.l.b16 %v301
      %v618 = vunpack.c.l.b16 %v302
      %v619 = vunpack.c.l.b16 %v303
      %v620 = vunpack.c.l.b16 %v304
      %v621 = vunpack.c.l.b16 %v305
      %v622 = vunpack.c.l.b16 %v306
      %v623 = vunpack.c.l.b16 %v307
      %v624 = vunpack.c.l.b16 %v308
      %v625 = vunpack.c.l.b16 %v309
      %v626 = vunpack.c.l.b16 %v310
      %v627 = vunpack.c.l.b16 %v311
      %v628 = vunpack.c.l.b16 %v312
      %v629 = vunpack.c.l.b16 %v313
      %v630 = vpack.c.b16 %v595, %v594
      %v631 = vpack.c.b16 %v597, %v596
      %v632 = vpack.c.b16 %v599, %v598
      %v633 = vpack.c.b16 %v601, %v600
      %v634 = vpack.c.b16 %v603, %v602
      %v635 = vpack.c.b16 %v605, %v604
      %v636 = vpack.c.b16 %v607, %v606
      %v637 = vpack.c.b16 %v609, %v608
      %v638 = vpack.c.b16 %v611, %v610
      %v639 = vpack.c.b16 %v613, %v612
      %v640 = vpack.c.b16 %v615, %v614
      %v641 = vpack.c.b16 %v617, %v616
      %v642 = vpack.c.b16 %v619, %v618
      %v643 = vpack.c.b16 %v621, %v620
      %v644 = vpack.c.b16 %v623, %v622
      %v645 = vpack.c.b16 %v625, %v624
      %v646 = vpack.c.b16 %v627, %v626
      %v647 = vpack.c.b16 %v629, %v628
      %vm666 = vcmask 261120
      %v668 = vsel %vm666, %v480, 0
      %v671 = vsel %vm666, %v483, 0
      %v674 = vsel %vm666, %v486, 0
      %v677 = vsel %vm666, %v489, 0
      %v680 = vsel %vm666, %v492, 0
      %v683 = vsel %vm666, %v495, 0
      %v686 = vsel %vm666, %v498, 0
      %v689 = vsel %vm666, %v501, 0
      %v692 = vsel %vm666, %v504, 0
      %v695 = vsel %vm666, %v507, 0
      %v698 = vsel %vm666, %v510, 0
      %v701 = vsel %vm666, %v513, 0
      %v704 = vsel %vm666, %v516, 0
      %v707 = vsel %vm666, %v519, 0
      %v710 = vsel %vm666, %v522, 0
      %v713 = vsel %vm666, %v525, 0
      %715 = vmatpush.bf16.msra.mxu0 %v637
      %716 = vmatpush.bf16.msra.mxu0 %v636
      %717 = vmatpush.bf16.msra.mxu0 %v635
      %718 = vmatpush.bf16.msra.mxu0 %v634
      %719 = vmatpush.bf16.msra.mxu0 %v633
      %720 = vmatpush.bf16.msra.mxu0 %v632
      %721 = vmatpush.bf16.msra.mxu0 %v631
      %722 = vmatpush.bf16.msra.mxu0 %v630
      %723 = vmatmul.bf16.gmra.mxu0 %v478
      %v724 = vpop.f32.mrf.mxu0
      %v725 = vadd.f32 %v316, %v724
      %v726 = vpop.f32.mrf.mxu0
      %v727 = vadd.f32 %v316, %v726
      %728 = vmatmul.bf16.gmra.mxu0 %v481
      %v729 = vpop.f32.mrf.mxu0
      %v730 = vadd.f32 %v316, %v729
      %v731 = vpop.f32.mrf.mxu0
      %v732 = vadd.f32 %v316, %v731
      %733 = vmatmul.bf16.gmra.mxu0 %v484
      %v734 = vpop.f32.mrf.mxu0
      %v735 = vadd.f32 %v316, %v734
      %v736 = vpop.f32.mrf.mxu0
      %v737 = vadd.f32 %v316, %v736
      %738 = vmatmul.bf16.gmra.mxu0 %v487
      %v739 = vpop.f32.mrf.mxu0
      %v740 = vadd.f32 %v316, %v739
      %v741 = vpop.f32.mrf.mxu0
      %v742 = vadd.f32 %v316, %v741
      %743 = vmatmul.bf16.gmra.mxu0 %v490
      %v744 = vpop.f32.mrf.mxu0
      %v745 = vadd.f32 %v316, %v744
      %v746 = vpop.f32.mrf.mxu0
      %v747 = vadd.f32 %v316, %v746
      %748 = vmatmul.bf16.gmra.mxu0 %v493
      %v749 = vpop.f32.mrf.mxu0
      %v750 = vadd.f32 %v316, %v749
      %v751 = vpop.f32.mrf.mxu0
      %v752 = vadd.f32 %v316, %v751
      %753 = vmatmul.bf16.gmra.mxu0 %v496
      %v754 = vpop.f32.mrf.mxu0
      %v755 = vadd.f32 %v316, %v754
      %v756 = vpop.f32.mrf.mxu0
      %v757 = vadd.f32 %v316, %v756
      %758 = vmatmul.bf16.gmra.mxu0 %v499
      %v759 = vpop.f32.mrf.mxu0
      %v760 = vadd.f32 %v316, %v759
      %v761 = vpop.f32.mrf.mxu0
      %v762 = vadd.f32 %v316, %v761
      %763 = vmatmul.bf16.gmra.mxu0 %v502
      %v764 = vpop.f32.mrf.mxu0
      %v765 = vadd.f32 %v316, %v764
      %v766 = vpop.f32.mrf.mxu0
      %v767 = vadd.f32 %v316, %v766
      %768 = vmatmul.bf16.gmra.mxu0 %v505
      %v769 = vpop.f32.mrf.mxu0
      %v770 = vadd.f32 %v316, %v769
      %v771 = vpop.f32.mrf.mxu0
      %v772 = vadd.f32 %v316, %v771
      %773 = vmatmul.bf16.gmra.mxu0 %v508
      %v774 = vpop.f32.mrf.mxu0
      %v775 = vadd.f32 %v316, %v774
      %v776 = vpop.f32.mrf.mxu0
      %v777 = vadd.f32 %v316, %v776
      %778 = vmatmul.bf16.gmra.mxu0 %v511
      %v779 = vpop.f32.mrf.mxu0
      %v780 = vadd.f32 %v316, %v779
      %v781 = vpop.f32.mrf.mxu0
      %v782 = vadd.f32 %v316, %v781
      %783 = vmatmul.bf16.gmra.mxu0 %v514
      %v784 = vpop.f32.mrf.mxu0
      %v785 = vadd.f32 %v316, %v784
      %v786 = vpop.f32.mrf.mxu0
      %v787 = vadd.f32 %v316, %v786
      %788 = vmatmul.bf16.gmra.mxu0 %v517
      %v789 = vpop.f32.mrf.mxu0
      %v790 = vadd.f32 %v316, %v789
      %v791 = vpop.f32.mrf.mxu0
      %v792 = vadd.f32 %v316, %v791
      %793 = vmatmul.bf16.gmra.mxu0 %v520
      %v794 = vpop.f32.mrf.mxu0
      %v795 = vadd.f32 %v316, %v794
      %v796 = vpop.f32.mrf.mxu0
      %v797 = vadd.f32 %v316, %v796
      %798 = vmatmul.bf16.gmra.mxu0 %v523
      %v799 = vpop.f32.mrf.mxu0
      %v800 = vadd.f32 %v316, %v799
      %v801 = vpop.f32.mrf.mxu0
      %v802 = vadd.f32 %v316, %v801
      %803 = vdwg.mxu0
      %804 = vmatpush.bf16.msra.mxu0 %v645
      %805 = vmatpush.bf16.msra.mxu0 %v644
      %806 = vmatpush.bf16.msra.mxu0 %v643
      %807 = vmatpush.bf16.msra.mxu0 %v642
      %808 = vmatpush.bf16.msra.mxu0 %v641
      %809 = vmatpush.bf16.msra.mxu0 %v640
      %810 = vmatpush.bf16.msra.mxu0 %v639
      %811 = vmatpush.bf16.msra.mxu0 %v638
      %812 = vmatmul.bf16.gmra.mxu0 %v479
      %v813 = vpop.f32.mrf.mxu0
      %v814 = vadd.f32 %v725, %v813
      %v815 = vpop.f32.mrf.mxu0
      %v816 = vadd.f32 %v727, %v815
      %817 = vmatmul.bf16.gmra.mxu0 %v482
      %v818 = vpop.f32.mrf.mxu0
      %v819 = vadd.f32 %v730, %v818
      %v820 = vpop.f32.mrf.mxu0
      %v821 = vadd.f32 %v732, %v820
      %822 = vmatmul.bf16.gmra.mxu0 %v485
      %v823 = vpop.f32.mrf.mxu0
      %v824 = vadd.f32 %v735, %v823
      %v825 = vpop.f32.mrf.mxu0
      %v826 = vadd.f32 %v737, %v825
      %827 = vmatmul.bf16.gmra.mxu0 %v488
      %v828 = vpop.f32.mrf.mxu0
      %v829 = vadd.f32 %v740, %v828
      %v830 = vpop.f32.mrf.mxu0
      %v831 = vadd.f32 %v742, %v830
      %832 = vmatmul.bf16.gmra.mxu0 %v491
      %v833 = vpop.f32.mrf.mxu0
      %v834 = vadd.f32 %v745, %v833
      %v835 = vpop.f32.mrf.mxu0
      %v836 = vadd.f32 %v747, %v835
      %837 = vmatmul.bf16.gmra.mxu0 %v494
      %v838 = vpop.f32.mrf.mxu0
      %v839 = vadd.f32 %v750, %v838
      %v840 = vpop.f32.mrf.mxu0
      %v841 = vadd.f32 %v752, %v840
      %842 = vmatmul.bf16.gmra.mxu0 %v497
      %v843 = vpop.f32.mrf.mxu0
      %v844 = vadd.f32 %v755, %v843
      %v845 = vpop.f32.mrf.mxu0
      %v846 = vadd.f32 %v757, %v845
      %847 = vmatmul.bf16.gmra.mxu0 %v500
      %v848 = vpop.f32.mrf.mxu0
      %v849 = vadd.f32 %v760, %v848
      %v850 = vpop.f32.mrf.mxu0
      %v851 = vadd.f32 %v762, %v850
      %852 = vmatmul.bf16.gmra.mxu0 %v503
      %v853 = vpop.f32.mrf.mxu0
      %v854 = vadd.f32 %v765, %v853
      %v855 = vpop.f32.mrf.mxu0
      %v856 = vadd.f32 %v767, %v855
      %857 = vmatmul.bf16.gmra.mxu0 %v506
      %v858 = vpop.f32.mrf.mxu0
      %v859 = vadd.f32 %v770, %v858
      %v860 = vpop.f32.mrf.mxu0
      %v861 = vadd.f32 %v772, %v860
      %862 = vmatmul.bf16.gmra.mxu0 %v509
      %v863 = vpop.f32.mrf.mxu0
      %v864 = vadd.f32 %v775, %v863
      %v865 = vpop.f32.mrf.mxu0
      %v866 = vadd.f32 %v777, %v865
      %867 = vmatmul.bf16.gmra.mxu0 %v512
      %v868 = vpop.f32.mrf.mxu0
      %v869 = vadd.f32 %v780, %v868
      %v870 = vpop.f32.mrf.mxu0
      %v871 = vadd.f32 %v782, %v870
      %872 = vmatmul.bf16.gmra.mxu0 %v515
      %v873 = vpop.f32.mrf.mxu0
      %v874 = vadd.f32 %v785, %v873
      %v875 = vpop.f32.mrf.mxu0
      %v876 = vadd.f32 %v787, %v875
      %877 = vmatmul.bf16.gmra.mxu0 %v518
      %v878 = vpop.f32.mrf.mxu0
      %v879 = vadd.f32 %v790, %v878
      %v880 = vpop.f32.mrf.mxu0
      %v881 = vadd.f32 %v792, %v880
      %882 = vmatmul.bf16.gmra.mxu0 %v521
      %v883 = vpop.f32.mrf.mxu0
      %v884 = vadd.f32 %v795, %v883
      %v885 = vpop.f32.mrf.mxu0
      %v886 = vadd.f32 %v797, %v885
      %887 = vmatmul.bf16.gmra.mxu0 %v524
      %v888 = vpop.f32.mrf.mxu0
      %v889 = vadd.f32 %v800, %v888
      %v890 = vpop.f32.mrf.mxu0
      %v891 = vadd.f32 %v802, %v890
      %892 = vdwg.mxu0
      %893 = vmatpush.bf16.msra.mxu0 0
      %894 = vmatpush.bf16.msra.mxu0 0
      %895 = vmatpush.bf16.msra.mxu0 0
      %896 = vmatpush.bf16.msra.mxu0 0
      %897 = vmatpush.bf16.msra.mxu0 0
      %898 = vmatpush.bf16.msra.mxu0 0
      %899 = vmatpush.bf16.msra.mxu0 %v647
      %900 = vmatpush.bf16.msra.mxu0 %v646
      %901 = vmatmul.bf16.gmra.mxu0 %v668
      %v902 = vpop.f32.mrf.mxu0
      %v903 = vadd.f32 %v814, %v902
      %v904 = vpop.f32.mrf.mxu0
      %v905 = vadd.f32 %v816, %v904
      %906 = vmatmul.bf16.gmra.mxu0 %v671
      %v907 = vpop.f32.mrf.mxu0
      %v908 = vadd.f32 %v819, %v907
      %v909 = vpop.f32.mrf.mxu0
      %v910 = vadd.f32 %v821, %v909
      %911 = vmatmul.bf16.gmra.mxu0 %v674
      %v912 = vpop.f32.mrf.mxu0
      %v913 = vadd.f32 %v824, %v912
      %v914 = vpop.f32.mrf.mxu0
      %v915 = vadd.f32 %v826, %v914
      %916 = vmatmul.bf16.gmra.mxu0 %v677
      %v917 = vpop.f32.mrf.mxu0
      %v918 = vadd.f32 %v829, %v917
      %v919 = vpop.f32.mrf.mxu0
      %v920 = vadd.f32 %v831, %v919
      %921 = vmatmul.bf16.gmra.mxu0 %v680
      %v922 = vpop.f32.mrf.mxu0
      %v923 = vadd.f32 %v834, %v922
      %v924 = vpop.f32.mrf.mxu0
      %v925 = vadd.f32 %v836, %v924
      %926 = vmatmul.bf16.gmra.mxu0 %v683
      %v927 = vpop.f32.mrf.mxu0
      %v928 = vadd.f32 %v839, %v927
      %v929 = vpop.f32.mrf.mxu0
      %v930 = vadd.f32 %v841, %v929
      %931 = vmatmul.bf16.gmra.mxu0 %v686
      %v932 = vpop.f32.mrf.mxu0
      %v933 = vadd.f32 %v844, %v932
      %v934 = vpop.f32.mrf.mxu0
      %v935 = vadd.f32 %v846, %v934
      %936 = vmatmul.bf16.gmra.mxu0 %v689
      %v937 = vpop.f32.mrf.mxu0
      %v938 = vadd.f32 %v849, %v937
      %v939 = vpop.f32.mrf.mxu0
      %v940 = vadd.f32 %v851, %v939
      %941 = vmatmul.bf16.gmra.mxu0 %v692
      %v942 = vpop.f32.mrf.mxu0
      %v943 = vadd.f32 %v854, %v942
      %v944 = vpop.f32.mrf.mxu0
      %v945 = vadd.f32 %v856, %v944
      %946 = vmatmul.bf16.gmra.mxu0 %v695
      %v947 = vpop.f32.mrf.mxu0
      %v948 = vadd.f32 %v859, %v947
      %v949 = vpop.f32.mrf.mxu0
      %v950 = vadd.f32 %v861, %v949
      %951 = vmatmul.bf16.gmra.mxu0 %v698
      %v952 = vpop.f32.mrf.mxu0
      %v953 = vadd.f32 %v864, %v952
      %v954 = vpop.f32.mrf.mxu0
      %v955 = vadd.f32 %v866, %v954
      %956 = vmatmul.bf16.gmra.mxu0 %v701
      %v957 = vpop.f32.mrf.mxu0
      %v958 = vadd.f32 %v869, %v957
      %v959 = vpop.f32.mrf.mxu0
      %v960 = vadd.f32 %v871, %v959
      %961 = vmatmul.bf16.gmra.mxu0 %v704
      %v962 = vpop.f32.mrf.mxu0
      %v963 = vadd.f32 %v874, %v962
      %v964 = vpop.f32.mrf.mxu0
      %v965 = vadd.f32 %v876, %v964
      %966 = vmatmul.bf16.gmra.mxu0 %v707
      %v967 = vpop.f32.mrf.mxu0
      %v968 = vadd.f32 %v879, %v967
      %v969 = vpop.f32.mrf.mxu0
      %v970 = vadd.f32 %v881, %v969
      %971 = vmatmul.bf16.gmra.mxu0 %v710
      %v972 = vpop.f32.mrf.mxu0
      %v973 = vadd.f32 %v884, %v972
      %v974 = vpop.f32.mrf.mxu0
      %v975 = vadd.f32 %v886, %v974
      %976 = vmatmul.bf16.gmra.mxu0 %v713
      %v977 = vpop.f32.mrf.mxu0
      %v978 = vadd.f32 %v889, %v977
      %v979 = vpop.f32.mrf.mxu0
      %v980 = vadd.f32 %v891, %v979
      %981 = vdwg.mxu0
      %v982 = vpack.c.bf16 %v903, %v903
      %v983 = vpack.c.bf16 %v905, %v905
      %v984 = vpack.c.bf16 %v908, %v908
      %v985 = vpack.c.bf16 %v910, %v910
      %v986 = vpack.c.bf16 %v913, %v913
      %v987 = vpack.c.bf16 %v915, %v915
      %v988 = vpack.c.bf16 %v918, %v918
      %v989 = vpack.c.bf16 %v920, %v920
      %v990 = vpack.c.bf16 %v923, %v923
      %v991 = vpack.c.bf16 %v925, %v925
      %v992 = vpack.c.bf16 %v928, %v928
      %v993 = vpack.c.bf16 %v930, %v930
      %v994 = vpack.c.bf16 %v933, %v933
      %v995 = vpack.c.bf16 %v935, %v935
      %v996 = vpack.c.bf16 %v938, %v938
      %v997 = vpack.c.bf16 %v940, %v940
      %v998 = vpack.c.bf16 %v943, %v943
      %v999 = vpack.c.bf16 %v945, %v945
      %v1000 = vpack.c.bf16 %v948, %v948
      %v1001 = vpack.c.bf16 %v950, %v950
      %v1002 = vpack.c.bf16 %v953, %v953
      %v1003 = vpack.c.bf16 %v955, %v955
      %v1004 = vpack.c.bf16 %v958, %v958
      %v1005 = vpack.c.bf16 %v960, %v960
      %v1006 = vpack.c.bf16 %v963, %v963
      %v1007 = vpack.c.bf16 %v965, %v965
      %v1008 = vpack.c.bf16 %v968, %v968
      %v1009 = vpack.c.bf16 %v970, %v970
      %v1010 = vpack.c.bf16 %v973, %v973
      %v1011 = vpack.c.bf16 %v975, %v975
      %v1012 = vpack.c.bf16 %v978, %v978
      %v1013 = vpack.c.bf16 %v980, %v980
      %vm1014 = vcmask 257024
      %1015 = vst.msk [vmem:[%s211] sm:$0xf] %vm1014, %v982
      %1016 = vst.msk [vmem:[%s211 + $0x4] sm:$0xf] %vm1014, %v983
      %1017 = vst.msk [vmem:[%s211 + $0x8] sm:$0xf] %vm1014, %v984
      %1018 = vst.msk [vmem:[%s211 + $0xc] sm:$0xf] %vm1014, %v985
      %1019 = vst.msk [vmem:[%s211 + $0x10] sm:$0xf] %vm1014, %v986
      %1020 = vst.msk [vmem:[%s211 + $0x14] sm:$0xf] %vm1014, %v987
      %1021 = vst.msk [vmem:[%s211 + $0x18] sm:$0xf] %vm1014, %v988
      %1022 = vst.msk [vmem:[%s211 + $0x1c] sm:$0xf] %vm1014, %v989
      %1023 = vst.msk [vmem:[%s211 + $0x20] sm:$0xf] %vm1014, %v990
      %1024 = vst.msk [vmem:[%s211 + $0x24] sm:$0xf] %vm1014, %v991
      %1025 = vst.msk [vmem:[%s211 + $0x28] sm:$0xf] %vm1014, %v992
      %1026 = vst.msk [vmem:[%s211 + $0x2c] sm:$0xf] %vm1014, %v993
      %1027 = vst.msk [vmem:[%s211 + $0x30] sm:$0xf] %vm1014, %v994
      %1028 = vst.msk [vmem:[%s211 + $0x34] sm:$0xf] %vm1014, %v995
      %1029 = vst.msk [vmem:[%s211 + $0x38] sm:$0xf] %vm1014, %v996
      %1030 = vst.msk [vmem:[%s211 + $0x3c] sm:$0xf] %vm1014, %v997
      %1031 = vst.msk [vmem:[%s211 + $0x40] sm:$0xf] %vm1014, %v998
      %1032 = vst.msk [vmem:[%s211 + $0x44] sm:$0xf] %vm1014, %v999
      %1033 = vst.msk [vmem:[%s211 + $0x48] sm:$0xf] %vm1014, %v1000
      %1034 = vst.msk [vmem:[%s211 + $0x4c] sm:$0xf] %vm1014, %v1001
      %1035 = vst.msk [vmem:[%s211 + $0x50] sm:$0xf] %vm1014, %v1002
      %1036 = vst.msk [vmem:[%s211 + $0x54] sm:$0xf] %vm1014, %v1003
      %1037 = vst.msk [vmem:[%s211 + $0x58] sm:$0xf] %vm1014, %v1004
      %1038 = vst.msk [vmem:[%s211 + $0x5c] sm:$0xf] %vm1014, %v1005
      %1039 = vst.msk [vmem:[%s211 + $0x60] sm:$0xf] %vm1014, %v1006
      %1040 = vst.msk [vmem:[%s211 + $0x64] sm:$0xf] %vm1014, %v1007
      %1041 = vst.msk [vmem:[%s211 + $0x68] sm:$0xf] %vm1014, %v1008
      %1042 = vst.msk [vmem:[%s211 + $0x6c] sm:$0xf] %vm1014, %v1009
      %1043 = vst.msk [vmem:[%s211 + $0x70] sm:$0xf] %vm1014, %v1010
      %1044 = vst.msk [vmem:[%s211 + $0x74] sm:$0xf] %vm1014, %v1011
      %1045 = vst.msk [vmem:[%s211 + $0x78] sm:$0xf] %vm1014, %v1012
      %1046 = vst.msk [vmem:[%s211 + $0x7c] sm:$0xf] %vm1014, %v1013
      %s1047 = smul.u32 32, %s19
      %p1048 = scmp.lt.s32.totalorder %s18, 1
      %s1049 = scalar_select %p1048, %s18, 1
      %p1050 = scmp.lt.s32.totalorder %s1047, 31
      %s1051 = scalar_select %p1050, %s1047, 31
      %s1052 = smul.addr %s1049, 32
      %s1053 = sadd.s32 %s1051, %s1052
      %s1054 = smul.addr %s1053, 4
      %s1055 = scalar_lea.vmem %s3, %s1054
      // Predicated region
      $region33: #{forward_single.18} parent=31 // pred_check
        %p1056 = pneg %p116
      $region34: #{forward_single.18} parent=31 // pred_check_branch
        %1058 = sbr.rel (%p1056) target = $region36
      $region35: #{forward_single.18} parent=31 // pred_region
        %s1059 = smul.u32 32, %s19
      $region36: #{forward_single.18} parent=31 // pred_fallthru
        _
    $region32: #{forward_single.18} parent=5 // pred_fallthru
      _
    %p1060 = scmp.le.s32.totalorder 2, %s9
    // Predicated region
    $region37: #{forward_single.18} parent=5 // pred_check
      %p1061 = pneg %p1060
    $region38: #{forward_single.18} parent=5 // pred_check_branch
      %1063 = sbr.rel (%p1061) target = $region40
    $region39: #{forward_single.18} parent=5 // pred_region
      %s1064 = ssub.s32 %s9, 2
      // Predicated region
      $region41: #{forward_single.18} parent=39 // pred_check
        %p1065 = pneg %p122
      $region42: #{forward_single.18} parent=39 // pred_check_branch
        %1067 = sbr.rel (%p1065) target = $region44
      $region43: #{forward_single.18} parent=39 // pred_region
        %s1068 = smul.u32 32, %s21
        %p1069 = scmp.lt.s32.totalorder %s20, 1
        %s1070 = scalar_select %p1069, %s20, 1
        %p1071 = scmp.lt.s32.totalorder %s1068, 31
        %s1072 = scalar_select %p1071, %s1068, 31
        %s1073 = smul.addr %s1070, 32
        %s1074 = sadd.s32 %s1072, %s1073
        %s1075 = smul.addr %s1074, 4
        %s1076 = scalar_lea.vmem %s3, %s1075
      $region44: #{forward_single.18} parent=39 // pred_fallthru
        _
    $region40: #{forward_single.18} parent=5 // pred_fallthru
      _
  $region6: #{forward_single.18} parent=0 // loop_footer
    %s13 = sadd.s32 1, %s9
  $region7: #{forward_single.18} parent=0 // loop_footer_branch
    %8 = sbr.rel target = $region3
  $region8: #{forward_single.18} parent=0 // loop_exit
    _

// kernel: forward_single.23
$region0: #{forward_single.23}
  #allocation0 [shape = 'u32[]', space=smem, size = 0x4, offset = 0x4, fixed_abs, tag = 'smem constant byte address 0x4 - core index']
  #allocation1 [shape = 'u32[72,128]{1,0:T(1,128)}', space=vmem, size = 0x9000, scoped, tag = 'internal scratch']
  %s0 = inlined_call_operand.vmem [shape: bf16[2,18,18,32], index: 0, kind: input, shape index: {}]
  %s1 = inlined_call_operand.vmem [shape: bf16[288,128], index: 1, kind: input, shape index: {}]
  %s2 = inlined_call_operand.vmem [shape: f32[2,1,32], index: 2, kind: input, shape index: {}]
  %s3 = inlined_call_operand.vmem [shape: f32[2,1,32], index: 3, kind: input, shape index: {}]
  %s4 = inlined_call_operand.vmem [shape: f32[1,128], index: 4, kind: input, shape index: {}]
  %s5 = inlined_call_operand.vmem [shape: bf16[2,256,128], index: 5, kind: output, shape index: {}]
  %s6 = sld [smem:[#allocation0]]
  $region53: #{forward_single.23} parent=0
    _
  %s8 = ssub.s32 1, %s6
  %s9 = scalar_select 0, %s8, %s6
  loop: start=0, step=1, limit=4
  $region2: #{forward_single.23} parent=0 // loop_pre_header
    _
  $region3: #{forward_single.23} parent=0 // loop_header
    %s11 = sphi 0, %s15
    %p12 = scmp.ge.s32.totalorder %s11, 4
    %s18 = sphi 0, %s30
    %s19 = sphi 0, %s26
    %s20 = sphi 0, %s18
    %s21 = sphi 0, %s19
    %s22 = sphi 0, %s20
    %s23 = sphi 0, %s21
    %s33 = sphi 0, %s35
    %s36 = sphi 0, %s33
    %s37 = sphi 0, %s36
    %s53 = sphi 0, %s37
    %s57 = sphi 0, %s57
    %s59 = sphi 0, %s57
    %s60 = sphi 0, %s59
    %s74 = sphi 0, %s60
    %s80 = sphi 0, %s82
    %s83 = sphi 0, %s80
    %s84 = sphi 0, %s83
    %s100 = sphi 0, %s84
    %s106 = sphi 0, %s108
    %s109 = sphi 0, %s106
    %s110 = sphi 0, %s109
    %s126 = sphi 0, %s110
    %s130 = sphi 0, %s130
    %s132 = sphi 0, %s130
    %s133 = sphi 0, %s132
    %s147 = sphi 0, %s133
    %s155 = sphi 0, %s157
    %s158 = sphi 0, %s155
    %s159 = sphi 0, %s158
    %s175 = sphi 0, %s159
  $region4: #{forward_single.23} parent=0 // loop_header_branch
    %14 = sbr.rel (%p12) target = $region8
  $region5: #{forward_single.23} parent=0 // loop_body
    %s16 = ssub.s32 %s11, 1
    %s17 = ssub.s32 %s11, 2
    %s24 = sadd.s32 1, %s19
    %p25 = scmp.ge.s32.totalorder %s24, 1
    %s26 = scalar_select %p25, 0, %s24
    %s27 = sadd.s32 1, %s18
    %s28 = scalar_select %p25, %s27, %s18
    %p29 = scmp.ge.s32.totalorder %s28, 2
    %s30 = scalar_select %p29, 0, %s28
    %s31 = ssub.s32 %s18, %s30
    %p32 = scmp.eq.s32.totalorder %s31, 0
    %s34 = sadd.s32 %s33, 1
    %s35 = scalar_select %p32, %s33, %s34
    %p38 = pneg %p32
    %p39 = scmp.eq.s32.totalorder %s11, 1
    %p40 = por %p38, %p39
    %p41 = scmp.ne.s32.totalorder %s33, %s36
    %p42 = scmp.eq.s32.totalorder %s11, 0
    %p43 = por %p41, %p42
    %p44 = scmp.ne.s32.totalorder %s33, %s36
    %p45 = scmp.eq.s32.totalorder %s16, 1
    %p46 = por %p44, %p45
    %p47 = scmp.ne.s32.totalorder %s36, %s37
    %p48 = scmp.eq.s32.totalorder %s16, 0
    %p49 = por %p47, %p48
    %p50 = scmp.ne.s32.totalorder %s36, %s37
    %p51 = scmp.eq.s32.totalorder %s17, 1
    %p52 = por %p50, %p51
    %p54 = scmp.ne.s32.totalorder %s37, %s53
    %p55 = scmp.eq.s32.totalorder %s17, 0
    %p56 = por %p54, %p55
    %s58 = sadd.s32 %s57, 1
    %p61 = scmp.eq.s32.totalorder %s11, 1
    %p62 = scmp.ne.s32.totalorder %s57, %s59
    %p63 = scmp.eq.s32.totalorder %s11, 0
    %p64 = por %p62, %p63
    %p65 = scmp.ne.s32.totalorder %s57, %s59
    %p66 = scmp.eq.s32.totalorder %s16, 1
    %p67 = por %p65, %p66
    %p68 = scmp.ne.s32.totalorder %s59, %s60
    %p69 = scmp.eq.s32.totalorder %s16, 0
    %p70 = por %p68, %p69
    %p71 = scmp.ne.s32.totalorder %s59, %s60
    %p72 = scmp.eq.s32.totalorder %s17, 1
    %p73 = por %p71, %p72
    %p75 = scmp.ne.s32.totalorder %s60, %s74
    %p76 = scmp.eq.s32.totalorder %s17, 0
    %p77 = por %p75, %p76
    %s78 = ssub.s32 %s18, %s30
    %p79 = scmp.eq.s32.totalorder %s78, 0
    %s81 = sadd.s32 %s80, 1
    %s82 = scalar_select %p79, %s80, %s81
    %p85 = pneg %p79
    %p86 = scmp.eq.s32.totalorder %s11, 1
    %p87 = por %p85, %p86
    %p88 = scmp.ne.s32.totalorder %s80, %s83
    %p89 = scmp.eq.s32.totalorder %s11, 0
    %p90 = por %p88, %p89
    %p91 = scmp.ne.s32.totalorder %s80, %s83
    %p92 = scmp.eq.s32.totalorder %s16, 1
    %p93 = por %p91, %p92
    %p94 = scmp.ne.s32.totalorder %s83, %s84
    %p95 = scmp.eq.s32.totalorder %s16, 0
    %p96 = por %p94, %p95
    %p97 = scmp.ne.s32.totalorder %s83, %s84
    %p98 = scmp.eq.s32.totalorder %s17, 1
    %p99 = por %p97, %p98
    %p101 = scmp.ne.s32.totalorder %s84, %s100
    %p102 = scmp.eq.s32.totalorder %s17, 0
    %p103 = por %p101, %p102
    %s104 = ssub.s32 %s18, %s30
    %p105 = scmp.eq.s32.totalorder %s104, 0
    %s107 = sadd.s32 %s106, 1
    %s108 = scalar_select %p105, %s106, %s107
    %p111 = pneg %p105
    %p112 = scmp.eq.s32.totalorder %s11, 1
    %p113 = por %p111, %p112
    %p114 = scmp.ne.s32.totalorder %s106, %s109
    %p115 = scmp.eq.s32.totalorder %s11, 0
    %p116 = por %p114, %p115
    %p117 = scmp.ne.s32.totalorder %s106, %s109
    %p118 = scmp.eq.s32.totalorder %s16, 1
    %p119 = por %p117, %p118
    %p120 = scmp.ne.s32.totalorder %s109, %s110
    %p121 = scmp.eq.s32.totalorder %s16, 0
    %p122 = por %p120, %p121
    %p123 = scmp.ne.s32.totalorder %s109, %s110
    %p124 = scmp.eq.s32.totalorder %s17, 1
    %p125 = por %p123, %p124
    %p127 = scmp.ne.s32.totalorder %s110, %s126
    %p128 = scmp.eq.s32.totalorder %s17, 0
    %p129 = por %p127, %p128
    %s131 = sadd.s32 %s130, 1
    %p134 = scmp.eq.s32.totalorder %s11, 1
    %p135 = scmp.ne.s32.totalorder %s130, %s132
    %p136 = scmp.eq.s32.totalorder %s11, 0
    %p137 = por %p135, %p136
    %p138 = scmp.ne.s32.totalorder %s130, %s132
    %p139 = scmp.eq.s32.totalorder %s16, 1
    %p140 = por %p138, %p139
    %p141 = scmp.ne.s32.totalorder %s132, %s133
    %p142 = scmp.eq.s32.totalorder %s16, 0
    %p143 = por %p141, %p142
    %p144 = scmp.ne.s32.totalorder %s132, %s133
    %p145 = scmp.eq.s32.totalorder %s17, 1
    %p146 = por %p144, %p145
    %p148 = scmp.ne.s32.totalorder %s133, %s147
    %p149 = scmp.eq.s32.totalorder %s17, 0
    %p150 = por %p148, %p149
    %s151 = ssub.s32 %s18, %s30
    %s152 = ssub.s32 %s19, %s26
    %s153 = sor.u32 %s151, %s152
    %p154 = scmp.eq.s32.totalorder %s153, 0
    %s156 = sadd.s32 %s155, 1
    %s157 = scalar_select %p154, %s155, %s156
    %p160 = pneg %p154
    %p161 = scmp.eq.s32.totalorder %s11, 1
    %p162 = por %p160, %p161
    %p163 = scmp.ne.s32.totalorder %s155, %s158
    %p164 = scmp.eq.s32.totalorder %s11, 0
    %p165 = por %p163, %p164
    %p166 = scmp.ne.s32.totalorder %s155, %s158
    %p167 = scmp.eq.s32.totalorder %s16, 1
    %p168 = por %p166, %p167
    %p169 = scmp.ne.s32.totalorder %s158, %s159
    %p170 = scmp.eq.s32.totalorder %s16, 0
    %p171 = por %p169, %p170
    %p172 = scmp.ne.s32.totalorder %s158, %s159
    %p173 = scmp.eq.s32.totalorder %s17, 1
    %p174 = por %p172, %p173
    %p176 = scmp.ne.s32.totalorder %s159, %s175
    %p177 = scmp.eq.s32.totalorder %s17, 0
    %p178 = por %p176, %p177
    %p179 = scmp.le.s32.totalorder 1, %s11
    %p180 = scmp.lt.s32.totalorder %s11, 3
    %p181 = pnand %p179, %p180
    %p182 = pneg %p181
    // Predicated region
    $region9: #{forward_single.23} parent=5 // pred_check
      _
    $region10: #{forward_single.23} parent=5 // pred_check_branch
      %184 = sbr.rel (%p181) target = $region12
    $region11: #{forward_single.23} parent=5 // pred_region
      %s185 = ssub.s32 %s11, 1
      // Predicated region
      $region13: #{forward_single.23} parent=11 // pred_check
        %p186 = pneg %p70
      $region14: #{forward_single.23} parent=11 // pred_check_branch
        %188 = sbr.rel (%p186) target = $region16
      $region15: #{forward_single.23} parent=11 // pred_region
        _
      $region16: #{forward_single.23} parent=11 // pred_fallthru
        _
      // Predicated region
      $region17: #{forward_single.23} parent=11 // pred_check
        %p189 = pneg %p143
      $region18: #{forward_single.23} parent=11 // pred_check_branch
        %191 = sbr.rel (%p189) target = $region20
      $region19: #{forward_single.23} parent=11 // pred_region
        _
      $region20: #{forward_single.23} parent=11 // pred_fallthru
        _
    $region12: #{forward_single.23} parent=5 // pred_fallthru
      _
    %p192 = scmp.lt.s32.totalorder %s11, 2
    // Predicated region
    $region21: #{forward_single.23} parent=5 // pred_check
      %p193 = pneg %p192
    $region22: #{forward_single.23} parent=5 // pred_check_branch
      %195 = sbr.rel (%p193) target = $region24
    $region23: #{forward_single.23} parent=5 // pred_region
      // Predicated region
      $region25: #{forward_single.23} parent=23 // pred_check
        %p196 = pneg %p43
      $region26: #{forward_single.23} parent=23 // pred_check_branch
        %198 = sbr.rel (%p196) target = $region28
      $region27: #{forward_single.23} parent=23 // pred_region
        %p199 = scmp.lt.s32.totalorder %s18, 1
        %s200 = scalar_select %p199, %s18, 1
        %s201 = smul.addr %s200, 54
        %s202 = smul.addr %s201, 4
        %s203 = scalar_lea.vmem %s0, %s202
      $region28: #{forward_single.23} parent=23 // pred_fallthru
        _
      // Predicated region
      $region29: #{forward_single.23} parent=23 // pred_check
        %p204 = pneg %p90
      $region30: #{forward_single.23} parent=23 // pred_check_branch
        %206 = sbr.rel (%p204) target = $region32
      $region31: #{forward_single.23} parent=23 // pred_region
        %p207 = scmp.lt.s32.totalorder %s18, 1
        %s208 = scalar_select %p207, %s18, 1
        %s209 = scalar_lea.vmem %s2, %s208
      $region32: #{forward_single.23} parent=23 // pred_fallthru
        _
      // Predicated region
      $region33: #{forward_single.23} parent=23 // pred_check
        %p210 = pneg %p116
      $region34: #{forward_single.23} parent=23 // pred_check_branch
        %212 = sbr.rel (%p210) target = $region36
      $region35: #{forward_single.23} parent=23 // pred_region
        %p213 = scmp.lt.s32.totalorder %s18, 1
        %s214 = scalar_select %p213, %s18, 1
        %s215 = scalar_lea.vmem %s3, %s214
      $region36: #{forward_single.23} parent=23 // pred_fallthru
        _
    $region24: #{forward_single.23} parent=5 // pred_fallthru
      _
    %p216 = scmp.le.s32.totalorder 1, %s11
    %p217 = scmp.lt.s32.totalorder %s11, 3
    %p218 = pnand %p216, %p217
    %p219 = pneg %p218
    // Predicated region
    $region37: #{forward_single.23} parent=5 // pred_check
      _
    $region38: #{forward_single.23} parent=5 // pred_check_branch
      %221 = sbr.rel (%p218) target = $region40
    $region39: #{forward_single.23} parent=5 // pred_region
      %s222 = ssub.s32 %s11, 1
      %p223 = scmp.lt.s32.totalorder %s20, 1
      %s224 = scalar_select %p223, %s20, 1
      %s225 = smul.addr %s224, 54
      %s226 = smul.addr %s225, 4
      %s227 = scalar_lea.vmem %s0, %s226
      %p228 = pneg %p49
      %p229 = pneg %p46
      %p230 = pneg %p70
      %p231 = pneg %p67
      %p232 = scmp.lt.s32.totalorder %s20, 1
      %s233 = scalar_select %p232, %s20, 1
      %s234 = scalar_lea.vmem %s2, %s233
      %p235 = pneg %p96
      %p236 = pneg %p93
      %p237 = scmp.lt.s32.totalorder %s20, 1
      %s238 = scalar_select %p237, %s20, 1
      %s239 = scalar_lea.vmem %s3, %s238
      %p240 = pneg %p122
      %p241 = pneg %p119
      %p242 = pneg %p143
      %p243 = pneg %p140
      %p244 = pneg %p171
      %p245 = pneg %p168
      %s246 = smul.u32 32, %s21
      %p247 = scmp.lt.s32.totalorder %s20, 1
      %s248 = scalar_select %p247, %s20, 1
      %p249 = scmp.lt.s32.totalorder %s246, 31
      %s250 = scalar_select %p249, %s246, 31
      %s251 = smul.addr %s248, 32
      %s252 = sadd.s32 %s250, %s251
      %s253 = smul.addr %s252, 4
      %s254 = scalar_lea.vmem %s5, %s253
      %p255 = scmp.lt.s32.totalorder %s20, 1
      %s256 = scalar_select %p255, %s20, 1
      %s257 = smul.addr %s256, 54
      %s258 = smul.addr %s257, 4
      %s259 = scalar_lea.vmem %s0, %s258
      %p260 = scmp.lt.s32.totalorder %s20, 1
      %s261 = scalar_select %p260, %s20, 1
      %s262 = scalar_lea.vmem %s2, %s261
      %p263 = scmp.lt.s32.totalorder %s20, 1
      %s264 = scalar_select %p263, %s20, 1
      %s265 = scalar_lea.vmem %s3, %s264
      %s266 = smul.u32 32, %s21
      %p267 = scmp.lt.s32.totalorder %s20, 1
      %s268 = scalar_select %p267, %s20, 1
      %p269 = scmp.lt.s32.totalorder %s266, 31
      %s270 = scalar_select %p269, %s266, 31
      %s271 = smul.addr %s268, 32
      %s272 = sadd.s32 %s270, %s271
      %s273 = smul.addr %s272, 4
      %s274 = scalar_lea.vmem %s5, %s273
      %s275 = smul.u32 32, %s21
      %s277 = smul.u32 %s21, 16
      %s278 = smul.u32 %s277, 3
      %s279 = smul.addr %s278, 4
      %s280 = scalar_lea.vmem %s259, %s279
      %v281 = vld [vmem:[%s280] sm:$0xf]
      %v282 = vld [vmem:[%s280 + $0x4] sm:$0xf]
      %v283 = vld [vmem:[%s280 + $0x8] sm:$0x1]
      %v284 = vld [vmem:[%s280 + $0xc] sm:$0xf]
      %v285 = vld [vmem:[%s280 + $0x10] sm:$0xf]
      %v286 = vld [vmem:[%s280 + $0x14] sm:$0x1]
      %v287 = vld [vmem:[%s280 + $0x18] sm:$0xf]
      %v288 = vld [vmem:[%s280 + $0x1c] sm:$0xf]
      %v289 = vld [vmem:[%s280 + $0x20] sm:$0x1]
      %v290 = vld [vmem:[%s280 + $0x24] sm:$0xf]
      %v291 = vld [vmem:[%s280 + $0x28] sm:$0xf]
      %v292 = vld [vmem:[%s280 + $0x2c] sm:$0x1]
      %v293 = vld [vmem:[%s280 + $0x30] sm:$0xf]
      %v294 = vld [vmem:[%s280 + $0x34] sm:$0xf]
      %v295 = vld [vmem:[%s280 + $0x38] sm:$0x1]
      %v296 = vld [vmem:[%s280 + $0x3c] sm:$0xf]
      %v297 = vld [vmem:[%s280 + $0x40] sm:$0xf]
      %v298 = vld [vmem:[%s280 + $0x44] sm:$0x1]
      %v299 = vld [vmem:[%s280 + $0x48] sm:$0xf]
      %v300 = vld [vmem:[%s280 + $0x4c] sm:$0xf]
      %v301 = vld [vmem:[%s280 + $0x50] sm:$0x1]
      %v302 = vld [vmem:[%s280 + $0x54] sm:$0xf]
      %v303 = vld [vmem:[%s280 + $0x58] sm:$0xf]
      %v304 = vld [vmem:[%s280 + $0x5c] sm:$0x1]
      %v305 = vld [vmem:[%s280 + $0x60] sm:$0xf]
      %v306 = vld [vmem:[%s280 + $0x64] sm:$0xf]
      %v307 = vld [vmem:[%s280 + $0x68] sm:$0x1]
      %v308 = vld [vmem:[%s280 + $0x6c] sm:$0xf]
      %v309 = vld [vmem:[%s280 + $0x70] sm:$0xf]
      %v310 = vld [vmem:[%s280 + $0x74] sm:$0x1]
      %v311 = vld [vmem:[%s280 + $0x78] sm:$0xf]
      %v312 = vld [vmem:[%s280 + $0x7c] sm:$0xf]
      %v313 = vld [vmem:[%s280 + $0x80] sm:$0x1]
      %v314 = vld [vmem:[%s280 + $0x84] sm:$0xf]
      %v315 = vld [vmem:[%s280 + $0x88] sm:$0xf]
      %v316 = vld [vmem:[%s280 + $0x8c] sm:$0x1]
      %v317 = vld [vmem:[%s280 + $0x90] sm:$0xf]
      %v318 = vld [vmem:[%s280 + $0x94] sm:$0xf]
      %v319 = vld [vmem:[%s280 + $0x98] sm:$0x1]
      %v320 = vld [vmem:[%s280 + $0x9c] sm:$0xf]
      %v321 = vld [vmem:[%s280 + $0xa0] sm:$0xf]
      %v322 = vld [vmem:[%s280 + $0xa4] sm:$0x1]
      %v323 = vld [vmem:[%s280 + $0xa8] sm:$0xf]
      %v324 = vld [vmem:[%s280 + $0xac] sm:$0xf]
      %v325 = vld [vmem:[%s280 + $0xb0] sm:$0x1]
      %v326 = vld [vmem:[%s280 + $0xb4] sm:$0xf]
      %v327 = vld [vmem:[%s280 + $0xb8] sm:$0xf]
      %v328 = vld [vmem:[%s280 + $0xbc] sm:$0x1]
      %v329 = vld [vmem:[%s280 + $0xc0] sm:$0xf]
      %v330 = vld [vmem:[%s280 + $0xc4] sm:$0xf]
      %v331 = vld [vmem:[%s280 + $0xc8] sm:$0x1]
      %v332 = vld [vmem:[%s280 + $0xcc] sm:$0xf]
      %v333 = vld [vmem:[%s280 + $0xd0] sm:$0xf]
      %v334 = vld [vmem:[%s280 + $0xd4] sm:$0x1]
      %v335 = vunpack.c.l.bf16 %v281
      %v336 = vunpack.c.l.bf16 %v282
      %v337 = vunpack.c.l.bf16 %v283
      %v338 = vunpack.c.l.bf16 %v284
      %v339 = vunpack.c.l.bf16 %v285
      %v340 = vunpack.c.l.bf16 %v286
      %v341 = vunpack.c.l.bf16 %v287
      %v342 = vunpack.c.l.bf16 %v288
      %v343 = vunpack.c.l.bf16 %v289
      %v344 = vunpack.c.l.bf16 %v290
      %v345 = vunpack.c.l.bf16 %v291
      %v346 = vunpack.c.l.bf16 %v292
      %v347 = vunpack.c.l.bf16 %v293
      %v348 = vunpack.c.l.bf16 %v294
      %v349 = vunpack.c.l.bf16 %v295
      %v350 = vunpack.c.l.bf16 %v296
      %v351 = vunpack.c.l.bf16 %v297
      %v352 = vunpack.c.l.bf16 %v298
      %v353 = vunpack.c.l.bf16 %v299
      %v354 = vunpack.c.l.bf16 %v300
      %v355 = vunpack.c.l.bf16 %v301
      %v356 = vunpack.c.l.bf16 %v302
      %v357 = vunpack.c.l.bf16 %v303
      %v358 = vunpack.c.l.bf16 %v304
      %v359 = vunpack.c.l.bf16 %v305
      %v360 = vunpack.c.l.bf16 %v306
      %v361 = vunpack.c.l.bf16 %v307
      %v362 = vunpack.c.l.bf16 %v308
      %v363 = vunpack.c.l.bf16 %v309
      %v364 = vunpack.c.l.bf16 %v310
      %v365 = vunpack.c.l.bf16 %v311
      %v366 = vunpack.c.l.bf16 %v312
      %v367 = vunpack.c.l.bf16 %v313
      %v368 = vunpack.c.l.bf16 %v314
      %v369 = vunpack.c.l.bf16 %v315
      %v370 = vunpack.c.l.bf16 %v316
      %v371 = vunpack.c.l.bf16 %v317
      %v372 = vunpack.c.l.bf16 %v318
      %v373 = vunpack.c.l.bf16 %v319
      %v374 = vunpack.c.l.bf16 %v320
      %v375 = vunpack.c.l.bf16 %v321
      %v376 = vunpack.c.l.bf16 %v322
      %v377 = vunpack.c.l.bf16 %v323
      %v378 = vunpack.c.l.bf16 %v324
      %v379 = vunpack.c.l.bf16 %v325
      %v380 = vunpack.c.l.bf16 %v326
      %v381 = vunpack.c.l.bf16 %v327
      %v382 = vunpack.c.l.bf16 %v328
      %v383 = vunpack.c.l.bf16 %v329
      %v384 = vunpack.c.l.bf16 %v330
      %v385 = vunpack.c.l.bf16 %v331
      %v386 = vunpack.c.l.bf16 %v332
      %v387 = vunpack.c.l.bf16 %v333
      %v388 = vunpack.c.l.bf16 %v334
      %v389 = vld [vmem:[%s262] sm:$0x1]
      %v391 = vperm.slane %v389, 0
      %v393 = vmul.f32 %v335, %v391
      %v394 = vmul.f32 %v336, %v391
      %v395 = vmul.f32 %v337, %v391
      %v396 = vmul.f32 %v338, %v391
      %v397 = vmul.f32 %v339, %v391
      %v398 = vmul.f32 %v340, %v391
      %v399 = vmul.f32 %v341, %v391
      %v400 = vmul.f32 %v342, %v391
      %v401 = vmul.f32 %v343, %v391
      %v402 = vmul.f32 %v344, %v391
      %v403 = vmul.f32 %v345, %v391
      %v404 = vmul.f32 %v346, %v391
      %v405 = vmul.f32 %v347, %v391
      %v406 = vmul.f32 %v348, %v391
      %v407 = vmul.f32 %v349, %v391
      %v408 = vmul.f32 %v350, %v391
      %v409 = vmul.f32 %v351, %v391
      %v410 = vmul.f32 %v352, %v391
      %v411 = vmul.f32 %v353, %v391
      %v412 = vmul.f32 %v354, %v391
      %v413 = vmul.f32 %v355, %v391
      %v414 = vmul.f32 %v356, %v391
      %v415 = vmul.f32 %v357, %v391
      %v416 = vmul.f32 %v358, %v391
      %v417 = vmul.f32 %v359, %v391
      %v418 = vmul.f32 %v360, %v391
      %v419 = vmul.f32 %v361, %v391
      %v420 = vmul.f32 %v362, %v391
      %v421 = vmul.f32 %v363, %v391
      %v422 = vmul.f32 %v364, %v391
      %v423 = vmul.f32 %v365, %v391
      %v424 = vmul.f32 %v366, %v391
      %v425 = vmul.f32 %v367, %v391
      %v426 = vmul.f32 %v368, %v391
      %v427 = vmul.f32 %v369, %v391
      %v428 = vmul.f32 %v370, %v391
      %v429 = vmul.f32 %v371, %v391
      %v430 = vmul.f32 %v372, %v391
      %v431 = vmul.f32 %v373, %v391
      %v432 = vmul.f32 %v374, %v391
      %v433 = vmul.f32 %v375, %v391
      %v434 = vmul.f32 %v376, %v391
      %v435 = vmul.f32 %v377, %v391
      %v436 = vmul.f32 %v378, %v391
      %v437 = vmul.f32 %v379, %v391
      %v438 = vmul.f32 %v380, %v391
      %v439 = vmul.f32 %v381, %v391
      %v440 = vmul.f32 %v382, %v391
      %v441 = vmul.f32 %v383, %v391
      %v442 = vmul.f32 %v384, %v391
      %v443 = vmul.f32 %v385, %v391
      %v444 = vmul.f32 %v386, %v391
      %v445 = vmul.f32 %v387, %v391
      %v446 = vmul.f32 %v388, %v391
      %v447 = vld [vmem:[%s265] sm:$0x1]
      %v449 = vperm.slane %v447, 0
      %v451 = vadd.f32 %v393, %v449
      %v452 = vadd.f32 %v394, %v449
      %v453 = vadd.f32 %v395, %v449
      %v454 = vadd.f32 %v396, %v449
      %v455 = vadd.f32 %v397, %v449
      %v456 = vadd.f32 %v398, %v449
      %v457 = vadd.f32 %v399, %v449
      %v458 = vadd.f32 %v400, %v449
      %v459 = vadd.f32 %v401, %v449
      %v460 = vadd.f32 %v402, %v449
      %v461 = vadd.f32 %v403, %v449
      %v462 = vadd.f32 %v404, %v449
      %v463 = vadd.f32 %v405, %v449
      %v464 = vadd.f32 %v406, %v449
      %v465 = vadd.f32 %v407, %v449
      %v466 = vadd.f32 %v408, %v449
      %v467 = vadd.f32 %v409, %v449
      %v468 = vadd.f32 %v410, %v449
      %v469 = vadd.f32 %v411, %v449
      %v470 = vadd.f32 %v412, %v449
      %v471 = vadd.f32 %v413, %v449
      %v472 = vadd.f32 %v414, %v449
      %v473 = vadd.f32 %v415, %v449
      %v474 = vadd.f32 %v416, %v449
      %v475 = vadd.f32 %v417, %v449
      %v476 = vadd.f32 %v418, %v449
      %v477 = vadd.f32 %v419, %v449
      %v478 = vadd.f32 %v420, %v449
      %v479 = vadd.f32 %v421, %v449
      %v480 = vadd.f32 %v422, %v449
      %v481 = vadd.f32 %v423, %v449
      %v482 = vadd.f32 %v424, %v449
      %v483 = vadd.f32 %v425, %v449
      %v484 = vadd.f32 %v426, %v449
      %v485 = vadd.f32 %v427, %v449
      %v486 = vadd.f32 %v428, %v449
      %v487 = vadd.f32 %v429, %v449
      %v488 = vadd.f32 %v430, %v449
      %v489 = vadd.f32 %v431, %v449
      %v490 = vadd.f32 %v432, %v449
      %v491 = vadd.f32 %v433, %v449
      %v492 = vadd.f32 %v434, %v449
      %v493 = vadd.f32 %v435, %v449
      %v494 = vadd.f32 %v436, %v449
      %v495 = vadd.f32 %v437, %v449
      %v496 = vadd.f32 %v438, %v449
      %v497 = vadd.f32 %v439, %v449
      %v498 = vadd.f32 %v440, %v449
      %v499 = vadd.f32 %v441, %v449
      %v500 = vadd.f32 %v442, %v449
      %v501 = vadd.f32 %v443, %v449
      %v502 = vadd.f32 %v444, %v449
      %v503 = vadd.f32 %v445, %v449
      %v504 = vadd.f32 %v446, %v449
      %v505 = vmax.f32 %v451, 0.0
      %v506 = vmax.f32 %v452, 0.0
      %v507 = vmax.f32 %v453, 0.0
      %v508 = vmax.f32 %v454, 0.0
      %v509 = vmax.f32 %v455, 0.0
      %v510 = vmax.f32 %v456, 0.0
      %v511 = vmax.f32 %v457, 0.0
      %v512 = vmax.f32 %v458, 0.0
      %v513 = vmax.f32 %v459, 0.0
      %v514 = vmax.f32 %v460, 0.0
      %v515 = vmax.f32 %v461, 0.0
      %v516 = vmax.f32 %v462, 0.0
      %v517 = vmax.f32 %v463, 0.0
      %v518 = vmax.f32 %v464, 0.0
      %v519 = vmax.f32 %v465, 0.0
      %v520 = vmax.f32 %v466, 0.0
      %v521 = vmax.f32 %v467, 0.0
      %v522 = vmax.f32 %v468, 0.0
      %v523 = vmax.f32 %v469, 0.0
      %v524 = vmax.f32 %v470, 0.0
      %v525 = vmax.f32 %v471, 0.0
      %v526 = vmax.f32 %v472, 0.0
      %v527 = vmax.f32 %v473, 0.0
      %v528 = vmax.f32 %v474, 0.0
      %v529 = vmax.f32 %v475, 0.0
      %v530 = vmax.f32 %v476, 0.0
      %v531 = vmax.f32 %v477, 0.0
      %v532 = vmax.f32 %v478, 0.0
      %v533 = vmax.f32 %v479, 0.0
      %v534 = vmax.f32 %v480, 0.0
      %v535 = vmax.f32 %v481, 0.0
      %v536 = vmax.f32 %v482, 0.0
      %v537 = vmax.f32 %v483, 0.0
      %v538 = vmax.f32 %v484, 0.0
      %v539 = vmax.f32 %v485, 0.0
      %v540 = vmax.f32 %v486, 0.0
      %v541 = vmax.f32 %v487, 0.0
      %v542 = vmax.f32 %v488, 0.0
      %v543 = vmax.f32 %v489, 0.0
      %v544 = vmax.f32 %v490, 0.0
      %v545 = vmax.f32 %v491, 0.0
      %v546 = vmax.f32 %v492, 0.0
      %v547 = vmax.f32 %v493, 0.0
      %v548 = vmax.f32 %v494, 0.0
      %v549 = vmax.f32 %v495, 0.0
      %v550 = vmax.f32 %v496, 0.0
      %v551 = vmax.f32 %v497, 0.0
      %v552 = vmax.f32 %v498, 0.0
      %v553 = vmax.f32 %v499, 0.0
      %v554 = vmax.f32 %v500, 0.0
      %v555 = vmax.f32 %v501, 0.0
      %v556 = vmax.f32 %v502, 0.0
      %v557 = vmax.f32 %v503, 0.0
      %v558 = vmax.f32 %v504, 0.0
      %vm559 = vcmask 1040384
      %v560 = vsel %vm559, 0.0, %v505
      %v561 = vsel %vm559, 0.0, %v508
      %v562 = vsel %vm559, 0.0, %v511
      %v563 = vsel %vm559, 0.0, %v514
      %v564 = vsel %vm559, 0.0, %v517
      %v565 = vsel %vm559, 0.0, %v520
      %v566 = vsel %vm559, 0.0, %v523
      %v567 = vsel %vm559, 0.0, %v526
      %v568 = vsel %vm559, 0.0, %v529
      %v569 = vsel %vm559, 0.0, %v532
      %v570 = vsel %vm559, 0.0, %v535
      %v571 = vsel %vm559, 0.0, %v538
      %v572 = vsel %vm559, 0.0, %v541
      %v573 = vsel %vm559, 0.0, %v544
      %v574 = vsel %vm559, 0.0, %v547
      %v575 = vsel %vm559, 0.0, %v550
      %v576 = vsel %vm559, 0.0, %v553
      %v577 = vsel %vm559, 0.0, %v556
      %v578 = vsel %vm559, %v507, 0.0
      %v579 = vsel %vm559, %v510, 0.0
      %v580 = vsel %vm559, %v513, 0.0
      %v581 = vsel %vm559, %v516, 0.0
      %v582 = vsel %vm559, %v519, 0.0
      %v583 = vsel %vm559, %v522, 0.0
      %v584 = vsel %vm559, %v525, 0.0
      %v585 = vsel %vm559, %v528, 0.0
      %v586 = vsel %vm559, %v531, 0.0
      %v587 = vsel %vm559, %v534, 0.0
      %v588 = vsel %vm559, %v537, 0.0
      %v589 = vsel %vm559, %v540, 0.0
      %v590 = vsel %vm559, %v543, 0.0
      %v591 = vsel %vm559, %v546, 0.0
      %v592 = vsel %vm559, %v549, 0.0
      %v593 = vsel %vm559, %v552, 0.0
      %v594 = vsel %vm559, %v555, 0.0
      %v595 = vsel %vm559, %v558, 0.0
      %p596 = scmp.gt.s32.totalorder %s21, 0
      %s597 = scalar_select %p596, 1, 0
      %s598 = scvt.s32.f32 %s597
      %p599 = scmp.lt.s32.totalorder %s21, 0
      %s600 = scalar_select %p599, 1, 0
      %s601 = scvt.s32.f32 %s600
      %v602 = vstv %s598
      %v603 = vmul.f32 %v560, %v602
      %v604 = vmul.f32 %v506, %v602
      %v605 = vmul.f32 %v578, %v602
      %v606 = vstv %s601
      %v607 = vmul.f32 %v577, %v606
      %v608 = vmul.f32 %v557, %v606
      %v609 = vmul.f32 %v595, %v606
      %v610 = vpack.c.bf16 %v603, %v603
      %v611 = vpack.c.bf16 %v604, %v604
      %v612 = vpack.c.bf16 %v605, %v605
      %v613 = vpack.c.bf16 %v561, %v561
      %v614 = vpack.c.bf16 %v509, %v509
      %v615 = vpack.c.bf16 %v579, %v579
      %v616 = vpack.c.bf16 %v562, %v562
      %v617 = vpack.c.bf16 %v512, %v512
      %v618 = vpack.c.bf16 %v580, %v580
      %v619 = vpack.c.bf16 %v563, %v563
      %v620 = vpack.c.bf16 %v515, %v515
      %v621 = vpack.c.bf16 %v581, %v581
      %v622 = vpack.c.bf16 %v564, %v564
      %v623 = vpack.c.bf16 %v518, %v518
      %v624 = vpack.c.bf16 %v582, %v582
      %v625 = vpack.c.bf16 %v565, %v565
      %v626 = vpack.c.bf16 %v521, %v521
      %v627 = vpack.c.bf16 %v583, %v583
      %v628 = vpack.c.bf16 %v566, %v566
      %v629 = vpack.c.bf16 %v524, %v524
      %v630 = vpack.c.bf16 %v584, %v584
      %v631 = vpack.c.bf16 %v567, %v567
      %v632 = vpack.c.bf16 %v527, %v527
      %v633 = vpack.c.bf16 %v585, %v585
      %v634 = vpack.c.bf16 %v568, %v568
      %v635 = vpack.c.bf16 %v530, %v530
      %v636 = vpack.c.bf16 %v586, %v586
      %v637 = vpack.c.bf16 %v569, %v569
      %v638 = vpack.c.bf16 %v533, %v533
      %v639 = vpack.c.bf16 %v587, %v587
      %v640 = vpack.c.bf16 %v570, %v570
      %v641 = vpack.c.bf16 %v536, %v536
      %v642 = vpack.c.bf16 %v588, %v588
      %v643 = vpack.c.bf16 %v571, %v571
      %v644 = vpack.c.bf16 %v539, %v539
      %v645 = vpack.c.bf16 %v589, %v589
      %v646 = vpack.c.bf16 %v572, %v572
      %v647 = vpack.c.bf16 %v542, %v542
      %v648 = vpack.c.bf16 %v590, %v590
      %v649 = vpack.c.bf16 %v573, %v573
      %v650 = vpack.c.bf16 %v545, %v545
      %v651 = vpack.c.bf16 %v591, %v591
      %v652 = vpack.c.bf16 %v574, %v574
      %v653 = vpack.c.bf16 %v548, %v548
      %v654 = vpack.c.bf16 %v592, %v592
      %v655 = vpack.c.bf16 %v575, %v575
      %v656 = vpack.c.bf16 %v551, %v551
      %v657 = vpack.c.bf16 %v593, %v593
      %v658 = vpack.c.bf16 %v576, %v576
      %v659 = vpack.c.bf16 %v554, %v554
      %v660 = vpack.c.bf16 %v594, %v594
      %v661 = vpack.c.bf16 %v607, %v607
      %v662 = vpack.c.bf16 %v608, %v608
      %v663 = vpack.c.bf16 %v609, %v609
      %v696 = vunpack.c.l.b16 %v610
      %v697 = vunpack.c.l.b16 %v611
      %v698 = vunpack.c.l.b16 %v613
      %v699 = vunpack.c.l.b16 %v614
      %v700 = vunpack.c.l.b16 %v616
      %v701 = vunpack.c.l.b16 %v617
      %v702 = vunpack.c.l.b16 %v619
      %v703 = vunpack.c.l.b16 %v620
      %v704 = vunpack.c.l.b16 %v622
      %v705 = vunpack.c.l.b16 %v623
      %v706 = vunpack.c.l.b16 %v625
      %v707 = vunpack.c.l.b16 %v626
      %v708 = vunpack.c.l.b16 %v628
      %v709 = vunpack.c.l.b16 %v629
      %v710 = vunpack.c.l.b16 %v631
      %v711 = vunpack.c.l.b16 %v632
      %v712 = vunpack.c.l.b16 %v634
      %v713 = vunpack.c.l.b16 %v635
      %v714 = vunpack.c.l.b16 %v637
      %v715 = vunpack.c.l.b16 %v638
      %v716 = vunpack.c.l.b16 %v640
      %v717 = vunpack.c.l.b16 %v641
      %v718 = vunpack.c.l.b16 %v643
      %v719 = vunpack.c.l.b16 %v644
      %v720 = vunpack.c.l.b16 %v646
      %v721 = vunpack.c.l.b16 %v647
      %v722 = vunpack.c.l.b16 %v649
      %v723 = vunpack.c.l.b16 %v650
      %v724 = vunpack.c.l.b16 %v652
      %v725 = vunpack.c.l.b16 %v653
      %v726 = vunpack.c.l.b16 %v655
      %v727 = vunpack.c.l.b16 %v656
      %v728 = vpack.c.b16 %v697, %v696
      %v729 = vpack.c.b16 %v699, %v698
      %v730 = vpack.c.b16 %v701, %v700
      %v731 = vpack.c.b16 %v703, %v702
      %v732 = vpack.c.b16 %v705, %v704
      %v733 = vpack.c.b16 %v707, %v706
      %v734 = vpack.c.b16 %v709, %v708
      %v735 = vpack.c.b16 %v711, %v710
      %v736 = vpack.c.b16 %v713, %v712
      %v737 = vpack.c.b16 %v715, %v714
      %v738 = vpack.c.b16 %v717, %v716
      %v739 = vpack.c.b16 %v719, %v718
      %v740 = vpack.c.b16 %v721, %v720
      %v741 = vpack.c.b16 %v723, %v722
      %v742 = vpack.c.b16 %v725, %v724
      %v743 = vpack.c.b16 %v727, %v726
      %v760 = vunpack.c.l.b16 %v612
      %v761 = vunpack.c.l.b16 %v615
      %v762 = vunpack.c.l.b16 %v618
      %v763 = vunpack.c.l.b16 %v621
      %v764 = vunpack.c.l.b16 %v624
      %v765 = vunpack.c.l.b16 %v627
      %v766 = vunpack.c.l.b16 %v630
      %v767 = vunpack.c.l.b16 %v633
      %v768 = vunpack.c.l.b16 %v636
      %v769 = vunpack.c.l.b16 %v639
      %v770 = vunpack.c.l.b16 %v642
      %v771 = vunpack.c.l.b16 %v645
      %v772 = vunpack.c.l.b16 %v648
      %v773 = vunpack.c.l.b16 %v651
      %v774 = vunpack.c.l.b16 %v654
      %v775 = vunpack.c.l.b16 %v657
      %v776 = vpack.c.b16 %v760, %v760
      %v777 = vpack.c.b16 %v761, %v761
      %v778 = vpack.c.b16 %v762, %v762
      %v779 = vpack.c.b16 %v763, %v763
      %v780 = vpack.c.b16 %v764, %v764
      %v781 = vpack.c.b16 %v765, %v765
      %v782 = vpack.c.b16 %v766, %v766
      %v783 = vpack.c.b16 %v767, %v767
      %v784 = vpack.c.b16 %v768, %v768
      %v785 = vpack.c.b16 %v769, %v769
      %v786 = vpack.c.b16 %v770, %v770
      %v787 = vpack.c.b16 %v771, %v771
      %v788 = vpack.c.b16 %v772, %v772
      %v789 = vpack.c.b16 %v773, %v773
      %v790 = vpack.c.b16 %v774, %v774
      %v791 = vpack.c.b16 %v775, %v775
      %vm792 = vsmask.f32 7424
      %v794 = vshrl.u32 %v728, 16
      %v796 = vshll.u32 %v728, 16
      %v798 = vrot.slane %v796, 1
      %v799 = vor.u32 %v794, %v798
      %v801 = vshll.u32 %v776, 16
      %v803 = vrot.slane %v801, 1
      %v804 = vsel %vm792, %v799, %v803
      %v806 = vshrl.u32 %v729, 16
      %v808 = vshll.u32 %v729, 16
      %v810 = vrot.slane %v808, 1
      %v811 = vor.u32 %v806, %v810
      %v813 = vshll.u32 %v777, 16
      %v815 = vrot.slane %v813, 1
      %v816 = vsel %vm792, %v811, %v815
      %v818 = vshrl.u32 %v730, 16
      %v820 = vshll.u32 %v730, 16
      %v822 = vrot.slane %v820, 1
      %v823 = vor.u32 %v818, %v822
      %v825 = vshll.u32 %v778, 16
      %v827 = vrot.slane %v825, 1
      %v828 = vsel %vm792, %v823, %v827
      %v830 = vshrl.u32 %v731, 16
      %v832 = vshll.u32 %v731, 16
      %v834 = vrot.slane %v832, 1
      %v835 = vor.u32 %v830, %v834
      %v837 = vshll.u32 %v779, 16
      %v839 = vrot.slane %v837, 1
      %v840 = vsel %vm792, %v835, %v839
      %v842 = vshrl.u32 %v732, 16
      %v844 = vshll.u32 %v732, 16
      %v846 = vrot.slane %v844, 1
      %v847 = vor.u32 %v842, %v846
      %v849 = vshll.u32 %v780, 16
      %v851 = vrot.slane %v849, 1
      %v852 = vsel %vm792, %v847, %v851
      %v854 = vshrl.u32 %v733, 16
      %v856 = vshll.u32 %v733, 16
      %v858 = vrot.slane %v856, 1
      %v859 = vor.u32 %v854, %v858
      %v861 = vshll.u32 %v781, 16
      %v863 = vrot.slane %v861, 1
      %v864 = vsel %vm792, %v859, %v863
      %v866 = vshrl.u32 %v734, 16
      %v868 = vshll.u32 %v734, 16
      %v870 = vrot.slane %v868, 1
      %v871 = vor.u32 %v866, %v870
      %v873 = vshll.u32 %v782, 16
      %v875 = vrot.slane %v873, 1
      %v876 = vsel %vm792, %v871, %v875
      %v878 = vshrl.u32 %v735, 16
      %v880 = vshll.u32 %v735, 16
      %v882 = vrot.slane %v880, 1
      %v883 = vor.u32 %v878, %v882
      %v885 = vshll.u32 %v783, 16
      %v887 = vrot.slane %v885, 1
      %v888 = vsel %vm792, %v883, %v887
      %v890 = vshrl.u32 %v736, 16
      %v892 = vshll.u32 %v736, 16
      %v894 = vrot.slane %v892, 1
      %v895 = vor.u32 %v890, %v894
      %v897 = vshll.u32 %v784, 16
      %v899 = vrot.slane %v897, 1
      %v900 = vsel %vm792, %v895, %v899
      %v902 = vshrl.u32 %v737, 16
      %v904 = vshll.u32 %v737, 16
      %v906 = vrot.slane %v904, 1
      %v907 = vor.u32 %v902, %v906
      %v909 = vshll.u32 %v785, 16
      %v911 = vrot.slane %v909, 1
      %v912 = vsel %vm792, %v907, %v911
      %v914 = vshrl.u32 %v738, 16
      %v916 = vshll.u32 %v738, 16
      %v918 = vrot.slane %v916, 1
      %v919 = vor.u32 %v914, %v918
      %v921 = vshll.u32 %v786, 16
      %v923 = vrot.slane %v921, 1
      %v924 = vsel %vm792, %v919, %v923
      %v926 = vshrl.u32 %v739, 16
      %v928 = vshll.u32 %v739, 16
      %v930 = vrot.slane %v928, 1
      %v931 = vor.u32 %v926, %v930
      %v933 = vshll.u32 %v787, 16
      %v935 = vrot.slane %v933, 1
      %v936 = vsel %vm792, %v931, %v935
      %v938 = vshrl.u32 %v740, 16
      %v940 = vshll.u32 %v740, 16
      %v942 = vrot.slane %v940, 1
      %v943 = vor.u32 %v938, %v942
      %v945 = vshll.u32 %v788, 16
      %v947 = vrot.slane %v945, 1
      %v948 = vsel %vm792, %v943, %v947
      %v950 = vshrl.u32 %v741, 16
      %v952 = vshll.u32 %v741, 16
      %v954 = vrot.slane %v952, 1
      %v955 = vor.u32 %v950, %v954
      %v957 = vshll.u32 %v789, 16
      %v959 = vrot.slane %v957, 1
      %v960 = vsel %vm792, %v955, %v959
      %v962 = vshrl.u32 %v742, 16
      %v964 = vshll.u32 %v742, 16
      %v966 = vrot.slane %v964, 1
      %v967 = vor.u32 %v962, %v966
      %v969 = vshll.u32 %v790, 16
      %v971 = vrot.slane %v969, 1
      %v972 = vsel %vm792, %v967, %v971
      %v974 = vshrl.u32 %v743, 16
      %v976 = vshll.u32 %v743, 16
      %v978 = vrot.slane %v976, 1
      %v979 = vor.u32 %v974, %v978
      %v981 = vshll.u32 %v791, 16
      %v983 = vrot.slane %v981, 1
      %v984 = vsel %vm792, %v979, %v983
      %985 = vrot.lane.b32.xlu0 %v804, 32
      %v986 = vpop.permute.xlu0 %985
      %987 = vrot.lane.b32.xlu0 %v816, 32
      %v988 = vpop.permute.xlu0 %987
      %989 = vrot.lane.b32.xlu0 %v828, 32
      %v990 = vpop.permute.xlu0 %989
      %991 = vrot.lane.b32.xlu0 %v840, 32
      %v992 = vpop.permute.xlu0 %991
      %993 = vrot.lane.b32.xlu0 %v852, 32
      %v994 = vpop.permute.xlu0 %993
      %995 = vrot.lane.b32.xlu0 %v864, 32
      %v996 = vpop.permute.xlu0 %995
      %997 = vrot.lane.b32.xlu0 %v876, 32
      %v998 = vpop.permute.xlu0 %997
      %999 = vrot.lane.b32.xlu0 %v888, 32
      %v1000 = vpop.permute.xlu0 %999
      %1001 = vrot.lane.b32.xlu0 %v900, 32
      %v1002 = vpop.permute.xlu0 %1001
      %1003 = vrot.lane.b32.xlu0 %v912, 32
      %v1004 = vpop.permute.xlu0 %1003
      %1005 = vrot.lane.b32.xlu0 %v924, 32
      %v1006 = vpop.permute.xlu0 %1005
      %1007 = vrot.lane.b32.xlu0 %v936, 32
      %v1008 = vpop.permute.xlu0 %1007
      %1009 = vrot.lane.b32.xlu0 %v948, 32
      %v1010 = vpop.permute.xlu0 %1009
      %1011 = vrot.lane.b32.xlu0 %v960, 32
      %v1012 = vpop.permute.xlu0 %1011
      %1013 = vrot.lane.b32.xlu0 %v972, 32
      %v1014 = vpop.permute.xlu0 %1013
      %1015 = vrot.lane.b32.xlu0 %v984, 32
      %v1016 = vpop.permute.xlu0 %1015
      %vm1017 = vcmask 1046528
      %v1018 = vrot.slane %v728, 1
      %v1019 = vrot.slane %v776, 1
      %v1020 = vsel %vm1017, %v1018, %v1019
      %v1021 = vrot.slane %v729, 1
      %v1022 = vrot.slane %v777, 1
      %v1023 = vsel %vm1017, %v1021, %v1022
      %v1024 = vrot.slane %v730, 1
      %v1025 = vrot.slane %v778, 1
      %v1026 = vsel %vm1017, %v1024, %v1025
      %v1027 = vrot.slane %v731, 1
      %v1028 = vrot.slane %v779, 1
      %v1029 = vsel %vm1017, %v1027, %v1028
      %v1030 = vrot.slane %v732, 1
      %v1031 = vrot.slane %v780, 1
      %v1032 = vsel %vm1017, %v1030, %v1031
      %v1033 = vrot.slane %v733, 1
      %v1034 = vrot.slane %v781, 1
      %v1035 = vsel %vm1017, %v1033, %v1034
      %v1036 = vrot.slane %v734, 1
      %v1037 = vrot.slane %v782, 1
      %v1038 = vsel %vm1017, %v1036, %v1037
      %v1039 = vrot.slane %v735, 1
      %v1040 = vrot.slane %v783, 1
      %v1041 = vsel %vm1017, %v1039, %v1040
      %v1042 = vrot.slane %v736, 1
      %v1043 = vrot.slane %v784, 1
      %v1044 = vsel %vm1017, %v1042, %v1043
      %v1045 = vrot.slane %v737, 1
      %v1046 = vrot.slane %v785, 1
      %v1047 = vsel %vm1017, %v1045, %v1046
      %v1048 = vrot.slane %v738, 1
      %v1049 = vrot.slane %v786, 1
      %v1050 = vsel %vm1017, %v1048, %v1049
      %v1051 = vrot.slane %v739, 1
      %v1052 = vrot.slane %v787, 1
      %v1053 = vsel %vm1017, %v1051, %v1052
      %v1054 = vrot.slane %v740, 1
      %v1055 = vrot.slane %v788, 1
      %v1056 = vsel %vm1017, %v1054, %v1055
      %v1057 = vrot.slane %v741, 1
      %v1058 = vrot.slane %v789, 1
      %v1059 = vsel %vm1017, %v1057, %v1058
      %v1060 = vrot.slane %v742, 1
      %v1061 = vrot.slane %v790, 1
      %v1062 = vsel %vm1017, %v1060, %v1061
      %v1063 = vrot.slane %v743, 1
      %v1064 = vrot.slane %v791, 1
      %v1065 = vsel %vm1017, %v1063, %v1064
      %1066 = vrot.lane.b32.xlu0 %v1020, 64
      %v1067 = vpop.permute.xlu0 %1066
      %1068 = vrot.lane.b32.xlu0 %v1023, 64
      %v1069 = vpop.permute.xlu0 %1068
      %1070 = vrot.lane.b32.xlu0 %v1026, 64
      %v1071 = vpop.permute.xlu0 %1070
      %1072 = vrot.lane.b32.xlu0 %v1029, 64
      %v1073 = vpop.permute.xlu0 %1072
      %1074 = vrot.lane.b32.xlu0 %v1032, 64
      %v1075 = vpop.permute.xlu0 %1074
      %1076 = vrot.lane.b32.xlu0 %v1035, 64
      %v1077 = vpop.permute.xlu0 %1076
      %1078 = vrot.lane.b32.xlu0 %v1038, 64
      %v1079 = vpop.permute.xlu0 %1078
      %1080 = vrot.lane.b32.xlu0 %v1041, 64
      %v1081 = vpop.permute.xlu0 %1080
      %1082 = vrot.lane.b32.xlu0 %v1044, 64
      %v1083 = vpop.permute.xlu0 %1082
      %1084 = vrot.lane.b32.xlu0 %v1047, 64
      %v1085 = vpop.permute.xlu0 %1084
      %1086 = vrot.lane.b32.xlu0 %v1050, 64
      %v1087 = vpop.permute.xlu0 %1086
      %1088 = vrot.lane.b32.xlu0 %v1053, 64
      %v1089 = vpop.permute.xlu0 %1088
      %1090 = vrot.lane.b32.xlu0 %v1056, 64
      %v1091 = vpop.permute.xlu0 %1090
      %1092 = vrot.lane.b32.xlu0 %v1059, 64
      %v1093 = vpop.permute.xlu0 %1092
      %1094 = vrot.lane.b32.xlu0 %v1062, 64
      %v1095 = vpop.permute.xlu0 %1094
      %1096 = vrot.lane.b32.xlu0 %v1065, 64
      %v1097 = vpop.permute.xlu0 %1096
      %v1100 = vunpack.c.l.b16 %v658
      %v1101 = vunpack.c.l.b16 %v659
      %v1102 = vpack.c.b16 %v1101, %v1100
      %1103 = vrot.lane.b32.xlu0 %v729, 96
      %v1104 = vpop.permute.xlu0 %1103
      %1105 = vrot.lane.b32.xlu0 %v730, 96
      %v1106 = vpop.permute.xlu0 %1105
      %1107 = vrot.lane.b32.xlu0 %v731, 96
      %v1108 = vpop.permute.xlu0 %1107
      %1109 = vrot.lane.b32.xlu0 %v732, 96
      %v1110 = vpop.permute.xlu0 %1109
      %1111 = vrot.lane.b32.xlu0 %v733, 96
      %v1112 = vpop.permute.xlu0 %1111
      %1113 = vrot.lane.b32.xlu0 %v734, 96
      %v1114 = vpop.permute.xlu0 %1113
      %1115 = vrot.lane.b32.xlu0 %v735, 96
      %v1116 = vpop.permute.xlu0 %1115
      %1117 = vrot.lane.b32.xlu0 %v736, 96
      %v1118 = vpop.permute.xlu0 %1117
      %1119 = vrot.lane.b32.xlu0 %v737, 96
      %v1120 = vpop.permute.xlu0 %1119
      %1121 = vrot.lane.b32.xlu0 %v738, 96
      %v1122 = vpop.permute.xlu0 %1121
      %1123 = vrot.lane.b32.xlu0 %v739, 96
      %v1124 = vpop.permute.xlu0 %1123
      %1125 = vrot.lane.b32.xlu0 %v740, 96
      %v1126 = vpop.permute.xlu0 %1125
      %1127 = vrot.lane.b32.xlu0 %v741, 96
      %v1128 = vpop.permute.xlu0 %1127
      %1129 = vrot.lane.b32.xlu0 %v742, 96
      %v1130 = vpop.permute.xlu0 %1129
      %1131 = vrot.lane.b32.xlu0 %v743, 96
      %v1132 = vpop.permute.xlu0 %1131
      %1133 = vrot.lane.b32.xlu0 %v1102, 96
      %v1134 = vpop.permute.xlu0 %1133
      %v1136 = vunpack.c.l.b16 %v660
      %v1137 = vpack.c.b16 %v1136, %v1136
      %v1139 = vshrl.u32 %v1102, 16
      %v1141 = vshll.u32 %v1102, 16
      %v1143 = vrot.slane %v1141, 1
      %v1144 = vor.u32 %v1139, %v1143
      %v1146 = vshll.u32 %v1137, 16
      %v1148 = vrot.slane %v1146, 1
      %v1149 = vsel %vm792, %v1144, %v1148
      %v1150 = vrot.slane %v1102, 1
      %v1151 = vrot.slane %v1137, 1
      %v1152 = vsel %vm1017, %v1150, %v1151
      %1153 = vrot.lane.b32.xlu0 %v1023, 32
      %v1154 = vpop.permute.xlu0 %1153
      %1155 = vrot.lane.b32.xlu0 %v1026, 32
      %v1156 = vpop.permute.xlu0 %1155
      %1157 = vrot.lane.b32.xlu0 %v1029, 32
      %v1158 = vpop.permute.xlu0 %1157
      %1159 = vrot.lane.b32.xlu0 %v1032, 32
      %v1160 = vpop.permute.xlu0 %1159
      %1161 = vrot.lane.b32.xlu0 %v1035, 32
      %v1162 = vpop.permute.xlu0 %1161
      %1163 = vrot.lane.b32.xlu0 %v1038, 32
      %v1164 = vpop.permute.xlu0 %1163
      %1165 = vrot.lane.b32.xlu0 %v1041, 32
      %v1166 = vpop.permute.xlu0 %1165
      %1167 = vrot.lane.b32.xlu0 %v1044, 32
      %v1168 = vpop.permute.xlu0 %1167
      %1169 = vrot.lane.b32.xlu0 %v1047, 32
      %v1170 = vpop.permute.xlu0 %1169
      %1171 = vrot.lane.b32.xlu0 %v1050, 32
      %v1172 = vpop.permute.xlu0 %1171
      %1173 = vrot.lane.b32.xlu0 %v1053, 32
      %v1174 = vpop.permute.xlu0 %1173
      %1175 = vrot.lane.b32.xlu0 %v1056, 32
      %v1176 = vpop.permute.xlu0 %1175
      %1177 = vrot.lane.b32.xlu0 %v1059, 32
      %v1178 = vpop.permute.xlu0 %1177
      %1179 = vrot.lane.b32.xlu0 %v1062, 32
      %v1180 = vpop.permute.xlu0 %1179
      %1181 = vrot.lane.b32.xlu0 %v1065, 32
      %v1182 = vpop.permute.xlu0 %1181
      %1183 = vrot.lane.b32.xlu0 %v1152, 32
      %v1184 = vpop.permute.xlu0 %1183
      %v1187 = vunpack.c.l.b16 %v661
      %v1188 = vunpack.c.l.b16 %v662
      %v1189 = vpack.c.b16 %v1188, %v1187
      %1190 = vrot.lane.b32.xlu0 %v730, 64
      %v1191 = vpop.permute.xlu0 %1190
      %1192 = vrot.lane.b32.xlu0 %v731, 64
      %v1193 = vpop.permute.xlu0 %1192
      %1194 = vrot.lane.b32.xlu0 %v732, 64
      %v1195 = vpop.permute.xlu0 %1194
      %1196 = vrot.lane.b32.xlu0 %v733, 64
      %v1197 = vpop.permute.xlu0 %1196
      %1198 = vrot.lane.b32.xlu0 %v734, 64
      %v1199 = vpop.permute.xlu0 %1198
      %1200 = vrot.lane.b32.xlu0 %v735, 64
      %v1201 = vpop.permute.xlu0 %1200
      %1202 = vrot.lane.b32.xlu0 %v736, 64
      %v1203 = vpop.permute.xlu0 %1202
      %1204 = vrot.lane.b32.xlu0 %v737, 64
      %v1205 = vpop.permute.xlu0 %1204
      %1206 = vrot.lane.b32.xlu0 %v738, 64
      %v1207 = vpop.permute.xlu0 %1206
      %1208 = vrot.lane.b32.xlu0 %v739, 64
      %v1209 = vpop.permute.xlu0 %1208
      %1210 = vrot.lane.b32.xlu0 %v740, 64
      %v1211 = vpop.permute.xlu0 %1210
      %1212 = vrot.lane.b32.xlu0 %v741, 64
      %v1213 = vpop.permute.xlu0 %1212
      %1214 = vrot.lane.b32.xlu0 %v742, 64
      %v1215 = vpop.permute.xlu0 %1214
      %1216 = vrot.lane.b32.xlu0 %v743, 64
      %v1217 = vpop.permute.xlu0 %1216
      %1218 = vrot.lane.b32.xlu0 %v1102, 64
      %v1219 = vpop.permute.xlu0 %1218
      %1220 = vrot.lane.b32.xlu0 %v1189, 64
      %v1221 = vpop.permute.xlu0 %1220
      %v1223 = vunpack.c.l.b16 %v663
      %v1224 = vpack.c.b16 %v1223, %v1223
      %v1226 = vshrl.u32 %v1189, 16
      %v1228 = vshll.u32 %v1189, 16
      %v1230 = vrot.slane %v1228, 1
      %v1231 = vor.u32 %v1226, %v1230
      %v1233 = vshll.u32 %v1224, 16
      %v1235 = vrot.slane %v1233, 1
      %v1236 = vsel %vm792, %v1231, %v1235
      %1237 = vrot.lane.b32.xlu0 %v828, 96
      %v1238 = vpop.permute.xlu0 %1237
      %1239 = vrot.lane.b32.xlu0 %v840, 96
      %v1240 = vpop.permute.xlu0 %1239
      %1241 = vrot.lane.b32.xlu0 %v852, 96
      %v1242 = vpop.permute.xlu0 %1241
      %1243 = vrot.lane.b32.xlu0 %v864, 96
      %v1244 = vpop.permute.xlu0 %1243
      %1245 = vrot.lane.b32.xlu0 %v876, 96
      %v1246 = vpop.permute.xlu0 %1245
      %1247 = vrot.lane.b32.xlu0 %v888, 96
      %v1248 = vpop.permute.xlu0 %1247
      %1249 = vrot.lane.b32.xlu0 %v900, 96
      %v1250 = vpop.permute.xlu0 %1249
      %1251 = vrot.lane.b32.xlu0 %v912, 96
      %v1252 = vpop.permute.xlu0 %1251
      %1253 = vrot.lane.b32.xlu0 %v924, 96
      %v1254 = vpop.permute.xlu0 %1253
      %1255 = vrot.lane.b32.xlu0 %v936, 96
      %v1256 = vpop.permute.xlu0 %1255
      %1257 = vrot.lane.b32.xlu0 %v948, 96
      %v1258 = vpop.permute.xlu0 %1257
      %1259 = vrot.lane.b32.xlu0 %v960, 96
      %v1260 = vpop.permute.xlu0 %1259
      %1261 = vrot.lane.b32.xlu0 %v972, 96
      %v1262 = vpop.permute.xlu0 %1261
      %1263 = vrot.lane.b32.xlu0 %v984, 96
      %v1264 = vpop.permute.xlu0 %1263
      %1265 = vrot.lane.b32.xlu0 %v1149, 96
      %v1266 = vpop.permute.xlu0 %1265
      %1267 = vrot.lane.b32.xlu0 %v1236, 96
      %v1268 = vpop.permute.xlu0 %1267
      %v1269 = vrot.slane %v1189, 1
      %v1270 = vrot.slane %v1224, 1
      %v1271 = vsel %vm1017, %v1269, %v1270
      %vm1272 = vcmask 261120
      %v1274 = vsel %vm1272, %v728, %v986
      %v1276 = vsel %vm1272, %v729, %v988
      %v1278 = vsel %vm1272, %v730, %v990
      %v1280 = vsel %vm1272, %v731, %v992
      %v1282 = vsel %vm1272, %v732, %v994
      %v1284 = vsel %vm1272, %v733, %v996
      %v1286 = vsel %vm1272, %v734, %v998
      %v1288 = vsel %vm1272, %v735, %v1000
      %v1290 = vsel %vm1272, %v736, %v1002
      %v1292 = vsel %vm1272, %v737, %v1004
      %v1294 = vsel %vm1272, %v738, %v1006
      %v1296 = vsel %vm1272, %v739, %v1008
      %v1298 = vsel %vm1272, %v740, %v1010
      %v1300 = vsel %vm1272, %v741, %v1012
      %v1302 = vsel %vm1272, %v742, %v1014
      %v1304 = vsel %vm1272, %v743, %v1016
      %vm1305 = vcmask 523264
      %v1307 = vsel %vm1305, %v1274, %v1067
      %v1309 = vsel %vm1305, %v1276, %v1069
      %v1311 = vsel %vm1305, %v1278, %v1071
      %v1313 = vsel %vm1305, %v1280, %v1073
      %v1315 = vsel %vm1305, %v1282, %v1075
      %v1317 = vsel %vm1305, %v1284, %v1077
      %v1319 = vsel %vm1305, %v1286, %v1079
      %v1321 = vsel %vm1305, %v1288, %v1081
      %v1323 = vsel %vm1305, %v1290, %v1083
      %v1325 = vsel %vm1305, %v1292, %v1085
      %v1327 = vsel %vm1305, %v1294, %v1087
      %v1329 = vsel %vm1305, %v1296, %v1089
      %v1331 = vsel %vm1305, %v1298, %v1091
      %v1333 = vsel %vm1305, %v1300, %v1093
      %v1335 = vsel %vm1305, %v1302, %v1095
      %v1337 = vsel %vm1305, %v1304, %v1097
      %vm1338 = vcmask 785408
      %v1340 = vsel %vm1338, %v1307, %v1104
      %v1343 = vsel %vm1338, %v1309, %v1106
      %v1346 = vsel %vm1338, %v1311, %v1108
      %v1349 = vsel %vm1338, %v1313, %v1110
      %v1352 = vsel %vm1338, %v1315, %v1112
      %v1355 = vsel %vm1338, %v1317, %v1114
      %v1358 = vsel %vm1338, %v1319, %v1116
      %v1361 = vsel %vm1338, %v1321, %v1118
      %v1364 = vsel %vm1338, %v1323, %v1120
      %v1367 = vsel %vm1338, %v1325, %v1122
      %v1370 = vsel %vm1338, %v1327, %v1124
      %v1373 = vsel %vm1338, %v1329, %v1126
      %v1376 = vsel %vm1338, %v1331, %v1128
      %v1379 = vsel %vm1338, %v1333, %v1130
      %v1382 = vsel %vm1338, %v1335, %v1132
      %v1385 = vsel %vm1338, %v1337, %v1134
      %v1389 = vsel %vm1272, %v816, %v1154
      %v1392 = vsel %vm1272, %v828, %v1156
      %v1395 = vsel %vm1272, %v840, %v1158
      %v1398 = vsel %vm1272, %v852, %v1160
      %v1401 = vsel %vm1272, %v864, %v1162
      %v1404 = vsel %vm1272, %v876, %v1164
      %v1407 = vsel %vm1272, %v888, %v1166
      %v1410 = vsel %vm1272, %v900, %v1168
      %v1413 = vsel %vm1272, %v912, %v1170
      %v1416 = vsel %vm1272, %v924, %v1172
      %v1419 = vsel %vm1272, %v936, %v1174
      %v1422 = vsel %vm1272, %v948, %v1176
      %v1425 = vsel %vm1272, %v960, %v1178
      %v1428 = vsel %vm1272, %v972, %v1180
      %v1431 = vsel %vm1272, %v984, %v1182
      %v1434 = vsel %vm1272, %v1149, %v1184
      %v1436 = vsel %vm1305, %v1389, %v1191
      %v1438 = vsel %vm1305, %v1392, %v1193
      %v1440 = vsel %vm1305, %v1395, %v1195
      %v1442 = vsel %vm1305, %v1398, %v1197
      %v1444 = vsel %vm1305, %v1401, %v1199
      %v1446 = vsel %vm1305, %v1404, %v1201
      %v1448 = vsel %vm1305, %v1407, %v1203
      %v1450 = vsel %vm1305, %v1410, %v1205
      %v1452 = vsel %vm1305, %v1413, %v1207
      %v1454 = vsel %vm1305, %v1416, %v1209
      %v1456 = vsel %vm1305, %v1419, %v1211
      %v1458 = vsel %vm1305, %v1422, %v1213
      %v1460 = vsel %vm1305, %v1425, %v1215
      %v1462 = vsel %vm1305, %v1428, %v1217
      %v1464 = vsel %vm1305, %v1431, %v1219
      %v1466 = vsel %vm1305, %v1434, %v1221
      %v1468 = vsel %vm1338, %v1436, %v1238
      %v1471 = vsel %vm1338, %v1438, %v1240
      %v1474 = vsel %vm1338, %v1440, %v1242
      %v1477 = vsel %vm1338, %v1442, %v1244
      %v1480 = vsel %vm1338, %v1444, %v1246
      %v1483 = vsel %vm1338, %v1446, %v1248
      %v1486 = vsel %vm1338, %v1448, %v1250
      %v1489 = vsel %vm1338, %v1450, %v1252
      %v1492 = vsel %vm1338, %v1452, %v1254
      %v1495 = vsel %vm1338, %v1454, %v1256
      %v1498 = vsel %vm1338, %v1456, %v1258
      %v1501 = vsel %vm1338, %v1458, %v1260
      %v1504 = vsel %vm1338, %v1460, %v1262
      %v1507 = vsel %vm1338, %v1462, %v1264
      %v1510 = vsel %vm1338, %v1464, %v1266
      %v1513 = vsel %vm1338, %v1466, %v1268
      %v1515 = vld [vmem:[%s1] sm:$0xf]
      %v1516 = vld [vmem:[%s1 + $0x4] sm:$0xf]
      %v1517 = vld [vmem:[%s1 + $0x8] sm:$0xf]
      %v1518 = vld [vmem:[%s1 + $0xc] sm:$0xf]
      %v1519 = vld [vmem:[%s1 + $0x10] sm:$0xf]
      %v1520 = vld [vmem:[%s1 + $0x14] sm:$0xf]
      %v1521 = vld [vmem:[%s1 + $0x18] sm:$0xf]
      %v1522 = vld [vmem:[%s1 + $0x1c] sm:$0xf]
      %v1523 = vld [vmem:[%s1 + $0x20] sm:$0xf]
      %v1524 = vld [vmem:[%s1 + $0x24] sm:$0xf]
      %v1525 = vld [vmem:[%s1 + $0x28] sm:$0xf]
      %v1526 = vld [vmem:[%s1 + $0x2c] sm:$0xf]
      %v1527 = vld [vmem:[%s1 + $0x30] sm:$0xf]
      %v1528 = vld [vmem:[%s1 + $0x34] sm:$0xf]
      %v1529 = vld [vmem:[%s1 + $0x38] sm:$0xf]
      %v1530 = vld [vmem:[%s1 + $0x3c] sm:$0xf]
      %v1531 = vld [vmem:[%s1 + $0x40] sm:$0xf]
      %v1532 = vld [vmem:[%s1 + $0x44] sm:$0xf]
      %v1533 = vld [vmem:[%s1 + $0x48] sm:$0xf]
      %v1534 = vld [vmem:[%s1 + $0x4c] sm:$0xf]
      %v1535 = vld [vmem:[%s1 + $0x50] sm:$0xf]
      %v1536 = vld [vmem:[%s1 + $0x54] sm:$0xf]
      %v1537 = vld [vmem:[%s1 + $0x58] sm:$0xf]
      %v1538 = vld [vmem:[%s1 + $0x5c] sm:$0xf]
      %v1539 = vld [vmem:[%s1 + $0x60] sm:$0xf]
      %v1540 = vld [vmem:[%s1 + $0x64] sm:$0xf]
      %v1541 = vld [vmem:[%s1 + $0x68] sm:$0xf]
      %v1542 = vld [vmem:[%s1 + $0x6c] sm:$0xf]
      %v1543 = vld [vmem:[%s1 + $0x70] sm:$0xf]
      %v1544 = vld [vmem:[%s1 + $0x74] sm:$0xf]
      %v1545 = vld [vmem:[%s1 + $0x78] sm:$0xf]
      %v1546 = vld [vmem:[%s1 + $0x7c] sm:$0xf]
      %v1547 = vld [vmem:[%s1 + $0x80] sm:$0xf]
      %v1548 = vld [vmem:[%s1 + $0x84] sm:$0xf]
      %v1549 = vld [vmem:[%s1 + $0x88] sm:$0xf]
      %v1550 = vld [vmem:[%s1 + $0x8c] sm:$0xf]
      %v1551 = vld [vmem:[%s4] sm:$0x1]
      %v1553 = vperm.slane %v1551, 0
      %v1591 = vunpack.c.l.b16 %v1515
      %v1592 = vunpack.c.l.b16 %v1516
      %v1593 = vunpack.c.l.b16 %v1517
      %v1594 = vunpack.c.l.b16 %v1518
      %v1595 = vunpack.c.l.b16 %v1519
      %v1596 = vunpack.c.l.b16 %v1520
      %v1597 = vunpack.c.l.b16 %v1521
      %v1598 = vunpack.c.l.b16 %v1522
      %v1599 = vunpack.c.l.b16 %v1523
      %v1600 = vunpack.c.l.b16 %v1524
      %v1601 = vunpack.c.l.b16 %v1525
      %v1602 = vunpack.c.l.b16 %v1526
      %v1603 = vunpack.c.l.b16 %v1527
      %v1604 = vunpack.c.l.b16 %v1528
      %v1605 = vunpack.c.l.b16 %v1529
      %v1606 = vunpack.c.l.b16 %v1530
      %v1607 = vunpack.c.l.b16 %v1531
      %v1608 = vunpack.c.l.b16 %v1532
      %v1609 = vunpack.c.l.b16 %v1533
      %v1610 = vunpack.c.l.b16 %v1534
      %v1611 = vunpack.c.l.b16 %v1535
      %v1612 = vunpack.c.l.b16 %v1536
      %v1613 = vunpack.c.l.b16 %v1537
      %v1614 = vunpack.c.l.b16 %v1538
      %v1615 = vunpack.c.l.b16 %v1539
      %v1616 = vunpack.c.l.b16 %v1540
      %v1617 = vunpack.c.l.b16 %v1541
      %v1618 = vunpack.c.l.b16 %v1542
      %v1619 = vunpack.c.l.b16 %v1543
      %v1620 = vunpack.c.l.b16 %v1544
      %v1621 = vunpack.c.l.b16 %v1545
      %v1622 = vunpack.c.l.b16 %v1546
      %v1623 = vunpack.c.l.b16 %v1547
      %v1624 = vunpack.c.l.b16 %v1548
      %v1625 = vunpack.c.l.b16 %v1549
      %v1626 = vunpack.c.l.b16 %v1550
      %v1627 = vpack.c.b16 %v1592, %v1591
      %v1628 = vpack.c.b16 %v1594, %v1593
      %v1629 = vpack.c.b16 %v1596, %v1595
      %v1630 = vpack.c.b16 %v1598, %v1597
      %v1631 = vpack.c.b16 %v1600, %v1599
      %v1632 = vpack.c.b16 %v1602, %v1601
      %v1633 = vpack.c.b16 %v1604, %v1603
      %v1634 = vpack.c.b16 %v1606, %v1605
      %v1635 = vpack.c.b16 %v1608, %v1607
      %v1636 = vpack.c.b16 %v1610, %v1609
      %v1637 = vpack.c.b16 %v1612, %v1611
      %v1638 = vpack.c.b16 %v1614, %v1613
      %v1639 = vpack.c.b16 %v1616, %v1615
      %v1640 = vpack.c.b16 %v1618, %v1617
      %v1641 = vpack.c.b16 %v1620, %v1619
      %v1642 = vpack.c.b16 %v1622, %v1621
      %v1643 = vpack.c.b16 %v1624, %v1623
      %v1644 = vpack.c.b16 %v1626, %v1625
      %v1664 = vsel %vm1272, %v1026, 0
      %v1667 = vsel %vm1272, %v1029, 0
      %v1670 = vsel %vm1272, %v1032, 0
      %v1673 = vsel %vm1272, %v1035, 0
      %v1676 = vsel %vm1272, %v1038, 0
      %v1679 = vsel %vm1272, %v1041, 0
      %v1682 = vsel %vm1272, %v1044, 0
      %v1685 = vsel %vm1272, %v1047, 0
      %v1688 = vsel %vm1272, %v1050, 0
      %v1691 = vsel %vm1272, %v1053, 0
      %v1694 = vsel %vm1272, %v1056, 0
      %v1697 = vsel %vm1272, %v1059, 0
      %v1700 = vsel %vm1272, %v1062, 0
      %v1703 = vsel %vm1272, %v1065, 0
      %v1706 = vsel %vm1272, %v1152, 0
      %v1709 = vsel %vm1272, %v1271, 0
      %1711 = vmatpush.bf16.msra.mxu0 %v1634
      %1712 = vmatpush.bf16.msra.mxu0 %v1633
      %1713 = vmatpush.bf16.msra.mxu0 %v1632
      %1714 = vmatpush.bf16.msra.mxu0 %v1631
      %1715 = vmatpush.bf16.msra.mxu0 %v1630
      %1716 = vmatpush.bf16.msra.mxu0 %v1629
      %1717 = vmatpush.bf16.msra.mxu0 %v1628
      %1718 = vmatpush.bf16.msra.mxu0 %v1627
      %1719 = vmatmul.bf16.gmra.mxu0 %v1340
      %v1720 = vpop.f32.mrf.mxu0
      %v1721 = vadd.f32 %v1553, %v1720
      %v1722 = vpop.f32.mrf.mxu0
      %v1723 = vadd.f32 %v1553, %v1722
      %1724 = vmatmul.bf16.gmra.mxu0 %v1343
      %v1725 = vpop.f32.mrf.mxu0
      %v1726 = vadd.f32 %v1553, %v1725
      %v1727 = vpop.f32.mrf.mxu0
      %v1728 = vadd.f32 %v1553, %v1727
      %1729 = vmatmul.bf16.gmra.mxu0 %v1346
      %v1730 = vpop.f32.mrf.mxu0
      %v1731 = vadd.f32 %v1553, %v1730
      %v1732 = vpop.f32.mrf.mxu0
      %v1733 = vadd.f32 %v1553, %v1732
      %1734 = vmatmul.bf16.gmra.mxu0 %v1349
      %v1735 = vpop.f32.mrf.mxu0
      %v1736 = vadd.f32 %v1553, %v1735
      %v1737 = vpop.f32.mrf.mxu0
      %v1738 = vadd.f32 %v1553, %v1737
      %1739 = vmatmul.bf16.gmra.mxu0 %v1352
      %v1740 = vpop.f32.mrf.mxu0
      %v1741 = vadd.f32 %v1553, %v1740
      %v1742 = vpop.f32.mrf.mxu0
      %v1743 = vadd.f32 %v1553, %v1742
      %1744 = vmatmul.bf16.gmra.mxu0 %v1355
      %v1745 = vpop.f32.mrf.mxu0
      %v1746 = vadd.f32 %v1553, %v1745
      %v1747 = vpop.f32.mrf.mxu0
      %v1748 = vadd.f32 %v1553, %v1747
      %1749 = vmatmul.bf16.gmra.mxu0 %v1358
      %v1750 = vpop.f32.mrf.mxu0
      %v1751 = vadd.f32 %v1553, %v1750
      %v1752 = vpop.f32.mrf.mxu0
      %v1753 = vadd.f32 %v1553, %v1752
      %1754 = vmatmul.bf16.gmra.mxu0 %v1361
      %v1755 = vpop.f32.mrf.mxu0
      %v1756 = vadd.f32 %v1553, %v1755
      %v1757 = vpop.f32.mrf.mxu0
      %v1758 = vadd.f32 %v1553, %v1757
      %1759 = vmatmul.bf16.gmra.mxu0 %v1364
      %v1760 = vpop.f32.mrf.mxu0
      %v1761 = vadd.f32 %v1553, %v1760
      %v1762 = vpop.f32.mrf.mxu0
      %v1763 = vadd.f32 %v1553, %v1762
      %1764 = vmatmul.bf16.gmra.mxu0 %v1367
      %v1765 = vpop.f32.mrf.mxu0
      %v1766 = vadd.f32 %v1553, %v1765
      %v1767 = vpop.f32.mrf.mxu0
      %v1768 = vadd.f32 %v1553, %v1767
      %1769 = vmatmul.bf16.gmra.mxu0 %v1370
      %v1770 = vpop.f32.mrf.mxu0
      %v1771 = vadd.f32 %v1553, %v1770
      %v1772 = vpop.f32.mrf.mxu0
      %v1773 = vadd.f32 %v1553, %v1772
      %1774 = vmatmul.bf16.gmra.mxu0 %v1373
      %v1775 = vpop.f32.mrf.mxu0
      %v1776 = vadd.f32 %v1553, %v1775
      %v1777 = vpop.f32.mrf.mxu0
      %v1778 = vadd.f32 %v1553, %v1777
      %1779 = vmatmul.bf16.gmra.mxu0 %v1376
      %v1780 = vpop.f32.mrf.mxu0
      %v1781 = vadd.f32 %v1553, %v1780
      %v1782 = vpop.f32.mrf.mxu0
      %v1783 = vadd.f32 %v1553, %v1782
      %1784 = vmatmul.bf16.gmra.mxu0 %v1379
      %v1785 = vpop.f32.mrf.mxu0
      %v1786 = vadd.f32 %v1553, %v1785
      %v1787 = vpop.f32.mrf.mxu0
      %v1788 = vadd.f32 %v1553, %v1787
      %1789 = vmatmul.bf16.gmra.mxu0 %v1382
      %v1790 = vpop.f32.mrf.mxu0
      %v1791 = vadd.f32 %v1553, %v1790
      %v1792 = vpop.f32.mrf.mxu0
      %v1793 = vadd.f32 %v1553, %v1792
      %1794 = vmatmul.bf16.gmra.mxu0 %v1385
      %v1795 = vpop.f32.mrf.mxu0
      %v1796 = vadd.f32 %v1553, %v1795
      %v1797 = vpop.f32.mrf.mxu0
      %v1798 = vadd.f32 %v1553, %v1797
      %1799 = vdwg.mxu0
      %1800 = vmatpush.bf16.msra.mxu0 %v1642
      %1801 = vmatpush.bf16.msra.mxu0 %v1641
      %1802 = vmatpush.bf16.msra.mxu0 %v1640
      %1803 = vmatpush.bf16.msra.mxu0 %v1639
      %1804 = vmatpush.bf16.msra.mxu0 %v1638
      %1805 = vmatpush.bf16.msra.mxu0 %v1637
      %1806 = vmatpush.bf16.msra.mxu0 %v1636
      %1807 = vmatpush.bf16.msra.mxu0 %v1635
      %1808 = vmatmul.bf16.gmra.mxu0 %v1468
      %v1809 = vpop.f32.mrf.mxu0
      %v1810 = vadd.f32 %v1721, %v1809
      %v1811 = vpop.f32.mrf.mxu0
      %v1812 = vadd.f32 %v1723, %v1811
      %1813 = vmatmul.bf16.gmra.mxu0 %v1471
      %v1814 = vpop.f32.mrf.mxu0
      %v1815 = vadd.f32 %v1726, %v1814
      %v1816 = vpop.f32.mrf.mxu0
      %v1817 = vadd.f32 %v1728, %v1816
      %1818 = vmatmul.bf16.gmra.mxu0 %v1474
      %v1819 = vpop.f32.mrf.mxu0
      %v1820 = vadd.f32 %v1731, %v1819
      %v1821 = vpop.f32.mrf.mxu0
      %v1822 = vadd.f32 %v1733, %v1821
      %1823 = vmatmul.bf16.gmra.mxu0 %v1477
      %v1824 = vpop.f32.mrf.mxu0
      %v1825 = vadd.f32 %v1736, %v1824
      %v1826 = vpop.f32.mrf.mxu0
      %v1827 = vadd.f32 %v1738, %v1826
      %1828 = vmatmul.bf16.gmra.mxu0 %v1480
      %v1829 = vpop.f32.mrf.mxu0
      %v1830 = vadd.f32 %v1741, %v1829
      %v1831 = vpop.f32.mrf.mxu0
      %v1832 = vadd.f32 %v1743, %v1831
      %1833 = vmatmul.bf16.gmra.mxu0 %v1483
      %v1834 = vpop.f32.mrf.mxu0
      %v1835 = vadd.f32 %v1746, %v1834
      %v1836 = vpop.f32.mrf.mxu0
      %v1837 = vadd.f32 %v1748, %v1836
      %1838 = vmatmul.bf16.gmra.mxu0 %v1486
      %v1839 = vpop.f32.mrf.mxu0
      %v1840 = vadd.f32 %v1751, %v1839
      %v1841 = vpop.f32.mrf.mxu0
      %v1842 = vadd.f32 %v1753, %v1841
      %1843 = vmatmul.bf16.gmra.mxu0 %v1489
      %v1844 = vpop.f32.mrf.mxu0
      %v1845 = vadd.f32 %v1756, %v1844
      %v1846 = vpop.f32.mrf.mxu0
      %v1847 = vadd.f32 %v1758, %v1846
      %1848 = vmatmul.bf16.gmra.mxu0 %v1492
      %v1849 = vpop.f32.mrf.mxu0
      %v1850 = vadd.f32 %v1761, %v1849
      %v1851 = vpop.f32.mrf.mxu0
      %v1852 = vadd.f32 %v1763, %v1851
      %1853 = vmatmul.bf16.gmra.mxu0 %v1495
      %v1854 = vpop.f32.mrf.mxu0
      %v1855 = vadd.f32 %v1766, %v1854
      %v1856 = vpop.f32.mrf.mxu0
      %v1857 = vadd.f32 %v1768, %v1856
      %1858 = vmatmul.bf16.gmra.mxu0 %v1498
      %v1859 = vpop.f32.mrf.mxu0
      %v1860 = vadd.f32 %v1771, %v1859
      %v1861 = vpop.f32.mrf.mxu0
      %v1862 = vadd.f32 %v1773, %v1861
      %1863 = vmatmul.bf16.gmra.mxu0 %v1501
      %v1864 = vpop.f32.mrf.mxu0
      %v1865 = vadd.f32 %v1776, %v1864
      %v1866 = vpop.f32.mrf.mxu0
      %v1867 = vadd.f32 %v1778, %v1866
      %1868 = vmatmul.bf16.gmra.mxu0 %v1504
      %v1869 = vpop.f32.mrf.mxu0
      %v1870 = vadd.f32 %v1781, %v1869
      %v1871 = vpop.f32.mrf.mxu0
      %v1872 = vadd.f32 %v1783, %v1871
      %1873 = vmatmul.bf16.gmra.mxu0 %v1507
      %v1874 = vpop.f32.mrf.mxu0
      %v1875 = vadd.f32 %v1786, %v1874
      %v1876 = vpop.f32.mrf.mxu0
      %v1877 = vadd.f32 %v1788, %v1876
      %1878 = vmatmul.bf16.gmra.mxu0 %v1510
      %v1879 = vpop.f32.mrf.mxu0
      %v1880 = vadd.f32 %v1791, %v1879
      %v1881 = vpop.f32.mrf.mxu0
      %v1882 = vadd.f32 %v1793, %v1881
      %1883 = vmatmul.bf16.gmra.mxu0 %v1513
      %v1884 = vpop.f32.mrf.mxu0
      %v1885 = vadd.f32 %v1796, %v1884
      %v1886 = vpop.f32.mrf.mxu0
      %v1887 = vadd.f32 %v1798, %v1886
      %1888 = vdwg.mxu0
      %1889 = vmatpush.bf16.msra.mxu0 0
      %1890 = vmatpush.bf16.msra.mxu0 0
      %1891 = vmatpush.bf16.msra.mxu0 0
      %1892 = vmatpush.bf16.msra.mxu0 0
      %1893 = vmatpush.bf16.msra.mxu0 0
      %1894 = vmatpush.bf16.msra.mxu0 0
      %1895 = vmatpush.bf16.msra.mxu0 %v1644
      %1896 = vmatpush.bf16.msra.mxu0 %v1643
      %1897 = vmatmul.bf16.gmra.mxu0 %v1664
      %v1898 = vpop.f32.mrf.mxu0
      %v1899 = vadd.f32 %v1810, %v1898
      %v1900 = vpop.f32.mrf.mxu0
      %v1901 = vadd.f32 %v1812, %v1900
      %1902 = vmatmul.bf16.gmra.mxu0 %v1667
      %v1903 = vpop.f32.mrf.mxu0
      %v1904 = vadd.f32 %v1815, %v1903
      %v1905 = vpop.f32.mrf.mxu0
      %v1906 = vadd.f32 %v1817, %v1905
      %1907 = vmatmul.bf16.gmra.mxu0 %v1670
      %v1908 = vpop.f32.mrf.mxu0
      %v1909 = vadd.f32 %v1820, %v1908
      %v1910 = vpop.f32.mrf.mxu0
      %v1911 = vadd.f32 %v1822, %v1910
      %1912 = vmatmul.bf16.gmra.mxu0 %v1673
      %v1913 = vpop.f32.mrf.mxu0
      %v1914 = vadd.f32 %v1825, %v1913
      %v1915 = vpop.f32.mrf.mxu0
      %v1916 = vadd.f32 %v1827, %v1915
      %1917 = vmatmul.bf16.gmra.mxu0 %v1676
      %v1918 = vpop.f32.mrf.mxu0
      %v1919 = vadd.f32 %v1830, %v1918
      %v1920 = vpop.f32.mrf.mxu0
      %v1921 = vadd.f32 %v1832, %v1920
      %1922 = vmatmul.bf16.gmra.mxu0 %v1679
      %v1923 = vpop.f32.mrf.mxu0
      %v1924 = vadd.f32 %v1835, %v1923
      %v1925 = vpop.f32.mrf.mxu0
      %v1926 = vadd.f32 %v1837, %v1925
      %1927 = vmatmul.bf16.gmra.mxu0 %v1682
      %v1928 = vpop.f32.mrf.mxu0
      %v1929 = vadd.f32 %v1840, %v1928
      %v1930 = vpop.f32.mrf.mxu0
      %v1931 = vadd.f32 %v1842, %v1930
      %1932 = vmatmul.bf16.gmra.mxu0 %v1685
      %v1933 = vpop.f32.mrf.mxu0
      %v1934 = vadd.f32 %v1845, %v1933
      %v1935 = vpop.f32.mrf.mxu0
      %v1936 = vadd.f32 %v1847, %v1935
      %1937 = vmatmul.bf16.gmra.mxu0 %v1688
      %v1938 = vpop.f32.mrf.mxu0
      %v1939 = vadd.f32 %v1850, %v1938
      %v1940 = vpop.f32.mrf.mxu0
      %v1941 = vadd.f32 %v1852, %v1940
      %1942 = vmatmul.bf16.gmra.mxu0 %v1691
      %v1943 = vpop.f32.mrf.mxu0
      %v1944 = vadd.f32 %v1855, %v1943
      %v1945 = vpop.f32.mrf.mxu0
      %v1946 = vadd.f32 %v1857, %v1945
      %1947 = vmatmul.bf16.gmra.mxu0 %v1694
      %v1948 = vpop.f32.mrf.mxu0
      %v1949 = vadd.f32 %v1860, %v1948
      %v1950 = vpop.f32.mrf.mxu0
      %v1951 = vadd.f32 %v1862, %v1950
      %1952 = vmatmul.bf16.gmra.mxu0 %v1697
      %v1953 = vpop.f32.mrf.mxu0
      %v1954 = vadd.f32 %v1865, %v1953
      %v1955 = vpop.f32.mrf.mxu0
      %v1956 = vadd.f32 %v1867, %v1955
      %1957 = vmatmul.bf16.gmra.mxu0 %v1700
      %v1958 = vpop.f32.mrf.mxu0
      %v1959 = vadd.f32 %v1870, %v1958
      %v1960 = vpop.f32.mrf.mxu0
      %v1961 = vadd.f32 %v1872, %v1960
      %1962 = vmatmul.bf16.gmra.mxu0 %v1703
      %v1963 = vpop.f32.mrf.mxu0
      %v1964 = vadd.f32 %v1875, %v1963
      %v1965 = vpop.f32.mrf.mxu0
      %v1966 = vadd.f32 %v1877, %v1965
      %1967 = vmatmul.bf16.gmra.mxu0 %v1706
      %v1968 = vpop.f32.mrf.mxu0
      %v1969 = vadd.f32 %v1880, %v1968
      %v1970 = vpop.f32.mrf.mxu0
      %v1971 = vadd.f32 %v1882, %v1970
      %1972 = vmatmul.bf16.gmra.mxu0 %v1709
      %v1973 = vpop.f32.mrf.mxu0
      %v1974 = vadd.f32 %v1885, %v1973
      %v1975 = vpop.f32.mrf.mxu0
      %v1976 = vadd.f32 %v1887, %v1975
      %1977 = vdwg.mxu0
      %v1978 = vpack.c.bf16 %v1899, %v1899
      %v1979 = vpack.c.bf16 %v1901, %v1901
      %v1980 = vpack.c.bf16 %v1904, %v1904
      %v1981 = vpack.c.bf16 %v1906, %v1906
      %v1982 = vpack.c.bf16 %v1909, %v1909
      %v1983 = vpack.c.bf16 %v1911, %v1911
      %v1984 = vpack.c.bf16 %v1914, %v1914
      %v1985 = vpack.c.bf16 %v1916, %v1916
      %v1986 = vpack.c.bf16 %v1919, %v1919
      %v1987 = vpack.c.bf16 %v1921, %v1921
      %v1988 = vpack.c.bf16 %v1924, %v1924
      %v1989 = vpack.c.bf16 %v1926, %v1926
      %v1990 = vpack.c.bf16 %v1929, %v1929
      %v1991 = vpack.c.bf16 %v1931, %v1931
      %v1992 = vpack.c.bf16 %v1934, %v1934
      %v1993 = vpack.c.bf16 %v1936, %v1936
      %v1994 = vpack.c.bf16 %v1939, %v1939
      %v1995 = vpack.c.bf16 %v1941, %v1941
      %v1996 = vpack.c.bf16 %v1944, %v1944
      %v1997 = vpack.c.bf16 %v1946, %v1946
      %v1998 = vpack.c.bf16 %v1949, %v1949
      %v1999 = vpack.c.bf16 %v1951, %v1951
      %v2000 = vpack.c.bf16 %v1954, %v1954
      %v2001 = vpack.c.bf16 %v1956, %v1956
      %v2002 = vpack.c.bf16 %v1959, %v1959
      %v2003 = vpack.c.bf16 %v1961, %v1961
      %v2004 = vpack.c.bf16 %v1964, %v1964
      %v2005 = vpack.c.bf16 %v1966, %v1966
      %v2006 = vpack.c.bf16 %v1969, %v1969
      %v2007 = vpack.c.bf16 %v1971, %v1971
      %v2008 = vpack.c.bf16 %v1974, %v1974
      %v2009 = vpack.c.bf16 %v1976, %v1976
      %2010 = vst [vmem:[%s274] sm:$0xf] %v1978
      %2011 = vst [vmem:[%s274 + $0x4] sm:$0xf] %v1979
      %2012 = vst [vmem:[%s274 + $0x8] sm:$0xf] %v1980
      %2013 = vst [vmem:[%s274 + $0xc] sm:$0xf] %v1981
      %2014 = vst [vmem:[%s274 + $0x10] sm:$0xf] %v1982
      %2015 = vst [vmem:[%s274 + $0x14] sm:$0xf] %v1983
      %2016 = vst [vmem:[%s274 + $0x18] sm:$0xf] %v1984
      %2017 = vst [vmem:[%s274 + $0x1c] sm:$0xf] %v1985
      %2018 = vst [vmem:[%s274 + $0x20] sm:$0xf] %v1986
      %2019 = vst [vmem:[%s274 + $0x24] sm:$0xf] %v1987
      %2020 = vst [vmem:[%s274 + $0x28] sm:$0xf] %v1988
      %2021 = vst [vmem:[%s274 + $0x2c] sm:$0xf] %v1989
      %2022 = vst [vmem:[%s274 + $0x30] sm:$0xf] %v1990
      %2023 = vst [vmem:[%s274 + $0x34] sm:$0xf] %v1991
      %2024 = vst [vmem:[%s274 + $0x38] sm:$0xf] %v1992
      %2025 = vst [vmem:[%s274 + $0x3c] sm:$0xf] %v1993
      %2026 = vst [vmem:[%s274 + $0x40] sm:$0xf] %v1994
      %2027 = vst [vmem:[%s274 + $0x44] sm:$0xf] %v1995
      %2028 = vst [vmem:[%s274 + $0x48] sm:$0xf] %v1996
      %2029 = vst [vmem:[%s274 + $0x4c] sm:$0xf] %v1997
      %2030 = vst [vmem:[%s274 + $0x50] sm:$0xf] %v1998
      %2031 = vst [vmem:[%s274 + $0x54] sm:$0xf] %v1999
      %2032 = vst [vmem:[%s274 + $0x58] sm:$0xf] %v2000
      %2033 = vst [vmem:[%s274 + $0x5c] sm:$0xf] %v2001
      %2034 = vst [vmem:[%s274 + $0x60] sm:$0xf] %v2002
      %2035 = vst [vmem:[%s274 + $0x64] sm:$0xf] %v2003
      %2036 = vst [vmem:[%s274 + $0x68] sm:$0xf] %v2004
      %2037 = vst [vmem:[%s274 + $0x6c] sm:$0xf] %v2005
      %2038 = vst [vmem:[%s274 + $0x70] sm:$0xf] %v2006
      %2039 = vst [vmem:[%s274 + $0x74] sm:$0xf] %v2007
      %2040 = vst [vmem:[%s274 + $0x78] sm:$0xf] %v2008
      %2041 = vst [vmem:[%s274 + $0x7c] sm:$0xf] %v2009
      %s2042 = smul.u32 32, %s21
      %p2043 = scmp.lt.s32.totalorder %s20, 1
      %s2044 = scalar_select %p2043, %s20, 1
      %p2045 = scmp.lt.s32.totalorder %s2042, 31
      %s2046 = scalar_select %p2045, %s2042, 31
      %s2047 = smul.addr %s2044, 32
      %s2048 = sadd.s32 %s2046, %s2047
      %s2049 = smul.addr %s2048, 4
      %s2050 = scalar_lea.vmem %s5, %s2049
      // Predicated region
      $region41: #{forward_single.23} parent=39 // pred_check
        %p2051 = pneg %p168
      $region42: #{forward_single.23} parent=39 // pred_check_branch
        %2053 = sbr.rel (%p2051) target = $region44
      $region43: #{forward_single.23} parent=39 // pred_region
        %s2054 = smul.u32 32, %s21
      $region44: #{forward_single.23} parent=39 // pred_fallthru
        _
    $region40: #{forward_single.23} parent=5 // pred_fallthru
      _
    %p2055 = scmp.le.s32.totalorder 2, %s11
    // Predicated region
    $region45: #{forward_single.23} parent=5 // pred_check
      %p2056 = pneg %p2055
    $region46: #{forward_single.23} parent=5 // pred_check_branch
      %2058 = sbr.rel (%p2056) target = $region48
    $region47: #{forward_single.23} parent=5 // pred_region
      %s2059 = ssub.s32 %s11, 2
      // Predicated region
      $region49: #{forward_single.23} parent=47 // pred_check
        %p2060 = pneg %p174
      $region50: #{forward_single.23} parent=47 // pred_check_branch
        %2062 = sbr.rel (%p2060) target = $region52
      $region51: #{forward_single.23} parent=47 // pred_region
        %s2063 = smul.u32 32, %s23
        %p2064 = scmp.lt.s32.totalorder %s22, 1
        %s2065 = scalar_select %p2064, %s22, 1
        %p2066 = scmp.lt.s32.totalorder %s2063, 31
        %s2067 = scalar_select %p2066, %s2063, 31
        %s2068 = smul.addr %s2065, 32
        %s2069 = sadd.s32 %s2067, %s2068
        %s2070 = smul.addr %s2069, 4
        %s2071 = scalar_lea.vmem %s5, %s2070
      $region52: #{forward_single.23} parent=47 // pred_fallthru
        _
    $region48: #{forward_single.23} parent=5 // pred_fallthru
      _
  $region6: #{forward_single.23} parent=0 // loop_footer
    %s15 = sadd.s32 1, %s11
  $region7: #{forward_single.23} parent=0 // loop_footer_branch
    %10 = sbr.rel target = $region3
  $region8: #{forward_single.23} parent=0 // loop_exit
    _

</llo_original>
